<compile_context>
chip_gen: v7x
topology: tpu7x:2x2x1
jax: 0.10.0
libtpu: 0.0.40
codegen_flags: <defaults>
</compile_context>

<pallas_src>
import functools
import math

import jax
import jax.numpy as jnp
from jax import lax
from jax.experimental import pallas as pl
from jax.experimental.pallas import tpu as pltpu


_VMEM_LIMIT = 32 * 1024 * 1024   # lifts v5e's 16 MiB scoped default; fits v6e/v7x


# ----------------------------------------------------------------------------
# small helpers
# ----------------------------------------------------------------------------
def _round_up(x, m):
    return (x + m - 1) // m * m


def _choose_tile(n, cap, multiple):
    """Largest divisor of n that is <= cap and a multiple of `multiple`.

    Falls back to the full dimension (only used for weight dims, which are
    small; attention seq dims are padded instead — see masked_mha)."""
    if n <= cap:
        return n
    t = (cap // multiple) * multiple
    while t >= multiple:
        if n % t == 0:
            return t
        t -= multiple
    return n


# ----------------------------------------------------------------------------
# Pallas kernels
# ----------------------------------------------------------------------------
def _flash_attn_kernel(flags_ref, q_ref, k_ref, v_ref, m_ref, o_ref,
                       m_sc, l_sc, acc_sc, *, neg):
    """Flash attention over one (b*f) slice, all heads batched.

    flags_ref : SMEM (nq, nk) int32 tile occupancy (0 empty / 1 partial / 2 full)
    q_ref : (1, H, tq, d) bf16      k_ref/v_ref : (1, H, tk, d) bf16
    m_ref : (1, tq, tk) int8 (mask is b/f invariant)
    o_ref : (1, tq, C) — lane-dense output (heads merged into lanes)
    scratch: m_sc/l_sc (H, tq, 1) f32 (trailing 1 keeps the lane-broadcast of
             the running max/sum cheap), acc_sc (H, tq, d) f32
    """
    qi = pl.program_id(1)
    ki = pl.program_id(2)
    flag = flags_ref[qi, ki]

    @pl.when(ki == 0)
    def _():
        m_sc[...] = jnp.full_like(m_sc, neg)
        l_sc[...] = jnp.zeros_like(l_sc)
        acc_sc[...] = jnp.zeros_like(acc_sc)

    def update(masked):
        q = q_ref[0]                    # (H, tq, d) — scale folded into wq
        k = k_ref[0]                    # (H, tk, d)
        v = v_ref[0]
        # scores (H, tq, tk), contract last dims (no explicit transpose), f32.
        s = lax.dot_general(q, k, dimension_numbers=(((2,), (2,)), ((0,), (0,))),
                            preferred_element_type=jnp.float32)
        if masked:
            keep = m_ref[0] != 0        # (tq, tk) bool
            s = jnp.where(keep[None], s, neg)
        m_prev = m_sc[...]
        m_new = jnp.maximum(m_prev, s.max(-1, keepdims=True))
        alpha = jnp.exp(m_prev - m_new)
        p = jnp.exp(s - m_new)
        l_sc[...] = alpha * l_sc[...] + p.sum(-1, keepdims=True)
        acc_sc[...] = alpha * acc_sc[...] + lax.dot_general(
            p.astype(v.dtype), v, dimension_numbers=(((2,), (1,)), ((0,), (0,))),
            preferred_element_type=jnp.float32)
        m_sc[...] = m_new

    @pl.when(flag == 1)                 # partially visible tile: masked update
    def _():
        update(masked=True)

    @pl.when(flag == 2)                 # fully visible tile: skip the select
    def _():
        update(masked=False)
    # flag == 0 (no visible pair): the whole tile's compute is skipped.

    @pl.when(ki == pl.num_programs(2) - 1)
    def _():
        l = l_sc[...]
        inv_l = pl.reciprocal(jnp.where(l > 0.0, l, 1.0), approx=True)
        # Query rows that never saw a visible key output zeros.
        # TODO(synk): PyTorch softmax over an all-masked row is NaN/uniform
        # depending on the (unprovided) reference implementation.
        acc = jnp.where(m_sc[...] > neg * 0.5, acc_sc[...] * inv_l, 0.0)  # (H,tq,d)
        heads = [acc[h] for h in range(acc.shape[0])]
        o_ref[0] = jnp.concatenate(heads, axis=-1).astype(o_ref.dtype)    # (tq, C)


def masked_mha(q, k, v, mask, num_heads):
    """Masked multi-head cross-attention with block-sparse tile skipping.

    q : (BF, Lq, C) bf16, k/v : (BF, Lk, C) bf16,
    mask : (Lq, Lk) int8 (shared across BF; nonzero = attend).
    Returns (BF, Lq, C) bf16, lane-dense (no post-kernel head transpose).
    """
    BF, Lq, C = q.shape
    Lk = k.shape[1]
    H = num_heads
    d = C // H
    NEG = -1e30

    # ---- tile selection (VMEM budgeted for v7x's 64 MiB / 32 MiB scoped) ----
    score_budget = 4 * 1024 * 1024
    kv_budget = 8 * 1024 * 1024
    tq_cap = 512 if H <= 8 else (256 if H <= 16 else 128)
    tq = _round_up(Lq, 8) if Lq <= tq_cap else tq_cap
    Lk_r = _round_up(Lk, 128)
    kv_bytes = 2 * 2 * H * Lk_r * d * 2          # K+V, bf16, double-buffered
    if kv_bytes <= kv_budget and H * tq * Lk_r * 4 <= score_budget:
        tk = Lk_r      # K/V resident across query tiles: streamed once per (b,f)
    else:
        tk_cap = max(128, min(512, (score_budget // (H * tq * 4)) // 128 * 128))
        tk = Lk_r if Lk_r <= tk_cap else tk_cap

    # pad to tile multiples (padded keys are masked out, padded queries sliced)
    Lq_p, Lk_p = _round_up(Lq, tq), _round_up(Lk, tk)
    if Lq_p != Lq:
        q = jnp.pad(q, ((0, 0), (0, Lq_p - Lq), (0, 0)))
    if Lk_p != Lk:
        k = jnp.pad(k, ((0, 0), (0, Lk_p - Lk), (0, 0)))
        v = jnp.pad(v, ((0, 0), (0, Lk_p - Lk), (0, 0)))
    if (Lq_p, Lk_p) != (Lq, Lk):
        mask = jnp.pad(mask, ((0, Lq_p - Lq), (0, Lk_p - Lk)))
    nq, nk = Lq_p // tq, Lk_p // tk

    # head-major operands for the batched MXU dots
    qh = q.reshape(BF, Lq_p, H, d).transpose(0, 2, 1, 3)
    kh = k.reshape(BF, Lk_p, H, d).transpose(0, 2, 1, 3)
    vh = v.reshape(BF, Lk_p, H, d).transpose(0, 2, 1, 3)
    mask8 = mask.astype(jnp.int8).reshape(1, Lq_p, Lk_p)

    # per-tile occupancy flags: 0 = empty, 1 = partial, 2 = fully visible
    cnt = (mask8[0] != 0).reshape(nq, tq, nk, tk).sum(axis=(1, 3), dtype=jnp.int32)
    flags = (cnt > 0).astype(jnp.int32) + (cnt >= tq * tk).astype(jnp.int32)

    kernel = functools.partial(_flash_attn_kernel, neg=NEG)
    out = pl.pallas_call(
        kernel,
        grid_spec=pltpu.PrefetchScalarGridSpec(
            num_scalar_prefetch=1,
            grid=(BF, nq, nk),
            in_specs=[
                pl.BlockSpec((1, H, tq, d), lambda b, qi, ki, fl: (b, 0, qi, 0)),
                pl.BlockSpec((1, H, tk, d), lambda b, qi, ki, fl: (b, 0, ki, 0)),
                pl.BlockSpec((1, H, tk, d), lambda b, qi, ki, fl: (b, 0, ki, 0)),
                # TODO(synk): mask tiles are still DMA'd; in-kernel visibility
                # recompute from per-tile direction vectors would remove it.
                pl.BlockSpec((1, tq, tk), lambda b, qi, ki, fl: (0, qi, ki)),
            ],
            out_specs=pl.BlockSpec((1, tq, C), lambda b, qi, ki, fl: (b, qi, 0)),
            scratch_shapes=[
                pltpu.VMEM((H, tq, 1), jnp.float32),   # running max
                pltpu.VMEM((H, tq, 1), jnp.float32),   # running sum
                pltpu.VMEM((H, tq, d), jnp.float32),   # output accumulator
            ],
        ),
        out_shape=jax.ShapeDtypeStruct((BF, Lq_p, C), q.dtype),
        compiler_params=pltpu.CompilerParams(
            dimension_semantics=("parallel", "parallel", "arbitrary"),
            vmem_limit_bytes=_VMEM_LIMIT),
    )(flags, qh, kh, vh, mask8)

    if Lq_p != Lq:
        out = out[:, :Lq]
    return out


def _matmul_kernel(x_ref, w_ref, b_ref, o_ref, acc_ref):
    kk = pl.program_id(2)

    @pl.when(kk == 0)
    def _():
        acc_ref[...] = jnp.zeros_like(acc_ref)

    acc_ref[...] += jnp.dot(x_ref[...], w_ref[...],
                            preferred_element_type=jnp.float32)

    @pl.when(kk == pl.num_programs(2) - 1)
    def _():
        o_ref[...] = (acc_ref[...] + b_ref[...]).astype(o_ref.dtype)


def linear_pallas(x, w, b, *, out_dtype=None):
    """y = x @ w + b ; bf16 inputs, f32 MXU accumulation."""
    lead = x.shape[:-1]
    K = x.shape[-1]
    N = w.shape[1]
    out_dtype = out_dtype or x.dtype

    x2 = x.reshape(-1, K).astype(jnp.bfloat16)
    M = x2.shape[0]
    tm = min(512, _round_up(M, 8))        # larger M tiles halve weight re-streaming
    Mp = _round_up(M, tm)
    if Mp != M:
        x2 = jnp.pad(x2, ((0, Mp - M), (0, 0)))
    tn = _choose_tile(N, 512, 128)
    tk = _choose_tile(K, 512, 128)

    y = pl.pallas_call(
        _matmul_kernel,
        grid=(Mp // tm, N // tn, K // tk),
        in_specs=[
            pl.BlockSpec((tm, tk), lambda i, j, kk: (i, kk)),
            pl.BlockSpec((tk, tn), lambda i, j, kk: (kk, j)),
            pl.BlockSpec((1, tn), lambda i, j, kk: (0, j)),
        ],
        out_specs=pl.BlockSpec((tm, tn), lambda i, j, kk: (i, j)),
        out_shape=jax.ShapeDtypeStruct((Mp, N), out_dtype),
        scratch_shapes=[pltpu.VMEM((tm, tn), jnp.float32)],
        compiler_params=pltpu.CompilerParams(
            dimension_semantics=("parallel", "parallel", "arbitrary"),
            vmem_limit_bytes=_VMEM_LIMIT),
    )(x2, w.astype(jnp.bfloat16), b.reshape(1, N).astype(jnp.float32))
    if Mp != M:
        y = y[:M]
    return y.reshape(*lead, N)


def _ffn_kernel(x_ref, w1_ref, b1_ref, w2_ref, b2_ref, o_ref, acc_ref):
    j = pl.program_id(1)

    @pl.when(j == 0)
    def _():
        acc_ref[...] = jnp.zeros_like(acc_ref)

    h = jnp.dot(x_ref[...], w1_ref[...], preferred_element_type=jnp.float32)
    h = jax.nn.gelu(h + b1_ref[...], approximate=True)
    acc_ref[...] += jnp.dot(h.astype(w2_ref.dtype), w2_ref[...],
                            preferred_element_type=jnp.float32)

    @pl.when(j == pl.num_programs(1) - 1)
    def _():
        o_ref[...] = (acc_ref[...] + b2_ref[...]).astype(o_ref.dtype)


def ffn_pallas(x, w1, b1, w2, b2, *, out_dtype=None):
    """Fused x @ w1 -> gelu -> @ w2, tiled over the hidden dim (no HBM trip)."""
    lead = x.shape[:-1]
    C = x.shape[-1]
    Hd = w1.shape[1]
    out_dtype = out_dtype or x.dtype

    x2 = x.reshape(-1, C).astype(jnp.bfloat16)
    M = x2.shape[0]
    tm = min(512, _round_up(M, 8))
    Mp = _round_up(M, tm)
    if Mp != M:
        x2 = jnp.pad(x2, ((0, Mp - M), (0, 0)))
    th = _choose_tile(Hd, 512, 128)

    y = pl.pallas_call(
        _ffn_kernel,
        grid=(Mp // tm, Hd // th),
        in_specs=[
            pl.BlockSpec((tm, C), lambda i, j: (i, 0)),
            pl.BlockSpec((C, th), lambda i, j: (0, j)),
            pl.BlockSpec((1, th), lambda i, j: (0, j)),
            pl.BlockSpec((th, C), lambda i, j: (j, 0)),
            pl.BlockSpec((1, C), lambda i, j: (0, 0)),
        ],
        out_specs=pl.BlockSpec((tm, C), lambda i, j: (i, 0)),
        out_shape=jax.ShapeDtypeStruct((Mp, C), out_dtype),
        scratch_shapes=[pltpu.VMEM((tm, C), jnp.float32)],
        compiler_params=pltpu.CompilerParams(
            dimension_semantics=("parallel", "arbitrary"),
            vmem_limit_bytes=_VMEM_LIMIT),
    )(x2, w1.astype(jnp.bfloat16), b1.reshape(1, Hd).astype(jnp.float32),
      w2.astype(jnp.bfloat16), b2.reshape(1, C).astype(jnp.float32))
    if Mp != M:
        y = y[:M]
    return y.reshape(*lead, C)


# ----------------------------------------------------------------------------
# Plain-JAX glue (layer norm, PE, geometry)
# ----------------------------------------------------------------------------
def layer_norm(x, g, b, eps=1e-5):
    mu = jnp.mean(x, axis=-1, keepdims=True)
    var = jnp.mean((x - mu) ** 2, axis=-1, keepdims=True)
    return (x - mu) * lax.rsqrt(var + eps) * g + b


def spherical_pe(coords, num_freqs):
    """coords (..., 2) -> (..., 4*num_freqs) sinusoidal embedding."""
    freqs = 2.0 ** jnp.arange(num_freqs, dtype=coords.dtype)
    ang = coords[..., None] * freqs                               # (..., 2, F)
    pe = jnp.concatenate([jnp.sin(ang), jnp.cos(ang)], axis=-1)   # (..., 2, 2F)
    return pe.reshape(*coords.shape[:-1], 4 * num_freqs)


def _latlon_to_dir(c):
    lat, lon = c[..., 0], c[..., 1]
    return jnp.stack([jnp.cos(lat) * jnp.sin(lon), jnp.sin(lat),
                      jnp.cos(lat) * jnp.cos(lon)], -1)


def get_coords(ph, pw, eh, ew, cameras, dtype=jnp.float32):
    yaws = cameras["yaw"].astype(dtype)                           # (m,)
    fov = jnp.asarray(cameras["fov"], dtype)
    ys = ((jnp.arange(ph, dtype=dtype) + 0.5) / ph) * 2.0 - 1.0
    xs = ((jnp.arange(pw, dtype=dtype) + 0.5) / pw) * 2.0 - 1.0
    yy, xx = jnp.meshgrid(ys, xs, indexing="ij")
    t = jnp.tan(fov / 2.0)
    dirs = jnp.stack([xx * t, yy * t, jnp.ones_like(xx)], -1)
    dirs = dirs / jnp.linalg.norm(dirs, axis=-1, keepdims=True)

    def rotate(yaw):
        cy, sy = jnp.cos(yaw), jnp.sin(yaw)
        x, y, z = dirs[..., 0], dirs[..., 1], dirs[..., 2]
        return jnp.stack([cy * x + sy * z, y, -sy * x + cy * z], -1)

    pdirs = jax.vmap(rotate)(yaws)                                # (m, ph, pw, 3)
    pers_coords = jnp.stack(
        [jnp.arcsin(jnp.clip(pdirs[..., 1], -1.0, 1.0)),
         jnp.arctan2(pdirs[..., 0], pdirs[..., 2])], -1)          # (m, ph, pw, 2)

    lat = ((jnp.arange(eh, dtype=dtype) + 0.5) / eh) * jnp.pi - jnp.pi / 2
    lon = ((jnp.arange(ew, dtype=dtype) + 0.5) / ew) * 2 * jnp.pi - jnp.pi
    lat_g, lon_g = jnp.meshgrid(lat, lon, indexing="ij")
    equi_coords = jnp.stack([lat_g, lon_g], -1)                   # (eh, ew, 2)
    return pers_coords, equi_coords


def get_attention_masks(pers_coords, equi_coords, cameras, dtype=jnp.float32):
    """Geometric visibility, built directly in flattened token layout.

    TODO(synk): get_merged_masks is not defined in the provided source; this
    is a synthetic FOV-cone visibility mask with the same consumer layout.
    Returns pers_attn_mask (eh*ew, m*ph*pw) int8 and equi_attn_mask (its T).
    """
    m_, ph_, pw_, _ = pers_coords.shape
    eh_, ew_, _ = equi_coords.shape
    pd = _latlon_to_dir(pers_coords).reshape(m_ * ph_ * pw_, 3).astype(dtype)
    ed = _latlon_to_dir(equi_coords).reshape(eh_ * ew_, 3).astype(dtype)
    thresh = jnp.cos(jnp.asarray(cameras["fov"], dtype))
    vis = (ed @ pd.T) > thresh                      # (Le, Lp): one small matmul
    return vis.astype(jnp.int8), vis.T.astype(jnp.int8)


def basic_transformer_block(p, x, context, mask, query_pe, num_heads):
    """Norm -> masked cross-attn (+query PE) -> residual -> norm -> MLP.

    TODO(synk): BasicTransformerBlock is not defined in the provided source;
    this is a standard pre-norm cross-attention block. `mask` is one (Lq, Lk)
    visibility mask shared by all (b, f) slices."""
    C = x.shape[-1]
    h = layer_norm(x, p["ln1_g"], p["ln1_b"])
    ctx = layer_norm(context, p["lnc_g"], p["lnc_b"])

    # wq pre-scaled by 1/sqrt(head_dim) and pre-cast bf16; wkv pre-fused (C,2C).
    q = linear_pallas(h + query_pe, p["wq_s"], p["bq_s"], out_dtype=jnp.bfloat16)
    kv = linear_pallas(ctx, p["wkv"], p["bkv"], out_dtype=jnp.bfloat16)
    k, v = kv[..., :C], kv[..., C:]

    attn = masked_mha(q, k, v, mask, num_heads)                    # (BF, Lq, C) bf16
    x = x + linear_pallas(attn, p["wo"], p["bo"], out_dtype=x.dtype)
    h = layer_norm(x, p["ln2_g"], p["ln2_b"])
    x = x + ffn_pallas(h, p["w1"], p["b1"], p["w2"], p["b2"], out_dtype=x.dtype)
    return x


# ----------------------------------------------------------------------------
# WarpAttn forward
# ----------------------------------------------------------------------------
def warp_attn_forward(params, pers_x, equi_x, cameras, *, dim):
    num_heads = dim // 32
    pe_freqs = dim // 4

    bm, c, f, ph, pw = pers_x.shape
    b, _, _, eh, ew = equi_x.shape
    m = bm // b
    Lp, Le = m * ph * pw, eh * ew
    bf = b * f

    pers_coords, equi_coords = get_coords(ph, pw, eh, ew, cameras, pers_x.dtype)
    pers_attn_mask, equi_attn_mask = get_attention_masks(
        pers_coords, equi_coords, cameras, pers_x.dtype)

    # channel-last activations: a single transpose per input tensor.
    pers_cl = (pers_x.reshape(b, m, c, f, ph, pw)
               .transpose(0, 3, 1, 4, 5, 2)
               .reshape(bf, Lp, c))
    equi_cl = (equi_x.transpose(0, 2, 3, 4, 1)
               .reshape(bf, Le, c))

    # PEs built channel-last as (1, L, C); broadcast happens inside the adds
    # (no materialized NCFHW PE tensors, no extra layout passes).
    pers_pe = spherical_pe(pers_coords, pe_freqs).reshape(1, Lp, c).astype(pers_x.dtype)
    equi_pe = spherical_pe(equi_coords, pe_freqs).reshape(1, Le, c).astype(equi_x.dtype)

    tp = params["transformer"]

    # equirect queries attend to perspective keys (keys carry their PE)
    equi_x_out = basic_transformer_block(
        tp, equi_cl, pers_cl + pers_pe, pers_attn_mask, equi_pe, num_heads)

    # perspective queries attend to equirect keys
    pers_x_out = basic_transformer_block(
        tp, pers_cl, equi_cl + equi_pe, equi_attn_mask, pers_pe, num_heads)

    # back to NCFHW
    pers_x_out = (pers_x_out.reshape(b, f, m, ph, pw, c)
                  .transpose(0, 2, 5, 1, 3, 4)
                  .reshape(bm, c, f, ph, pw))
    equi_x_out = (equi_x_out.reshape(b, f, eh, ew, c)
                  .transpose(0, 4, 1, 2, 3))
    return pers_x_out, equi_x_out


# ----------------------------------------------------------------------------
# Deterministic parameter init (weights pre-fused / pre-cast for the hot path)
# ----------------------------------------------------------------------------
def init_params(key, dim):
    ff = 4 * dim
    head_dim = 32
    scale = 1.0 / math.sqrt(head_dim)
    ks = jax.random.split(key, 6)
    std = 0.02

    def w(k, shape):
        return jax.random.normal(k, shape, jnp.float32) * std

    wq, wk, wv = w(ks[0], (dim, dim)), w(ks[1], (dim, dim)), w(ks[2], (dim, dim))
    t = dict(
        ln1_g=jnp.ones((dim,), jnp.float32), ln1_b=jnp.zeros((dim,), jnp.float32),
        lnc_g=jnp.ones((dim,), jnp.float32), lnc_b=jnp.zeros((dim,), jnp.float32),
        ln2_g=jnp.ones((dim,), jnp.float32), ln2_b=jnp.zeros((dim,), jnp.float32),
        # softmax scale folded into wq; K/V fused into one lane-dense projection.
        wq_s=(wq * scale).astype(jnp.bfloat16),
        bq_s=jnp.zeros((dim,), jnp.float32),
        wkv=jnp.concatenate([wk, wv], axis=1).astype(jnp.bfloat16),
        bkv=jnp.zeros((2 * dim,), jnp.float32),
        wo=w(ks[3], (dim, dim)).astype(jnp.bfloat16), bo=jnp.zeros((dim,), jnp.float32),
        w1=w(ks[4], (dim, ff)).astype(jnp.bfloat16), b1=jnp.zeros((ff,), jnp.float32),
        w2=w(ks[5], (ff, dim)).astype(jnp.bfloat16), b2=jnp.zeros((dim,), jnp.float32),
    )
    return {"transformer": t}


# ----------------------------------------------------------------------------
if __name__ == "__main__":
    dim = 64                     # heads = dim // 32 = 2, head_dim = 32
    b, m, f = 1, 2, 2
    ph = pw = 8                  # perspective tokens: m*ph*pw = 128
    eh, ew = 8, 16               # equirect tokens:    eh*ew   = 128

    key = jax.random.PRNGKey(0)
    k1, k2, kp = jax.random.split(key, 3)
    pers_x = jax.random.normal(k1, (b * m, dim, f, ph, pw), jnp.float32)
    equi_x = jax.random.normal(k2, (b, dim, f, eh, ew), jnp.float32)
    cameras = {"yaw": jnp.array([0.0, math.pi], jnp.float32),
               "fov": math.pi / 2}

    params = init_params(kp, dim)

    fwd = jax.jit(functools.partial(warp_attn_forward, dim=dim))
    pers_out, equi_out = fwd(params, pers_x, equi_x, cameras)
    jax.block_until_ready((pers_out, equi_out))

    assert pers_out.shape == (b * m, dim, f, ph, pw), pers_out.shape
    assert equi_out.shape == (b, dim, f, eh, ew), equi_out.shape
    assert bool(jnp.all(jnp.isfinite(pers_out))) and bool(jnp.all(jnp.isfinite(equi_out)))
    print("KERNEL_OK")
</pallas_src>

<mosaic_0001>
module attributes {stable_mosaic.version = 11 : i64} {
  func.func @_matmul_kernel(%arg0: i32, %arg1: i32, %arg2: i32, %arg3: memref<256x64xbf16, #tpu.memory_space<vmem>>, %arg4: memref<64x64xbf16, #tpu.memory_space<vmem>>, %arg5: memref<1x64xf32, #tpu.memory_space<vmem>>, %arg6: memref<256x64xbf16, #tpu.memory_space<vmem>>, %arg7: memref<256x64xf32, #tpu.memory_space<vmem>>) attributes {dimension_semantics = [#tpu.dimension_semantics<parallel>, #tpu.dimension_semantics<parallel>, #tpu.dimension_semantics<arbitrary>], iteration_bounds = array<i64: 1, 1, 1>, scalar_prefetch = 0 : i64, scratch_operands = 1 : i64, tpu.core_type = #tpu.core_type<tc>, window_params = [{transform_indices = @transform_0, window_bounds = array<i64: 256, 64>}, {transform_indices = @transform_1, window_bounds = array<i64: 64, 64>}, {transform_indices = @transform_2, window_bounds = array<i64: 1, 64>}, {transform_indices = @transform_3, window_bounds = array<i64: 256, 64>}]} {
    %c0_i32 = arith.constant 0 : i32
    %0 = arith.cmpi eq, %arg2, %c0_i32 : i32
    %1 = arith.extui %0 : i1 to i32
    %c0_i32_0 = arith.constant 0 : i32
    %2 = arith.cmpi ne, %1, %c0_i32_0 : i32
    scf.if %2 {
      %cst_10 = arith.constant 0.000000e+00 : f32
      %12 = vector.broadcast %cst_10 : f32 to vector<256x64xf32>
      %c0_11 = arith.constant 0 : index
      %c0_12 = arith.constant 0 : index
      %13 = vector.load %arg7[%c0_11, %c0_12] : memref<256x64xf32, #tpu.memory_space<vmem>>, vector<256x64xf32>
      tpu.vector_store %arg7[%c0_11, %c0_12], %12 {strides = array<i32>} : memref<256x64xf32, #tpu.memory_space<vmem>>, vector<256x64xf32>,
    } else {
    }
    %c0 = arith.constant 0 : index
    %c0_1 = arith.constant 0 : index
    %3 = vector.load %arg7[%c0, %c0_1] : memref<256x64xf32, #tpu.memory_space<vmem>>, vector<256x64xf32>
    %c0_2 = arith.constant 0 : index
    %c0_3 = arith.constant 0 : index
    %4 = vector.load %arg3[%c0_2, %c0_3] : memref<256x64xbf16, #tpu.memory_space<vmem>>, vector<256x64xbf16>
    %c0_4 = arith.constant 0 : index
    %c0_5 = arith.constant 0 : index
    %5 = vector.load %arg4[%c0_4, %c0_5] : memref<64x64xbf16, #tpu.memory_space<vmem>>, vector<64x64xbf16>
    %cst = arith.constant dense<0.000000e+00> : vector<256x64xf32>
    %6 = tpu.matmul %4, %5, %cst {dimension_numbers = #tpu.dot_dimension_numbers<[1], [0], [0], [1], [0, 0, 1, 1], [], []>} : vector<256x64xbf16>, vector<64x64xbf16>, vector<256x64xf32> -> vector<256x64xf32>
    %7 = arith.addf %3, %6 : vector<256x64xf32>
    %c0_6 = arith.constant 0 : index
    %c0_7 = arith.constant 0 : index
    %8 = vector.load %arg7[%c0_6, %c0_7] : memref<256x64xf32, #tpu.memory_space<vmem>>, vector<256x64xf32>
    tpu.vector_store %arg7[%c0_6, %c0_7], %7 {strides = array<i32>} : memref<256x64xf32, #tpu.memory_space<vmem>>, vector<256x64xf32>,
    %c0_i32_8 = arith.constant 0 : i32
    %9 = arith.cmpi eq, %arg2, %c0_i32_8 : i32
    %10 = arith.extui %9 : i1 to i32
    %c0_i32_9 = arith.constant 0 : i32
    %11 = arith.cmpi ne, %10, %c0_i32_9 : i32
    scf.if %11 {
      %c0_10 = arith.constant 0 : index
      %c0_11 = arith.constant 0 : index
      %12 = vector.load %arg7[%c0_10, %c0_11] : memref<256x64xf32, #tpu.memory_space<vmem>>, vector<256x64xf32>
      %c0_12 = arith.constant 0 : index
      %c0_13 = arith.constant 0 : index
      %13 = vector.load %arg5[%c0_12, %c0_13] : memref<1x64xf32, #tpu.memory_space<vmem>>, vector<1x64xf32>
      %14 = vector.broadcast %13 : vector<1x64xf32> to vector<256x64xf32>
      %15 = arith.addf %12, %14 : vector<256x64xf32>
      %16 = arith.truncf %15 : vector<256x64xf32> to vector<256x64xbf16>
      %c0_14 = arith.constant 0 : index
      %c0_15 = arith.constant 0 : index
      %17 = vector.load %arg6[%c0_14, %c0_15] : memref<256x64xbf16, #tpu.memory_space<vmem>>, vector<256x64xbf16>
      tpu.vector_store %arg6[%c0_14, %c0_15], %16 {strides = array<i32>} : memref<256x64xbf16, #tpu.memory_space<vmem>>, vector<256x64xbf16>,
    } else {
    }
    return
  }
  func.func @transform_0(%arg0: i32, %arg1: i32, %arg2: i32) -> (i32, i32) {
    %c0_i32 = arith.constant 0 : i32
    return %arg0, %arg2 : i32, i32
  }
  func.func @transform_1(%arg0: i32, %arg1: i32, %arg2: i32) -> (i32, i32) {
    %c0_i32 = arith.constant 0 : i32
    return %arg2, %arg1 : i32, i32
  }
  func.func @transform_2(%arg0: i32, %arg1: i32, %arg2: i32) -> (i32, i32) {
    %c0_i32 = arith.constant 0 : i32
    %c0_i32_0 = arith.constant 0 : i32
    return %c0_i32, %arg1 : i32, i32
  }
  func.func @transform_3(%arg0: i32, %arg1: i32, %arg2: i32) -> (i32, i32) {
    %c0_i32 = arith.constant 0 : i32
    return %arg0, %arg1 : i32, i32
  }
}

module attributes {stable_mosaic.version = 11 : i64} {
  func.func @_matmul_kernel(%arg0: i32, %arg1: i32, %arg2: i32, %arg3: memref<256x64xbf16, #tpu.memory_space<vmem>>, %arg4: memref<64x128xbf16, #tpu.memory_space<vmem>>, %arg5: memref<1x128xf32, #tpu.memory_space<vmem>>, %arg6: memref<256x128xbf16, #tpu.memory_space<vmem>>, %arg7: memref<256x128xf32, #tpu.memory_space<vmem>>) attributes {dimension_semantics = [#tpu.dimension_semantics<parallel>, #tpu.dimension_semantics<parallel>, #tpu.dimension_semantics<arbitrary>], iteration_bounds = array<i64: 1, 1, 1>, scalar_prefetch = 0 : i64, scratch_operands = 1 : i64, tpu.core_type = #tpu.core_type<tc>, window_params = [{transform_indices = @transform_0, window_bounds = array<i64: 256, 64>}, {transform_indices = @transform_1, window_bounds = array<i64: 64, 128>}, {transform_indices = @transform_2, window_bounds = array<i64: 1, 128>}, {transform_indices = @transform_3, window_bounds = array<i64: 256, 128>}]} {
    %c0_i32 = arith.constant 0 : i32
    %0 = arith.cmpi eq, %arg2, %c0_i32 : i32
    %1 = arith.extui %0 : i1 to i32
    %c0_i32_0 = arith.constant 0 : i32
    %2 = arith.cmpi ne, %1, %c0_i32_0 : i32
    scf.if %2 {
      %cst_10 = arith.constant 0.000000e+00 : f32
      %12 = vector.broadcast %cst_10 : f32 to vector<256x128xf32>
      %c0_11 = arith.constant 0 : index
      %c0_12 = arith.constant 0 : index
      %13 = vector.load %arg7[%c0_11, %c0_12] : memref<256x128xf32, #tpu.memory_space<vmem>>, vector<256x128xf32>
      tpu.vector_store %arg7[%c0_11, %c0_12], %12 {strides = array<i32>} : memref<256x128xf32, #tpu.memory_space<vmem>>, vector<256x128xf32>,
    } else {
    }
    %c0 = arith.constant 0 : index
    %c0_1 = arith.constant 0 : index
    %3 = vector.load %arg7[%c0, %c0_1] : memref<256x128xf32, #tpu.memory_space<vmem>>, vector<256x128xf32>
    %c0_2 = arith.constant 0 : index
    %c0_3 = arith.constant 0 : index
    %4 = vector.load %arg3[%c0_2, %c0_3] : memref<256x64xbf16, #tpu.memory_space<vmem>>, vector<256x64xbf16>
    %c0_4 = arith.constant 0 : index
    %c0_5 = arith.constant 0 : index
    %5 = vector.load %arg4[%c0_4, %c0_5] : memref<64x128xbf16, #tpu.memory_space<vmem>>, vector<64x128xbf16>
    %cst = arith.constant dense<0.000000e+00> : vector<256x128xf32>
    %6 = tpu.matmul %4, %5, %cst {dimension_numbers = #tpu.dot_dimension_numbers<[1], [0], [0], [1], [0, 0, 1, 1], [], []>} : vector<256x64xbf16>, vector<64x128xbf16>, vector<256x128xf32> -> vector<256x128xf32>
    %7 = arith.addf %3, %6 : vector<256x128xf32>
    %c0_6 = arith.constant 0 : index
    %c0_7 = arith.constant 0 : index
    %8 = vector.load %arg7[%c0_6, %c0_7] : memref<256x128xf32, #tpu.memory_space<vmem>>, vector<256x128xf32>
    tpu.vector_store %arg7[%c0_6, %c0_7], %7 {strides = array<i32>} : memref<256x128xf32, #tpu.memory_space<vmem>>, vector<256x128xf32>,
    %c0_i32_8 = arith.constant 0 : i32
    %9 = arith.cmpi eq, %arg2, %c0_i32_8 : i32
    %10 = arith.extui %9 : i1 to i32
    %c0_i32_9 = arith.constant 0 : i32
    %11 = arith.cmpi ne, %10, %c0_i32_9 : i32
    scf.if %11 {
      %c0_10 = arith.constant 0 : index
      %c0_11 = arith.constant 0 : index
      %12 = vector.load %arg7[%c0_10, %c0_11] : memref<256x128xf32, #tpu.memory_space<vmem>>, vector<256x128xf32>
      %c0_12 = arith.constant 0 : index
      %c0_13 = arith.constant 0 : index
      %13 = vector.load %arg5[%c0_12, %c0_13] : memref<1x128xf32, #tpu.memory_space<vmem>>, vector<1x128xf32>
      %14 = vector.broadcast %13 : vector<1x128xf32> to vector<256x128xf32>
      %15 = arith.addf %12, %14 : vector<256x128xf32>
      %16 = arith.truncf %15 : vector<256x128xf32> to vector<256x128xbf16>
      %c0_14 = arith.constant 0 : index
      %c0_15 = arith.constant 0 : index
      %17 = vector.load %arg6[%c0_14, %c0_15] : memref<256x128xbf16, #tpu.memory_space<vmem>>, vector<256x128xbf16>
      tpu.vector_store %arg6[%c0_14, %c0_15], %16 {strides = array<i32>} : memref<256x128xbf16, #tpu.memory_space<vmem>>, vector<256x128xbf16>,
    } else {
    }
    return
  }
  func.func @transform_0(%arg0: i32, %arg1: i32, %arg2: i32) -> (i32, i32) {
    %c0_i32 = arith.constant 0 : i32
    return %arg0, %arg2 : i32, i32
  }
  func.func @transform_1(%arg0: i32, %arg1: i32, %arg2: i32) -> (i32, i32) {
    %c0_i32 = arith.constant 0 : i32
    return %arg2, %arg1 : i32, i32
  }
  func.func @transform_2(%arg0: i32, %arg1: i32, %arg2: i32) -> (i32, i32) {
    %c0_i32 = arith.constant 0 : i32
    %c0_i32_0 = arith.constant 0 : i32
    return %c0_i32, %arg1 : i32, i32
  }
  func.func @transform_3(%arg0: i32, %arg1: i32, %arg2: i32) -> (i32, i32) {
    %c0_i32 = arith.constant 0 : i32
    return %arg0, %arg1 : i32, i32
  }
}

module attributes {stable_mosaic.version = 11 : i64} {
  func.func @_flash_attn_kernel(%arg0: i32, %arg1: i32, %arg2: i32, %arg3: memref<1x1xi32, #tpu.memory_space<smem>>, %arg4: memref<1x2x128x32xbf16, #tpu.memory_space<vmem>>, %arg5: memref<1x2x128x32xbf16, #tpu.memory_space<vmem>>, %arg6: memref<1x2x128x32xbf16, #tpu.memory_space<vmem>>, %arg7: memref<1x128x128xi8, #tpu.memory_space<vmem>>, %arg8: memref<1x128x64xbf16, #tpu.memory_space<vmem>>, %arg9: memref<2x128x1xf32, #tpu.memory_space<vmem>>, %arg10: memref<2x128x1xf32, #tpu.memory_space<vmem>>, %arg11: memref<2x128x32xf32, #tpu.memory_space<vmem>>) attributes {dimension_semantics = [#tpu.dimension_semantics<parallel>, #tpu.dimension_semantics<parallel>, #tpu.dimension_semantics<arbitrary>], iteration_bounds = array<i64: 2, 1, 1>, scalar_prefetch = 1 : i64, scratch_operands = 3 : i64, tpu.core_type = #tpu.core_type<tc>, window_params = [{transform_indices = @transform_0, window_bounds = array<i64: 1, 2, 128, 32>}, {transform_indices = @transform_1, window_bounds = array<i64: 1, 2, 128, 32>}, {transform_indices = @transform_2, window_bounds = array<i64: 1, 2, 128, 32>}, {transform_indices = @transform_3, window_bounds = array<i64: 1, 128, 128>}, {transform_indices = @transform_4, window_bounds = array<i64: 1, 128, 64>}]} {
    %0 = arith.index_cast %arg1 : i32 to index
    %1 = arith.index_cast %arg2 : i32 to index
    %2 = memref.load %arg3[%0, %1] : memref<1x1xi32, #tpu.memory_space<smem>>
    %c0_i32 = arith.constant 0 : i32
    %3 = arith.cmpi eq, %arg2, %c0_i32 : i32
    %4 = arith.extui %3 : i1 to i32
    %c0_i32_0 = arith.constant 0 : i32
    %5 = arith.cmpi ne, %4, %c0_i32_0 : i32
    scf.if %5 {
      %cst = arith.constant -1.000000e+30 : f32
      %15 = vector.broadcast %cst : f32 to vector<2x128x1xf32>
      %c0 = arith.constant 0 : index
      %c0_5 = arith.constant 0 : index
      %c0_6 = arith.constant 0 : index
      %16 = vector.load %arg9[%c0, %c0_5, %c0_6] : memref<2x128x1xf32, #tpu.memory_space<vmem>>, vector<2x128x1xf32>
      tpu.vector_store %arg9[%c0, %c0_5, %c0_6], %15 {strides = array<i32>} : memref<2x128x1xf32, #tpu.memory_space<vmem>>, vector<2x128x1xf32>,
      %cst_7 = arith.constant 0.000000e+00 : f32
      %17 = vector.broadcast %cst_7 : f32 to vector<2x128x1xf32>
      %c0_8 = arith.constant 0 : index
      %c0_9 = arith.constant 0 : index
      %c0_10 = arith.constant 0 : index
      %18 = vector.load %arg10[%c0_8, %c0_9, %c0_10] : memref<2x128x1xf32, #tpu.memory_space<vmem>>, vector<2x128x1xf32>
      tpu.vector_store %arg10[%c0_8, %c0_9, %c0_10], %17 {strides = array<i32>} : memref<2x128x1xf32, #tpu.memory_space<vmem>>, vector<2x128x1xf32>,
      %cst_11 = arith.constant 0.000000e+00 : f32
      %19 = vector.broadcast %cst_11 : f32 to vector<2x128x32xf32>
      %c0_12 = arith.constant 0 : index
      %c0_13 = arith.constant 0 : index
      %c0_14 = arith.constant 0 : index
      %20 = vector.load %arg11[%c0_12, %c0_13, %c0_14] : memref<2x128x32xf32, #tpu.memory_space<vmem>>, vector<2x128x32xf32>
      tpu.vector_store %arg11[%c0_12, %c0_13, %c0_14], %19 {strides = array<i32>} : memref<2x128x32xf32, #tpu.memory_space<vmem>>, vector<2x128x32xf32>,
    } else {
    }
    %c1_i32 = arith.constant 1 : i32
    %6 = arith.cmpi eq, %2, %c1_i32 : i32
    %7 = arith.extui %6 : i1 to i32
    %c0_i32_1 = arith.constant 0 : i32
    %8 = arith.cmpi ne, %7, %c0_i32_1 : i32
    scf.if %8 {
      %c0 = arith.constant 0 : index
      %c0_5 = arith.constant 0 : index
      %c0_6 = arith.constant 0 : index
      %c0_7 = arith.constant 0 : index
      %15 = vector.load %arg4[%c0, %c0_5, %c0_6, %c0_7] : memref<1x2x128x32xbf16, #tpu.memory_space<vmem>>, vector<1x2x128x32xbf16>
      %16 = vector.shape_cast %15 : vector<1x2x128x32xbf16> to vector<2x128x32xbf16>
      %c0_8 = arith.constant 0 : index
      %c0_9 = arith.constant 0 : index
      %c0_10 = arith.constant 0 : index
      %c0_11 = arith.constant 0 : index
      %17 = vector.load %arg5[%c0_8, %c0_9, %c0_10, %c0_11] : memref<1x2x128x32xbf16, #tpu.memory_space<vmem>>, vector<1x2x128x32xbf16>
      %18 = vector.shape_cast %17 : vector<1x2x128x32xbf16> to vector<2x128x32xbf16>
      %c0_12 = arith.constant 0 : index
      %c0_13 = arith.constant 0 : index
      %c0_14 = arith.constant 0 : index
      %c0_15 = arith.constant 0 : index
      %19 = vector.load %arg6[%c0_12, %c0_13, %c0_14, %c0_15] : memref<1x2x128x32xbf16, #tpu.memory_space<vmem>>, vector<1x2x128x32xbf16>
      %20 = vector.shape_cast %19 : vector<1x2x128x32xbf16> to vector<2x128x32xbf16>
      %cst = arith.constant dense<0.000000e+00> : vector<2x128x128xf32>
      %21 = tpu.matmul %16, %18, %cst {dimension_numbers = #tpu.dot_dimension_numbers<[2], [2], [1], [1], [0, 0, 0, 1, 1, 1], [0], [0]>} : vector<2x128x32xbf16>, vector<2x128x32xbf16>, vector<2x128x128xf32> -> vector<2x128x128xf32>
      %c0_16 = arith.constant 0 : index
      %c0_17 = arith.constant 0 : index
      %c0_18 = arith.constant 0 : index
      %22 = vector.load %arg7[%c0_16, %c0_17, %c0_18] : memref<1x128x128xi8, #tpu.memory_space<vmem>>, vector<1x128x128xi8>
      %23 = vector.shape_cast %22 : vector<1x128x128xi8> to vector<128x128xi8>
      %c0_i8 = arith.constant 0 : i8
      %24 = vector.broadcast %c0_i8 : i8 to vector<128x128xi8>
      %25 = arith.cmpi ne, %23, %24 : vector<128x128xi8>
      %26 = vector.shape_cast %25 : vector<128x128xi1> to vector<1x128x128xi1>
      %cst_19 = arith.constant -1.000000e+30 : f32
      %27 = vector.shape_cast %26 : vector<1x128x128xi1> to vector<1x128x128xi1>
      %28 = vector.broadcast %27 : vector<1x128x128xi1> to vector<2x128x128xi1>
      %29 = vector.broadcast %cst_19 : f32 to vector<2x128x128xf32>
      %30 = arith.select %28, %21, %29 : vector<2x128x128xi1>, vector<2x128x128xf32>
      %c0_20 = arith.constant 0 : index
      %c0_21 = arith.constant 0 : index
      %c0_22 = arith.constant 0 : index
      %31 = vector.load %arg9[%c0_20, %c0_21, %c0_22] : memref<2x128x1xf32, #tpu.memory_space<vmem>>, vector<2x128x1xf32>
      %cst_23 = arith.constant dense<0xFF800000> : vector<2x128xf32>
      %32 = vector.multi_reduction <maximumf>, %30, %cst_23 [2] : vector<2x128x128xf32> to vector<2x128xf32>
      %33 = vector.shape_cast %32 : vector<2x128xf32> to vector<2x128x1xf32>
      %34 = arith.maximumf %31, %33 : vector<2x128x1xf32>
      %35 = arith.subf %31, %34 : vector<2x128x1xf32>
      %36 = math.exp %35 : vector<2x128x1xf32>
      %37 = vector.broadcast %34 : vector<2x128x1xf32> to vector<2x128x128xf32>
      %38 = arith.subf %30, %37 : vector<2x128x128xf32>
      %39 = math.exp %38 : vector<2x128x128xf32>
      %c0_24 = arith.constant 0 : index
      %c0_25 = arith.constant 0 : index
      %c0_26 = arith.constant 0 : index
      %40 = vector.load %arg10[%c0_24, %c0_25, %c0_26] : memref<2x128x1xf32, #tpu.memory_space<vmem>>, vector<2x128x1xf32>
      %41 = arith.mulf %36, %40 : vector<2x128x1xf32>
      %cst_27 = arith.constant dense<0.000000e+00> : vector<2x128xf32>
      %42 = vector.multi_reduction <add>, %39, %cst_27 [2] : vector<2x128x128xf32> to vector<2x128xf32>
      %43 = vector.shape_cast %42 : vector<2x128xf32> to vector<2x128x1xf32>
      %44 = arith.addf %41, %43 : vector<2x128x1xf32>
      %c0_28 = arith.constant 0 : index
      %c0_29 = arith.constant 0 : index
      %c0_30 = arith.constant 0 : index
      %45 = vector.load %arg10[%c0_28, %c0_29, %c0_30] : memref<2x128x1xf32, #tpu.memory_space<vmem>>, vector<2x128x1xf32>
      tpu.vector_store %arg10[%c0_28, %c0_29, %c0_30], %44 {strides = array<i32>} : memref<2x128x1xf32, #tpu.memory_space<vmem>>, vector<2x128x1xf32>,
      %c0_31 = arith.constant 0 : index
      %c0_32 = arith.constant 0 : index
      %c0_33 = arith.constant 0 : index
      %46 = vector.load %arg11[%c0_31, %c0_32, %c0_33] : memref<2x128x32xf32, #tpu.memory_space<vmem>>, vector<2x128x32xf32>
      %47 = vector.broadcast %36 : vector<2x128x1xf32> to vector<2x128x32xf32>
      %48 = arith.mulf %47, %46 : vector<2x128x32xf32>
      %49 = arith.truncf %39 : vector<2x128x128xf32> to vector<2x128x128xbf16>
      %cst_34 = arith.constant dense<0.000000e+00> : vector<2x128x32xf32>
      %50 = tpu.matmul %49, %20, %cst_34 {dimension_numbers = #tpu.dot_dimension_numbers<[2], [1], [1], [2], [0, 0, 0, 1, 1, 2], [0], [0]>} : vector<2x128x128xbf16>, vector<2x128x32xbf16>, vector<2x128x32xf32> -> vector<2x128x32xf32>
      %51 = arith.addf %48, %50 : vector<2x128x32xf32>
      %c0_35 = arith.constant 0 : index
      %c0_36 = arith.constant 0 : index
      %c0_37 = arith.constant 0 : index
      %52 = vector.load %arg11[%c0_35, %c0_36, %c0_37] : memref<2x128x32xf32, #tpu.memory_space<vmem>>, vector<2x128x32xf32>
      tpu.vector_store %arg11[%c0_35, %c0_36, %c0_37], %51 {strides = array<i32>} : memref<2x128x32xf32, #tpu.memory_space<vmem>>, vector<2x128x32xf32>,
      %c0_38 = arith.constant 0 : index
      %c0_39 = arith.constant 0 : index
      %c0_40 = arith.constant 0 : index
      %53 = vector.load %arg9[%c0_38, %c0_39, %c0_40] : memref<2x128x1xf32, #tpu.memory_space<vmem>>, vector<2x128x1xf32>
      tpu.vector_store %arg9[%c0_38, %c0_39, %c0_40], %34 {strides = array<i32>} : memref<2x128x1xf32, #tpu.memory_space<vmem>>, vector<2x128x1xf32>,
    } else {
    }
    %c2_i32 = arith.constant 2 : i32
    %9 = arith.cmpi eq, %2, %c2_i32 : i32
    %10 = arith.extui %9 : i1 to i32
    %c0_i32_2 = arith.constant 0 : i32
    %11 = arith.cmpi ne, %10, %c0_i32_2 : i32
    scf.if %11 {
      %c0 = arith.constant 0 : index
      %c0_5 = arith.constant 0 : index
      %c0_6 = arith.constant 0 : index
      %c0_7 = arith.constant 0 : index
      %15 = vector.load %arg4[%c0, %c0_5, %c0_6, %c0_7] : memref<1x2x128x32xbf16, #tpu.memory_space<vmem>>, vector<1x2x128x32xbf16>
      %16 = vector.shape_cast %15 : vector<1x2x128x32xbf16> to vector<2x128x32xbf16>
      %c0_8 = arith.constant 0 : index
      %c0_9 = arith.constant 0 : index
      %c0_10 = arith.constant 0 : index
      %c0_11 = arith.constant 0 : index
      %17 = vector.load %arg5[%c0_8, %c0_9, %c0_10, %c0_11] : memref<1x2x128x32xbf16, #tpu.memory_space<vmem>>, vector<1x2x128x32xbf16>
      %18 = vector.shape_cast %17 : vector<1x2x128x32xbf16> to vector<2x128x32xbf16>
      %c0_12 = arith.constant 0 : index
      %c0_13 = arith.constant 0 : index
      %c0_14 = arith.constant 0 : index
      %c0_15 = arith.constant 0 : index
      %19 = vector.load %arg6[%c0_12, %c0_13, %c0_14, %c0_15] : memref<1x2x128x32xbf16, #tpu.memory_space<vmem>>, vector<1x2x128x32xbf16>
      %20 = vector.shape_cast %19 : vector<1x2x128x32xbf16> to vector<2x128x32xbf16>
      %cst = arith.constant dense<0.000000e+00> : vector<2x128x128xf32>
      %21 = tpu.matmul %16, %18, %cst {dimension_numbers = #tpu.dot_dimension_numbers<[2], [2], [1], [1], [0, 0, 0, 1, 1, 1], [0], [0]>} : vector<2x128x32xbf16>, vector<2x128x32xbf16>, vector<2x128x128xf32> -> vector<2x128x128xf32>
      %c0_16 = arith.constant 0 : index
      %c0_17 = arith.constant 0 : index
      %c0_18 = arith.constant 0 : index
      %22 = vector.load %arg9[%c0_16, %c0_17, %c0_18] : memref<2x128x1xf32, #tpu.memory_space<vmem>>, vector<2x128x1xf32>
      %cst_19 = arith.constant dense<0xFF800000> : vector<2x128xf32>
      %23 = vector.multi_reduction <maximumf>, %21, %cst_19 [2] : vector<2x128x128xf32> to vector<2x128xf32>
      %24 = vector.shape_cast %23 : vector<2x128xf32> to vector<2x128x1xf32>
      %25 = arith.maximumf %22, %24 : vector<2x128x1xf32>
      %26 = arith.subf %22, %25 : vector<2x128x1xf32>
      %27 = math.exp %26 : vector<2x128x1xf32>
      %28 = vector.broadcast %25 : vector<2x128x1xf32> to vector<2x128x128xf32>
      %29 = arith.subf %21, %28 : vector<2x128x128xf32>
      %30 = math.exp %29 : vector<2x128x128xf32>
      %c0_20 = arith.constant 0 : index
      %c0_21 = arith.constant 0 : index
      %c0_22 = arith.constant 0 : index
      %31 = vector.load %arg10[%c0_20, %c0_21, %c0_22] : memref<2x128x1xf32, #tpu.memory_space<vmem>>, vector<2x128x1xf32>
      %32 = arith.mulf %27, %31 : vector<2x128x1xf32>
      %cst_23 = arith.constant dense<0.000000e+00> : vector<2x128xf32>
      %33 = vector.multi_reduction <add>, %30, %cst_23 [2] : vector<2x128x128xf32> to vector<2x128xf32>
      %34 = vector.shape_cast %33 : vector<2x128xf32> to vector<2x128x1xf32>
      %35 = arith.addf %32, %34 : vector<2x128x1xf32>
      %c0_24 = arith.constant 0 : index
      %c0_25 = arith.constant 0 : index
      %c0_26 = arith.constant 0 : index
      %36 = vector.load %arg10[%c0_24, %c0_25, %c0_26] : memref<2x128x1xf32, #tpu.memory_space<vmem>>, vector<2x128x1xf32>
      tpu.vector_store %arg10[%c0_24, %c0_25, %c0_26], %35 {strides = array<i32>} : memref<2x128x1xf32, #tpu.memory_space<vmem>>, vector<2x128x1xf32>,
      %c0_27 = arith.constant 0 : index
      %c0_28 = arith.constant 0 : index
      %c0_29 = arith.constant 0 : index
      %37 = vector.load %arg11[%c0_27, %c0_28, %c0_29] : memref<2x128x32xf32, #tpu.memory_space<vmem>>, vector<2x128x32xf32>
      %38 = vector.broadcast %27 : vector<2x128x1xf32> to vector<2x128x32xf32>
      %39 = arith.mulf %38, %37 : vector<2x128x32xf32>
      %40 = arith.truncf %30 : vector<2x128x128xf32> to vector<2x128x128xbf16>
      %cst_30 = arith.constant dense<0.000000e+00> : vector<2x128x32xf32>
      %41 = tpu.matmul %40, %20, %cst_30 {dimension_numbers = #tpu.dot_dimension_numbers<[2], [1], [1], [2], [0, 0, 0, 1, 1, 2], [0], [0]>} : vector<2x128x128xbf16>, vector<2x128x32xbf16>, vector<2x128x32xf32> -> vector<2x128x32xf32>
      %42 = arith.addf %39, %41 : vector<2x128x32xf32>
      %c0_31 = arith.constant 0 : index
      %c0_32 = arith.constant 0 : index
      %c0_33 = arith.constant 0 : index
      %43 = vector.load %arg11[%c0_31, %c0_32, %c0_33] : memref<2x128x32xf32, #tpu.memory_space<vmem>>, vector<2x128x32xf32>
      tpu.vector_store %arg11[%c0_31, %c0_32, %c0_33], %42 {strides = array<i32>} : memref<2x128x32xf32, #tpu.memory_space<vmem>>, vector<2x128x32xf32>,
      %c0_34 = arith.constant 0 : index
      %c0_35 = arith.constant 0 : index
      %c0_36 = arith.constant 0 : index
      %44 = vector.load %arg9[%c0_34, %c0_35, %c0_36] : memref<2x128x1xf32, #tpu.memory_space<vmem>>, vector<2x128x1xf32>
      tpu.vector_store %arg9[%c0_34, %c0_35, %c0_36], %25 {strides = array<i32>} : memref<2x128x1xf32, #tpu.memory_space<vmem>>, vector<2x128x1xf32>,
    } else {
    }
    %c0_i32_3 = arith.constant 0 : i32
    %12 = arith.cmpi eq, %arg2, %c0_i32_3 : i32
    %13 = arith.extui %12 : i1 to i32
    %c0_i32_4 = arith.constant 0 : i32
    %14 = arith.cmpi ne, %13, %c0_i32_4 : i32
    scf.if %14 {
      %c0 = arith.constant 0 : index
      %c0_5 = arith.constant 0 : index
      %c0_6 = arith.constant 0 : index
      %15 = vector.load %arg10[%c0, %c0_5, %c0_6] : memref<2x128x1xf32, #tpu.memory_space<vmem>>, vector<2x128x1xf32>
      %cst = arith.constant 0.000000e+00 : f32
      %16 = vector.broadcast %cst : f32 to vector<2x128x1xf32>
      %17 = arith.cmpf ogt, %15, %16 : vector<2x128x1xf32>
      %cst_7 = arith.constant 1.000000e+00 : f32
      %18 = vector.broadcast %cst_7 : f32 to vector<2x128x1xf32>
      %19 = arith.select %17, %15, %18 : vector<2x128x1xi1>, vector<2x128x1xf32>
      %20 = tpu.reciprocal %19 {approx = true} : vector<2x128x1xf32> -> vector<2x128x1xf32>
      %c0_8 = arith.constant 0 : index
      %c0_9 = arith.constant 0 : index
      %c0_10 = arith.constant 0 : index
      %21 = vector.load %arg9[%c0_8, %c0_9, %c0_10] : memref<2x128x1xf32, #tpu.memory_space<vmem>>, vector<2x128x1xf32>
      %cst_11 = arith.constant -5.000000e+29 : f32
      %22 = vector.broadcast %cst_11 : f32 to vector<2x128x1xf32>
      %23 = arith.cmpf ogt, %21, %22 : vector<2x128x1xf32>
      %c0_12 = arith.constant 0 : index
      %c0_13 = arith.constant 0 : index
      %c0_14 = arith.constant 0 : index
      %24 = vector.load %arg11[%c0_12, %c0_13, %c0_14] : memref<2x128x32xf32, #tpu.memory_space<vmem>>, vector<2x128x32xf32>
      %25 = vector.broadcast %20 : vector<2x128x1xf32> to vector<2x128x32xf32>
      %26 = arith.mulf %24, %25 : vector<2x128x32xf32>
      %cst_15 = arith.constant 0.000000e+00 : f32
      %27 = vector.shape_cast %23 : vector<2x128x1xi1> to vector<2x128x1xi1>
      %28 = vector.broadcast %27 : vector<2x128x1xi1> to vector<2x128x32xi1>
      %29 = vector.broadcast %cst_15 : f32 to vector<2x128x32xf32>
      %30 = arith.select %28, %26, %29 : vector<2x128x32xi1>, vector<2x128x32xf32>
      %31 = vector.extract_strided_slice %30 {offsets = [0, 0, 0], sizes = [1, 128, 32], strides = [1, 1, 1]} : vector<2x128x32xf32> to vector<1x128x32xf32>
      %32 = vector.shape_cast %31 : vector<1x128x32xf32> to vector<128x32xf32>
      %33 = vector.extract_strided_slice %30 {offsets = [1, 0, 0], sizes = [1, 128, 32], strides = [1, 1, 1]} : vector<2x128x32xf32> to vector<1x128x32xf32>
      %34 = vector.shape_cast %33 : vector<1x128x32xf32> to vector<128x32xf32>
      %35 = tpu.concatenate %32, %34 in 1 : vector<128x32xf32>, vector<128x32xf32> -> vector<128x64xf32>
      %36 = arith.truncf %35 : vector<128x64xf32> to vector<128x64xbf16>
      %c0_16 = arith.constant 0 : index
      %c0_17 = arith.constant 0 : index
      %c0_18 = arith.constant 0 : index
      %37 = vector.load %arg8[%c0_16, %c0_17, %c0_18] : memref<1x128x64xbf16, #tpu.memory_space<vmem>>, vector<1x128x64xbf16>
      %38 = vector.shape_cast %37 : vector<1x128x64xbf16> to vector<128x64xbf16>
      %39 = vector.shape_cast %36 : vector<128x64xbf16> to vector<1x128x64xbf16>
      tpu.vector_store %arg8[%c0_16, %c0_17, %c0_18], %39 {strides = array<i32>} : memref<1x128x64xbf16, #tpu.memory_space<vmem>>, vector<1x128x64xbf16>,
    } else {
    }
    return
  }
  func.func @transform_0(%arg0: i32, %arg1: i32, %arg2: i32, %arg3: memref<1x1xi32, #tpu.memory_space<smem>>) -> (i32, i32, i32, i32) {
    %c0_i32 = arith.constant 0 : i32
    %c0_i32_0 = arith.constant 0 : i32
    %c0_i32_1 = arith.constant 0 : i32
    return %arg0, %c0_i32, %arg1, %c0_i32_0 : i32, i32, i32, i32
  }
  func.func @transform_1(%arg0: i32, %arg1: i32, %arg2: i32, %arg3: memref<1x1xi32, #tpu.memory_space<smem>>) -> (i32, i32, i32, i32) {
    %c0_i32 = arith.constant 0 : i32
    %c0_i32_0 = arith.constant 0 : i32
    %c0_i32_1 = arith.constant 0 : i32
    return %arg0, %c0_i32, %arg2, %c0_i32_0 : i32, i32, i32, i32
  }
  func.func @transform_2(%arg0: i32, %arg1: i32, %arg2: i32, %arg3: memref<1x1xi32, #tpu.memory_space<smem>>) -> (i32, i32, i32, i32) {
    %c0_i32 = arith.constant 0 : i32
    %c0_i32_0 = arith.constant 0 : i32
    %c0_i32_1 = arith.constant 0 : i32
    return %arg0, %c0_i32, %arg2, %c0_i32_0 : i32, i32, i32, i32
  }
  func.func @transform_3(%arg0: i32, %arg1: i32, %arg2: i32, %arg3: memref<1x1xi32, #tpu.memory_space<smem>>) -> (i32, i32, i32) {
    %c0_i32 = arith.constant 0 : i32
    %c0_i32_0 = arith.constant 0 : i32
    return %c0_i32, %arg1, %arg2 : i32, i32, i32
  }
  func.func @transform_4(%arg0: i32, %arg1: i32, %arg2: i32, %arg3: memref<1x1xi32, #tpu.memory_space<smem>>) -> (i32, i32, i32) {
    %c0_i32 = arith.constant 0 : i32
    %c0_i32_0 = arith.constant 0 : i32
    return %arg0, %arg1, %c0_i32 : i32, i32, i32
  }
}

module attributes {stable_mosaic.version = 11 : i64} {
  func.func @_matmul_kernel(%arg0: i32, %arg1: i32, %arg2: i32, %arg3: memref<256x64xbf16, #tpu.memory_space<vmem>>, %arg4: memref<64x64xbf16, #tpu.memory_space<vmem>>, %arg5: memref<1x64xf32, #tpu.memory_space<vmem>>, %arg6: memref<256x64xf32, #tpu.memory_space<vmem>>, %arg7: memref<256x64xf32, #tpu.memory_space<vmem>>) attributes {dimension_semantics = [#tpu.dimension_semantics<parallel>, #tpu.dimension_semantics<parallel>, #tpu.dimension_semantics<arbitrary>], iteration_bounds = array<i64: 1, 1, 1>, scalar_prefetch = 0 : i64, scratch_operands = 1 : i64, tpu.core_type = #tpu.core_type<tc>, window_params = [{transform_indices = @transform_0, window_bounds = array<i64: 256, 64>}, {transform_indices = @transform_1, window_bounds = array<i64: 64, 64>}, {transform_indices = @transform_2, window_bounds = array<i64: 1, 64>}, {transform_indices = @transform_3, window_bounds = array<i64: 256, 64>}]} {
    %c0_i32 = arith.constant 0 : i32
    %0 = arith.cmpi eq, %arg2, %c0_i32 : i32
    %1 = arith.extui %0 : i1 to i32
    %c0_i32_0 = arith.constant 0 : i32
    %2 = arith.cmpi ne, %1, %c0_i32_0 : i32
    scf.if %2 {
      %cst_10 = arith.constant 0.000000e+00 : f32
      %12 = vector.broadcast %cst_10 : f32 to vector<256x64xf32>
      %c0_11 = arith.constant 0 : index
      %c0_12 = arith.constant 0 : index
      %13 = vector.load %arg7[%c0_11, %c0_12] : memref<256x64xf32, #tpu.memory_space<vmem>>, vector<256x64xf32>
      tpu.vector_store %arg7[%c0_11, %c0_12], %12 {strides = array<i32>} : memref<256x64xf32, #tpu.memory_space<vmem>>, vector<256x64xf32>,
    } else {
    }
    %c0 = arith.constant 0 : index
    %c0_1 = arith.constant 0 : index
    %3 = vector.load %arg7[%c0, %c0_1] : memref<256x64xf32, #tpu.memory_space<vmem>>, vector<256x64xf32>
    %c0_2 = arith.constant 0 : index
    %c0_3 = arith.constant 0 : index
    %4 = vector.load %arg3[%c0_2, %c0_3] : memref<256x64xbf16, #tpu.memory_space<vmem>>, vector<256x64xbf16>
    %c0_4 = arith.constant 0 : index
    %c0_5 = arith.constant 0 : index
    %5 = vector.load %arg4[%c0_4, %c0_5] : memref<64x64xbf16, #tpu.memory_space<vmem>>, vector<64x64xbf16>
    %cst = arith.constant dense<0.000000e+00> : vector<256x64xf32>
    %6 = tpu.matmul %4, %5, %cst {dimension_numbers = #tpu.dot_dimension_numbers<[1], [0], [0], [1], [0, 0, 1, 1], [], []>} : vector<256x64xbf16>, vector<64x64xbf16>, vector<256x64xf32> -> vector<256x64xf32>
    %7 = arith.addf %3, %6 : vector<256x64xf32>
    %c0_6 = arith.constant 0 : index
    %c0_7 = arith.constant 0 : index
    %8 = vector.load %arg7[%c0_6, %c0_7] : memref<256x64xf32, #tpu.memory_space<vmem>>, vector<256x64xf32>
    tpu.vector_store %arg7[%c0_6, %c0_7], %7 {strides = array<i32>} : memref<256x64xf32, #tpu.memory_space<vmem>>, vector<256x64xf32>,
    %c0_i32_8 = arith.constant 0 : i32
    %9 = arith.cmpi eq, %arg2, %c0_i32_8 : i32
    %10 = arith.extui %9 : i1 to i32
    %c0_i32_9 = arith.constant 0 : i32
    %11 = arith.cmpi ne, %10, %c0_i32_9 : i32
    scf.if %11 {
      %c0_10 = arith.constant 0 : index
      %c0_11 = arith.constant 0 : index
      %12 = vector.load %arg7[%c0_10, %c0_11] : memref<256x64xf32, #tpu.memory_space<vmem>>, vector<256x64xf32>
      %c0_12 = arith.constant 0 : index
      %c0_13 = arith.constant 0 : index
      %13 = vector.load %arg5[%c0_12, %c0_13] : memref<1x64xf32, #tpu.memory_space<vmem>>, vector<1x64xf32>
      %14 = vector.broadcast %13 : vector<1x64xf32> to vector<256x64xf32>
      %15 = arith.addf %12, %14 : vector<256x64xf32>
      %c0_14 = arith.constant 0 : index
      %c0_15 = arith.constant 0 : index
      %16 = vector.load %arg6[%c0_14, %c0_15] : memref<256x64xf32, #tpu.memory_space<vmem>>, vector<256x64xf32>
      tpu.vector_store %arg6[%c0_14, %c0_15], %15 {strides = array<i32>} : memref<256x64xf32, #tpu.memory_space<vmem>>, vector<256x64xf32>,
    } else {
    }
    return
  }
  func.func @transform_0(%arg0: i32, %arg1: i32, %arg2: i32) -> (i32, i32) {
    %c0_i32 = arith.constant 0 : i32
    return %arg0, %arg2 : i32, i32
  }
  func.func @transform_1(%arg0: i32, %arg1: i32, %arg2: i32) -> (i32, i32) {
    %c0_i32 = arith.constant 0 : i32
    return %arg2, %arg1 : i32, i32
  }
  func.func @transform_2(%arg0: i32, %arg1: i32, %arg2: i32) -> (i32, i32) {
    %c0_i32 = arith.constant 0 : i32
    %c0_i32_0 = arith.constant 0 : i32
    return %c0_i32, %arg1 : i32, i32
  }
  func.func @transform_3(%arg0: i32, %arg1: i32, %arg2: i32) -> (i32, i32) {
    %c0_i32 = arith.constant 0 : i32
    return %arg0, %arg1 : i32, i32
  }
}

module attributes {stable_mosaic.version = 11 : i64} {
  func.func @_ffn_kernel(%arg0: i32, %arg1: i32, %arg2: memref<256x64xbf16, #tpu.memory_space<vmem>>, %arg3: memref<64x256xbf16, #tpu.memory_space<vmem>>, %arg4: memref<1x256xf32, #tpu.memory_space<vmem>>, %arg5: memref<256x64xbf16, #tpu.memory_space<vmem>>, %arg6: memref<1x64xf32, #tpu.memory_space<vmem>>, %arg7: memref<256x64xf32, #tpu.memory_space<vmem>>, %arg8: memref<256x64xf32, #tpu.memory_space<vmem>>) attributes {dimension_semantics = [#tpu.dimension_semantics<parallel>, #tpu.dimension_semantics<arbitrary>], iteration_bounds = array<i64: 1, 1>, scalar_prefetch = 0 : i64, scratch_operands = 1 : i64, tpu.core_type = #tpu.core_type<tc>, window_params = [{transform_indices = @transform_0, window_bounds = array<i64: 256, 64>}, {transform_indices = @transform_1, window_bounds = array<i64: 64, 256>}, {transform_indices = @transform_2, window_bounds = array<i64: 1, 256>}, {transform_indices = @transform_3, window_bounds = array<i64: 256, 64>}, {pipeline_mode = #tpu.pipeline_mode<synchronous>, transform_indices = @transform_4, window_bounds = array<i64: 1, 64>}, {transform_indices = @transform_5, window_bounds = array<i64: 256, 64>}]} {
    %c0_i32 = arith.constant 0 : i32
    %0 = arith.cmpi eq, %arg1, %c0_i32 : i32
    %1 = arith.extui %0 : i1 to i32
    %c0_i32_0 = arith.constant 0 : i32
    %2 = arith.cmpi ne, %1, %c0_i32_0 : i32
    scf.if %2 {
      %cst_19 = arith.constant 0.000000e+00 : f32
      %31 = vector.broadcast %cst_19 : f32 to vector<256x64xf32>
      %c0_20 = arith.constant 0 : index
      %c0_21 = arith.constant 0 : index
      %32 = vector.load %arg8[%c0_20, %c0_21] : memref<256x64xf32, #tpu.memory_space<vmem>>, vector<256x64xf32>
      tpu.vector_store %arg8[%c0_20, %c0_21], %31 {strides = array<i32>} : memref<256x64xf32, #tpu.memory_space<vmem>>, vector<256x64xf32>,
    } else {
    }
    %c0 = arith.constant 0 : index
    %c0_1 = arith.constant 0 : index
    %3 = vector.load %arg2[%c0, %c0_1] : memref<256x64xbf16, #tpu.memory_space<vmem>>, vector<256x64xbf16>
    %c0_2 = arith.constant 0 : index
    %c0_3 = arith.constant 0 : index
    %4 = vector.load %arg3[%c0_2, %c0_3] : memref<64x256xbf16, #tpu.memory_space<vmem>>, vector<64x256xbf16>
    %cst = arith.constant dense<0.000000e+00> : vector<256x256xf32>
    %5 = tpu.matmul %3, %4, %cst {dimension_numbers = #tpu.dot_dimension_numbers<[1], [0], [0], [1], [0, 0, 1, 1], [], []>} : vector<256x64xbf16>, vector<64x256xbf16>, vector<256x256xf32> -> vector<256x256xf32>
    %c0_4 = arith.constant 0 : index
    %c0_5 = arith.constant 0 : index
    %6 = vector.load %arg4[%c0_4, %c0_5] : memref<1x256xf32, #tpu.memory_space<vmem>>, vector<1x256xf32>
    %7 = vector.broadcast %6 : vector<1x256xf32> to vector<256x256xf32>
    %8 = arith.addf %5, %7 : vector<256x256xf32>
    %9 = arith.mulf %8, %8 : vector<256x256xf32>
    %10 = arith.mulf %8, %9 : vector<256x256xf32>
    %cst_6 = arith.constant 4.471500e-02 : f32
    %11 = vector.broadcast %cst_6 : f32 to vector<256x256xf32>
    %12 = arith.mulf %11, %10 : vector<256x256xf32>
    %13 = arith.addf %8, %12 : vector<256x256xf32>
    %cst_7 = arith.constant 0.797884583 : f32
    %14 = vector.broadcast %cst_7 : f32 to vector<256x256xf32>
    %15 = arith.mulf %14, %13 : vector<256x256xf32>
    %16 = math.tanh %15 : vector<256x256xf32>
    %cst_8 = arith.constant 1.000000e+00 : f32
    %17 = vector.broadcast %cst_8 : f32 to vector<256x256xf32>
    %18 = arith.addf %17, %16 : vector<256x256xf32>
    %cst_9 = arith.constant 5.000000e-01 : f32
    %19 = vector.broadcast %cst_9 : f32 to vector<256x256xf32>
    %20 = arith.mulf %19, %18 : vector<256x256xf32>
    %21 = arith.mulf %8, %20 : vector<256x256xf32>
    %c0_10 = arith.constant 0 : index
    %c0_11 = arith.constant 0 : index
    %22 = vector.load %arg8[%c0_10, %c0_11] : memref<256x64xf32, #tpu.memory_space<vmem>>, vector<256x64xf32>
    %23 = arith.truncf %21 : vector<256x256xf32> to vector<256x256xbf16>
    %c0_12 = arith.constant 0 : index
    %c0_13 = arith.constant 0 : index
    %24 = vector.load %arg5[%c0_12, %c0_13] : memref<256x64xbf16, #tpu.memory_space<vmem>>, vector<256x64xbf16>
    %cst_14 = arith.constant dense<0.000000e+00> : vector<256x64xf32>
    %25 = tpu.matmul %23, %24, %cst_14 {dimension_numbers = #tpu.dot_dimension_numbers<[1], [0], [0], [1], [0, 0, 1, 1], [], []>} : vector<256x256xbf16>, vector<256x64xbf16>, vector<256x64xf32> -> vector<256x64xf32>
    %26 = arith.addf %22, %25 : vector<256x64xf32>
    %c0_15 = arith.constant 0 : index
    %c0_16 = arith.constant 0 : index
    %27 = vector.load %arg8[%c0_15, %c0_16] : memref<256x64xf32, #tpu.memory_space<vmem>>, vector<256x64xf32>
    tpu.vector_store %arg8[%c0_15, %c0_16], %26 {strides = array<i32>} : memref<256x64xf32, #tpu.memory_space<vmem>>, vector<256x64xf32>,
    %c0_i32_17 = arith.constant 0 : i32
    %28 = arith.cmpi eq, %arg1, %c0_i32_17 : i32
    %29 = arith.extui %28 : i1 to i32
    %c0_i32_18 = arith.constant 0 : i32
    %30 = arith.cmpi ne, %29, %c0_i32_18 : i32
    scf.if %30 {
      %c0_19 = arith.constant 0 : index
      %c0_20 = arith.constant 0 : index
      %31 = vector.load %arg8[%c0_19, %c0_20] : memref<256x64xf32, #tpu.memory_space<vmem>>, vector<256x64xf32>
      %c0_21 = arith.constant 0 : index
      %c0_22 = arith.constant 0 : index
      %32 = vector.load %arg6[%c0_21, %c0_22] : memref<1x64xf32, #tpu.memory_space<vmem>>, vector<1x64xf32>
      %33 = vector.broadcast %32 : vector<1x64xf32> to vector<256x64xf32>
      %34 = arith.addf %31, %33 : vector<256x64xf32>
      %c0_23 = arith.constant 0 : index
      %c0_24 = arith.constant 0 : index
      %35 = vector.load %arg7[%c0_23, %c0_24] : memref<256x64xf32, #tpu.memory_space<vmem>>, vector<256x64xf32>
      tpu.vector_store %arg7[%c0_23, %c0_24], %34 {strides = array<i32>} : memref<256x64xf32, #tpu.memory_space<vmem>>, vector<256x64xf32>,
    } else {
    }
    return
  }
  func.func @transform_0(%arg0: i32, %arg1: i32) -> (i32, i32) {
    %c0_i32 = arith.constant 0 : i32
    %c0_i32_0 = arith.constant 0 : i32
    return %arg0, %c0_i32 : i32, i32
  }
  func.func @transform_1(%arg0: i32, %arg1: i32) -> (i32, i32) {
    %c0_i32 = arith.constant 0 : i32
    %c0_i32_0 = arith.constant 0 : i32
    return %c0_i32, %arg1 : i32, i32
  }
  func.func @transform_2(%arg0: i32, %arg1: i32) -> (i32, i32) {
    %c0_i32 = arith.constant 0 : i32
    %c0_i32_0 = arith.constant 0 : i32
    return %c0_i32, %arg1 : i32, i32
  }
  func.func @transform_3(%arg0: i32, %arg1: i32) -> (i32, i32) {
    %c0_i32 = arith.constant 0 : i32
    %c0_i32_0 = arith.constant 0 : i32
    return %arg1, %c0_i32 : i32, i32
  }
  func.func @transform_4(%arg0: i32, %arg1: i32) -> (i32, i32) {
    %c0_i32 = arith.constant 0 : i32
    %c0_i32_0 = arith.constant 0 : i32
    %c0_i32_1 = arith.constant 0 : i32
    return %c0_i32, %c0_i32_0 : i32, i32
  }
  func.func @transform_5(%arg0: i32, %arg1: i32) -> (i32, i32) {
    %c0_i32 = arith.constant 0 : i32
    %c0_i32_0 = arith.constant 0 : i32
    return %arg0, %c0_i32 : i32, i32
  }
}

</mosaic_0001>

<llo_original>
// kernel: neg.1
$region0: #{neg.1}
  #allocation0 [shape = 's32[1]{0}', space=sflag, size = 0x4, scoped, tag = 'scoped memory for neg.1']
  %s0 = inlined_call_operand.vmem [shape: f32[2], index: 0, kind: input, shape index: {}]
  %s1 = inlined_call_operand.vmem [shape: f32[2], index: 1, kind: output, shape index: {}]
  %v2 = vld [vmem:[%s0] sm:$0x1]
  %3 = xla_tuple %v2
  %4 = xla_tuple %3
  %v5 = vxor.u32 %v2, 2147483648
  %6 = xla_tuple %v5
  %7 = vst [vmem:[%s1] sm:$0x1] %v5

// kernel: warp_attn_forward.11
$region0: #{warp_attn_forward.11}
  #allocation0 [shape = 'u32[]', space=smem, size = 0x4, offset = 0x4, fixed_abs, tag = 'smem constant byte address 0x4 - core index']
  #allocation1 [shape = 'u32[144,128]{1,0:T(1,128)}', space=vmem, size = 0x12000, scoped, tag = 'internal scratch']
  #allocation2 [shape = 'f32[256,128]{1,0:T(8,128)}', space=vmem, size = 0x20000, scoped, tag = 'scratch operand']
  %s0 = inlined_call_operand.vmem [shape: bf16[256,64], index: 0, kind: input, shape index: {}]
  %s1 = inlined_call_operand.vmem [shape: bf16[64,128], index: 1, kind: input, shape index: {}]
  %s2 = inlined_call_operand.vmem [shape: f32[1,128], index: 2, kind: input, shape index: {}]
  %s3 = inlined_call_operand.vmem [shape: bf16[256,128], index: 3, kind: output, shape index: {}]
  %s4 = sld [smem:[#allocation0]]
  $region30: #{warp_attn_forward.11} parent=0
    _
  %s6 = ssub.s32 1, %s4
  %s7 = scalar_select 0, %s6, %s4
  // Predicated region
  $region2: #{warp_attn_forward.11} parent=0 // pred_check
    _
  $region3: #{warp_attn_forward.11} parent=0 // pred_check_branch
    %9 = sbr.rel (0) target = $region5
  $region4: #{warp_attn_forward.11} parent=0 // pred_region
    _
  $region5: #{warp_attn_forward.11} parent=0 // pred_fallthru
    _
  // Predicated region
  $region6: #{warp_attn_forward.11} parent=0 // pred_check
    _
  $region7: #{warp_attn_forward.11} parent=0 // pred_check_branch
    %11 = sbr.rel (0) target = $region9
  $region8: #{warp_attn_forward.11} parent=0 // pred_region
    _
  $region9: #{warp_attn_forward.11} parent=0 // pred_fallthru
    _
  // Predicated region
  $region10: #{warp_attn_forward.11} parent=0 // pred_check
    _
  $region11: #{warp_attn_forward.11} parent=0 // pred_check_branch
    %13 = sbr.rel (0) target = $region13
  $region12: #{warp_attn_forward.11} parent=0 // pred_region
    _
  $region13: #{warp_attn_forward.11} parent=0 // pred_fallthru
    _
  %p15 = scmp.eq.s32.totalorder 0, 0
  // Predicated region
  $region14: #{warp_attn_forward.11} parent=0 // pred_check
    %p16 = pneg %p15
  $region15: #{warp_attn_forward.11} parent=0 // pred_check_branch
    %18 = sbr.rel (%p16) target = $region17
  $region16: #{warp_attn_forward.11} parent=0 // pred_region
    %19 = vst [vmem:[#allocation2] sm:$0xff] 0.0
    %20 = vst [vmem:[#allocation2 + $0x8] sm:$0xff] 0.0
    %21 = vst [vmem:[#allocation2 + $0x10] sm:$0xff] 0.0
    %22 = vst [vmem:[#allocation2 + $0x18] sm:$0xff] 0.0
    %23 = vst [vmem:[#allocation2 + $0x20] sm:$0xff] 0.0
    %24 = vst [vmem:[#allocation2 + $0x28] sm:$0xff] 0.0
    %25 = vst [vmem:[#allocation2 + $0x30] sm:$0xff] 0.0
    %26 = vst [vmem:[#allocation2 + $0x38] sm:$0xff] 0.0
    %27 = vst [vmem:[#allocation2 + $0x40] sm:$0xff] 0.0
    %28 = vst [vmem:[#allocation2 + $0x48] sm:$0xff] 0.0
    %29 = vst [vmem:[#allocation2 + $0x50] sm:$0xff] 0.0
    %30 = vst [vmem:[#allocation2 + $0x58] sm:$0xff] 0.0
    %31 = vst [vmem:[#allocation2 + $0x60] sm:$0xff] 0.0
    %32 = vst [vmem:[#allocation2 + $0x68] sm:$0xff] 0.0
    %33 = vst [vmem:[#allocation2 + $0x70] sm:$0xff] 0.0
    %34 = vst [vmem:[#allocation2 + $0x78] sm:$0xff] 0.0
    %35 = vst [vmem:[#allocation2 + $0x80] sm:$0xff] 0.0
    %36 = vst [vmem:[#allocation2 + $0x88] sm:$0xff] 0.0
    %37 = vst [vmem:[#allocation2 + $0x90] sm:$0xff] 0.0
    %38 = vst [vmem:[#allocation2 + $0x98] sm:$0xff] 0.0
    %39 = vst [vmem:[#allocation2 + $0xa0] sm:$0xff] 0.0
    %40 = vst [vmem:[#allocation2 + $0xa8] sm:$0xff] 0.0
    %41 = vst [vmem:[#allocation2 + $0xb0] sm:$0xff] 0.0
    %42 = vst [vmem:[#allocation2 + $0xb8] sm:$0xff] 0.0
    %43 = vst [vmem:[#allocation2 + $0xc0] sm:$0xff] 0.0
    %44 = vst [vmem:[#allocation2 + $0xc8] sm:$0xff] 0.0
    %45 = vst [vmem:[#allocation2 + $0xd0] sm:$0xff] 0.0
    %46 = vst [vmem:[#allocation2 + $0xd8] sm:$0xff] 0.0
    %47 = vst [vmem:[#allocation2 + $0xe0] sm:$0xff] 0.0
    %48 = vst [vmem:[#allocation2 + $0xe8] sm:$0xff] 0.0
    %49 = vst [vmem:[#allocation2 + $0xf0] sm:$0xff] 0.0
    %50 = vst [vmem:[#allocation2 + $0xf8] sm:$0xff] 0.0
  $region17: #{warp_attn_forward.11} parent=0 // pred_fallthru
    _
  %v51 = vld [vmem:[#allocation2] sm:$0xff]
  %v52 = vld [vmem:[#allocation2 + $0x8] sm:$0xff]
  %v53 = vld [vmem:[#allocation2 + $0x10] sm:$0xff]
  %v54 = vld [vmem:[#allocation2 + $0x18] sm:$0xff]
  %v55 = vld [vmem:[#allocation2 + $0x20] sm:$0xff]
  %v56 = vld [vmem:[#allocation2 + $0x28] sm:$0xff]
  %v57 = vld [vmem:[#allocation2 + $0x30] sm:$0xff]
  %v58 = vld [vmem:[#allocation2 + $0x38] sm:$0xff]
  %v59 = vld [vmem:[#allocation2 + $0x40] sm:$0xff]
  %v60 = vld [vmem:[#allocation2 + $0x48] sm:$0xff]
  %v61 = vld [vmem:[#allocation2 + $0x50] sm:$0xff]
  %v62 = vld [vmem:[#allocation2 + $0x58] sm:$0xff]
  %v63 = vld [vmem:[#allocation2 + $0x60] sm:$0xff]
  %v64 = vld [vmem:[#allocation2 + $0x68] sm:$0xff]
  %v65 = vld [vmem:[#allocation2 + $0x70] sm:$0xff]
  %v66 = vld [vmem:[#allocation2 + $0x78] sm:$0xff]
  %v67 = vld [vmem:[#allocation2 + $0x80] sm:$0xff]
  %v68 = vld [vmem:[#allocation2 + $0x88] sm:$0xff]
  %v69 = vld [vmem:[#allocation2 + $0x90] sm:$0xff]
  %v70 = vld [vmem:[#allocation2 + $0x98] sm:$0xff]
  %v71 = vld [vmem:[#allocation2 + $0xa0] sm:$0xff]
  %v72 = vld [vmem:[#allocation2 + $0xa8] sm:$0xff]
  %v73 = vld [vmem:[#allocation2 + $0xb0] sm:$0xff]
  %v74 = vld [vmem:[#allocation2 + $0xb8] sm:$0xff]
  %v75 = vld [vmem:[#allocation2 + $0xc0] sm:$0xff]
  %v76 = vld [vmem:[#allocation2 + $0xc8] sm:$0xff]
  %v77 = vld [vmem:[#allocation2 + $0xd0] sm:$0xff]
  %v78 = vld [vmem:[#allocation2 + $0xd8] sm:$0xff]
  %v79 = vld [vmem:[#allocation2 + $0xe0] sm:$0xff]
  %v80 = vld [vmem:[#allocation2 + $0xe8] sm:$0xff]
  %v81 = vld [vmem:[#allocation2 + $0xf0] sm:$0xff]
  %v82 = vld [vmem:[#allocation2 + $0xf8] sm:$0xff]
  %v83 = vld [vmem:[%s0] sm:$0xf]
  %v84 = vld [vmem:[%s0 + $0x4] sm:$0xf]
  %v85 = vld [vmem:[%s0 + $0x8] sm:$0xf]
  %v86 = vld [vmem:[%s0 + $0xc] sm:$0xf]
  %v87 = vld [vmem:[%s0 + $0x10] sm:$0xf]
  %v88 = vld [vmem:[%s0 + $0x14] sm:$0xf]
  %v89 = vld [vmem:[%s0 + $0x18] sm:$0xf]
  %v90 = vld [vmem:[%s0 + $0x1c] sm:$0xf]
  %v91 = vld [vmem:[%s0 + $0x20] sm:$0xf]
  %v92 = vld [vmem:[%s0 + $0x24] sm:$0xf]
  %v93 = vld [vmem:[%s0 + $0x28] sm:$0xf]
  %v94 = vld [vmem:[%s0 + $0x2c] sm:$0xf]
  %v95 = vld [vmem:[%s0 + $0x30] sm:$0xf]
  %v96 = vld [vmem:[%s0 + $0x34] sm:$0xf]
  %v97 = vld [vmem:[%s0 + $0x38] sm:$0xf]
  %v98 = vld [vmem:[%s0 + $0x3c] sm:$0xf]
  %v99 = vld [vmem:[%s0 + $0x40] sm:$0xf]
  %v100 = vld [vmem:[%s0 + $0x44] sm:$0xf]
  %v101 = vld [vmem:[%s0 + $0x48] sm:$0xf]
  %v102 = vld [vmem:[%s0 + $0x4c] sm:$0xf]
  %v103 = vld [vmem:[%s0 + $0x50] sm:$0xf]
  %v104 = vld [vmem:[%s0 + $0x54] sm:$0xf]
  %v105 = vld [vmem:[%s0 + $0x58] sm:$0xf]
  %v106 = vld [vmem:[%s0 + $0x5c] sm:$0xf]
  %v107 = vld [vmem:[%s0 + $0x60] sm:$0xf]
  %v108 = vld [vmem:[%s0 + $0x64] sm:$0xf]
  %v109 = vld [vmem:[%s0 + $0x68] sm:$0xf]
  %v110 = vld [vmem:[%s0 + $0x6c] sm:$0xf]
  %v111 = vld [vmem:[%s0 + $0x70] sm:$0xf]
  %v112 = vld [vmem:[%s0 + $0x74] sm:$0xf]
  %v113 = vld [vmem:[%s0 + $0x78] sm:$0xf]
  %v114 = vld [vmem:[%s0 + $0x7c] sm:$0xf]
  %v115 = vld [vmem:[%s1] sm:$0xf]
  %v116 = vld [vmem:[%s1 + $0x4] sm:$0xf]
  %v117 = vld [vmem:[%s1 + $0x8] sm:$0xf]
  %v118 = vld [vmem:[%s1 + $0xc] sm:$0xf]
  %v119 = vld [vmem:[%s1 + $0x10] sm:$0xf]
  %v120 = vld [vmem:[%s1 + $0x14] sm:$0xf]
  %v121 = vld [vmem:[%s1 + $0x18] sm:$0xf]
  %v122 = vld [vmem:[%s1 + $0x1c] sm:$0xf]
  %v155 = vunpack.c.l.b16 %v83
  %v156 = vunpack.c.l.b16 %v84
  %v157 = vunpack.c.l.b16 %v85
  %v158 = vunpack.c.l.b16 %v86
  %v159 = vunpack.c.l.b16 %v87
  %v160 = vunpack.c.l.b16 %v88
  %v161 = vunpack.c.l.b16 %v89
  %v162 = vunpack.c.l.b16 %v90
  %v163 = vunpack.c.l.b16 %v91
  %v164 = vunpack.c.l.b16 %v92
  %v165 = vunpack.c.l.b16 %v93
  %v166 = vunpack.c.l.b16 %v94
  %v167 = vunpack.c.l.b16 %v95
  %v168 = vunpack.c.l.b16 %v96
  %v169 = vunpack.c.l.b16 %v97
  %v170 = vunpack.c.l.b16 %v98
  %v171 = vunpack.c.l.b16 %v99
  %v172 = vunpack.c.l.b16 %v100
  %v173 = vunpack.c.l.b16 %v101
  %v174 = vunpack.c.l.b16 %v102
  %v175 = vunpack.c.l.b16 %v103
  %v176 = vunpack.c.l.b16 %v104
  %v177 = vunpack.c.l.b16 %v105
  %v178 = vunpack.c.l.b16 %v106
  %v179 = vunpack.c.l.b16 %v107
  %v180 = vunpack.c.l.b16 %v108
  %v181 = vunpack.c.l.b16 %v109
  %v182 = vunpack.c.l.b16 %v110
  %v183 = vunpack.c.l.b16 %v111
  %v184 = vunpack.c.l.b16 %v112
  %v185 = vunpack.c.l.b16 %v113
  %v186 = vunpack.c.l.b16 %v114
  %v187 = vpack.c.b16 %v156, %v155
  %v188 = vpack.c.b16 %v158, %v157
  %v189 = vpack.c.b16 %v160, %v159
  %v190 = vpack.c.b16 %v162, %v161
  %v191 = vpack.c.b16 %v164, %v163
  %v192 = vpack.c.b16 %v166, %v165
  %v193 = vpack.c.b16 %v168, %v167
  %v194 = vpack.c.b16 %v170, %v169
  %v195 = vpack.c.b16 %v172, %v171
  %v196 = vpack.c.b16 %v174, %v173
  %v197 = vpack.c.b16 %v176, %v175
  %v198 = vpack.c.b16 %v178, %v177
  %v199 = vpack.c.b16 %v180, %v179
  %v200 = vpack.c.b16 %v182, %v181
  %v201 = vpack.c.b16 %v184, %v183
  %v202 = vpack.c.b16 %v186, %v185
  %v211 = vunpack.c.l.b16 %v115
  %v212 = vunpack.c.l.b16 %v116
  %v213 = vunpack.c.l.b16 %v117
  %v214 = vunpack.c.l.b16 %v118
  %v215 = vunpack.c.l.b16 %v119
  %v216 = vunpack.c.l.b16 %v120
  %v217 = vunpack.c.l.b16 %v121
  %v218 = vunpack.c.l.b16 %v122
  %v219 = vpack.c.b16 %v212, %v211
  %v220 = vpack.c.b16 %v214, %v213
  %v221 = vpack.c.b16 %v216, %v215
  %v222 = vpack.c.b16 %v218, %v217
  %vm227 = vcmask 523264
  %v229 = vsel %vm227, %v187, 0
  %v232 = vsel %vm227, %v188, 0
  %v235 = vsel %vm227, %v189, 0
  %v238 = vsel %vm227, %v190, 0
  %v241 = vsel %vm227, %v191, 0
  %v244 = vsel %vm227, %v192, 0
  %v247 = vsel %vm227, %v193, 0
  %v250 = vsel %vm227, %v194, 0
  %v253 = vsel %vm227, %v195, 0
  %v256 = vsel %vm227, %v196, 0
  %v259 = vsel %vm227, %v197, 0
  %v262 = vsel %vm227, %v198, 0
  %v265 = vsel %vm227, %v199, 0
  %v268 = vsel %vm227, %v200, 0
  %v271 = vsel %vm227, %v201, 0
  %v274 = vsel %vm227, %v202, 0
  %276 = vmatprep.subr.bf16.mxu0 0
  %277 = vmatpush1.bf16.msra.mxu0 %v219
  %278 = vmatprep.subr.bf16.mxu0 0
  %279 = vmatpush1.bf16.msra.mxu0 %v220
  %280 = vmatprep.subr.bf16.mxu0 0
  %281 = vmatpush1.bf16.msra.mxu0 %v221
  %282 = vmatprep.subr.bf16.mxu0 0
  %283 = vmatpush1.bf16.msra.mxu0 %v222
  %284 = vmatprep.subr.bf16.mxu0 0
  %285 = vmatpush1.bf16.msra.mxu0 0
  %286 = vmatprep.subr.bf16.mxu0 0
  %287 = vmatpush1.bf16.msra.mxu0 0
  %288 = vmatprep.subr.bf16.mxu0 0
  %289 = vmatpush1.bf16.msra.mxu0 0
  %290 = vmatprep.subr.bf16.mxu0 0
  %291 = vmatpush1.bf16.msra.mxu0 0
  %292 = vmatprep.subr.bf16.mxu0 0
  %293 = vmatpush1.bf16.msra.mxu0 0
  %294 = vmatprep.subr.bf16.mxu0 0
  %295 = vmatpush1.bf16.msra.mxu0 0
  %296 = vmatprep.subr.bf16.mxu0 0
  %297 = vmatpush1.bf16.msra.mxu0 0
  %298 = vmatprep.subr.bf16.mxu0 0
  %299 = vmatpush1.bf16.msra.mxu0 0
  %300 = vmatprep.subr.bf16.mxu0 0
  %301 = vmatpush1.bf16.msra.mxu0 0
  %302 = vmatprep.subr.bf16.mxu0 0
  %303 = vmatpush1.bf16.msra.mxu0 0
  %304 = vmatprep.subr.bf16.mxu0 0
  %305 = vmatpush1.bf16.msra.mxu0 0
  %306 = vmatprep.subr.bf16.mxu0 0
  %307 = vmatpush1.bf16.msra.mxu0 0
  %308 = vmatprep.mubr.bf16.mxu0 0
  %309 = vmatmul.mubr.bf16.gmra.mrb[0].mxu0 %v229
  %v310 = vpop.f32.mrb[0].mxu0
  %v311 = vadd.f32 0.0, %v310
  %v312 = vpop.f32.mrb[0].mxu0
  %v313 = vpop.f32.mrb[0].mxu0
  %v314 = vadd.f32 0.0, %v313
  %v315 = vpop.f32.mrb[0].mxu0
  %316 = vmatprep.mubr.bf16.mxu0 0
  %317 = vmatmul.mubr.bf16.gmra.mrb[0].mxu0 %v232
  %v318 = vpop.f32.mrb[0].mxu0
  %v319 = vadd.f32 0.0, %v318
  %v320 = vpop.f32.mrb[0].mxu0
  %v321 = vpop.f32.mrb[0].mxu0
  %v322 = vadd.f32 0.0, %v321
  %v323 = vpop.f32.mrb[0].mxu0
  %324 = vmatprep.mubr.bf16.mxu0 0
  %325 = vmatmul.mubr.bf16.gmra.mrb[0].mxu0 %v235
  %v326 = vpop.f32.mrb[0].mxu0
  %v327 = vadd.f32 0.0, %v326
  %v328 = vpop.f32.mrb[0].mxu0
  %v329 = vpop.f32.mrb[0].mxu0
  %v330 = vadd.f32 0.0, %v329
  %v331 = vpop.f32.mrb[0].mxu0
  %332 = vmatprep.mubr.bf16.mxu0 0
  %333 = vmatmul.mubr.bf16.gmra.mrb[0].mxu0 %v238
  %v334 = vpop.f32.mrb[0].mxu0
  %v335 = vadd.f32 0.0, %v334
  %v336 = vpop.f32.mrb[0].mxu0
  %v337 = vpop.f32.mrb[0].mxu0
  %v338 = vadd.f32 0.0, %v337
  %v339 = vpop.f32.mrb[0].mxu0
  %340 = vmatprep.mubr.bf16.mxu0 0
  %341 = vmatmul.mubr.bf16.gmra.mrb[0].mxu0 %v241
  %v342 = vpop.f32.mrb[0].mxu0
  %v343 = vadd.f32 0.0, %v342
  %v344 = vpop.f32.mrb[0].mxu0
  %v345 = vpop.f32.mrb[0].mxu0
  %v346 = vadd.f32 0.0, %v345
  %v347 = vpop.f32.mrb[0].mxu0
  %348 = vmatprep.mubr.bf16.mxu0 0
  %349 = vmatmul.mubr.bf16.gmra.mrb[0].mxu0 %v244
  %v350 = vpop.f32.mrb[0].mxu0
  %v351 = vadd.f32 0.0, %v350
  %v352 = vpop.f32.mrb[0].mxu0
  %v353 = vpop.f32.mrb[0].mxu0
  %v354 = vadd.f32 0.0, %v353
  %v355 = vpop.f32.mrb[0].mxu0
  %356 = vmatprep.mubr.bf16.mxu0 0
  %357 = vmatmul.mubr.bf16.gmra.mrb[0].mxu0 %v247
  %v358 = vpop.f32.mrb[0].mxu0
  %v359 = vadd.f32 0.0, %v358
  %v360 = vpop.f32.mrb[0].mxu0
  %v361 = vpop.f32.mrb[0].mxu0
  %v362 = vadd.f32 0.0, %v361
  %v363 = vpop.f32.mrb[0].mxu0
  %364 = vmatprep.mubr.bf16.mxu0 0
  %365 = vmatmul.mubr.bf16.gmra.mrb[0].mxu0 %v250
  %v366 = vpop.f32.mrb[0].mxu0
  %v367 = vadd.f32 0.0, %v366
  %v368 = vpop.f32.mrb[0].mxu0
  %v369 = vpop.f32.mrb[0].mxu0
  %v370 = vadd.f32 0.0, %v369
  %v371 = vpop.f32.mrb[0].mxu0
  %372 = vmatprep.mubr.bf16.mxu0 0
  %373 = vmatmul.mubr.bf16.gmra.mrb[0].mxu0 %v253
  %v374 = vpop.f32.mrb[0].mxu0
  %v375 = vadd.f32 0.0, %v374
  %v376 = vpop.f32.mrb[0].mxu0
  %v377 = vpop.f32.mrb[0].mxu0
  %v378 = vadd.f32 0.0, %v377
  %v379 = vpop.f32.mrb[0].mxu0
  %380 = vmatprep.mubr.bf16.mxu0 0
  %381 = vmatmul.mubr.bf16.gmra.mrb[0].mxu0 %v256
  %v382 = vpop.f32.mrb[0].mxu0
  %v383 = vadd.f32 0.0, %v382
  %v384 = vpop.f32.mrb[0].mxu0
  %v385 = vpop.f32.mrb[0].mxu0
  %v386 = vadd.f32 0.0, %v385
  %v387 = vpop.f32.mrb[0].mxu0
  %388 = vmatprep.mubr.bf16.mxu0 0
  %389 = vmatmul.mubr.bf16.gmra.mrb[0].mxu0 %v259
  %v390 = vpop.f32.mrb[0].mxu0
  %v391 = vadd.f32 0.0, %v390
  %v392 = vpop.f32.mrb[0].mxu0
  %v393 = vpop.f32.mrb[0].mxu0
  %v394 = vadd.f32 0.0, %v393
  %v395 = vpop.f32.mrb[0].mxu0
  %396 = vmatprep.mubr.bf16.mxu0 0
  %397 = vmatmul.mubr.bf16.gmra.mrb[0].mxu0 %v262
  %v398 = vpop.f32.mrb[0].mxu0
  %v399 = vadd.f32 0.0, %v398
  %v400 = vpop.f32.mrb[0].mxu0
  %v401 = vpop.f32.mrb[0].mxu0
  %v402 = vadd.f32 0.0, %v401
  %v403 = vpop.f32.mrb[0].mxu0
  %404 = vmatprep.mubr.bf16.mxu0 0
  %405 = vmatmul.mubr.bf16.gmra.mrb[0].mxu0 %v265
  %v406 = vpop.f32.mrb[0].mxu0
  %v407 = vadd.f32 0.0, %v406
  %v408 = vpop.f32.mrb[0].mxu0
  %v409 = vpop.f32.mrb[0].mxu0
  %v410 = vadd.f32 0.0, %v409
  %v411 = vpop.f32.mrb[0].mxu0
  %412 = vmatprep.mubr.bf16.mxu0 0
  %413 = vmatmul.mubr.bf16.gmra.mrb[0].mxu0 %v268
  %v414 = vpop.f32.mrb[0].mxu0
  %v415 = vadd.f32 0.0, %v414
  %v416 = vpop.f32.mrb[0].mxu0
  %v417 = vpop.f32.mrb[0].mxu0
  %v418 = vadd.f32 0.0, %v417
  %v419 = vpop.f32.mrb[0].mxu0
  %420 = vmatprep.mubr.bf16.mxu0 0
  %421 = vmatmul.mubr.bf16.gmra.mrb[0].mxu0 %v271
  %v422 = vpop.f32.mrb[0].mxu0
  %v423 = vadd.f32 0.0, %v422
  %v424 = vpop.f32.mrb[0].mxu0
  %v425 = vpop.f32.mrb[0].mxu0
  %v426 = vadd.f32 0.0, %v425
  %v427 = vpop.f32.mrb[0].mxu0
  %428 = vmatprep.mubr.bf16.mxu0 0
  %429 = vmatmul.mubr.bf16.gmra.mrb[0].mxu0 %v274
  %v430 = vpop.f32.mrb[0].mxu0
  %v431 = vadd.f32 0.0, %v430
  %v432 = vpop.f32.mrb[0].mxu0
  %v433 = vpop.f32.mrb[0].mxu0
  %v434 = vadd.f32 0.0, %v433
  %v435 = vpop.f32.mrb[0].mxu0
  %436 = vdwg.mxu0
  %v437 = vadd.f32 %v51, %v311
  %v438 = vadd.f32 %v52, %v314
  %v439 = vadd.f32 %v53, %v319
  %v440 = vadd.f32 %v54, %v322
  %v441 = vadd.f32 %v55, %v327
  %v442 = vadd.f32 %v56, %v330
  %v443 = vadd.f32 %v57, %v335
  %v444 = vadd.f32 %v58, %v338
  %v445 = vadd.f32 %v59, %v343
  %v446 = vadd.f32 %v60, %v346
  %v447 = vadd.f32 %v61, %v351
  %v448 = vadd.f32 %v62, %v354
  %v449 = vadd.f32 %v63, %v359
  %v450 = vadd.f32 %v64, %v362
  %v451 = vadd.f32 %v65, %v367
  %v452 = vadd.f32 %v66, %v370
  %v453 = vadd.f32 %v67, %v375
  %v454 = vadd.f32 %v68, %v378
  %v455 = vadd.f32 %v69, %v383
  %v456 = vadd.f32 %v70, %v386
  %v457 = vadd.f32 %v71, %v391
  %v458 = vadd.f32 %v72, %v394
  %v459 = vadd.f32 %v73, %v399
  %v460 = vadd.f32 %v74, %v402
  %v461 = vadd.f32 %v75, %v407
  %v462 = vadd.f32 %v76, %v410
  %v463 = vadd.f32 %v77, %v415
  %v464 = vadd.f32 %v78, %v418
  %v465 = vadd.f32 %v79, %v423
  %v466 = vadd.f32 %v80, %v426
  %v467 = vadd.f32 %v81, %v431
  %v468 = vadd.f32 %v82, %v434
  %469 = vst [vmem:[#allocation2] sm:$0xff] %v437
  %470 = vst [vmem:[#allocation2 + $0x8] sm:$0xff] %v438
  %471 = vst [vmem:[#allocation2 + $0x10] sm:$0xff] %v439
  %472 = vst [vmem:[#allocation2 + $0x18] sm:$0xff] %v440
  %473 = vst [vmem:[#allocation2 + $0x20] sm:$0xff] %v441
  %474 = vst [vmem:[#allocation2 + $0x28] sm:$0xff] %v442
  %475 = vst [vmem:[#allocation2 + $0x30] sm:$0xff] %v443
  %476 = vst [vmem:[#allocation2 + $0x38] sm:$0xff] %v444
  %477 = vst [vmem:[#allocation2 + $0x40] sm:$0xff] %v445
  %478 = vst [vmem:[#allocation2 + $0x48] sm:$0xff] %v446
  %479 = vst [vmem:[#allocation2 + $0x50] sm:$0xff] %v447
  %480 = vst [vmem:[#allocation2 + $0x58] sm:$0xff] %v448
  %481 = vst [vmem:[#allocation2 + $0x60] sm:$0xff] %v449
  %482 = vst [vmem:[#allocation2 + $0x68] sm:$0xff] %v450
  %483 = vst [vmem:[#allocation2 + $0x70] sm:$0xff] %v451
  %484 = vst [vmem:[#allocation2 + $0x78] sm:$0xff] %v452
  %485 = vst [vmem:[#allocation2 + $0x80] sm:$0xff] %v453
  %486 = vst [vmem:[#allocation2 + $0x88] sm:$0xff] %v454
  %487 = vst [vmem:[#allocation2 + $0x90] sm:$0xff] %v455
  %488 = vst [vmem:[#allocation2 + $0x98] sm:$0xff] %v456
  %489 = vst [vmem:[#allocation2 + $0xa0] sm:$0xff] %v457
  %490 = vst [vmem:[#allocation2 + $0xa8] sm:$0xff] %v458
  %491 = vst [vmem:[#allocation2 + $0xb0] sm:$0xff] %v459
  %492 = vst [vmem:[#allocation2 + $0xb8] sm:$0xff] %v460
  %493 = vst [vmem:[#allocation2 + $0xc0] sm:$0xff] %v461
  %494 = vst [vmem:[#allocation2 + $0xc8] sm:$0xff] %v462
  %495 = vst [vmem:[#allocation2 + $0xd0] sm:$0xff] %v463
  %496 = vst [vmem:[#allocation2 + $0xd8] sm:$0xff] %v464
  %497 = vst [vmem:[#allocation2 + $0xe0] sm:$0xff] %v465
  %498 = vst [vmem:[#allocation2 + $0xe8] sm:$0xff] %v466
  %499 = vst [vmem:[#allocation2 + $0xf0] sm:$0xff] %v467
  %500 = vst [vmem:[#allocation2 + $0xf8] sm:$0xff] %v468
  // Predicated region
  $region18: #{warp_attn_forward.11} parent=0 // pred_check
    %p501 = pneg %p15
  $region19: #{warp_attn_forward.11} parent=0 // pred_check_branch
    %503 = sbr.rel (%p501) target = $region21
  $region20: #{warp_attn_forward.11} parent=0 // pred_region
    %v504 = vld [vmem:[#allocation2] sm:$0xff]
    %v505 = vld [vmem:[#allocation2 + $0x8] sm:$0xff]
    %v506 = vld [vmem:[#allocation2 + $0x10] sm:$0xff]
    %v507 = vld [vmem:[#allocation2 + $0x18] sm:$0xff]
    %v508 = vld [vmem:[#allocation2 + $0x20] sm:$0xff]
    %v509 = vld [vmem:[#allocation2 + $0x28] sm:$0xff]
    %v510 = vld [vmem:[#allocation2 + $0x30] sm:$0xff]
    %v511 = vld [vmem:[#allocation2 + $0x38] sm:$0xff]
    %v512 = vld [vmem:[#allocation2 + $0x40] sm:$0xff]
    %v513 = vld [vmem:[#allocation2 + $0x48] sm:$0xff]
    %v514 = vld [vmem:[#allocation2 + $0x50] sm:$0xff]
    %v515 = vld [vmem:[#allocation2 + $0x58] sm:$0xff]
    %v516 = vld [vmem:[#allocation2 + $0x60] sm:$0xff]
    %v517 = vld [vmem:[#allocation2 + $0x68] sm:$0xff]
    %v518 = vld [vmem:[#allocation2 + $0x70] sm:$0xff]
    %v519 = vld [vmem:[#allocation2 + $0x78] sm:$0xff]
    %v520 = vld [vmem:[#allocation2 + $0x80] sm:$0xff]
    %v521 = vld [vmem:[#allocation2 + $0x88] sm:$0xff]
    %v522 = vld [vmem:[#allocation2 + $0x90] sm:$0xff]
    %v523 = vld [vmem:[#allocation2 + $0x98] sm:$0xff]
    %v524 = vld [vmem:[#allocation2 + $0xa0] sm:$0xff]
    %v525 = vld [vmem:[#allocation2 + $0xa8] sm:$0xff]
    %v526 = vld [vmem:[#allocation2 + $0xb0] sm:$0xff]
    %v527 = vld [vmem:[#allocation2 + $0xb8] sm:$0xff]
    %v528 = vld [vmem:[#allocation2 + $0xc0] sm:$0xff]
    %v529 = vld [vmem:[#allocation2 + $0xc8] sm:$0xff]
    %v530 = vld [vmem:[#allocation2 + $0xd0] sm:$0xff]
    %v531 = vld [vmem:[#allocation2 + $0xd8] sm:$0xff]
    %v532 = vld [vmem:[#allocation2 + $0xe0] sm:$0xff]
    %v533 = vld [vmem:[#allocation2 + $0xe8] sm:$0xff]
    %v534 = vld [vmem:[#allocation2 + $0xf0] sm:$0xff]
    %v535 = vld [vmem:[#allocation2 + $0xf8] sm:$0xff]
    %v536 = vld [vmem:[%s2] sm:$0x1]
    %v538 = vlaneseq
    %v539 = vshrl.u32 %v538, 7
    %v540 = vsub.s32 0, %v539
    %v541 = vrot.slane %v536, %v540
    %v543 = vadd.f32 %v504, %v541
    %v544 = vadd.f32 %v505, %v541
    %v545 = vadd.f32 %v506, %v541
    %v546 = vadd.f32 %v507, %v541
    %v547 = vadd.f32 %v508, %v541
    %v548 = vadd.f32 %v509, %v541
    %v549 = vadd.f32 %v510, %v541
    %v550 = vadd.f32 %v511, %v541
    %v551 = vadd.f32 %v512, %v541
    %v552 = vadd.f32 %v513, %v541
    %v553 = vadd.f32 %v514, %v541
    %v554 = vadd.f32 %v515, %v541
    %v555 = vadd.f32 %v516, %v541
    %v556 = vadd.f32 %v517, %v541
    %v557 = vadd.f32 %v518, %v541
    %v558 = vadd.f32 %v519, %v541
    %v559 = vadd.f32 %v520, %v541
    %v560 = vadd.f32 %v521, %v541
    %v561 = vadd.f32 %v522, %v541
    %v562 = vadd.f32 %v523, %v541
    %v563 = vadd.f32 %v524, %v541
    %v564 = vadd.f32 %v525, %v541
    %v565 = vadd.f32 %v526, %v541
    %v566 = vadd.f32 %v527, %v541
    %v567 = vadd.f32 %v528, %v541
    %v568 = vadd.f32 %v529, %v541
    %v569 = vadd.f32 %v530, %v541
    %v570 = vadd.f32 %v531, %v541
    %v571 = vadd.f32 %v532, %v541
    %v572 = vadd.f32 %v533, %v541
    %v573 = vadd.f32 %v534, %v541
    %v574 = vadd.f32 %v535, %v541
    %v575 = vpack.c.bf16 %v544, %v543
    %v576 = vpack.c.bf16 %v546, %v545
    %v577 = vpack.c.bf16 %v548, %v547
    %v578 = vpack.c.bf16 %v550, %v549
    %v579 = vpack.c.bf16 %v552, %v551
    %v580 = vpack.c.bf16 %v554, %v553
    %v581 = vpack.c.bf16 %v556, %v555
    %v582 = vpack.c.bf16 %v558, %v557
    %v583 = vpack.c.bf16 %v560, %v559
    %v584 = vpack.c.bf16 %v562, %v561
    %v585 = vpack.c.bf16 %v564, %v563
    %v586 = vpack.c.bf16 %v566, %v565
    %v587 = vpack.c.bf16 %v568, %v567
    %v588 = vpack.c.bf16 %v570, %v569
    %v589 = vpack.c.bf16 %v572, %v571
    %v590 = vpack.c.bf16 %v574, %v573
    %v607 = vunpack.c.l.b16 %v575
    %v608 = vunpack.c.h.b16 %v575
    %v609 = vunpack.c.l.b16 %v576
    %v610 = vunpack.c.h.b16 %v576
    %v611 = vunpack.c.l.b16 %v577
    %v612 = vunpack.c.h.b16 %v577
    %v613 = vunpack.c.l.b16 %v578
    %v614 = vunpack.c.h.b16 %v578
    %v615 = vunpack.c.l.b16 %v579
    %v616 = vunpack.c.h.b16 %v579
    %v617 = vunpack.c.l.b16 %v580
    %v618 = vunpack.c.h.b16 %v580
    %v619 = vunpack.c.l.b16 %v581
    %v620 = vunpack.c.h.b16 %v581
    %v621 = vunpack.c.l.b16 %v582
    %v622 = vunpack.c.h.b16 %v582
    %v623 = vunpack.c.l.b16 %v583
    %v624 = vunpack.c.h.b16 %v583
    %v625 = vunpack.c.l.b16 %v584
    %v626 = vunpack.c.h.b16 %v584
    %v627 = vunpack.c.l.b16 %v585
    %v628 = vunpack.c.h.b16 %v585
    %v629 = vunpack.c.l.b16 %v586
    %v630 = vunpack.c.h.b16 %v586
    %v631 = vunpack.c.l.b16 %v587
    %v632 = vunpack.c.h.b16 %v587
    %v633 = vunpack.c.l.b16 %v588
    %v634 = vunpack.c.h.b16 %v588
    %v635 = vunpack.c.l.b16 %v589
    %v636 = vunpack.c.h.b16 %v589
    %v637 = vunpack.c.l.b16 %v590
    %v638 = vunpack.c.h.b16 %v590
    %v639 = vpack.c.b16 %v607, %v607
    %v640 = vpack.c.b16 %v608, %v608
    %v641 = vpack.c.b16 %v609, %v609
    %v642 = vpack.c.b16 %v610, %v610
    %v643 = vpack.c.b16 %v611, %v611
    %v644 = vpack.c.b16 %v612, %v612
    %v645 = vpack.c.b16 %v613, %v613
    %v646 = vpack.c.b16 %v614, %v614
    %v647 = vpack.c.b16 %v615, %v615
    %v648 = vpack.c.b16 %v616, %v616
    %v649 = vpack.c.b16 %v617, %v617
    %v650 = vpack.c.b16 %v618, %v618
    %v651 = vpack.c.b16 %v619, %v619
    %v652 = vpack.c.b16 %v620, %v620
    %v653 = vpack.c.b16 %v621, %v621
    %v654 = vpack.c.b16 %v622, %v622
    %v655 = vpack.c.b16 %v623, %v623
    %v656 = vpack.c.b16 %v624, %v624
    %v657 = vpack.c.b16 %v625, %v625
    %v658 = vpack.c.b16 %v626, %v626
    %v659 = vpack.c.b16 %v627, %v627
    %v660 = vpack.c.b16 %v628, %v628
    %v661 = vpack.c.b16 %v629, %v629
    %v662 = vpack.c.b16 %v630, %v630
    %v663 = vpack.c.b16 %v631, %v631
    %v664 = vpack.c.b16 %v632, %v632
    %v665 = vpack.c.b16 %v633, %v633
    %v666 = vpack.c.b16 %v634, %v634
    %v667 = vpack.c.b16 %v635, %v635
    %v668 = vpack.c.b16 %v636, %v636
    %v669 = vpack.c.b16 %v637, %v637
    %v670 = vpack.c.b16 %v638, %v638
    %703 = vst [vmem:[%s3] sm:$0xf] %v639
    %704 = vst [vmem:[%s3 + $0x4] sm:$0xf] %v640
    %705 = vst [vmem:[%s3 + $0x8] sm:$0xf] %v641
    %706 = vst [vmem:[%s3 + $0xc] sm:$0xf] %v642
    %707 = vst [vmem:[%s3 + $0x10] sm:$0xf] %v643
    %708 = vst [vmem:[%s3 + $0x14] sm:$0xf] %v644
    %709 = vst [vmem:[%s3 + $0x18] sm:$0xf] %v645
    %710 = vst [vmem:[%s3 + $0x1c] sm:$0xf] %v646
    %711 = vst [vmem:[%s3 + $0x20] sm:$0xf] %v647
    %712 = vst [vmem:[%s3 + $0x24] sm:$0xf] %v648
    %713 = vst [vmem:[%s3 + $0x28] sm:$0xf] %v649
    %714 = vst [vmem:[%s3 + $0x2c] sm:$0xf] %v650
    %715 = vst [vmem:[%s3 + $0x30] sm:$0xf] %v651
    %716 = vst [vmem:[%s3 + $0x34] sm:$0xf] %v652
    %717 = vst [vmem:[%s3 + $0x38] sm:$0xf] %v653
    %718 = vst [vmem:[%s3 + $0x3c] sm:$0xf] %v654
    %719 = vst [vmem:[%s3 + $0x40] sm:$0xf] %v655
    %720 = vst [vmem:[%s3 + $0x44] sm:$0xf] %v656
    %721 = vst [vmem:[%s3 + $0x48] sm:$0xf] %v657
    %722 = vst [vmem:[%s3 + $0x4c] sm:$0xf] %v658
    %723 = vst [vmem:[%s3 + $0x50] sm:$0xf] %v659
    %724 = vst [vmem:[%s3 + $0x54] sm:$0xf] %v660
    %725 = vst [vmem:[%s3 + $0x58] sm:$0xf] %v661
    %726 = vst [vmem:[%s3 + $0x5c] sm:$0xf] %v662
    %727 = vst [vmem:[%s3 + $0x60] sm:$0xf] %v663
    %728 = vst [vmem:[%s3 + $0x64] sm:$0xf] %v664
    %729 = vst [vmem:[%s3 + $0x68] sm:$0xf] %v665
    %730 = vst [vmem:[%s3 + $0x6c] sm:$0xf] %v666
    %731 = vst [vmem:[%s3 + $0x70] sm:$0xf] %v667
    %732 = vst [vmem:[%s3 + $0x74] sm:$0xf] %v668
    %733 = vst [vmem:[%s3 + $0x78] sm:$0xf] %v669
    %734 = vst [vmem:[%s3 + $0x7c] sm:$0xf] %v670
  $region21: #{warp_attn_forward.11} parent=0 // pred_fallthru
    _
  // Predicated region
  $region22: #{warp_attn_forward.11} parent=0 // pred_check
    _
  $region23: #{warp_attn_forward.11} parent=0 // pred_check_branch
    %736 = sbr.rel (0) target = $region25
  $region24: #{warp_attn_forward.11} parent=0 // pred_region
    _
  $region25: #{warp_attn_forward.11} parent=0 // pred_fallthru
    _
  // Predicated region
  $region26: #{warp_attn_forward.11} parent=0 // pred_check
    _
  $region27: #{warp_attn_forward.11} parent=0 // pred_check_branch
    %738 = sbr.rel (0) target = $region29
  $region28: #{warp_attn_forward.11} parent=0 // pred_region
    _
  $region29: #{warp_attn_forward.11} parent=0 // pred_fallthru
    _

// kernel: warp_attn_forward.15
$region0: #{warp_attn_forward.15}
  #allocation0 [shape = 'u32[]', space=smem, size = 0x4, offset = 0x4, fixed_abs, tag = 'smem constant byte address 0x4 - core index']
  #allocation1 [shape = 'u32[144,128]{1,0:T(1,128)}', space=vmem, size = 0x12000, scoped, tag = 'internal scratch']
  #allocation2 [shape = 'f32[256,64]{1,0:T(8,128)}', space=vmem, size = 0x20000, scoped, tag = 'scratch operand']
  %s0 = inlined_call_operand.vmem [shape: bf16[256,64], index: 0, kind: input, shape index: {}]
  %s1 = inlined_call_operand.vmem [shape: bf16[64,64], index: 1, kind: input, shape index: {}]
  %s2 = inlined_call_operand.vmem [shape: f32[1,64], index: 2, kind: input, shape index: {}]
  %s3 = inlined_call_operand.vmem [shape: bf16[256,64], index: 3, kind: output, shape index: {}]
  %s4 = sld [smem:[#allocation0]]
  $region30: #{warp_attn_forward.15} parent=0
    _
  %s6 = ssub.s32 1, %s4
  %s7 = scalar_select 0, %s6, %s4
  // Predicated region
  $region2: #{warp_attn_forward.15} parent=0 // pred_check
    _
  $region3: #{warp_attn_forward.15} parent=0 // pred_check_branch
    %9 = sbr.rel (0) target = $region5
  $region4: #{warp_attn_forward.15} parent=0 // pred_region
    _
  $region5: #{warp_attn_forward.15} parent=0 // pred_fallthru
    _
  // Predicated region
  $region6: #{warp_attn_forward.15} parent=0 // pred_check
    _
  $region7: #{warp_attn_forward.15} parent=0 // pred_check_branch
    %11 = sbr.rel (0) target = $region9
  $region8: #{warp_attn_forward.15} parent=0 // pred_region
    _
  $region9: #{warp_attn_forward.15} parent=0 // pred_fallthru
    _
  // Predicated region
  $region10: #{warp_attn_forward.15} parent=0 // pred_check
    _
  $region11: #{warp_attn_forward.15} parent=0 // pred_check_branch
    %13 = sbr.rel (0) target = $region13
  $region12: #{warp_attn_forward.15} parent=0 // pred_region
    _
  $region13: #{warp_attn_forward.15} parent=0 // pred_fallthru
    _
  %p15 = scmp.eq.s32.totalorder 0, 0
  // Predicated region
  $region14: #{warp_attn_forward.15} parent=0 // pred_check
    %p16 = pneg %p15
  $region15: #{warp_attn_forward.15} parent=0 // pred_check_branch
    %18 = sbr.rel (%p16) target = $region17
  $region16: #{warp_attn_forward.15} parent=0 // pred_region
    %vm19 = vcmask 523264
    %20 = vst.msk [vmem:[#allocation2] sm:$0xff] %vm19, 0.0
    %21 = vst.msk [vmem:[#allocation2 + $0x8] sm:$0xff] %vm19, 0.0
    %22 = vst.msk [vmem:[#allocation2 + $0x10] sm:$0xff] %vm19, 0.0
    %23 = vst.msk [vmem:[#allocation2 + $0x18] sm:$0xff] %vm19, 0.0
    %24 = vst.msk [vmem:[#allocation2 + $0x20] sm:$0xff] %vm19, 0.0
    %25 = vst.msk [vmem:[#allocation2 + $0x28] sm:$0xff] %vm19, 0.0
    %26 = vst.msk [vmem:[#allocation2 + $0x30] sm:$0xff] %vm19, 0.0
    %27 = vst.msk [vmem:[#allocation2 + $0x38] sm:$0xff] %vm19, 0.0
    %28 = vst.msk [vmem:[#allocation2 + $0x40] sm:$0xff] %vm19, 0.0
    %29 = vst.msk [vmem:[#allocation2 + $0x48] sm:$0xff] %vm19, 0.0
    %30 = vst.msk [vmem:[#allocation2 + $0x50] sm:$0xff] %vm19, 0.0
    %31 = vst.msk [vmem:[#allocation2 + $0x58] sm:$0xff] %vm19, 0.0
    %32 = vst.msk [vmem:[#allocation2 + $0x60] sm:$0xff] %vm19, 0.0
    %33 = vst.msk [vmem:[#allocation2 + $0x68] sm:$0xff] %vm19, 0.0
    %34 = vst.msk [vmem:[#allocation2 + $0x70] sm:$0xff] %vm19, 0.0
    %35 = vst.msk [vmem:[#allocation2 + $0x78] sm:$0xff] %vm19, 0.0
    %36 = vst.msk [vmem:[#allocation2 + $0x80] sm:$0xff] %vm19, 0.0
    %37 = vst.msk [vmem:[#allocation2 + $0x88] sm:$0xff] %vm19, 0.0
    %38 = vst.msk [vmem:[#allocation2 + $0x90] sm:$0xff] %vm19, 0.0
    %39 = vst.msk [vmem:[#allocation2 + $0x98] sm:$0xff] %vm19, 0.0
    %40 = vst.msk [vmem:[#allocation2 + $0xa0] sm:$0xff] %vm19, 0.0
    %41 = vst.msk [vmem:[#allocation2 + $0xa8] sm:$0xff] %vm19, 0.0
    %42 = vst.msk [vmem:[#allocation2 + $0xb0] sm:$0xff] %vm19, 0.0
    %43 = vst.msk [vmem:[#allocation2 + $0xb8] sm:$0xff] %vm19, 0.0
    %44 = vst.msk [vmem:[#allocation2 + $0xc0] sm:$0xff] %vm19, 0.0
    %45 = vst.msk [vmem:[#allocation2 + $0xc8] sm:$0xff] %vm19, 0.0
    %46 = vst.msk [vmem:[#allocation2 + $0xd0] sm:$0xff] %vm19, 0.0
    %47 = vst.msk [vmem:[#allocation2 + $0xd8] sm:$0xff] %vm19, 0.0
    %48 = vst.msk [vmem:[#allocation2 + $0xe0] sm:$0xff] %vm19, 0.0
    %49 = vst.msk [vmem:[#allocation2 + $0xe8] sm:$0xff] %vm19, 0.0
    %50 = vst.msk [vmem:[#allocation2 + $0xf0] sm:$0xff] %vm19, 0.0
    %51 = vst.msk [vmem:[#allocation2 + $0xf8] sm:$0xff] %vm19, 0.0
  $region17: #{warp_attn_forward.15} parent=0 // pred_fallthru
    _
  %v52 = vld [vmem:[#allocation2] sm:$0xff]
  %v53 = vld [vmem:[#allocation2 + $0x8] sm:$0xff]
  %v54 = vld [vmem:[#allocation2 + $0x10] sm:$0xff]
  %v55 = vld [vmem:[#allocation2 + $0x18] sm:$0xff]
  %v56 = vld [vmem:[#allocation2 + $0x20] sm:$0xff]
  %v57 = vld [vmem:[#allocation2 + $0x28] sm:$0xff]
  %v58 = vld [vmem:[#allocation2 + $0x30] sm:$0xff]
  %v59 = vld [vmem:[#allocation2 + $0x38] sm:$0xff]
  %v60 = vld [vmem:[#allocation2 + $0x40] sm:$0xff]
  %v61 = vld [vmem:[#allocation2 + $0x48] sm:$0xff]
  %v62 = vld [vmem:[#allocation2 + $0x50] sm:$0xff]
  %v63 = vld [vmem:[#allocation2 + $0x58] sm:$0xff]
  %v64 = vld [vmem:[#allocation2 + $0x60] sm:$0xff]
  %v65 = vld [vmem:[#allocation2 + $0x68] sm:$0xff]
  %v66 = vld [vmem:[#allocation2 + $0x70] sm:$0xff]
  %v67 = vld [vmem:[#allocation2 + $0x78] sm:$0xff]
  %v68 = vld [vmem:[#allocation2 + $0x80] sm:$0xff]
  %v69 = vld [vmem:[#allocation2 + $0x88] sm:$0xff]
  %v70 = vld [vmem:[#allocation2 + $0x90] sm:$0xff]
  %v71 = vld [vmem:[#allocation2 + $0x98] sm:$0xff]
  %v72 = vld [vmem:[#allocation2 + $0xa0] sm:$0xff]
  %v73 = vld [vmem:[#allocation2 + $0xa8] sm:$0xff]
  %v74 = vld [vmem:[#allocation2 + $0xb0] sm:$0xff]
  %v75 = vld [vmem:[#allocation2 + $0xb8] sm:$0xff]
  %v76 = vld [vmem:[#allocation2 + $0xc0] sm:$0xff]
  %v77 = vld [vmem:[#allocation2 + $0xc8] sm:$0xff]
  %v78 = vld [vmem:[#allocation2 + $0xd0] sm:$0xff]
  %v79 = vld [vmem:[#allocation2 + $0xd8] sm:$0xff]
  %v80 = vld [vmem:[#allocation2 + $0xe0] sm:$0xff]
  %v81 = vld [vmem:[#allocation2 + $0xe8] sm:$0xff]
  %v82 = vld [vmem:[#allocation2 + $0xf0] sm:$0xff]
  %v83 = vld [vmem:[#allocation2 + $0xf8] sm:$0xff]
  %v84 = vld [vmem:[%s0] sm:$0xf]
  %v85 = vld [vmem:[%s0 + $0x4] sm:$0xf]
  %v86 = vld [vmem:[%s0 + $0x8] sm:$0xf]
  %v87 = vld [vmem:[%s0 + $0xc] sm:$0xf]
  %v88 = vld [vmem:[%s0 + $0x10] sm:$0xf]
  %v89 = vld [vmem:[%s0 + $0x14] sm:$0xf]
  %v90 = vld [vmem:[%s0 + $0x18] sm:$0xf]
  %v91 = vld [vmem:[%s0 + $0x1c] sm:$0xf]
  %v92 = vld [vmem:[%s0 + $0x20] sm:$0xf]
  %v93 = vld [vmem:[%s0 + $0x24] sm:$0xf]
  %v94 = vld [vmem:[%s0 + $0x28] sm:$0xf]
  %v95 = vld [vmem:[%s0 + $0x2c] sm:$0xf]
  %v96 = vld [vmem:[%s0 + $0x30] sm:$0xf]
  %v97 = vld [vmem:[%s0 + $0x34] sm:$0xf]
  %v98 = vld [vmem:[%s0 + $0x38] sm:$0xf]
  %v99 = vld [vmem:[%s0 + $0x3c] sm:$0xf]
  %v100 = vld [vmem:[%s0 + $0x40] sm:$0xf]
  %v101 = vld [vmem:[%s0 + $0x44] sm:$0xf]
  %v102 = vld [vmem:[%s0 + $0x48] sm:$0xf]
  %v103 = vld [vmem:[%s0 + $0x4c] sm:$0xf]
  %v104 = vld [vmem:[%s0 + $0x50] sm:$0xf]
  %v105 = vld [vmem:[%s0 + $0x54] sm:$0xf]
  %v106 = vld [vmem:[%s0 + $0x58] sm:$0xf]
  %v107 = vld [vmem:[%s0 + $0x5c] sm:$0xf]
  %v108 = vld [vmem:[%s0 + $0x60] sm:$0xf]
  %v109 = vld [vmem:[%s0 + $0x64] sm:$0xf]
  %v110 = vld [vmem:[%s0 + $0x68] sm:$0xf]
  %v111 = vld [vmem:[%s0 + $0x6c] sm:$0xf]
  %v112 = vld [vmem:[%s0 + $0x70] sm:$0xf]
  %v113 = vld [vmem:[%s0 + $0x74] sm:$0xf]
  %v114 = vld [vmem:[%s0 + $0x78] sm:$0xf]
  %v115 = vld [vmem:[%s0 + $0x7c] sm:$0xf]
  %v116 = vld [vmem:[%s1] sm:$0xf]
  %v117 = vld [vmem:[%s1 + $0x4] sm:$0xf]
  %v118 = vld [vmem:[%s1 + $0x8] sm:$0xf]
  %v119 = vld [vmem:[%s1 + $0xc] sm:$0xf]
  %v120 = vld [vmem:[%s1 + $0x10] sm:$0xf]
  %v121 = vld [vmem:[%s1 + $0x14] sm:$0xf]
  %v122 = vld [vmem:[%s1 + $0x18] sm:$0xf]
  %v123 = vld [vmem:[%s1 + $0x1c] sm:$0xf]
  %v156 = vunpack.c.l.b16 %v84
  %v157 = vunpack.c.l.b16 %v85
  %v158 = vunpack.c.l.b16 %v86
  %v159 = vunpack.c.l.b16 %v87
  %v160 = vunpack.c.l.b16 %v88
  %v161 = vunpack.c.l.b16 %v89
  %v162 = vunpack.c.l.b16 %v90
  %v163 = vunpack.c.l.b16 %v91
  %v164 = vunpack.c.l.b16 %v92
  %v165 = vunpack.c.l.b16 %v93
  %v166 = vunpack.c.l.b16 %v94
  %v167 = vunpack.c.l.b16 %v95
  %v168 = vunpack.c.l.b16 %v96
  %v169 = vunpack.c.l.b16 %v97
  %v170 = vunpack.c.l.b16 %v98
  %v171 = vunpack.c.l.b16 %v99
  %v172 = vunpack.c.l.b16 %v100
  %v173 = vunpack.c.l.b16 %v101
  %v174 = vunpack.c.l.b16 %v102
  %v175 = vunpack.c.l.b16 %v103
  %v176 = vunpack.c.l.b16 %v104
  %v177 = vunpack.c.l.b16 %v105
  %v178 = vunpack.c.l.b16 %v106
  %v179 = vunpack.c.l.b16 %v107
  %v180 = vunpack.c.l.b16 %v108
  %v181 = vunpack.c.l.b16 %v109
  %v182 = vunpack.c.l.b16 %v110
  %v183 = vunpack.c.l.b16 %v111
  %v184 = vunpack.c.l.b16 %v112
  %v185 = vunpack.c.l.b16 %v113
  %v186 = vunpack.c.l.b16 %v114
  %v187 = vunpack.c.l.b16 %v115
  %v188 = vpack.c.b16 %v157, %v156
  %v189 = vpack.c.b16 %v159, %v158
  %v190 = vpack.c.b16 %v161, %v160
  %v191 = vpack.c.b16 %v163, %v162
  %v192 = vpack.c.b16 %v165, %v164
  %v193 = vpack.c.b16 %v167, %v166
  %v194 = vpack.c.b16 %v169, %v168
  %v195 = vpack.c.b16 %v171, %v170
  %v196 = vpack.c.b16 %v173, %v172
  %v197 = vpack.c.b16 %v175, %v174
  %v198 = vpack.c.b16 %v177, %v176
  %v199 = vpack.c.b16 %v179, %v178
  %v200 = vpack.c.b16 %v181, %v180
  %v201 = vpack.c.b16 %v183, %v182
  %v202 = vpack.c.b16 %v185, %v184
  %v203 = vpack.c.b16 %v187, %v186
  %v212 = vunpack.c.l.b16 %v116
  %v213 = vunpack.c.l.b16 %v117
  %v214 = vunpack.c.l.b16 %v118
  %v215 = vunpack.c.l.b16 %v119
  %v216 = vunpack.c.l.b16 %v120
  %v217 = vunpack.c.l.b16 %v121
  %v218 = vunpack.c.l.b16 %v122
  %v219 = vunpack.c.l.b16 %v123
  %v220 = vpack.c.b16 %v213, %v212
  %v221 = vpack.c.b16 %v215, %v214
  %v222 = vpack.c.b16 %v217, %v216
  %v223 = vpack.c.b16 %v219, %v218
  %vm228 = vcmask 523264
  %v230 = vsel %vm228, %v188, 0
  %v233 = vsel %vm228, %v189, 0
  %v236 = vsel %vm228, %v190, 0
  %v239 = vsel %vm228, %v191, 0
  %v242 = vsel %vm228, %v192, 0
  %v245 = vsel %vm228, %v193, 0
  %v248 = vsel %vm228, %v194, 0
  %v251 = vsel %vm228, %v195, 0
  %v254 = vsel %vm228, %v196, 0
  %v257 = vsel %vm228, %v197, 0
  %v260 = vsel %vm228, %v198, 0
  %v263 = vsel %vm228, %v199, 0
  %v266 = vsel %vm228, %v200, 0
  %v269 = vsel %vm228, %v201, 0
  %v272 = vsel %vm228, %v202, 0
  %v275 = vsel %vm228, %v203, 0
  %277 = vmatprep.subr.bf16.mxu0 0
  %278 = vmatpush1.bf16.msra.mxu0 %v220
  %279 = vmatprep.subr.bf16.mxu0 0
  %280 = vmatpush1.bf16.msra.mxu0 %v221
  %281 = vmatprep.subr.bf16.mxu0 0
  %282 = vmatpush1.bf16.msra.mxu0 %v222
  %283 = vmatprep.subr.bf16.mxu0 0
  %284 = vmatpush1.bf16.msra.mxu0 %v223
  %285 = vmatprep.subr.bf16.mxu0 0
  %286 = vmatpush1.bf16.msra.mxu0 0
  %287 = vmatprep.subr.bf16.mxu0 0
  %288 = vmatpush1.bf16.msra.mxu0 0
  %289 = vmatprep.subr.bf16.mxu0 0
  %290 = vmatpush1.bf16.msra.mxu0 0
  %291 = vmatprep.subr.bf16.mxu0 0
  %292 = vmatpush1.bf16.msra.mxu0 0
  %293 = vmatprep.subr.bf16.mxu0 0
  %294 = vmatpush1.bf16.msra.mxu0 0
  %295 = vmatprep.subr.bf16.mxu0 0
  %296 = vmatpush1.bf16.msra.mxu0 0
  %297 = vmatprep.subr.bf16.mxu0 0
  %298 = vmatpush1.bf16.msra.mxu0 0
  %299 = vmatprep.subr.bf16.mxu0 0
  %300 = vmatpush1.bf16.msra.mxu0 0
  %301 = vmatprep.subr.bf16.mxu0 0
  %302 = vmatpush1.bf16.msra.mxu0 0
  %303 = vmatprep.subr.bf16.mxu0 0
  %304 = vmatpush1.bf16.msra.mxu0 0
  %305 = vmatprep.subr.bf16.mxu0 0
  %306 = vmatpush1.bf16.msra.mxu0 0
  %307 = vmatprep.subr.bf16.mxu0 0
  %308 = vmatpush1.bf16.msra.mxu0 0
  %309 = vmatprep.mubr.bf16.mxu0 0
  %310 = vmatmul.mubr.bf16.gmra.mrb[0].mxu0 %v230
  %v311 = vpop.f32.mrb[0].mxu0
  %v312 = vadd.f32 0.0, %v311
  %v313 = vpop.f32.mrb[0].mxu0
  %v314 = vpop.f32.mrb[0].mxu0
  %v315 = vadd.f32 0.0, %v314
  %v316 = vpop.f32.mrb[0].mxu0
  %317 = vmatprep.mubr.bf16.mxu0 0
  %318 = vmatmul.mubr.bf16.gmra.mrb[0].mxu0 %v233
  %v319 = vpop.f32.mrb[0].mxu0
  %v320 = vadd.f32 0.0, %v319
  %v321 = vpop.f32.mrb[0].mxu0
  %v322 = vpop.f32.mrb[0].mxu0
  %v323 = vadd.f32 0.0, %v322
  %v324 = vpop.f32.mrb[0].mxu0
  %325 = vmatprep.mubr.bf16.mxu0 0
  %326 = vmatmul.mubr.bf16.gmra.mrb[0].mxu0 %v236
  %v327 = vpop.f32.mrb[0].mxu0
  %v328 = vadd.f32 0.0, %v327
  %v329 = vpop.f32.mrb[0].mxu0
  %v330 = vpop.f32.mrb[0].mxu0
  %v331 = vadd.f32 0.0, %v330
  %v332 = vpop.f32.mrb[0].mxu0
  %333 = vmatprep.mubr.bf16.mxu0 0
  %334 = vmatmul.mubr.bf16.gmra.mrb[0].mxu0 %v239
  %v335 = vpop.f32.mrb[0].mxu0
  %v336 = vadd.f32 0.0, %v335
  %v337 = vpop.f32.mrb[0].mxu0
  %v338 = vpop.f32.mrb[0].mxu0
  %v339 = vadd.f32 0.0, %v338
  %v340 = vpop.f32.mrb[0].mxu0
  %341 = vmatprep.mubr.bf16.mxu0 0
  %342 = vmatmul.mubr.bf16.gmra.mrb[0].mxu0 %v242
  %v343 = vpop.f32.mrb[0].mxu0
  %v344 = vadd.f32 0.0, %v343
  %v345 = vpop.f32.mrb[0].mxu0
  %v346 = vpop.f32.mrb[0].mxu0
  %v347 = vadd.f32 0.0, %v346
  %v348 = vpop.f32.mrb[0].mxu0
  %349 = vmatprep.mubr.bf16.mxu0 0
  %350 = vmatmul.mubr.bf16.gmra.mrb[0].mxu0 %v245
  %v351 = vpop.f32.mrb[0].mxu0
  %v352 = vadd.f32 0.0, %v351
  %v353 = vpop.f32.mrb[0].mxu0
  %v354 = vpop.f32.mrb[0].mxu0
  %v355 = vadd.f32 0.0, %v354
  %v356 = vpop.f32.mrb[0].mxu0
  %357 = vmatprep.mubr.bf16.mxu0 0
  %358 = vmatmul.mubr.bf16.gmra.mrb[0].mxu0 %v248
  %v359 = vpop.f32.mrb[0].mxu0
  %v360 = vadd.f32 0.0, %v359
  %v361 = vpop.f32.mrb[0].mxu0
  %v362 = vpop.f32.mrb[0].mxu0
  %v363 = vadd.f32 0.0, %v362
  %v364 = vpop.f32.mrb[0].mxu0
  %365 = vmatprep.mubr.bf16.mxu0 0
  %366 = vmatmul.mubr.bf16.gmra.mrb[0].mxu0 %v251
  %v367 = vpop.f32.mrb[0].mxu0
  %v368 = vadd.f32 0.0, %v367
  %v369 = vpop.f32.mrb[0].mxu0
  %v370 = vpop.f32.mrb[0].mxu0
  %v371 = vadd.f32 0.0, %v370
  %v372 = vpop.f32.mrb[0].mxu0
  %373 = vmatprep.mubr.bf16.mxu0 0
  %374 = vmatmul.mubr.bf16.gmra.mrb[0].mxu0 %v254
  %v375 = vpop.f32.mrb[0].mxu0
  %v376 = vadd.f32 0.0, %v375
  %v377 = vpop.f32.mrb[0].mxu0
  %v378 = vpop.f32.mrb[0].mxu0
  %v379 = vadd.f32 0.0, %v378
  %v380 = vpop.f32.mrb[0].mxu0
  %381 = vmatprep.mubr.bf16.mxu0 0
  %382 = vmatmul.mubr.bf16.gmra.mrb[0].mxu0 %v257
  %v383 = vpop.f32.mrb[0].mxu0
  %v384 = vadd.f32 0.0, %v383
  %v385 = vpop.f32.mrb[0].mxu0
  %v386 = vpop.f32.mrb[0].mxu0
  %v387 = vadd.f32 0.0, %v386
  %v388 = vpop.f32.mrb[0].mxu0
  %389 = vmatprep.mubr.bf16.mxu0 0
  %390 = vmatmul.mubr.bf16.gmra.mrb[0].mxu0 %v260
  %v391 = vpop.f32.mrb[0].mxu0
  %v392 = vadd.f32 0.0, %v391
  %v393 = vpop.f32.mrb[0].mxu0
  %v394 = vpop.f32.mrb[0].mxu0
  %v395 = vadd.f32 0.0, %v394
  %v396 = vpop.f32.mrb[0].mxu0
  %397 = vmatprep.mubr.bf16.mxu0 0
  %398 = vmatmul.mubr.bf16.gmra.mrb[0].mxu0 %v263
  %v399 = vpop.f32.mrb[0].mxu0
  %v400 = vadd.f32 0.0, %v399
  %v401 = vpop.f32.mrb[0].mxu0
  %v402 = vpop.f32.mrb[0].mxu0
  %v403 = vadd.f32 0.0, %v402
  %v404 = vpop.f32.mrb[0].mxu0
  %405 = vmatprep.mubr.bf16.mxu0 0
  %406 = vmatmul.mubr.bf16.gmra.mrb[0].mxu0 %v266
  %v407 = vpop.f32.mrb[0].mxu0
  %v408 = vadd.f32 0.0, %v407
  %v409 = vpop.f32.mrb[0].mxu0
  %v410 = vpop.f32.mrb[0].mxu0
  %v411 = vadd.f32 0.0, %v410
  %v412 = vpop.f32.mrb[0].mxu0
  %413 = vmatprep.mubr.bf16.mxu0 0
  %414 = vmatmul.mubr.bf16.gmra.mrb[0].mxu0 %v269
  %v415 = vpop.f32.mrb[0].mxu0
  %v416 = vadd.f32 0.0, %v415
  %v417 = vpop.f32.mrb[0].mxu0
  %v418 = vpop.f32.mrb[0].mxu0
  %v419 = vadd.f32 0.0, %v418
  %v420 = vpop.f32.mrb[0].mxu0
  %421 = vmatprep.mubr.bf16.mxu0 0
  %422 = vmatmul.mubr.bf16.gmra.mrb[0].mxu0 %v272
  %v423 = vpop.f32.mrb[0].mxu0
  %v424 = vadd.f32 0.0, %v423
  %v425 = vpop.f32.mrb[0].mxu0
  %v426 = vpop.f32.mrb[0].mxu0
  %v427 = vadd.f32 0.0, %v426
  %v428 = vpop.f32.mrb[0].mxu0
  %429 = vmatprep.mubr.bf16.mxu0 0
  %430 = vmatmul.mubr.bf16.gmra.mrb[0].mxu0 %v275
  %v431 = vpop.f32.mrb[0].mxu0
  %v432 = vadd.f32 0.0, %v431
  %v433 = vpop.f32.mrb[0].mxu0
  %v434 = vpop.f32.mrb[0].mxu0
  %v435 = vadd.f32 0.0, %v434
  %v436 = vpop.f32.mrb[0].mxu0
  %437 = vdwg.mxu0
  %v438 = vadd.f32 %v52, %v312
  %v439 = vadd.f32 %v53, %v315
  %v440 = vadd.f32 %v54, %v320
  %v441 = vadd.f32 %v55, %v323
  %v442 = vadd.f32 %v56, %v328
  %v443 = vadd.f32 %v57, %v331
  %v444 = vadd.f32 %v58, %v336
  %v445 = vadd.f32 %v59, %v339
  %v446 = vadd.f32 %v60, %v344
  %v447 = vadd.f32 %v61, %v347
  %v448 = vadd.f32 %v62, %v352
  %v449 = vadd.f32 %v63, %v355
  %v450 = vadd.f32 %v64, %v360
  %v451 = vadd.f32 %v65, %v363
  %v452 = vadd.f32 %v66, %v368
  %v453 = vadd.f32 %v67, %v371
  %v454 = vadd.f32 %v68, %v376
  %v455 = vadd.f32 %v69, %v379
  %v456 = vadd.f32 %v70, %v384
  %v457 = vadd.f32 %v71, %v387
  %v458 = vadd.f32 %v72, %v392
  %v459 = vadd.f32 %v73, %v395
  %v460 = vadd.f32 %v74, %v400
  %v461 = vadd.f32 %v75, %v403
  %v462 = vadd.f32 %v76, %v408
  %v463 = vadd.f32 %v77, %v411
  %v464 = vadd.f32 %v78, %v416
  %v465 = vadd.f32 %v79, %v419
  %v466 = vadd.f32 %v80, %v424
  %v467 = vadd.f32 %v81, %v427
  %v468 = vadd.f32 %v82, %v432
  %v469 = vadd.f32 %v83, %v435
  %470 = vst.msk [vmem:[#allocation2] sm:$0xff] %vm228, %v438
  %471 = vst.msk [vmem:[#allocation2 + $0x8] sm:$0xff] %vm228, %v439
  %472 = vst.msk [vmem:[#allocation2 + $0x10] sm:$0xff] %vm228, %v440
  %473 = vst.msk [vmem:[#allocation2 + $0x18] sm:$0xff] %vm228, %v441
  %474 = vst.msk [vmem:[#allocation2 + $0x20] sm:$0xff] %vm228, %v442
  %475 = vst.msk [vmem:[#allocation2 + $0x28] sm:$0xff] %vm228, %v443
  %476 = vst.msk [vmem:[#allocation2 + $0x30] sm:$0xff] %vm228, %v444
  %477 = vst.msk [vmem:[#allocation2 + $0x38] sm:$0xff] %vm228, %v445
  %478 = vst.msk [vmem:[#allocation2 + $0x40] sm:$0xff] %vm228, %v446
  %479 = vst.msk [vmem:[#allocation2 + $0x48] sm:$0xff] %vm228, %v447
  %480 = vst.msk [vmem:[#allocation2 + $0x50] sm:$0xff] %vm228, %v448
  %481 = vst.msk [vmem:[#allocation2 + $0x58] sm:$0xff] %vm228, %v449
  %482 = vst.msk [vmem:[#allocation2 + $0x60] sm:$0xff] %vm228, %v450
  %483 = vst.msk [vmem:[#allocation2 + $0x68] sm:$0xff] %vm228, %v451
  %484 = vst.msk [vmem:[#allocation2 + $0x70] sm:$0xff] %vm228, %v452
  %485 = vst.msk [vmem:[#allocation2 + $0x78] sm:$0xff] %vm228, %v453
  %486 = vst.msk [vmem:[#allocation2 + $0x80] sm:$0xff] %vm228, %v454
  %487 = vst.msk [vmem:[#allocation2 + $0x88] sm:$0xff] %vm228, %v455
  %488 = vst.msk [vmem:[#allocation2 + $0x90] sm:$0xff] %vm228, %v456
  %489 = vst.msk [vmem:[#allocation2 + $0x98] sm:$0xff] %vm228, %v457
  %490 = vst.msk [vmem:[#allocation2 + $0xa0] sm:$0xff] %vm228, %v458
  %491 = vst.msk [vmem:[#allocation2 + $0xa8] sm:$0xff] %vm228, %v459
  %492 = vst.msk [vmem:[#allocation2 + $0xb0] sm:$0xff] %vm228, %v460
  %493 = vst.msk [vmem:[#allocation2 + $0xb8] sm:$0xff] %vm228, %v461
  %494 = vst.msk [vmem:[#allocation2 + $0xc0] sm:$0xff] %vm228, %v462
  %495 = vst.msk [vmem:[#allocation2 + $0xc8] sm:$0xff] %vm228, %v463
  %496 = vst.msk [vmem:[#allocation2 + $0xd0] sm:$0xff] %vm228, %v464
  %497 = vst.msk [vmem:[#allocation2 + $0xd8] sm:$0xff] %vm228, %v465
  %498 = vst.msk [vmem:[#allocation2 + $0xe0] sm:$0xff] %vm228, %v466
  %499 = vst.msk [vmem:[#allocation2 + $0xe8] sm:$0xff] %vm228, %v467
  %500 = vst.msk [vmem:[#allocation2 + $0xf0] sm:$0xff] %vm228, %v468
  %501 = vst.msk [vmem:[#allocation2 + $0xf8] sm:$0xff] %vm228, %v469
  // Predicated region
  $region18: #{warp_attn_forward.15} parent=0 // pred_check
    %p502 = pneg %p15
  $region19: #{warp_attn_forward.15} parent=0 // pred_check_branch
    %504 = sbr.rel (%p502) target = $region21
  $region20: #{warp_attn_forward.15} parent=0 // pred_region
    %v505 = vld [vmem:[#allocation2] sm:$0xff]
    %v506 = vld [vmem:[#allocation2 + $0x8] sm:$0xff]
    %v507 = vld [vmem:[#allocation2 + $0x10] sm:$0xff]
    %v508 = vld [vmem:[#allocation2 + $0x18] sm:$0xff]
    %v509 = vld [vmem:[#allocation2 + $0x20] sm:$0xff]
    %v510 = vld [vmem:[#allocation2 + $0x28] sm:$0xff]
    %v511 = vld [vmem:[#allocation2 + $0x30] sm:$0xff]
    %v512 = vld [vmem:[#allocation2 + $0x38] sm:$0xff]
    %v513 = vld [vmem:[#allocation2 + $0x40] sm:$0xff]
    %v514 = vld [vmem:[#allocation2 + $0x48] sm:$0xff]
    %v515 = vld [vmem:[#allocation2 + $0x50] sm:$0xff]
    %v516 = vld [vmem:[#allocation2 + $0x58] sm:$0xff]
    %v517 = vld [vmem:[#allocation2 + $0x60] sm:$0xff]
    %v518 = vld [vmem:[#allocation2 + $0x68] sm:$0xff]
    %v519 = vld [vmem:[#allocation2 + $0x70] sm:$0xff]
    %v520 = vld [vmem:[#allocation2 + $0x78] sm:$0xff]
    %v521 = vld [vmem:[#allocation2 + $0x80] sm:$0xff]
    %v522 = vld [vmem:[#allocation2 + $0x88] sm:$0xff]
    %v523 = vld [vmem:[#allocation2 + $0x90] sm:$0xff]
    %v524 = vld [vmem:[#allocation2 + $0x98] sm:$0xff]
    %v525 = vld [vmem:[#allocation2 + $0xa0] sm:$0xff]
    %v526 = vld [vmem:[#allocation2 + $0xa8] sm:$0xff]
    %v527 = vld [vmem:[#allocation2 + $0xb0] sm:$0xff]
    %v528 = vld [vmem:[#allocation2 + $0xb8] sm:$0xff]
    %v529 = vld [vmem:[#allocation2 + $0xc0] sm:$0xff]
    %v530 = vld [vmem:[#allocation2 + $0xc8] sm:$0xff]
    %v531 = vld [vmem:[#allocation2 + $0xd0] sm:$0xff]
    %v532 = vld [vmem:[#allocation2 + $0xd8] sm:$0xff]
    %v533 = vld [vmem:[#allocation2 + $0xe0] sm:$0xff]
    %v534 = vld [vmem:[#allocation2 + $0xe8] sm:$0xff]
    %v535 = vld [vmem:[#allocation2 + $0xf0] sm:$0xff]
    %v536 = vld [vmem:[#allocation2 + $0xf8] sm:$0xff]
    %v537 = vld [vmem:[%s2] sm:$0x1]
    %v539 = vlaneseq
    %v540 = vshrl.u32 %v539, 7
    %v541 = vsub.s32 0, %v540
    %v542 = vrot.slane %v537, %v541
    %v544 = vadd.f32 %v505, %v542
    %v545 = vadd.f32 %v506, %v542
    %v546 = vadd.f32 %v507, %v542
    %v547 = vadd.f32 %v508, %v542
    %v548 = vadd.f32 %v509, %v542
    %v549 = vadd.f32 %v510, %v542
    %v550 = vadd.f32 %v511, %v542
    %v551 = vadd.f32 %v512, %v542
    %v552 = vadd.f32 %v513, %v542
    %v553 = vadd.f32 %v514, %v542
    %v554 = vadd.f32 %v515, %v542
    %v555 = vadd.f32 %v516, %v542
    %v556 = vadd.f32 %v517, %v542
    %v557 = vadd.f32 %v518, %v542
    %v558 = vadd.f32 %v519, %v542
    %v559 = vadd.f32 %v520, %v542
    %v560 = vadd.f32 %v521, %v542
    %v561 = vadd.f32 %v522, %v542
    %v562 = vadd.f32 %v523, %v542
    %v563 = vadd.f32 %v524, %v542
    %v564 = vadd.f32 %v525, %v542
    %v565 = vadd.f32 %v526, %v542
    %v566 = vadd.f32 %v527, %v542
    %v567 = vadd.f32 %v528, %v542
    %v568 = vadd.f32 %v529, %v542
    %v569 = vadd.f32 %v530, %v542
    %v570 = vadd.f32 %v531, %v542
    %v571 = vadd.f32 %v532, %v542
    %v572 = vadd.f32 %v533, %v542
    %v573 = vadd.f32 %v534, %v542
    %v574 = vadd.f32 %v535, %v542
    %v575 = vadd.f32 %v536, %v542
    %v576 = vpack.c.bf16 %v545, %v544
    %v577 = vpack.c.bf16 %v547, %v546
    %v578 = vpack.c.bf16 %v549, %v548
    %v579 = vpack.c.bf16 %v551, %v550
    %v580 = vpack.c.bf16 %v553, %v552
    %v581 = vpack.c.bf16 %v555, %v554
    %v582 = vpack.c.bf16 %v557, %v556
    %v583 = vpack.c.bf16 %v559, %v558
    %v584 = vpack.c.bf16 %v561, %v560
    %v585 = vpack.c.bf16 %v563, %v562
    %v586 = vpack.c.bf16 %v565, %v564
    %v587 = vpack.c.bf16 %v567, %v566
    %v588 = vpack.c.bf16 %v569, %v568
    %v589 = vpack.c.bf16 %v571, %v570
    %v590 = vpack.c.bf16 %v573, %v572
    %v591 = vpack.c.bf16 %v575, %v574
    %v608 = vunpack.c.l.b16 %v576
    %v609 = vunpack.c.h.b16 %v576
    %v610 = vunpack.c.l.b16 %v577
    %v611 = vunpack.c.h.b16 %v577
    %v612 = vunpack.c.l.b16 %v578
    %v613 = vunpack.c.h.b16 %v578
    %v614 = vunpack.c.l.b16 %v579
    %v615 = vunpack.c.h.b16 %v579
    %v616 = vunpack.c.l.b16 %v580
    %v617 = vunpack.c.h.b16 %v580
    %v618 = vunpack.c.l.b16 %v581
    %v619 = vunpack.c.h.b16 %v581
    %v620 = vunpack.c.l.b16 %v582
    %v621 = vunpack.c.h.b16 %v582
    %v622 = vunpack.c.l.b16 %v583
    %v623 = vunpack.c.h.b16 %v583
    %v624 = vunpack.c.l.b16 %v584
    %v625 = vunpack.c.h.b16 %v584
    %v626 = vunpack.c.l.b16 %v585
    %v627 = vunpack.c.h.b16 %v585
    %v628 = vunpack.c.l.b16 %v586
    %v629 = vunpack.c.h.b16 %v586
    %v630 = vunpack.c.l.b16 %v587
    %v631 = vunpack.c.h.b16 %v587
    %v632 = vunpack.c.l.b16 %v588
    %v633 = vunpack.c.h.b16 %v588
    %v634 = vunpack.c.l.b16 %v589
    %v635 = vunpack.c.h.b16 %v589
    %v636 = vunpack.c.l.b16 %v590
    %v637 = vunpack.c.h.b16 %v590
    %v638 = vunpack.c.l.b16 %v591
    %v639 = vunpack.c.h.b16 %v591
    %v640 = vpack.c.b16 %v608, %v608
    %v641 = vpack.c.b16 %v609, %v609
    %v642 = vpack.c.b16 %v610, %v610
    %v643 = vpack.c.b16 %v611, %v611
    %v644 = vpack.c.b16 %v612, %v612
    %v645 = vpack.c.b16 %v613, %v613
    %v646 = vpack.c.b16 %v614, %v614
    %v647 = vpack.c.b16 %v615, %v615
    %v648 = vpack.c.b16 %v616, %v616
    %v649 = vpack.c.b16 %v617, %v617
    %v650 = vpack.c.b16 %v618, %v618
    %v651 = vpack.c.b16 %v619, %v619
    %v652 = vpack.c.b16 %v620, %v620
    %v653 = vpack.c.b16 %v621, %v621
    %v654 = vpack.c.b16 %v622, %v622
    %v655 = vpack.c.b16 %v623, %v623
    %v656 = vpack.c.b16 %v624, %v624
    %v657 = vpack.c.b16 %v625, %v625
    %v658 = vpack.c.b16 %v626, %v626
    %v659 = vpack.c.b16 %v627, %v627
    %v660 = vpack.c.b16 %v628, %v628
    %v661 = vpack.c.b16 %v629, %v629
    %v662 = vpack.c.b16 %v630, %v630
    %v663 = vpack.c.b16 %v631, %v631
    %v664 = vpack.c.b16 %v632, %v632
    %v665 = vpack.c.b16 %v633, %v633
    %v666 = vpack.c.b16 %v634, %v634
    %v667 = vpack.c.b16 %v635, %v635
    %v668 = vpack.c.b16 %v636, %v636
    %v669 = vpack.c.b16 %v637, %v637
    %v670 = vpack.c.b16 %v638, %v638
    %v671 = vpack.c.b16 %v639, %v639
    %vm704 = vcmask 519168
    %705 = vst.msk [vmem:[%s3] sm:$0xf] %vm704, %v640
    %706 = vst.msk [vmem:[%s3 + $0x4] sm:$0xf] %vm704, %v641
    %707 = vst.msk [vmem:[%s3 + $0x8] sm:$0xf] %vm704, %v642
    %708 = vst.msk [vmem:[%s3 + $0xc] sm:$0xf] %vm704, %v643
    %709 = vst.msk [vmem:[%s3 + $0x10] sm:$0xf] %vm704, %v644
    %710 = vst.msk [vmem:[%s3 + $0x14] sm:$0xf] %vm704, %v645
    %711 = vst.msk [vmem:[%s3 + $0x18] sm:$0xf] %vm704, %v646
    %712 = vst.msk [vmem:[%s3 + $0x1c] sm:$0xf] %vm704, %v647
    %713 = vst.msk [vmem:[%s3 + $0x20] sm:$0xf] %vm704, %v648
    %714 = vst.msk [vmem:[%s3 + $0x24] sm:$0xf] %vm704, %v649
    %715 = vst.msk [vmem:[%s3 + $0x28] sm:$0xf] %vm704, %v650
    %716 = vst.msk [vmem:[%s3 + $0x2c] sm:$0xf] %vm704, %v651
    %717 = vst.msk [vmem:[%s3 + $0x30] sm:$0xf] %vm704, %v652
    %718 = vst.msk [vmem:[%s3 + $0x34] sm:$0xf] %vm704, %v653
    %719 = vst.msk [vmem:[%s3 + $0x38] sm:$0xf] %vm704, %v654
    %720 = vst.msk [vmem:[%s3 + $0x3c] sm:$0xf] %vm704, %v655
    %721 = vst.msk [vmem:[%s3 + $0x40] sm:$0xf] %vm704, %v656
    %722 = vst.msk [vmem:[%s3 + $0x44] sm:$0xf] %vm704, %v657
    %723 = vst.msk [vmem:[%s3 + $0x48] sm:$0xf] %vm704, %v658
    %724 = vst.msk [vmem:[%s3 + $0x4c] sm:$0xf] %vm704, %v659
    %725 = vst.msk [vmem:[%s3 + $0x50] sm:$0xf] %vm704, %v660
    %726 = vst.msk [vmem:[%s3 + $0x54] sm:$0xf] %vm704, %v661
    %727 = vst.msk [vmem:[%s3 + $0x58] sm:$0xf] %vm704, %v662
    %728 = vst.msk [vmem:[%s3 + $0x5c] sm:$0xf] %vm704, %v663
    %729 = vst.msk [vmem:[%s3 + $0x60] sm:$0xf] %vm704, %v664
    %730 = vst.msk [vmem:[%s3 + $0x64] sm:$0xf] %vm704, %v665
    %731 = vst.msk [vmem:[%s3 + $0x68] sm:$0xf] %vm704, %v666
    %732 = vst.msk [vmem:[%s3 + $0x6c] sm:$0xf] %vm704, %v667
    %733 = vst.msk [vmem:[%s3 + $0x70] sm:$0xf] %vm704, %v668
    %734 = vst.msk [vmem:[%s3 + $0x74] sm:$0xf] %vm704, %v669
    %735 = vst.msk [vmem:[%s3 + $0x78] sm:$0xf] %vm704, %v670
    %736 = vst.msk [vmem:[%s3 + $0x7c] sm:$0xf] %vm704, %v671
  $region21: #{warp_attn_forward.15} parent=0 // pred_fallthru
    _
  // Predicated region
  $region22: #{warp_attn_forward.15} parent=0 // pred_check
    _
  $region23: #{warp_attn_forward.15} parent=0 // pred_check_branch
    %738 = sbr.rel (0) target = $region25
  $region24: #{warp_attn_forward.15} parent=0 // pred_region
    _
  $region25: #{warp_attn_forward.15} parent=0 // pred_fallthru
    _
  // Predicated region
  $region26: #{warp_attn_forward.15} parent=0 // pred_check
    _
  $region27: #{warp_attn_forward.15} parent=0 // pred_check_branch
    %740 = sbr.rel (0) target = $region29
  $region28: #{warp_attn_forward.15} parent=0 // pred_region
    _
  $region29: #{warp_attn_forward.15} parent=0 // pred_fallthru
    _

// kernel: warp_attn_forward.13
$region0: #{warp_attn_forward.13}
  #allocation0 [shape = 'u32[]', space=smem, size = 0x4, offset = 0x4, fixed_abs, tag = 'smem constant byte address 0x4 - core index']
  #allocation1 [shape = 'u32[144,128]{1,0:T(1,128)}', space=vmem, size = 0x12000, scoped, tag = 'internal scratch']
  #allocation2 [shape = 'f32[256,64]{1,0:T(8,128)}', space=vmem, size = 0x20000, scoped, tag = 'scratch operand']
  %s0 = inlined_call_operand.vmem [shape: bf16[256,64], index: 0, kind: input, shape index: {}]
  %s1 = inlined_call_operand.vmem [shape: bf16[64,64], index: 1, kind: input, shape index: {}]
  %s2 = inlined_call_operand.vmem [shape: f32[1,64], index: 2, kind: input, shape index: {}]
  %s3 = inlined_call_operand.vmem [shape: f32[256,64], index: 3, kind: output, shape index: {}]
  %s4 = sld [smem:[#allocation0]]
  $region30: #{warp_attn_forward.13} parent=0
    _
  %s6 = ssub.s32 1, %s4
  %s7 = scalar_select 0, %s6, %s4
  // Predicated region
  $region2: #{warp_attn_forward.13} parent=0 // pred_check
    _
  $region3: #{warp_attn_forward.13} parent=0 // pred_check_branch
    %9 = sbr.rel (0) target = $region5
  $region4: #{warp_attn_forward.13} parent=0 // pred_region
    _
  $region5: #{warp_attn_forward.13} parent=0 // pred_fallthru
    _
  // Predicated region
  $region6: #{warp_attn_forward.13} parent=0 // pred_check
    _
  $region7: #{warp_attn_forward.13} parent=0 // pred_check_branch
    %11 = sbr.rel (0) target = $region9
  $region8: #{warp_attn_forward.13} parent=0 // pred_region
    _
  $region9: #{warp_attn_forward.13} parent=0 // pred_fallthru
    _
  // Predicated region
  $region10: #{warp_attn_forward.13} parent=0 // pred_check
    _
  $region11: #{warp_attn_forward.13} parent=0 // pred_check_branch
    %13 = sbr.rel (0) target = $region13
  $region12: #{warp_attn_forward.13} parent=0 // pred_region
    _
  $region13: #{warp_attn_forward.13} parent=0 // pred_fallthru
    _
  %p15 = scmp.eq.s32.totalorder 0, 0
  // Predicated region
  $region14: #{warp_attn_forward.13} parent=0 // pred_check
    %p16 = pneg %p15
  $region15: #{warp_attn_forward.13} parent=0 // pred_check_branch
    %18 = sbr.rel (%p16) target = $region17
  $region16: #{warp_attn_forward.13} parent=0 // pred_region
    %vm19 = vcmask 523264
    %20 = vst.msk [vmem:[#allocation2] sm:$0xff] %vm19, 0.0
    %21 = vst.msk [vmem:[#allocation2 + $0x8] sm:$0xff] %vm19, 0.0
    %22 = vst.msk [vmem:[#allocation2 + $0x10] sm:$0xff] %vm19, 0.0
    %23 = vst.msk [vmem:[#allocation2 + $0x18] sm:$0xff] %vm19, 0.0
    %24 = vst.msk [vmem:[#allocation2 + $0x20] sm:$0xff] %vm19, 0.0
    %25 = vst.msk [vmem:[#allocation2 + $0x28] sm:$0xff] %vm19, 0.0
    %26 = vst.msk [vmem:[#allocation2 + $0x30] sm:$0xff] %vm19, 0.0
    %27 = vst.msk [vmem:[#allocation2 + $0x38] sm:$0xff] %vm19, 0.0
    %28 = vst.msk [vmem:[#allocation2 + $0x40] sm:$0xff] %vm19, 0.0
    %29 = vst.msk [vmem:[#allocation2 + $0x48] sm:$0xff] %vm19, 0.0
    %30 = vst.msk [vmem:[#allocation2 + $0x50] sm:$0xff] %vm19, 0.0
    %31 = vst.msk [vmem:[#allocation2 + $0x58] sm:$0xff] %vm19, 0.0
    %32 = vst.msk [vmem:[#allocation2 + $0x60] sm:$0xff] %vm19, 0.0
    %33 = vst.msk [vmem:[#allocation2 + $0x68] sm:$0xff] %vm19, 0.0
    %34 = vst.msk [vmem:[#allocation2 + $0x70] sm:$0xff] %vm19, 0.0
    %35 = vst.msk [vmem:[#allocation2 + $0x78] sm:$0xff] %vm19, 0.0
    %36 = vst.msk [vmem:[#allocation2 + $0x80] sm:$0xff] %vm19, 0.0
    %37 = vst.msk [vmem:[#allocation2 + $0x88] sm:$0xff] %vm19, 0.0
    %38 = vst.msk [vmem:[#allocation2 + $0x90] sm:$0xff] %vm19, 0.0
    %39 = vst.msk [vmem:[#allocation2 + $0x98] sm:$0xff] %vm19, 0.0
    %40 = vst.msk [vmem:[#allocation2 + $0xa0] sm:$0xff] %vm19, 0.0
    %41 = vst.msk [vmem:[#allocation2 + $0xa8] sm:$0xff] %vm19, 0.0
    %42 = vst.msk [vmem:[#allocation2 + $0xb0] sm:$0xff] %vm19, 0.0
    %43 = vst.msk [vmem:[#allocation2 + $0xb8] sm:$0xff] %vm19, 0.0
    %44 = vst.msk [vmem:[#allocation2 + $0xc0] sm:$0xff] %vm19, 0.0
    %45 = vst.msk [vmem:[#allocation2 + $0xc8] sm:$0xff] %vm19, 0.0
    %46 = vst.msk [vmem:[#allocation2 + $0xd0] sm:$0xff] %vm19, 0.0
    %47 = vst.msk [vmem:[#allocation2 + $0xd8] sm:$0xff] %vm19, 0.0
    %48 = vst.msk [vmem:[#allocation2 + $0xe0] sm:$0xff] %vm19, 0.0
    %49 = vst.msk [vmem:[#allocation2 + $0xe8] sm:$0xff] %vm19, 0.0
    %50 = vst.msk [vmem:[#allocation2 + $0xf0] sm:$0xff] %vm19, 0.0
    %51 = vst.msk [vmem:[#allocation2 + $0xf8] sm:$0xff] %vm19, 0.0
  $region17: #{warp_attn_forward.13} parent=0 // pred_fallthru
    _
  %v52 = vld [vmem:[#allocation2] sm:$0xff]
  %v53 = vld [vmem:[#allocation2 + $0x8] sm:$0xff]
  %v54 = vld [vmem:[#allocation2 + $0x10] sm:$0xff]
  %v55 = vld [vmem:[#allocation2 + $0x18] sm:$0xff]
  %v56 = vld [vmem:[#allocation2 + $0x20] sm:$0xff]
  %v57 = vld [vmem:[#allocation2 + $0x28] sm:$0xff]
  %v58 = vld [vmem:[#allocation2 + $0x30] sm:$0xff]
  %v59 = vld [vmem:[#allocation2 + $0x38] sm:$0xff]
  %v60 = vld [vmem:[#allocation2 + $0x40] sm:$0xff]
  %v61 = vld [vmem:[#allocation2 + $0x48] sm:$0xff]
  %v62 = vld [vmem:[#allocation2 + $0x50] sm:$0xff]
  %v63 = vld [vmem:[#allocation2 + $0x58] sm:$0xff]
  %v64 = vld [vmem:[#allocation2 + $0x60] sm:$0xff]
  %v65 = vld [vmem:[#allocation2 + $0x68] sm:$0xff]
  %v66 = vld [vmem:[#allocation2 + $0x70] sm:$0xff]
  %v67 = vld [vmem:[#allocation2 + $0x78] sm:$0xff]
  %v68 = vld [vmem:[#allocation2 + $0x80] sm:$0xff]
  %v69 = vld [vmem:[#allocation2 + $0x88] sm:$0xff]
  %v70 = vld [vmem:[#allocation2 + $0x90] sm:$0xff]
  %v71 = vld [vmem:[#allocation2 + $0x98] sm:$0xff]
  %v72 = vld [vmem:[#allocation2 + $0xa0] sm:$0xff]
  %v73 = vld [vmem:[#allocation2 + $0xa8] sm:$0xff]
  %v74 = vld [vmem:[#allocation2 + $0xb0] sm:$0xff]
  %v75 = vld [vmem:[#allocation2 + $0xb8] sm:$0xff]
  %v76 = vld [vmem:[#allocation2 + $0xc0] sm:$0xff]
  %v77 = vld [vmem:[#allocation2 + $0xc8] sm:$0xff]
  %v78 = vld [vmem:[#allocation2 + $0xd0] sm:$0xff]
  %v79 = vld [vmem:[#allocation2 + $0xd8] sm:$0xff]
  %v80 = vld [vmem:[#allocation2 + $0xe0] sm:$0xff]
  %v81 = vld [vmem:[#allocation2 + $0xe8] sm:$0xff]
  %v82 = vld [vmem:[#allocation2 + $0xf0] sm:$0xff]
  %v83 = vld [vmem:[#allocation2 + $0xf8] sm:$0xff]
  %v84 = vld [vmem:[%s0] sm:$0xf]
  %v85 = vld [vmem:[%s0 + $0x4] sm:$0xf]
  %v86 = vld [vmem:[%s0 + $0x8] sm:$0xf]
  %v87 = vld [vmem:[%s0 + $0xc] sm:$0xf]
  %v88 = vld [vmem:[%s0 + $0x10] sm:$0xf]
  %v89 = vld [vmem:[%s0 + $0x14] sm:$0xf]
  %v90 = vld [vmem:[%s0 + $0x18] sm:$0xf]
  %v91 = vld [vmem:[%s0 + $0x1c] sm:$0xf]
  %v92 = vld [vmem:[%s0 + $0x20] sm:$0xf]
  %v93 = vld [vmem:[%s0 + $0x24] sm:$0xf]
  %v94 = vld [vmem:[%s0 + $0x28] sm:$0xf]
  %v95 = vld [vmem:[%s0 + $0x2c] sm:$0xf]
  %v96 = vld [vmem:[%s0 + $0x30] sm:$0xf]
  %v97 = vld [vmem:[%s0 + $0x34] sm:$0xf]
  %v98 = vld [vmem:[%s0 + $0x38] sm:$0xf]
  %v99 = vld [vmem:[%s0 + $0x3c] sm:$0xf]
  %v100 = vld [vmem:[%s0 + $0x40] sm:$0xf]
  %v101 = vld [vmem:[%s0 + $0x44] sm:$0xf]
  %v102 = vld [vmem:[%s0 + $0x48] sm:$0xf]
  %v103 = vld [vmem:[%s0 + $0x4c] sm:$0xf]
  %v104 = vld [vmem:[%s0 + $0x50] sm:$0xf]
  %v105 = vld [vmem:[%s0 + $0x54] sm:$0xf]
  %v106 = vld [vmem:[%s0 + $0x58] sm:$0xf]
  %v107 = vld [vmem:[%s0 + $0x5c] sm:$0xf]
  %v108 = vld [vmem:[%s0 + $0x60] sm:$0xf]
  %v109 = vld [vmem:[%s0 + $0x64] sm:$0xf]
  %v110 = vld [vmem:[%s0 + $0x68] sm:$0xf]
  %v111 = vld [vmem:[%s0 + $0x6c] sm:$0xf]
  %v112 = vld [vmem:[%s0 + $0x70] sm:$0xf]
  %v113 = vld [vmem:[%s0 + $0x74] sm:$0xf]
  %v114 = vld [vmem:[%s0 + $0x78] sm:$0xf]
  %v115 = vld [vmem:[%s0 + $0x7c] sm:$0xf]
  %v116 = vld [vmem:[%s1] sm:$0xf]
  %v117 = vld [vmem:[%s1 + $0x4] sm:$0xf]
  %v118 = vld [vmem:[%s1 + $0x8] sm:$0xf]
  %v119 = vld [vmem:[%s1 + $0xc] sm:$0xf]
  %v120 = vld [vmem:[%s1 + $0x10] sm:$0xf]
  %v121 = vld [vmem:[%s1 + $0x14] sm:$0xf]
  %v122 = vld [vmem:[%s1 + $0x18] sm:$0xf]
  %v123 = vld [vmem:[%s1 + $0x1c] sm:$0xf]
  %v156 = vunpack.c.l.b16 %v84
  %v157 = vunpack.c.l.b16 %v85
  %v158 = vunpack.c.l.b16 %v86
  %v159 = vunpack.c.l.b16 %v87
  %v160 = vunpack.c.l.b16 %v88
  %v161 = vunpack.c.l.b16 %v89
  %v162 = vunpack.c.l.b16 %v90
  %v163 = vunpack.c.l.b16 %v91
  %v164 = vunpack.c.l.b16 %v92
  %v165 = vunpack.c.l.b16 %v93
  %v166 = vunpack.c.l.b16 %v94
  %v167 = vunpack.c.l.b16 %v95
  %v168 = vunpack.c.l.b16 %v96
  %v169 = vunpack.c.l.b16 %v97
  %v170 = vunpack.c.l.b16 %v98
  %v171 = vunpack.c.l.b16 %v99
  %v172 = vunpack.c.l.b16 %v100
  %v173 = vunpack.c.l.b16 %v101
  %v174 = vunpack.c.l.b16 %v102
  %v175 = vunpack.c.l.b16 %v103
  %v176 = vunpack.c.l.b16 %v104
  %v177 = vunpack.c.l.b16 %v105
  %v178 = vunpack.c.l.b16 %v106
  %v179 = vunpack.c.l.b16 %v107
  %v180 = vunpack.c.l.b16 %v108
  %v181 = vunpack.c.l.b16 %v109
  %v182 = vunpack.c.l.b16 %v110
  %v183 = vunpack.c.l.b16 %v111
  %v184 = vunpack.c.l.b16 %v112
  %v185 = vunpack.c.l.b16 %v113
  %v186 = vunpack.c.l.b16 %v114
  %v187 = vunpack.c.l.b16 %v115
  %v188 = vpack.c.b16 %v157, %v156
  %v189 = vpack.c.b16 %v159, %v158
  %v190 = vpack.c.b16 %v161, %v160
  %v191 = vpack.c.b16 %v163, %v162
  %v192 = vpack.c.b16 %v165, %v164
  %v193 = vpack.c.b16 %v167, %v166
  %v194 = vpack.c.b16 %v169, %v168
  %v195 = vpack.c.b16 %v171, %v170
  %v196 = vpack.c.b16 %v173, %v172
  %v197 = vpack.c.b16 %v175, %v174
  %v198 = vpack.c.b16 %v177, %v176
  %v199 = vpack.c.b16 %v179, %v178
  %v200 = vpack.c.b16 %v181, %v180
  %v201 = vpack.c.b16 %v183, %v182
  %v202 = vpack.c.b16 %v185, %v184
  %v203 = vpack.c.b16 %v187, %v186
  %v212 = vunpack.c.l.b16 %v116
  %v213 = vunpack.c.l.b16 %v117
  %v214 = vunpack.c.l.b16 %v118
  %v215 = vunpack.c.l.b16 %v119
  %v216 = vunpack.c.l.b16 %v120
  %v217 = vunpack.c.l.b16 %v121
  %v218 = vunpack.c.l.b16 %v122
  %v219 = vunpack.c.l.b16 %v123
  %v220 = vpack.c.b16 %v213, %v212
  %v221 = vpack.c.b16 %v215, %v214
  %v222 = vpack.c.b16 %v217, %v216
  %v223 = vpack.c.b16 %v219, %v218
  %vm228 = vcmask 523264
  %v230 = vsel %vm228, %v188, 0
  %v233 = vsel %vm228, %v189, 0
  %v236 = vsel %vm228, %v190, 0
  %v239 = vsel %vm228, %v191, 0
  %v242 = vsel %vm228, %v192, 0
  %v245 = vsel %vm228, %v193, 0
  %v248 = vsel %vm228, %v194, 0
  %v251 = vsel %vm228, %v195, 0
  %v254 = vsel %vm228, %v196, 0
  %v257 = vsel %vm228, %v197, 0
  %v260 = vsel %vm228, %v198, 0
  %v263 = vsel %vm228, %v199, 0
  %v266 = vsel %vm228, %v200, 0
  %v269 = vsel %vm228, %v201, 0
  %v272 = vsel %vm228, %v202, 0
  %v275 = vsel %vm228, %v203, 0
  %277 = vmatprep.subr.bf16.mxu0 0
  %278 = vmatpush1.bf16.msra.mxu0 %v220
  %279 = vmatprep.subr.bf16.mxu0 0
  %280 = vmatpush1.bf16.msra.mxu0 %v221
  %281 = vmatprep.subr.bf16.mxu0 0
  %282 = vmatpush1.bf16.msra.mxu0 %v222
  %283 = vmatprep.subr.bf16.mxu0 0
  %284 = vmatpush1.bf16.msra.mxu0 %v223
  %285 = vmatprep.subr.bf16.mxu0 0
  %286 = vmatpush1.bf16.msra.mxu0 0
  %287 = vmatprep.subr.bf16.mxu0 0
  %288 = vmatpush1.bf16.msra.mxu0 0
  %289 = vmatprep.subr.bf16.mxu0 0
  %290 = vmatpush1.bf16.msra.mxu0 0
  %291 = vmatprep.subr.bf16.mxu0 0
  %292 = vmatpush1.bf16.msra.mxu0 0
  %293 = vmatprep.subr.bf16.mxu0 0
  %294 = vmatpush1.bf16.msra.mxu0 0
  %295 = vmatprep.subr.bf16.mxu0 0
  %296 = vmatpush1.bf16.msra.mxu0 0
  %297 = vmatprep.subr.bf16.mxu0 0
  %298 = vmatpush1.bf16.msra.mxu0 0
  %299 = vmatprep.subr.bf16.mxu0 0
  %300 = vmatpush1.bf16.msra.mxu0 0
  %301 = vmatprep.subr.bf16.mxu0 0
  %302 = vmatpush1.bf16.msra.mxu0 0
  %303 = vmatprep.subr.bf16.mxu0 0
  %304 = vmatpush1.bf16.msra.mxu0 0
  %305 = vmatprep.subr.bf16.mxu0 0
  %306 = vmatpush1.bf16.msra.mxu0 0
  %307 = vmatprep.subr.bf16.mxu0 0
  %308 = vmatpush1.bf16.msra.mxu0 0
  %309 = vmatprep.mubr.bf16.mxu0 0
  %310 = vmatmul.mubr.bf16.gmra.mrb[0].mxu0 %v230
  %v311 = vpop.f32.mrb[0].mxu0
  %v312 = vadd.f32 0.0, %v311
  %v313 = vpop.f32.mrb[0].mxu0
  %v314 = vpop.f32.mrb[0].mxu0
  %v315 = vadd.f32 0.0, %v314
  %v316 = vpop.f32.mrb[0].mxu0
  %317 = vmatprep.mubr.bf16.mxu0 0
  %318 = vmatmul.mubr.bf16.gmra.mrb[0].mxu0 %v233
  %v319 = vpop.f32.mrb[0].mxu0
  %v320 = vadd.f32 0.0, %v319
  %v321 = vpop.f32.mrb[0].mxu0
  %v322 = vpop.f32.mrb[0].mxu0
  %v323 = vadd.f32 0.0, %v322
  %v324 = vpop.f32.mrb[0].mxu0
  %325 = vmatprep.mubr.bf16.mxu0 0
  %326 = vmatmul.mubr.bf16.gmra.mrb[0].mxu0 %v236
  %v327 = vpop.f32.mrb[0].mxu0
  %v328 = vadd.f32 0.0, %v327
  %v329 = vpop.f32.mrb[0].mxu0
  %v330 = vpop.f32.mrb[0].mxu0
  %v331 = vadd.f32 0.0, %v330
  %v332 = vpop.f32.mrb[0].mxu0
  %333 = vmatprep.mubr.bf16.mxu0 0
  %334 = vmatmul.mubr.bf16.gmra.mrb[0].mxu0 %v239
  %v335 = vpop.f32.mrb[0].mxu0
  %v336 = vadd.f32 0.0, %v335
  %v337 = vpop.f32.mrb[0].mxu0
  %v338 = vpop.f32.mrb[0].mxu0
  %v339 = vadd.f32 0.0, %v338
  %v340 = vpop.f32.mrb[0].mxu0
  %341 = vmatprep.mubr.bf16.mxu0 0
  %342 = vmatmul.mubr.bf16.gmra.mrb[0].mxu0 %v242
  %v343 = vpop.f32.mrb[0].mxu0
  %v344 = vadd.f32 0.0, %v343
  %v345 = vpop.f32.mrb[0].mxu0
  %v346 = vpop.f32.mrb[0].mxu0
  %v347 = vadd.f32 0.0, %v346
  %v348 = vpop.f32.mrb[0].mxu0
  %349 = vmatprep.mubr.bf16.mxu0 0
  %350 = vmatmul.mubr.bf16.gmra.mrb[0].mxu0 %v245
  %v351 = vpop.f32.mrb[0].mxu0
  %v352 = vadd.f32 0.0, %v351
  %v353 = vpop.f32.mrb[0].mxu0
  %v354 = vpop.f32.mrb[0].mxu0
  %v355 = vadd.f32 0.0, %v354
  %v356 = vpop.f32.mrb[0].mxu0
  %357 = vmatprep.mubr.bf16.mxu0 0
  %358 = vmatmul.mubr.bf16.gmra.mrb[0].mxu0 %v248
  %v359 = vpop.f32.mrb[0].mxu0
  %v360 = vadd.f32 0.0, %v359
  %v361 = vpop.f32.mrb[0].mxu0
  %v362 = vpop.f32.mrb[0].mxu0
  %v363 = vadd.f32 0.0, %v362
  %v364 = vpop.f32.mrb[0].mxu0
  %365 = vmatprep.mubr.bf16.mxu0 0
  %366 = vmatmul.mubr.bf16.gmra.mrb[0].mxu0 %v251
  %v367 = vpop.f32.mrb[0].mxu0
  %v368 = vadd.f32 0.0, %v367
  %v369 = vpop.f32.mrb[0].mxu0
  %v370 = vpop.f32.mrb[0].mxu0
  %v371 = vadd.f32 0.0, %v370
  %v372 = vpop.f32.mrb[0].mxu0
  %373 = vmatprep.mubr.bf16.mxu0 0
  %374 = vmatmul.mubr.bf16.gmra.mrb[0].mxu0 %v254
  %v375 = vpop.f32.mrb[0].mxu0
  %v376 = vadd.f32 0.0, %v375
  %v377 = vpop.f32.mrb[0].mxu0
  %v378 = vpop.f32.mrb[0].mxu0
  %v379 = vadd.f32 0.0, %v378
  %v380 = vpop.f32.mrb[0].mxu0
  %381 = vmatprep.mubr.bf16.mxu0 0
  %382 = vmatmul.mubr.bf16.gmra.mrb[0].mxu0 %v257
  %v383 = vpop.f32.mrb[0].mxu0
  %v384 = vadd.f32 0.0, %v383
  %v385 = vpop.f32.mrb[0].mxu0
  %v386 = vpop.f32.mrb[0].mxu0
  %v387 = vadd.f32 0.0, %v386
  %v388 = vpop.f32.mrb[0].mxu0
  %389 = vmatprep.mubr.bf16.mxu0 0
  %390 = vmatmul.mubr.bf16.gmra.mrb[0].mxu0 %v260
  %v391 = vpop.f32.mrb[0].mxu0
  %v392 = vadd.f32 0.0, %v391
  %v393 = vpop.f32.mrb[0].mxu0
  %v394 = vpop.f32.mrb[0].mxu0
  %v395 = vadd.f32 0.0, %v394
  %v396 = vpop.f32.mrb[0].mxu0
  %397 = vmatprep.mubr.bf16.mxu0 0
  %398 = vmatmul.mubr.bf16.gmra.mrb[0].mxu0 %v263
  %v399 = vpop.f32.mrb[0].mxu0
  %v400 = vadd.f32 0.0, %v399
  %v401 = vpop.f32.mrb[0].mxu0
  %v402 = vpop.f32.mrb[0].mxu0
  %v403 = vadd.f32 0.0, %v402
  %v404 = vpop.f32.mrb[0].mxu0
  %405 = vmatprep.mubr.bf16.mxu0 0
  %406 = vmatmul.mubr.bf16.gmra.mrb[0].mxu0 %v266
  %v407 = vpop.f32.mrb[0].mxu0
  %v408 = vadd.f32 0.0, %v407
  %v409 = vpop.f32.mrb[0].mxu0
  %v410 = vpop.f32.mrb[0].mxu0
  %v411 = vadd.f32 0.0, %v410
  %v412 = vpop.f32.mrb[0].mxu0
  %413 = vmatprep.mubr.bf16.mxu0 0
  %414 = vmatmul.mubr.bf16.gmra.mrb[0].mxu0 %v269
  %v415 = vpop.f32.mrb[0].mxu0
  %v416 = vadd.f32 0.0, %v415
  %v417 = vpop.f32.mrb[0].mxu0
  %v418 = vpop.f32.mrb[0].mxu0
  %v419 = vadd.f32 0.0, %v418
  %v420 = vpop.f32.mrb[0].mxu0
  %421 = vmatprep.mubr.bf16.mxu0 0
  %422 = vmatmul.mubr.bf16.gmra.mrb[0].mxu0 %v272
  %v423 = vpop.f32.mrb[0].mxu0
  %v424 = vadd.f32 0.0, %v423
  %v425 = vpop.f32.mrb[0].mxu0
  %v426 = vpop.f32.mrb[0].mxu0
  %v427 = vadd.f32 0.0, %v426
  %v428 = vpop.f32.mrb[0].mxu0
  %429 = vmatprep.mubr.bf16.mxu0 0
  %430 = vmatmul.mubr.bf16.gmra.mrb[0].mxu0 %v275
  %v431 = vpop.f32.mrb[0].mxu0
  %v432 = vadd.f32 0.0, %v431
  %v433 = vpop.f32.mrb[0].mxu0
  %v434 = vpop.f32.mrb[0].mxu0
  %v435 = vadd.f32 0.0, %v434
  %v436 = vpop.f32.mrb[0].mxu0
  %437 = vdwg.mxu0
  %v438 = vadd.f32 %v52, %v312
  %v439 = vadd.f32 %v53, %v315
  %v440 = vadd.f32 %v54, %v320
  %v441 = vadd.f32 %v55, %v323
  %v442 = vadd.f32 %v56, %v328
  %v443 = vadd.f32 %v57, %v331
  %v444 = vadd.f32 %v58, %v336
  %v445 = vadd.f32 %v59, %v339
  %v446 = vadd.f32 %v60, %v344
  %v447 = vadd.f32 %v61, %v347
  %v448 = vadd.f32 %v62, %v352
  %v449 = vadd.f32 %v63, %v355
  %v450 = vadd.f32 %v64, %v360
  %v451 = vadd.f32 %v65, %v363
  %v452 = vadd.f32 %v66, %v368
  %v453 = vadd.f32 %v67, %v371
  %v454 = vadd.f32 %v68, %v376
  %v455 = vadd.f32 %v69, %v379
  %v456 = vadd.f32 %v70, %v384
  %v457 = vadd.f32 %v71, %v387
  %v458 = vadd.f32 %v72, %v392
  %v459 = vadd.f32 %v73, %v395
  %v460 = vadd.f32 %v74, %v400
  %v461 = vadd.f32 %v75, %v403
  %v462 = vadd.f32 %v76, %v408
  %v463 = vadd.f32 %v77, %v411
  %v464 = vadd.f32 %v78, %v416
  %v465 = vadd.f32 %v79, %v419
  %v466 = vadd.f32 %v80, %v424
  %v467 = vadd.f32 %v81, %v427
  %v468 = vadd.f32 %v82, %v432
  %v469 = vadd.f32 %v83, %v435
  %470 = vst.msk [vmem:[#allocation2] sm:$0xff] %vm228, %v438
  %471 = vst.msk [vmem:[#allocation2 + $0x8] sm:$0xff] %vm228, %v439
  %472 = vst.msk [vmem:[#allocation2 + $0x10] sm:$0xff] %vm228, %v440
  %473 = vst.msk [vmem:[#allocation2 + $0x18] sm:$0xff] %vm228, %v441
  %474 = vst.msk [vmem:[#allocation2 + $0x20] sm:$0xff] %vm228, %v442
  %475 = vst.msk [vmem:[#allocation2 + $0x28] sm:$0xff] %vm228, %v443
  %476 = vst.msk [vmem:[#allocation2 + $0x30] sm:$0xff] %vm228, %v444
  %477 = vst.msk [vmem:[#allocation2 + $0x38] sm:$0xff] %vm228, %v445
  %478 = vst.msk [vmem:[#allocation2 + $0x40] sm:$0xff] %vm228, %v446
  %479 = vst.msk [vmem:[#allocation2 + $0x48] sm:$0xff] %vm228, %v447
  %480 = vst.msk [vmem:[#allocation2 + $0x50] sm:$0xff] %vm228, %v448
  %481 = vst.msk [vmem:[#allocation2 + $0x58] sm:$0xff] %vm228, %v449
  %482 = vst.msk [vmem:[#allocation2 + $0x60] sm:$0xff] %vm228, %v450
  %483 = vst.msk [vmem:[#allocation2 + $0x68] sm:$0xff] %vm228, %v451
  %484 = vst.msk [vmem:[#allocation2 + $0x70] sm:$0xff] %vm228, %v452
  %485 = vst.msk [vmem:[#allocation2 + $0x78] sm:$0xff] %vm228, %v453
  %486 = vst.msk [vmem:[#allocation2 + $0x80] sm:$0xff] %vm228, %v454
  %487 = vst.msk [vmem:[#allocation2 + $0x88] sm:$0xff] %vm228, %v455
  %488 = vst.msk [vmem:[#allocation2 + $0x90] sm:$0xff] %vm228, %v456
  %489 = vst.msk [vmem:[#allocation2 + $0x98] sm:$0xff] %vm228, %v457
  %490 = vst.msk [vmem:[#allocation2 + $0xa0] sm:$0xff] %vm228, %v458
  %491 = vst.msk [vmem:[#allocation2 + $0xa8] sm:$0xff] %vm228, %v459
  %492 = vst.msk [vmem:[#allocation2 + $0xb0] sm:$0xff] %vm228, %v460
  %493 = vst.msk [vmem:[#allocation2 + $0xb8] sm:$0xff] %vm228, %v461
  %494 = vst.msk [vmem:[#allocation2 + $0xc0] sm:$0xff] %vm228, %v462
  %495 = vst.msk [vmem:[#allocation2 + $0xc8] sm:$0xff] %vm228, %v463
  %496 = vst.msk [vmem:[#allocation2 + $0xd0] sm:$0xff] %vm228, %v464
  %497 = vst.msk [vmem:[#allocation2 + $0xd8] sm:$0xff] %vm228, %v465
  %498 = vst.msk [vmem:[#allocation2 + $0xe0] sm:$0xff] %vm228, %v466
  %499 = vst.msk [vmem:[#allocation2 + $0xe8] sm:$0xff] %vm228, %v467
  %500 = vst.msk [vmem:[#allocation2 + $0xf0] sm:$0xff] %vm228, %v468
  %501 = vst.msk [vmem:[#allocation2 + $0xf8] sm:$0xff] %vm228, %v469
  // Predicated region
  $region18: #{warp_attn_forward.13} parent=0 // pred_check
    %p502 = pneg %p15
  $region19: #{warp_attn_forward.13} parent=0 // pred_check_branch
    %504 = sbr.rel (%p502) target = $region21
  $region20: #{warp_attn_forward.13} parent=0 // pred_region
    %v505 = vld [vmem:[#allocation2] sm:$0xff]
    %v506 = vld [vmem:[#allocation2 + $0x8] sm:$0xff]
    %v507 = vld [vmem:[#allocation2 + $0x10] sm:$0xff]
    %v508 = vld [vmem:[#allocation2 + $0x18] sm:$0xff]
    %v509 = vld [vmem:[#allocation2 + $0x20] sm:$0xff]
    %v510 = vld [vmem:[#allocation2 + $0x28] sm:$0xff]
    %v511 = vld [vmem:[#allocation2 + $0x30] sm:$0xff]
    %v512 = vld [vmem:[#allocation2 + $0x38] sm:$0xff]
    %v513 = vld [vmem:[#allocation2 + $0x40] sm:$0xff]
    %v514 = vld [vmem:[#allocation2 + $0x48] sm:$0xff]
    %v515 = vld [vmem:[#allocation2 + $0x50] sm:$0xff]
    %v516 = vld [vmem:[#allocation2 + $0x58] sm:$0xff]
    %v517 = vld [vmem:[#allocation2 + $0x60] sm:$0xff]
    %v518 = vld [vmem:[#allocation2 + $0x68] sm:$0xff]
    %v519 = vld [vmem:[#allocation2 + $0x70] sm:$0xff]
    %v520 = vld [vmem:[#allocation2 + $0x78] sm:$0xff]
    %v521 = vld [vmem:[#allocation2 + $0x80] sm:$0xff]
    %v522 = vld [vmem:[#allocation2 + $0x88] sm:$0xff]
    %v523 = vld [vmem:[#allocation2 + $0x90] sm:$0xff]
    %v524 = vld [vmem:[#allocation2 + $0x98] sm:$0xff]
    %v525 = vld [vmem:[#allocation2 + $0xa0] sm:$0xff]
    %v526 = vld [vmem:[#allocation2 + $0xa8] sm:$0xff]
    %v527 = vld [vmem:[#allocation2 + $0xb0] sm:$0xff]
    %v528 = vld [vmem:[#allocation2 + $0xb8] sm:$0xff]
    %v529 = vld [vmem:[#allocation2 + $0xc0] sm:$0xff]
    %v530 = vld [vmem:[#allocation2 + $0xc8] sm:$0xff]
    %v531 = vld [vmem:[#allocation2 + $0xd0] sm:$0xff]
    %v532 = vld [vmem:[#allocation2 + $0xd8] sm:$0xff]
    %v533 = vld [vmem:[#allocation2 + $0xe0] sm:$0xff]
    %v534 = vld [vmem:[#allocation2 + $0xe8] sm:$0xff]
    %v535 = vld [vmem:[#allocation2 + $0xf0] sm:$0xff]
    %v536 = vld [vmem:[#allocation2 + $0xf8] sm:$0xff]
    %v537 = vld [vmem:[%s2] sm:$0x1]
    %v539 = vlaneseq
    %v540 = vshrl.u32 %v539, 7
    %v541 = vsub.s32 0, %v540
    %v542 = vrot.slane %v537, %v541
    %v544 = vadd.f32 %v505, %v542
    %v545 = vadd.f32 %v506, %v542
    %v546 = vadd.f32 %v507, %v542
    %v547 = vadd.f32 %v508, %v542
    %v548 = vadd.f32 %v509, %v542
    %v549 = vadd.f32 %v510, %v542
    %v550 = vadd.f32 %v511, %v542
    %v551 = vadd.f32 %v512, %v542
    %v552 = vadd.f32 %v513, %v542
    %v553 = vadd.f32 %v514, %v542
    %v554 = vadd.f32 %v515, %v542
    %v555 = vadd.f32 %v516, %v542
    %v556 = vadd.f32 %v517, %v542
    %v557 = vadd.f32 %v518, %v542
    %v558 = vadd.f32 %v519, %v542
    %v559 = vadd.f32 %v520, %v542
    %v560 = vadd.f32 %v521, %v542
    %v561 = vadd.f32 %v522, %v542
    %v562 = vadd.f32 %v523, %v542
    %v563 = vadd.f32 %v524, %v542
    %v564 = vadd.f32 %v525, %v542
    %v565 = vadd.f32 %v526, %v542
    %v566 = vadd.f32 %v527, %v542
    %v567 = vadd.f32 %v528, %v542
    %v568 = vadd.f32 %v529, %v542
    %v569 = vadd.f32 %v530, %v542
    %v570 = vadd.f32 %v531, %v542
    %v571 = vadd.f32 %v532, %v542
    %v572 = vadd.f32 %v533, %v542
    %v573 = vadd.f32 %v534, %v542
    %v574 = vadd.f32 %v535, %v542
    %v575 = vadd.f32 %v536, %v542
    %576 = vst.msk [vmem:[%s3] sm:$0xff] %vm228, %v544
    %577 = vst.msk [vmem:[%s3 + $0x8] sm:$0xff] %vm228, %v545
    %578 = vst.msk [vmem:[%s3 + $0x10] sm:$0xff] %vm228, %v546
    %579 = vst.msk [vmem:[%s3 + $0x18] sm:$0xff] %vm228, %v547
    %580 = vst.msk [vmem:[%s3 + $0x20] sm:$0xff] %vm228, %v548
    %581 = vst.msk [vmem:[%s3 + $0x28] sm:$0xff] %vm228, %v549
    %582 = vst.msk [vmem:[%s3 + $0x30] sm:$0xff] %vm228, %v550
    %583 = vst.msk [vmem:[%s3 + $0x38] sm:$0xff] %vm228, %v551
    %584 = vst.msk [vmem:[%s3 + $0x40] sm:$0xff] %vm228, %v552
    %585 = vst.msk [vmem:[%s3 + $0x48] sm:$0xff] %vm228, %v553
    %586 = vst.msk [vmem:[%s3 + $0x50] sm:$0xff] %vm228, %v554
    %587 = vst.msk [vmem:[%s3 + $0x58] sm:$0xff] %vm228, %v555
    %588 = vst.msk [vmem:[%s3 + $0x60] sm:$0xff] %vm228, %v556
    %589 = vst.msk [vmem:[%s3 + $0x68] sm:$0xff] %vm228, %v557
    %590 = vst.msk [vmem:[%s3 + $0x70] sm:$0xff] %vm228, %v558
    %591 = vst.msk [vmem:[%s3 + $0x78] sm:$0xff] %vm228, %v559
    %592 = vst.msk [vmem:[%s3 + $0x80] sm:$0xff] %vm228, %v560
    %593 = vst.msk [vmem:[%s3 + $0x88] sm:$0xff] %vm228, %v561
    %594 = vst.msk [vmem:[%s3 + $0x90] sm:$0xff] %vm228, %v562
    %595 = vst.msk [vmem:[%s3 + $0x98] sm:$0xff] %vm228, %v563
    %596 = vst.msk [vmem:[%s3 + $0xa0] sm:$0xff] %vm228, %v564
    %597 = vst.msk [vmem:[%s3 + $0xa8] sm:$0xff] %vm228, %v565
    %598 = vst.msk [vmem:[%s3 + $0xb0] sm:$0xff] %vm228, %v566
    %599 = vst.msk [vmem:[%s3 + $0xb8] sm:$0xff] %vm228, %v567
    %600 = vst.msk [vmem:[%s3 + $0xc0] sm:$0xff] %vm228, %v568
    %601 = vst.msk [vmem:[%s3 + $0xc8] sm:$0xff] %vm228, %v569
    %602 = vst.msk [vmem:[%s3 + $0xd0] sm:$0xff] %vm228, %v570
    %603 = vst.msk [vmem:[%s3 + $0xd8] sm:$0xff] %vm228, %v571
    %604 = vst.msk [vmem:[%s3 + $0xe0] sm:$0xff] %vm228, %v572
    %605 = vst.msk [vmem:[%s3 + $0xe8] sm:$0xff] %vm228, %v573
    %606 = vst.msk [vmem:[%s3 + $0xf0] sm:$0xff] %vm228, %v574
    %607 = vst.msk [vmem:[%s3 + $0xf8] sm:$0xff] %vm228, %v575
  $region21: #{warp_attn_forward.13} parent=0 // pred_fallthru
    _
  // Predicated region
  $region22: #{warp_attn_forward.13} parent=0 // pred_check
    _
  $region23: #{warp_attn_forward.13} parent=0 // pred_check_branch
    %609 = sbr.rel (0) target = $region25
  $region24: #{warp_attn_forward.13} parent=0 // pred_region
    _
  $region25: #{warp_attn_forward.13} parent=0 // pred_fallthru
    _
  // Predicated region
  $region26: #{warp_attn_forward.13} parent=0 // pred_check
    _
  $region27: #{warp_attn_forward.13} parent=0 // pred_check_branch
    %611 = sbr.rel (0) target = $region29
  $region28: #{warp_attn_forward.13} parent=0 // pred_region
    _
  $region29: #{warp_attn_forward.13} parent=0 // pred_fallthru
    _

// kernel: warp_attn_forward.14
$region0: #{warp_attn_forward.14}
  #allocation0 [shape = 'u32[]', space=smem, size = 0x4, offset = 0x4, fixed_abs, tag = 'smem constant byte address 0x4 - core index']
  #allocation1 [shape = 'u32[144,128]{1,0:T(1,128)}', space=vmem, size = 0x12000, scoped, tag = 'internal scratch']
  #allocation2 [shape = 'f32[256,64]{1,0:T(8,128)}', space=vmem, size = 0x20000, scoped, tag = 'scratch operand']
  %s0 = inlined_call_operand.vmem [shape: bf16[256,64], index: 0, kind: input, shape index: {}]
  %s1 = inlined_call_operand.vmem [shape: bf16[64,256], index: 1, kind: input, shape index: {}]
  %s2 = inlined_call_operand.vmem [shape: f32[1,256], index: 2, kind: input, shape index: {}]
  %s3 = inlined_call_operand.vmem [shape: bf16[256,64], index: 3, kind: input, shape index: {}]
  %s4 = inlined_call_operand.vmem [shape: f32[1,64], index: 4, kind: input, shape index: {}]
  %s5 = inlined_call_operand.vmem [shape: f32[256,64], index: 5, kind: output, shape index: {}]
  %s6 = sld [smem:[#allocation0]]
  $region38: #{warp_attn_forward.14} parent=0
    _
  %s8 = ssub.s32 1, %s6
  %s9 = scalar_select 0, %s8, %s6
  // Predicated region
  $region2: #{warp_attn_forward.14} parent=0 // pred_check
    _
  $region3: #{warp_attn_forward.14} parent=0 // pred_check_branch
    %11 = sbr.rel (0) target = $region5
  $region4: #{warp_attn_forward.14} parent=0 // pred_region
    _
  $region5: #{warp_attn_forward.14} parent=0 // pred_fallthru
    _
  // Predicated region
  $region6: #{warp_attn_forward.14} parent=0 // pred_check
    _
  $region7: #{warp_attn_forward.14} parent=0 // pred_check_branch
    %13 = sbr.rel (0) target = $region9
  $region8: #{warp_attn_forward.14} parent=0 // pred_region
    _
  $region9: #{warp_attn_forward.14} parent=0 // pred_fallthru
    _
  // Predicated region
  $region10: #{warp_attn_forward.14} parent=0 // pred_check
    _
  $region11: #{warp_attn_forward.14} parent=0 // pred_check_branch
    %15 = sbr.rel (0) target = $region13
  $region12: #{warp_attn_forward.14} parent=0 // pred_region
    _
  $region13: #{warp_attn_forward.14} parent=0 // pred_fallthru
    _
  // Predicated region
  $region14: #{warp_attn_forward.14} parent=0 // pred_check
    _
  $region15: #{warp_attn_forward.14} parent=0 // pred_check_branch
    %17 = sbr.rel (0) target = $region17
  $region16: #{warp_attn_forward.14} parent=0 // pred_region
    _
  $region17: #{warp_attn_forward.14} parent=0 // pred_fallthru
    _
  // Predicated region
  $region18: #{warp_attn_forward.14} parent=0 // pred_check
    _
  $region19: #{warp_attn_forward.14} parent=0 // pred_check_branch
    %19 = sbr.rel (0) target = $region21
  $region20: #{warp_attn_forward.14} parent=0 // pred_region
    _
  $region21: #{warp_attn_forward.14} parent=0 // pred_fallthru
    _
  %p21 = scmp.eq.s32.totalorder 0, 0
  // Predicated region
  $region22: #{warp_attn_forward.14} parent=0 // pred_check
    %p22 = pneg %p21
  $region23: #{warp_attn_forward.14} parent=0 // pred_check_branch
    %24 = sbr.rel (%p22) target = $region25
  $region24: #{warp_attn_forward.14} parent=0 // pred_region
    %vm25 = vcmask 523264
    %26 = vst.msk [vmem:[#allocation2] sm:$0xff] %vm25, 0.0
    %27 = vst.msk [vmem:[#allocation2 + $0x8] sm:$0xff] %vm25, 0.0
    %28 = vst.msk [vmem:[#allocation2 + $0x10] sm:$0xff] %vm25, 0.0
    %29 = vst.msk [vmem:[#allocation2 + $0x18] sm:$0xff] %vm25, 0.0
    %30 = vst.msk [vmem:[#allocation2 + $0x20] sm:$0xff] %vm25, 0.0
    %31 = vst.msk [vmem:[#allocation2 + $0x28] sm:$0xff] %vm25, 0.0
    %32 = vst.msk [vmem:[#allocation2 + $0x30] sm:$0xff] %vm25, 0.0
    %33 = vst.msk [vmem:[#allocation2 + $0x38] sm:$0xff] %vm25, 0.0
    %34 = vst.msk [vmem:[#allocation2 + $0x40] sm:$0xff] %vm25, 0.0
    %35 = vst.msk [vmem:[#allocation2 + $0x48] sm:$0xff] %vm25, 0.0
    %36 = vst.msk [vmem:[#allocation2 + $0x50] sm:$0xff] %vm25, 0.0
    %37 = vst.msk [vmem:[#allocation2 + $0x58] sm:$0xff] %vm25, 0.0
    %38 = vst.msk [vmem:[#allocation2 + $0x60] sm:$0xff] %vm25, 0.0
    %39 = vst.msk [vmem:[#allocation2 + $0x68] sm:$0xff] %vm25, 0.0
    %40 = vst.msk [vmem:[#allocation2 + $0x70] sm:$0xff] %vm25, 0.0
    %41 = vst.msk [vmem:[#allocation2 + $0x78] sm:$0xff] %vm25, 0.0
    %42 = vst.msk [vmem:[#allocation2 + $0x80] sm:$0xff] %vm25, 0.0
    %43 = vst.msk [vmem:[#allocation2 + $0x88] sm:$0xff] %vm25, 0.0
    %44 = vst.msk [vmem:[#allocation2 + $0x90] sm:$0xff] %vm25, 0.0
    %45 = vst.msk [vmem:[#allocation2 + $0x98] sm:$0xff] %vm25, 0.0
    %46 = vst.msk [vmem:[#allocation2 + $0xa0] sm:$0xff] %vm25, 0.0
    %47 = vst.msk [vmem:[#allocation2 + $0xa8] sm:$0xff] %vm25, 0.0
    %48 = vst.msk [vmem:[#allocation2 + $0xb0] sm:$0xff] %vm25, 0.0
    %49 = vst.msk [vmem:[#allocation2 + $0xb8] sm:$0xff] %vm25, 0.0
    %50 = vst.msk [vmem:[#allocation2 + $0xc0] sm:$0xff] %vm25, 0.0
    %51 = vst.msk [vmem:[#allocation2 + $0xc8] sm:$0xff] %vm25, 0.0
    %52 = vst.msk [vmem:[#allocation2 + $0xd0] sm:$0xff] %vm25, 0.0
    %53 = vst.msk [vmem:[#allocation2 + $0xd8] sm:$0xff] %vm25, 0.0
    %54 = vst.msk [vmem:[#allocation2 + $0xe0] sm:$0xff] %vm25, 0.0
    %55 = vst.msk [vmem:[#allocation2 + $0xe8] sm:$0xff] %vm25, 0.0
    %56 = vst.msk [vmem:[#allocation2 + $0xf0] sm:$0xff] %vm25, 0.0
    %57 = vst.msk [vmem:[#allocation2 + $0xf8] sm:$0xff] %vm25, 0.0
  $region25: #{warp_attn_forward.14} parent=0 // pred_fallthru
    _
  %v58 = vld [vmem:[%s0] sm:$0xf]
  %v59 = vld [vmem:[%s0 + $0x4] sm:$0xf]
  %v60 = vld [vmem:[%s0 + $0x8] sm:$0xf]
  %v61 = vld [vmem:[%s0 + $0xc] sm:$0xf]
  %v62 = vld [vmem:[%s0 + $0x10] sm:$0xf]
  %v63 = vld [vmem:[%s0 + $0x14] sm:$0xf]
  %v64 = vld [vmem:[%s0 + $0x18] sm:$0xf]
  %v65 = vld [vmem:[%s0 + $0x1c] sm:$0xf]
  %v66 = vld [vmem:[%s0 + $0x20] sm:$0xf]
  %v67 = vld [vmem:[%s0 + $0x24] sm:$0xf]
  %v68 = vld [vmem:[%s0 + $0x28] sm:$0xf]
  %v69 = vld [vmem:[%s0 + $0x2c] sm:$0xf]
  %v70 = vld [vmem:[%s0 + $0x30] sm:$0xf]
  %v71 = vld [vmem:[%s0 + $0x34] sm:$0xf]
  %v72 = vld [vmem:[%s0 + $0x38] sm:$0xf]
  %v73 = vld [vmem:[%s0 + $0x3c] sm:$0xf]
  %v74 = vld [vmem:[%s0 + $0x40] sm:$0xf]
  %v75 = vld [vmem:[%s0 + $0x44] sm:$0xf]
  %v76 = vld [vmem:[%s0 + $0x48] sm:$0xf]
  %v77 = vld [vmem:[%s0 + $0x4c] sm:$0xf]
  %v78 = vld [vmem:[%s0 + $0x50] sm:$0xf]
  %v79 = vld [vmem:[%s0 + $0x54] sm:$0xf]
  %v80 = vld [vmem:[%s0 + $0x58] sm:$0xf]
  %v81 = vld [vmem:[%s0 + $0x5c] sm:$0xf]
  %v82 = vld [vmem:[%s0 + $0x60] sm:$0xf]
  %v83 = vld [vmem:[%s0 + $0x64] sm:$0xf]
  %v84 = vld [vmem:[%s0 + $0x68] sm:$0xf]
  %v85 = vld [vmem:[%s0 + $0x6c] sm:$0xf]
  %v86 = vld [vmem:[%s0 + $0x70] sm:$0xf]
  %v87 = vld [vmem:[%s0 + $0x74] sm:$0xf]
  %v88 = vld [vmem:[%s0 + $0x78] sm:$0xf]
  %v89 = vld [vmem:[%s0 + $0x7c] sm:$0xf]
  %v90 = vld [vmem:[%s1] sm:$0xff]
  %v91 = vld [vmem:[%s1 + $0x8] sm:$0xff]
  %v92 = vld [vmem:[%s1 + $0x10] sm:$0xff]
  %v93 = vld [vmem:[%s1 + $0x18] sm:$0xff]
  %v94 = vld [vmem:[%s1 + $0x20] sm:$0xff]
  %v95 = vld [vmem:[%s1 + $0x28] sm:$0xff]
  %v96 = vld [vmem:[%s1 + $0x30] sm:$0xff]
  %v97 = vld [vmem:[%s1 + $0x38] sm:$0xff]
  %v98 = vld [vmem:[%s2] sm:$0x3]
  %v100 = vlaneseq
  %v101 = vshrl.u32 %v100, 7
  %v102 = vsub.s32 0, %v101
  %v103 = vrot.slane %v98, %v102
  %v104 = vlaneseq
  %v105 = vshrl.u32 %v104, 7
  %v106 = vsub.s32 1, %v105
  %v107 = vrot.slane %v98, %v106
  %v142 = vunpack.c.l.b16 %v58
  %v143 = vunpack.c.l.b16 %v59
  %v144 = vunpack.c.l.b16 %v60
  %v145 = vunpack.c.l.b16 %v61
  %v146 = vunpack.c.l.b16 %v62
  %v147 = vunpack.c.l.b16 %v63
  %v148 = vunpack.c.l.b16 %v64
  %v149 = vunpack.c.l.b16 %v65
  %v150 = vunpack.c.l.b16 %v66
  %v151 = vunpack.c.l.b16 %v67
  %v152 = vunpack.c.l.b16 %v68
  %v153 = vunpack.c.l.b16 %v69
  %v154 = vunpack.c.l.b16 %v70
  %v155 = vunpack.c.l.b16 %v71
  %v156 = vunpack.c.l.b16 %v72
  %v157 = vunpack.c.l.b16 %v73
  %v158 = vunpack.c.l.b16 %v74
  %v159 = vunpack.c.l.b16 %v75
  %v160 = vunpack.c.l.b16 %v76
  %v161 = vunpack.c.l.b16 %v77
  %v162 = vunpack.c.l.b16 %v78
  %v163 = vunpack.c.l.b16 %v79
  %v164 = vunpack.c.l.b16 %v80
  %v165 = vunpack.c.l.b16 %v81
  %v166 = vunpack.c.l.b16 %v82
  %v167 = vunpack.c.l.b16 %v83
  %v168 = vunpack.c.l.b16 %v84
  %v169 = vunpack.c.l.b16 %v85
  %v170 = vunpack.c.l.b16 %v86
  %v171 = vunpack.c.l.b16 %v87
  %v172 = vunpack.c.l.b16 %v88
  %v173 = vunpack.c.l.b16 %v89
  %v174 = vpack.c.b16 %v143, %v142
  %v175 = vpack.c.b16 %v145, %v144
  %v176 = vpack.c.b16 %v147, %v146
  %v177 = vpack.c.b16 %v149, %v148
  %v178 = vpack.c.b16 %v151, %v150
  %v179 = vpack.c.b16 %v153, %v152
  %v180 = vpack.c.b16 %v155, %v154
  %v181 = vpack.c.b16 %v157, %v156
  %v182 = vpack.c.b16 %v159, %v158
  %v183 = vpack.c.b16 %v161, %v160
  %v184 = vpack.c.b16 %v163, %v162
  %v185 = vpack.c.b16 %v165, %v164
  %v186 = vpack.c.b16 %v167, %v166
  %v187 = vpack.c.b16 %v169, %v168
  %v188 = vpack.c.b16 %v171, %v170
  %v189 = vpack.c.b16 %v173, %v172
  %v198 = vunpack.c.l.b16 %v90
  %v199 = vunpack.c.h.b16 %v90
  %v200 = vunpack.c.l.b16 %v91
  %v201 = vunpack.c.h.b16 %v91
  %v202 = vunpack.c.l.b16 %v92
  %v203 = vunpack.c.h.b16 %v92
  %v204 = vunpack.c.l.b16 %v93
  %v205 = vunpack.c.h.b16 %v93
  %v206 = vunpack.c.l.b16 %v94
  %v207 = vunpack.c.h.b16 %v94
  %v208 = vunpack.c.l.b16 %v95
  %v209 = vunpack.c.h.b16 %v95
  %v210 = vunpack.c.l.b16 %v96
  %v211 = vunpack.c.h.b16 %v96
  %v212 = vunpack.c.l.b16 %v97
  %v213 = vunpack.c.h.b16 %v97
  %v214 = vpack.c.b16 %v200, %v198
  %v215 = vpack.c.b16 %v201, %v199
  %v216 = vpack.c.b16 %v204, %v202
  %v217 = vpack.c.b16 %v205, %v203
  %v218 = vpack.c.b16 %v208, %v206
  %v219 = vpack.c.b16 %v209, %v207
  %v220 = vpack.c.b16 %v212, %v210
  %v221 = vpack.c.b16 %v213, %v211
  %vm230 = vcmask 523264
  %v232 = vsel %vm230, %v174, 0
  %v235 = vsel %vm230, %v175, 0
  %v238 = vsel %vm230, %v176, 0
  %v241 = vsel %vm230, %v177, 0
  %v244 = vsel %vm230, %v178, 0
  %v247 = vsel %vm230, %v179, 0
  %v250 = vsel %vm230, %v180, 0
  %v253 = vsel %vm230, %v181, 0
  %v256 = vsel %vm230, %v182, 0
  %v259 = vsel %vm230, %v183, 0
  %v262 = vsel %vm230, %v184, 0
  %v265 = vsel %vm230, %v185, 0
  %v268 = vsel %vm230, %v186, 0
  %v271 = vsel %vm230, %v187, 0
  %v274 = vsel %vm230, %v188, 0
  %v277 = vsel %vm230, %v189, 0
  %279 = vmatprep.subr.bf16.mxu0 %v215
  %280 = vmatpush1.bf16.msra.mxu0 %v214
  %281 = vmatprep.subr.bf16.mxu0 %v217
  %282 = vmatpush1.bf16.msra.mxu0 %v216
  %283 = vmatprep.subr.bf16.mxu0 %v219
  %284 = vmatpush1.bf16.msra.mxu0 %v218
  %285 = vmatprep.subr.bf16.mxu0 %v221
  %286 = vmatpush1.bf16.msra.mxu0 %v220
  %287 = vmatprep.subr.bf16.mxu0 0
  %288 = vmatpush1.bf16.msra.mxu0 0
  %289 = vmatprep.subr.bf16.mxu0 0
  %290 = vmatpush1.bf16.msra.mxu0 0
  %291 = vmatprep.subr.bf16.mxu0 0
  %292 = vmatpush1.bf16.msra.mxu0 0
  %293 = vmatprep.subr.bf16.mxu0 0
  %294 = vmatpush1.bf16.msra.mxu0 0
  %295 = vmatprep.subr.bf16.mxu0 0
  %296 = vmatpush1.bf16.msra.mxu0 0
  %297 = vmatprep.subr.bf16.mxu0 0
  %298 = vmatpush1.bf16.msra.mxu0 0
  %299 = vmatprep.subr.bf16.mxu0 0
  %300 = vmatpush1.bf16.msra.mxu0 0
  %301 = vmatprep.subr.bf16.mxu0 0
  %302 = vmatpush1.bf16.msra.mxu0 0
  %303 = vmatprep.subr.bf16.mxu0 0
  %304 = vmatpush1.bf16.msra.mxu0 0
  %305 = vmatprep.subr.bf16.mxu0 0
  %306 = vmatpush1.bf16.msra.mxu0 0
  %307 = vmatprep.subr.bf16.mxu0 0
  %308 = vmatpush1.bf16.msra.mxu0 0
  %309 = vmatprep.subr.bf16.mxu0 0
  %310 = vmatpush1.bf16.msra.mxu0 0
  %311 = vmatprep.mubr.bf16.mxu0 0
  %312 = vmatmul.mubr.bf16.gmra.mrb[0].mxu0 %v232
  %v313 = vpop.f32.mrb[0].mxu0
  %v314 = vadd.f32 %v103, %v313
  %v315 = vpop.f32.mrb[0].mxu0
  %v316 = vadd.f32 %v107, %v315
  %v317 = vpop.f32.mrb[0].mxu0
  %v318 = vadd.f32 %v103, %v317
  %v319 = vpop.f32.mrb[0].mxu0
  %v320 = vadd.f32 %v107, %v319
  %321 = vmatprep.mubr.bf16.mxu0 0
  %322 = vmatmul.mubr.bf16.gmra.mrb[0].mxu0 %v235
  %v323 = vpop.f32.mrb[0].mxu0
  %v324 = vadd.f32 %v103, %v323
  %v325 = vpop.f32.mrb[0].mxu0
  %v326 = vadd.f32 %v107, %v325
  %v327 = vpop.f32.mrb[0].mxu0
  %v328 = vadd.f32 %v103, %v327
  %v329 = vpop.f32.mrb[0].mxu0
  %v330 = vadd.f32 %v107, %v329
  %331 = vmatprep.mubr.bf16.mxu0 0
  %332 = vmatmul.mubr.bf16.gmra.mrb[0].mxu0 %v238
  %v333 = vpop.f32.mrb[0].mxu0
  %v334 = vadd.f32 %v103, %v333
  %v335 = vpop.f32.mrb[0].mxu0
  %v336 = vadd.f32 %v107, %v335
  %v337 = vpop.f32.mrb[0].mxu0
  %v338 = vadd.f32 %v103, %v337
  %v339 = vpop.f32.mrb[0].mxu0
  %v340 = vadd.f32 %v107, %v339
  %341 = vmatprep.mubr.bf16.mxu0 0
  %342 = vmatmul.mubr.bf16.gmra.mrb[0].mxu0 %v241
  %v343 = vpop.f32.mrb[0].mxu0
  %v344 = vadd.f32 %v103, %v343
  %v345 = vpop.f32.mrb[0].mxu0
  %v346 = vadd.f32 %v107, %v345
  %v347 = vpop.f32.mrb[0].mxu0
  %v348 = vadd.f32 %v103, %v347
  %v349 = vpop.f32.mrb[0].mxu0
  %v350 = vadd.f32 %v107, %v349
  %351 = vmatprep.mubr.bf16.mxu0 0
  %352 = vmatmul.mubr.bf16.gmra.mrb[0].mxu0 %v244
  %v353 = vpop.f32.mrb[0].mxu0
  %v354 = vadd.f32 %v103, %v353
  %v355 = vpop.f32.mrb[0].mxu0
  %v356 = vadd.f32 %v107, %v355
  %v357 = vpop.f32.mrb[0].mxu0
  %v358 = vadd.f32 %v103, %v357
  %v359 = vpop.f32.mrb[0].mxu0
  %v360 = vadd.f32 %v107, %v359
  %361 = vmatprep.mubr.bf16.mxu0 0
  %362 = vmatmul.mubr.bf16.gmra.mrb[0].mxu0 %v247
  %v363 = vpop.f32.mrb[0].mxu0
  %v364 = vadd.f32 %v103, %v363
  %v365 = vpop.f32.mrb[0].mxu0
  %v366 = vadd.f32 %v107, %v365
  %v367 = vpop.f32.mrb[0].mxu0
  %v368 = vadd.f32 %v103, %v367
  %v369 = vpop.f32.mrb[0].mxu0
  %v370 = vadd.f32 %v107, %v369
  %371 = vmatprep.mubr.bf16.mxu0 0
  %372 = vmatmul.mubr.bf16.gmra.mrb[0].mxu0 %v250
  %v373 = vpop.f32.mrb[0].mxu0
  %v374 = vadd.f32 %v103, %v373
  %v375 = vpop.f32.mrb[0].mxu0
  %v376 = vadd.f32 %v107, %v375
  %v377 = vpop.f32.mrb[0].mxu0
  %v378 = vadd.f32 %v103, %v377
  %v379 = vpop.f32.mrb[0].mxu0
  %v380 = vadd.f32 %v107, %v379
  %381 = vmatprep.mubr.bf16.mxu0 0
  %382 = vmatmul.mubr.bf16.gmra.mrb[0].mxu0 %v253
  %v383 = vpop.f32.mrb[0].mxu0
  %v384 = vadd.f32 %v103, %v383
  %v385 = vpop.f32.mrb[0].mxu0
  %v386 = vadd.f32 %v107, %v385
  %v387 = vpop.f32.mrb[0].mxu0
  %v388 = vadd.f32 %v103, %v387
  %v389 = vpop.f32.mrb[0].mxu0
  %v390 = vadd.f32 %v107, %v389
  %391 = vmatprep.mubr.bf16.mxu0 0
  %392 = vmatmul.mubr.bf16.gmra.mrb[0].mxu0 %v256
  %v393 = vpop.f32.mrb[0].mxu0
  %v394 = vadd.f32 %v103, %v393
  %v395 = vpop.f32.mrb[0].mxu0
  %v396 = vadd.f32 %v107, %v395
  %v397 = vpop.f32.mrb[0].mxu0
  %v398 = vadd.f32 %v103, %v397
  %v399 = vpop.f32.mrb[0].mxu0
  %v400 = vadd.f32 %v107, %v399
  %401 = vmatprep.mubr.bf16.mxu0 0
  %402 = vmatmul.mubr.bf16.gmra.mrb[0].mxu0 %v259
  %v403 = vpop.f32.mrb[0].mxu0
  %v404 = vadd.f32 %v103, %v403
  %v405 = vpop.f32.mrb[0].mxu0
  %v406 = vadd.f32 %v107, %v405
  %v407 = vpop.f32.mrb[0].mxu0
  %v408 = vadd.f32 %v103, %v407
  %v409 = vpop.f32.mrb[0].mxu0
  %v410 = vadd.f32 %v107, %v409
  %411 = vmatprep.mubr.bf16.mxu0 0
  %412 = vmatmul.mubr.bf16.gmra.mrb[0].mxu0 %v262
  %v413 = vpop.f32.mrb[0].mxu0
  %v414 = vadd.f32 %v103, %v413
  %v415 = vpop.f32.mrb[0].mxu0
  %v416 = vadd.f32 %v107, %v415
  %v417 = vpop.f32.mrb[0].mxu0
  %v418 = vadd.f32 %v103, %v417
  %v419 = vpop.f32.mrb[0].mxu0
  %v420 = vadd.f32 %v107, %v419
  %421 = vmatprep.mubr.bf16.mxu0 0
  %422 = vmatmul.mubr.bf16.gmra.mrb[0].mxu0 %v265
  %v423 = vpop.f32.mrb[0].mxu0
  %v424 = vadd.f32 %v103, %v423
  %v425 = vpop.f32.mrb[0].mxu0
  %v426 = vadd.f32 %v107, %v425
  %v427 = vpop.f32.mrb[0].mxu0
  %v428 = vadd.f32 %v103, %v427
  %v429 = vpop.f32.mrb[0].mxu0
  %v430 = vadd.f32 %v107, %v429
  %431 = vmatprep.mubr.bf16.mxu0 0
  %432 = vmatmul.mubr.bf16.gmra.mrb[0].mxu0 %v268
  %v433 = vpop.f32.mrb[0].mxu0
  %v434 = vadd.f32 %v103, %v433
  %v435 = vpop.f32.mrb[0].mxu0
  %v436 = vadd.f32 %v107, %v435
  %v437 = vpop.f32.mrb[0].mxu0
  %v438 = vadd.f32 %v103, %v437
  %v439 = vpop.f32.mrb[0].mxu0
  %v440 = vadd.f32 %v107, %v439
  %441 = vmatprep.mubr.bf16.mxu0 0
  %442 = vmatmul.mubr.bf16.gmra.mrb[0].mxu0 %v271
  %v443 = vpop.f32.mrb[0].mxu0
  %v444 = vadd.f32 %v103, %v443
  %v445 = vpop.f32.mrb[0].mxu0
  %v446 = vadd.f32 %v107, %v445
  %v447 = vpop.f32.mrb[0].mxu0
  %v448 = vadd.f32 %v103, %v447
  %v449 = vpop.f32.mrb[0].mxu0
  %v450 = vadd.f32 %v107, %v449
  %451 = vmatprep.mubr.bf16.mxu0 0
  %452 = vmatmul.mubr.bf16.gmra.mrb[0].mxu0 %v274
  %v453 = vpop.f32.mrb[0].mxu0
  %v454 = vadd.f32 %v103, %v453
  %v455 = vpop.f32.mrb[0].mxu0
  %v456 = vadd.f32 %v107, %v455
  %v457 = vpop.f32.mrb[0].mxu0
  %v458 = vadd.f32 %v103, %v457
  %v459 = vpop.f32.mrb[0].mxu0
  %v460 = vadd.f32 %v107, %v459
  %461 = vmatprep.mubr.bf16.mxu0 0
  %462 = vmatmul.mubr.bf16.gmra.mrb[0].mxu0 %v277
  %v463 = vpop.f32.mrb[0].mxu0
  %v464 = vadd.f32 %v103, %v463
  %v465 = vpop.f32.mrb[0].mxu0
  %v466 = vadd.f32 %v107, %v465
  %v467 = vpop.f32.mrb[0].mxu0
  %v468 = vadd.f32 %v103, %v467
  %v469 = vpop.f32.mrb[0].mxu0
  %v470 = vadd.f32 %v107, %v469
  %471 = vdwg.mxu0
  %v472 = vmul.f32 %v314, %v314
  %v473 = vmul.f32 %v316, %v316
  %v474 = vmul.f32 %v318, %v318
  %v475 = vmul.f32 %v320, %v320
  %v476 = vmul.f32 %v324, %v324
  %v477 = vmul.f32 %v326, %v326
  %v478 = vmul.f32 %v328, %v328
  %v479 = vmul.f32 %v330, %v330
  %v480 = vmul.f32 %v334, %v334
  %v481 = vmul.f32 %v336, %v336
  %v482 = vmul.f32 %v338, %v338
  %v483 = vmul.f32 %v340, %v340
  %v484 = vmul.f32 %v344, %v344
  %v485 = vmul.f32 %v346, %v346
  %v486 = vmul.f32 %v348, %v348
  %v487 = vmul.f32 %v350, %v350
  %v488 = vmul.f32 %v354, %v354
  %v489 = vmul.f32 %v356, %v356
  %v490 = vmul.f32 %v358, %v358
  %v491 = vmul.f32 %v360, %v360
  %v492 = vmul.f32 %v364, %v364
  %v493 = vmul.f32 %v366, %v366
  %v494 = vmul.f32 %v368, %v368
  %v495 = vmul.f32 %v370, %v370
  %v496 = vmul.f32 %v374, %v374
  %v497 = vmul.f32 %v376, %v376
  %v498 = vmul.f32 %v378, %v378
  %v499 = vmul.f32 %v380, %v380
  %v500 = vmul.f32 %v384, %v384
  %v501 = vmul.f32 %v386, %v386
  %v502 = vmul.f32 %v388, %v388
  %v503 = vmul.f32 %v390, %v390
  %v504 = vmul.f32 %v394, %v394
  %v505 = vmul.f32 %v396, %v396
  %v506 = vmul.f32 %v398, %v398
  %v507 = vmul.f32 %v400, %v400
  %v508 = vmul.f32 %v404, %v404
  %v509 = vmul.f32 %v406, %v406
  %v510 = vmul.f32 %v408, %v408
  %v511 = vmul.f32 %v410, %v410
  %v512 = vmul.f32 %v414, %v414
  %v513 = vmul.f32 %v416, %v416
  %v514 = vmul.f32 %v418, %v418
  %v515 = vmul.f32 %v420, %v420
  %v516 = vmul.f32 %v424, %v424
  %v517 = vmul.f32 %v426, %v426
  %v518 = vmul.f32 %v428, %v428
  %v519 = vmul.f32 %v430, %v430
  %v520 = vmul.f32 %v434, %v434
  %v521 = vmul.f32 %v436, %v436
  %v522 = vmul.f32 %v438, %v438
  %v523 = vmul.f32 %v440, %v440
  %v524 = vmul.f32 %v444, %v444
  %v525 = vmul.f32 %v446, %v446
  %v526 = vmul.f32 %v448, %v448
  %v527 = vmul.f32 %v450, %v450
  %v528 = vmul.f32 %v454, %v454
  %v529 = vmul.f32 %v456, %v456
  %v530 = vmul.f32 %v458, %v458
  %v531 = vmul.f32 %v460, %v460
  %v532 = vmul.f32 %v464, %v464
  %v533 = vmul.f32 %v466, %v466
  %v534 = vmul.f32 %v468, %v468
  %v535 = vmul.f32 %v470, %v470
  %v536 = vmul.f32 %v314, %v472
  %v537 = vmul.f32 %v316, %v473
  %v538 = vmul.f32 %v318, %v474
  %v539 = vmul.f32 %v320, %v475
  %v540 = vmul.f32 %v324, %v476
  %v541 = vmul.f32 %v326, %v477
  %v542 = vmul.f32 %v328, %v478
  %v543 = vmul.f32 %v330, %v479
  %v544 = vmul.f32 %v334, %v480
  %v545 = vmul.f32 %v336, %v481
  %v546 = vmul.f32 %v338, %v482
  %v547 = vmul.f32 %v340, %v483
  %v548 = vmul.f32 %v344, %v484
  %v549 = vmul.f32 %v346, %v485
  %v550 = vmul.f32 %v348, %v486
  %v551 = vmul.f32 %v350, %v487
  %v552 = vmul.f32 %v354, %v488
  %v553 = vmul.f32 %v356, %v489
  %v554 = vmul.f32 %v358, %v490
  %v555 = vmul.f32 %v360, %v491
  %v556 = vmul.f32 %v364, %v492
  %v557 = vmul.f32 %v366, %v493
  %v558 = vmul.f32 %v368, %v494
  %v559 = vmul.f32 %v370, %v495
  %v560 = vmul.f32 %v374, %v496
  %v561 = vmul.f32 %v376, %v497
  %v562 = vmul.f32 %v378, %v498
  %v563 = vmul.f32 %v380, %v499
  %v564 = vmul.f32 %v384, %v500
  %v565 = vmul.f32 %v386, %v501
  %v566 = vmul.f32 %v388, %v502
  %v567 = vmul.f32 %v390, %v503
  %v568 = vmul.f32 %v394, %v504
  %v569 = vmul.f32 %v396, %v505
  %v570 = vmul.f32 %v398, %v506
  %v571 = vmul.f32 %v400, %v507
  %v572 = vmul.f32 %v404, %v508
  %v573 = vmul.f32 %v406, %v509
  %v574 = vmul.f32 %v408, %v510
  %v575 = vmul.f32 %v410, %v511
  %v576 = vmul.f32 %v414, %v512
  %v577 = vmul.f32 %v416, %v513
  %v578 = vmul.f32 %v418, %v514
  %v579 = vmul.f32 %v420, %v515
  %v580 = vmul.f32 %v424, %v516
  %v581 = vmul.f32 %v426, %v517
  %v582 = vmul.f32 %v428, %v518
  %v583 = vmul.f32 %v430, %v519
  %v584 = vmul.f32 %v434, %v520
  %v585 = vmul.f32 %v436, %v521
  %v586 = vmul.f32 %v438, %v522
  %v587 = vmul.f32 %v440, %v523
  %v588 = vmul.f32 %v444, %v524
  %v589 = vmul.f32 %v446, %v525
  %v590 = vmul.f32 %v448, %v526
  %v591 = vmul.f32 %v450, %v527
  %v592 = vmul.f32 %v454, %v528
  %v593 = vmul.f32 %v456, %v529
  %v594 = vmul.f32 %v458, %v530
  %v595 = vmul.f32 %v460, %v531
  %v596 = vmul.f32 %v464, %v532
  %v597 = vmul.f32 %v466, %v533
  %v598 = vmul.f32 %v468, %v534
  %v599 = vmul.f32 %v470, %v535
  %v600 = vmul.f32 %v536, 0.044715
  %v601 = vmul.f32 %v537, 0.044715
  %v602 = vmul.f32 %v538, 0.044715
  %v603 = vmul.f32 %v539, 0.044715
  %v604 = vmul.f32 %v540, 0.044715
  %v605 = vmul.f32 %v541, 0.044715
  %v606 = vmul.f32 %v542, 0.044715
  %v607 = vmul.f32 %v543, 0.044715
  %v608 = vmul.f32 %v544, 0.044715
  %v609 = vmul.f32 %v545, 0.044715
  %v610 = vmul.f32 %v546, 0.044715
  %v611 = vmul.f32 %v547, 0.044715
  %v612 = vmul.f32 %v548, 0.044715
  %v613 = vmul.f32 %v549, 0.044715
  %v614 = vmul.f32 %v550, 0.044715
  %v615 = vmul.f32 %v551, 0.044715
  %v616 = vmul.f32 %v552, 0.044715
  %v617 = vmul.f32 %v553, 0.044715
  %v618 = vmul.f32 %v554, 0.044715
  %v619 = vmul.f32 %v555, 0.044715
  %v620 = vmul.f32 %v556, 0.044715
  %v621 = vmul.f32 %v557, 0.044715
  %v622 = vmul.f32 %v558, 0.044715
  %v623 = vmul.f32 %v559, 0.044715
  %v624 = vmul.f32 %v560, 0.044715
  %v625 = vmul.f32 %v561, 0.044715
  %v626 = vmul.f32 %v562, 0.044715
  %v627 = vmul.f32 %v563, 0.044715
  %v628 = vmul.f32 %v564, 0.044715
  %v629 = vmul.f32 %v565, 0.044715
  %v630 = vmul.f32 %v566, 0.044715
  %v631 = vmul.f32 %v567, 0.044715
  %v632 = vmul.f32 %v568, 0.044715
  %v633 = vmul.f32 %v569, 0.044715
  %v634 = vmul.f32 %v570, 0.044715
  %v635 = vmul.f32 %v571, 0.044715
  %v636 = vmul.f32 %v572, 0.044715
  %v637 = vmul.f32 %v573, 0.044715
  %v638 = vmul.f32 %v574, 0.044715
  %v639 = vmul.f32 %v575, 0.044715
  %v640 = vmul.f32 %v576, 0.044715
  %v641 = vmul.f32 %v577, 0.044715
  %v642 = vmul.f32 %v578, 0.044715
  %v643 = vmul.f32 %v579, 0.044715
  %v644 = vmul.f32 %v580, 0.044715
  %v645 = vmul.f32 %v581, 0.044715
  %v646 = vmul.f32 %v582, 0.044715
  %v647 = vmul.f32 %v583, 0.044715
  %v648 = vmul.f32 %v584, 0.044715
  %v649 = vmul.f32 %v585, 0.044715
  %v650 = vmul.f32 %v586, 0.044715
  %v651 = vmul.f32 %v587, 0.044715
  %v652 = vmul.f32 %v588, 0.044715
  %v653 = vmul.f32 %v589, 0.044715
  %v654 = vmul.f32 %v590, 0.044715
  %v655 = vmul.f32 %v591, 0.044715
  %v656 = vmul.f32 %v592, 0.044715
  %v657 = vmul.f32 %v593, 0.044715
  %v658 = vmul.f32 %v594, 0.044715
  %v659 = vmul.f32 %v595, 0.044715
  %v660 = vmul.f32 %v596, 0.044715
  %v661 = vmul.f32 %v597, 0.044715
  %v662 = vmul.f32 %v598, 0.044715
  %v663 = vmul.f32 %v599, 0.044715
  %v664 = vadd.f32 %v314, %v600
  %v665 = vadd.f32 %v316, %v601
  %v666 = vadd.f32 %v318, %v602
  %v667 = vadd.f32 %v320, %v603
  %v668 = vadd.f32 %v324, %v604
  %v669 = vadd.f32 %v326, %v605
  %v670 = vadd.f32 %v328, %v606
  %v671 = vadd.f32 %v330, %v607
  %v672 = vadd.f32 %v334, %v608
  %v673 = vadd.f32 %v336, %v609
  %v674 = vadd.f32 %v338, %v610
  %v675 = vadd.f32 %v340, %v611
  %v676 = vadd.f32 %v344, %v612
  %v677 = vadd.f32 %v346, %v613
  %v678 = vadd.f32 %v348, %v614
  %v679 = vadd.f32 %v350, %v615
  %v680 = vadd.f32 %v354, %v616
  %v681 = vadd.f32 %v356, %v617
  %v682 = vadd.f32 %v358, %v618
  %v683 = vadd.f32 %v360, %v619
  %v684 = vadd.f32 %v364, %v620
  %v685 = vadd.f32 %v366, %v621
  %v686 = vadd.f32 %v368, %v622
  %v687 = vadd.f32 %v370, %v623
  %v688 = vadd.f32 %v374, %v624
  %v689 = vadd.f32 %v376, %v625
  %v690 = vadd.f32 %v378, %v626
  %v691 = vadd.f32 %v380, %v627
  %v692 = vadd.f32 %v384, %v628
  %v693 = vadd.f32 %v386, %v629
  %v694 = vadd.f32 %v388, %v630
  %v695 = vadd.f32 %v390, %v631
  %v696 = vadd.f32 %v394, %v632
  %v697 = vadd.f32 %v396, %v633
  %v698 = vadd.f32 %v398, %v634
  %v699 = vadd.f32 %v400, %v635
  %v700 = vadd.f32 %v404, %v636
  %v701 = vadd.f32 %v406, %v637
  %v702 = vadd.f32 %v408, %v638
  %v703 = vadd.f32 %v410, %v639
  %v704 = vadd.f32 %v414, %v640
  %v705 = vadd.f32 %v416, %v641
  %v706 = vadd.f32 %v418, %v642
  %v707 = vadd.f32 %v420, %v643
  %v708 = vadd.f32 %v424, %v644
  %v709 = vadd.f32 %v426, %v645
  %v710 = vadd.f32 %v428, %v646
  %v711 = vadd.f32 %v430, %v647
  %v712 = vadd.f32 %v434, %v648
  %v713 = vadd.f32 %v436, %v649
  %v714 = vadd.f32 %v438, %v650
  %v715 = vadd.f32 %v440, %v651
  %v716 = vadd.f32 %v444, %v652
  %v717 = vadd.f32 %v446, %v653
  %v718 = vadd.f32 %v448, %v654
  %v719 = vadd.f32 %v450, %v655
  %v720 = vadd.f32 %v454, %v656
  %v721 = vadd.f32 %v456, %v657
  %v722 = vadd.f32 %v458, %v658
  %v723 = vadd.f32 %v460, %v659
  %v724 = vadd.f32 %v464, %v660
  %v725 = vadd.f32 %v466, %v661
  %v726 = vadd.f32 %v468, %v662
  %v727 = vadd.f32 %v470, %v663
  %v728 = vmul.f32 %v664, 0.7978846
  %v729 = vmul.f32 %v665, 0.7978846
  %v730 = vmul.f32 %v666, 0.7978846
  %v731 = vmul.f32 %v667, 0.7978846
  %v732 = vmul.f32 %v668, 0.7978846
  %v733 = vmul.f32 %v669, 0.7978846
  %v734 = vmul.f32 %v670, 0.7978846
  %v735 = vmul.f32 %v671, 0.7978846
  %v736 = vmul.f32 %v672, 0.7978846
  %v737 = vmul.f32 %v673, 0.7978846
  %v738 = vmul.f32 %v674, 0.7978846
  %v739 = vmul.f32 %v675, 0.7978846
  %v740 = vmul.f32 %v676, 0.7978846
  %v741 = vmul.f32 %v677, 0.7978846
  %v742 = vmul.f32 %v678, 0.7978846
  %v743 = vmul.f32 %v679, 0.7978846
  %v744 = vmul.f32 %v680, 0.7978846
  %v745 = vmul.f32 %v681, 0.7978846
  %v746 = vmul.f32 %v682, 0.7978846
  %v747 = vmul.f32 %v683, 0.7978846
  %v748 = vmul.f32 %v684, 0.7978846
  %v749 = vmul.f32 %v685, 0.7978846
  %v750 = vmul.f32 %v686, 0.7978846
  %v751 = vmul.f32 %v687, 0.7978846
  %v752 = vmul.f32 %v688, 0.7978846
  %v753 = vmul.f32 %v689, 0.7978846
  %v754 = vmul.f32 %v690, 0.7978846
  %v755 = vmul.f32 %v691, 0.7978846
  %v756 = vmul.f32 %v692, 0.7978846
  %v757 = vmul.f32 %v693, 0.7978846
  %v758 = vmul.f32 %v694, 0.7978846
  %v759 = vmul.f32 %v695, 0.7978846
  %v760 = vmul.f32 %v696, 0.7978846
  %v761 = vmul.f32 %v697, 0.7978846
  %v762 = vmul.f32 %v698, 0.7978846
  %v763 = vmul.f32 %v699, 0.7978846
  %v764 = vmul.f32 %v700, 0.7978846
  %v765 = vmul.f32 %v701, 0.7978846
  %v766 = vmul.f32 %v702, 0.7978846
  %v767 = vmul.f32 %v703, 0.7978846
  %v768 = vmul.f32 %v704, 0.7978846
  %v769 = vmul.f32 %v705, 0.7978846
  %v770 = vmul.f32 %v706, 0.7978846
  %v771 = vmul.f32 %v707, 0.7978846
  %v772 = vmul.f32 %v708, 0.7978846
  %v773 = vmul.f32 %v709, 0.7978846
  %v774 = vmul.f32 %v710, 0.7978846
  %v775 = vmul.f32 %v711, 0.7978846
  %v776 = vmul.f32 %v712, 0.7978846
  %v777 = vmul.f32 %v713, 0.7978846
  %v778 = vmul.f32 %v714, 0.7978846
  %v779 = vmul.f32 %v715, 0.7978846
  %v780 = vmul.f32 %v716, 0.7978846
  %v781 = vmul.f32 %v717, 0.7978846
  %v782 = vmul.f32 %v718, 0.7978846
  %v783 = vmul.f32 %v719, 0.7978846
  %v784 = vmul.f32 %v720, 0.7978846
  %v785 = vmul.f32 %v721, 0.7978846
  %v786 = vmul.f32 %v722, 0.7978846
  %v787 = vmul.f32 %v723, 0.7978846
  %v788 = vmul.f32 %v724, 0.7978846
  %v789 = vmul.f32 %v725, 0.7978846
  %v790 = vmul.f32 %v726, 0.7978846
  %v791 = vmul.f32 %v727, 0.7978846
  %v792 = vtanh.pop %v728
  %v793 = vtanh.pop %v729
  %v794 = vtanh.pop %v730
  %v795 = vtanh.pop %v731
  %v796 = vtanh.pop %v732
  %v797 = vtanh.pop %v733
  %v798 = vtanh.pop %v734
  %v799 = vtanh.pop %v735
  %v800 = vtanh.pop %v736
  %v801 = vtanh.pop %v737
  %v802 = vtanh.pop %v738
  %v803 = vtanh.pop %v739
  %v804 = vtanh.pop %v740
  %v805 = vtanh.pop %v741
  %v806 = vtanh.pop %v742
  %v807 = vtanh.pop %v743
  %v808 = vtanh.pop %v744
  %v809 = vtanh.pop %v745
  %v810 = vtanh.pop %v746
  %v811 = vtanh.pop %v747
  %v812 = vtanh.pop %v748
  %v813 = vtanh.pop %v749
  %v814 = vtanh.pop %v750
  %v815 = vtanh.pop %v751
  %v816 = vtanh.pop %v752
  %v817 = vtanh.pop %v753
  %v818 = vtanh.pop %v754
  %v819 = vtanh.pop %v755
  %v820 = vtanh.pop %v756
  %v821 = vtanh.pop %v757
  %v822 = vtanh.pop %v758
  %v823 = vtanh.pop %v759
  %v824 = vtanh.pop %v760
  %v825 = vtanh.pop %v761
  %v826 = vtanh.pop %v762
  %v827 = vtanh.pop %v763
  %v828 = vtanh.pop %v764
  %v829 = vtanh.pop %v765
  %v830 = vtanh.pop %v766
  %v831 = vtanh.pop %v767
  %v832 = vtanh.pop %v768
  %v833 = vtanh.pop %v769
  %v834 = vtanh.pop %v770
  %v835 = vtanh.pop %v771
  %v836 = vtanh.pop %v772
  %v837 = vtanh.pop %v773
  %v838 = vtanh.pop %v774
  %v839 = vtanh.pop %v775
  %v840 = vtanh.pop %v776
  %v841 = vtanh.pop %v777
  %v842 = vtanh.pop %v778
  %v843 = vtanh.pop %v779
  %v844 = vtanh.pop %v780
  %v845 = vtanh.pop %v781
  %v846 = vtanh.pop %v782
  %v847 = vtanh.pop %v783
  %v848 = vtanh.pop %v784
  %v849 = vtanh.pop %v785
  %v850 = vtanh.pop %v786
  %v851 = vtanh.pop %v787
  %v852 = vtanh.pop %v788
  %v853 = vtanh.pop %v789
  %v854 = vtanh.pop %v790
  %v855 = vtanh.pop %v791
  %v856 = vadd.f32 %v792, 1.0
  %v857 = vadd.f32 %v793, 1.0
  %v858 = vadd.f32 %v794, 1.0
  %v859 = vadd.f32 %v795, 1.0
  %v860 = vadd.f32 %v796, 1.0
  %v861 = vadd.f32 %v797, 1.0
  %v862 = vadd.f32 %v798, 1.0
  %v863 = vadd.f32 %v799, 1.0
  %v864 = vadd.f32 %v800, 1.0
  %v865 = vadd.f32 %v801, 1.0
  %v866 = vadd.f32 %v802, 1.0
  %v867 = vadd.f32 %v803, 1.0
  %v868 = vadd.f32 %v804, 1.0
  %v869 = vadd.f32 %v805, 1.0
  %v870 = vadd.f32 %v806, 1.0
  %v871 = vadd.f32 %v807, 1.0
  %v872 = vadd.f32 %v808, 1.0
  %v873 = vadd.f32 %v809, 1.0
  %v874 = vadd.f32 %v810, 1.0
  %v875 = vadd.f32 %v811, 1.0
  %v876 = vadd.f32 %v812, 1.0
  %v877 = vadd.f32 %v813, 1.0
  %v878 = vadd.f32 %v814, 1.0
  %v879 = vadd.f32 %v815, 1.0
  %v880 = vadd.f32 %v816, 1.0
  %v881 = vadd.f32 %v817, 1.0
  %v882 = vadd.f32 %v818, 1.0
  %v883 = vadd.f32 %v819, 1.0
  %v884 = vadd.f32 %v820, 1.0
  %v885 = vadd.f32 %v821, 1.0
  %v886 = vadd.f32 %v822, 1.0
  %v887 = vadd.f32 %v823, 1.0
  %v888 = vadd.f32 %v824, 1.0
  %v889 = vadd.f32 %v825, 1.0
  %v890 = vadd.f32 %v826, 1.0
  %v891 = vadd.f32 %v827, 1.0
  %v892 = vadd.f32 %v828, 1.0
  %v893 = vadd.f32 %v829, 1.0
  %v894 = vadd.f32 %v830, 1.0
  %v895 = vadd.f32 %v831, 1.0
  %v896 = vadd.f32 %v832, 1.0
  %v897 = vadd.f32 %v833, 1.0
  %v898 = vadd.f32 %v834, 1.0
  %v899 = vadd.f32 %v835, 1.0
  %v900 = vadd.f32 %v836, 1.0
  %v901 = vadd.f32 %v837, 1.0
  %v902 = vadd.f32 %v838, 1.0
  %v903 = vadd.f32 %v839, 1.0
  %v904 = vadd.f32 %v840, 1.0
  %v905 = vadd.f32 %v841, 1.0
  %v906 = vadd.f32 %v842, 1.0
  %v907 = vadd.f32 %v843, 1.0
  %v908 = vadd.f32 %v844, 1.0
  %v909 = vadd.f32 %v845, 1.0
  %v910 = vadd.f32 %v846, 1.0
  %v911 = vadd.f32 %v847, 1.0
  %v912 = vadd.f32 %v848, 1.0
  %v913 = vadd.f32 %v849, 1.0
  %v914 = vadd.f32 %v850, 1.0
  %v915 = vadd.f32 %v851, 1.0
  %v916 = vadd.f32 %v852, 1.0
  %v917 = vadd.f32 %v853, 1.0
  %v918 = vadd.f32 %v854, 1.0
  %v919 = vadd.f32 %v855, 1.0
  %v920 = vmul.f32 %v856, 0.5
  %v921 = vmul.f32 %v857, 0.5
  %v922 = vmul.f32 %v858, 0.5
  %v923 = vmul.f32 %v859, 0.5
  %v924 = vmul.f32 %v860, 0.5
  %v925 = vmul.f32 %v861, 0.5
  %v926 = vmul.f32 %v862, 0.5
  %v927 = vmul.f32 %v863, 0.5
  %v928 = vmul.f32 %v864, 0.5
  %v929 = vmul.f32 %v865, 0.5
  %v930 = vmul.f32 %v866, 0.5
  %v931 = vmul.f32 %v867, 0.5
  %v932 = vmul.f32 %v868, 0.5
  %v933 = vmul.f32 %v869, 0.5
  %v934 = vmul.f32 %v870, 0.5
  %v935 = vmul.f32 %v871, 0.5
  %v936 = vmul.f32 %v872, 0.5
  %v937 = vmul.f32 %v873, 0.5
  %v938 = vmul.f32 %v874, 0.5
  %v939 = vmul.f32 %v875, 0.5
  %v940 = vmul.f32 %v876, 0.5
  %v941 = vmul.f32 %v877, 0.5
  %v942 = vmul.f32 %v878, 0.5
  %v943 = vmul.f32 %v879, 0.5
  %v944 = vmul.f32 %v880, 0.5
  %v945 = vmul.f32 %v881, 0.5
  %v946 = vmul.f32 %v882, 0.5
  %v947 = vmul.f32 %v883, 0.5
  %v948 = vmul.f32 %v884, 0.5
  %v949 = vmul.f32 %v885, 0.5
  %v950 = vmul.f32 %v886, 0.5
  %v951 = vmul.f32 %v887, 0.5
  %v952 = vmul.f32 %v888, 0.5
  %v953 = vmul.f32 %v889, 0.5
  %v954 = vmul.f32 %v890, 0.5
  %v955 = vmul.f32 %v891, 0.5
  %v956 = vmul.f32 %v892, 0.5
  %v957 = vmul.f32 %v893, 0.5
  %v958 = vmul.f32 %v894, 0.5
  %v959 = vmul.f32 %v895, 0.5
  %v960 = vmul.f32 %v896, 0.5
  %v961 = vmul.f32 %v897, 0.5
  %v962 = vmul.f32 %v898, 0.5
  %v963 = vmul.f32 %v899, 0.5
  %v964 = vmul.f32 %v900, 0.5
  %v965 = vmul.f32 %v901, 0.5
  %v966 = vmul.f32 %v902, 0.5
  %v967 = vmul.f32 %v903, 0.5
  %v968 = vmul.f32 %v904, 0.5
  %v969 = vmul.f32 %v905, 0.5
  %v970 = vmul.f32 %v906, 0.5
  %v971 = vmul.f32 %v907, 0.5
  %v972 = vmul.f32 %v908, 0.5
  %v973 = vmul.f32 %v909, 0.5
  %v974 = vmul.f32 %v910, 0.5
  %v975 = vmul.f32 %v911, 0.5
  %v976 = vmul.f32 %v912, 0.5
  %v977 = vmul.f32 %v913, 0.5
  %v978 = vmul.f32 %v914, 0.5
  %v979 = vmul.f32 %v915, 0.5
  %v980 = vmul.f32 %v916, 0.5
  %v981 = vmul.f32 %v917, 0.5
  %v982 = vmul.f32 %v918, 0.5
  %v983 = vmul.f32 %v919, 0.5
  %v984 = vmul.f32 %v314, %v920
  %v985 = vmul.f32 %v316, %v921
  %v986 = vmul.f32 %v318, %v922
  %v987 = vmul.f32 %v320, %v923
  %v988 = vmul.f32 %v324, %v924
  %v989 = vmul.f32 %v326, %v925
  %v990 = vmul.f32 %v328, %v926
  %v991 = vmul.f32 %v330, %v927
  %v992 = vmul.f32 %v334, %v928
  %v993 = vmul.f32 %v336, %v929
  %v994 = vmul.f32 %v338, %v930
  %v995 = vmul.f32 %v340, %v931
  %v996 = vmul.f32 %v344, %v932
  %v997 = vmul.f32 %v346, %v933
  %v998 = vmul.f32 %v348, %v934
  %v999 = vmul.f32 %v350, %v935
  %v1000 = vmul.f32 %v354, %v936
  %v1001 = vmul.f32 %v356, %v937
  %v1002 = vmul.f32 %v358, %v938
  %v1003 = vmul.f32 %v360, %v939
  %v1004 = vmul.f32 %v364, %v940
  %v1005 = vmul.f32 %v366, %v941
  %v1006 = vmul.f32 %v368, %v942
  %v1007 = vmul.f32 %v370, %v943
  %v1008 = vmul.f32 %v374, %v944
  %v1009 = vmul.f32 %v376, %v945
  %v1010 = vmul.f32 %v378, %v946
  %v1011 = vmul.f32 %v380, %v947
  %v1012 = vmul.f32 %v384, %v948
  %v1013 = vmul.f32 %v386, %v949
  %v1014 = vmul.f32 %v388, %v950
  %v1015 = vmul.f32 %v390, %v951
  %v1016 = vmul.f32 %v394, %v952
  %v1017 = vmul.f32 %v396, %v953
  %v1018 = vmul.f32 %v398, %v954
  %v1019 = vmul.f32 %v400, %v955
  %v1020 = vmul.f32 %v404, %v956
  %v1021 = vmul.f32 %v406, %v957
  %v1022 = vmul.f32 %v408, %v958
  %v1023 = vmul.f32 %v410, %v959
  %v1024 = vmul.f32 %v414, %v960
  %v1025 = vmul.f32 %v416, %v961
  %v1026 = vmul.f32 %v418, %v962
  %v1027 = vmul.f32 %v420, %v963
  %v1028 = vmul.f32 %v424, %v964
  %v1029 = vmul.f32 %v426, %v965
  %v1030 = vmul.f32 %v428, %v966
  %v1031 = vmul.f32 %v430, %v967
  %v1032 = vmul.f32 %v434, %v968
  %v1033 = vmul.f32 %v436, %v969
  %v1034 = vmul.f32 %v438, %v970
  %v1035 = vmul.f32 %v440, %v971
  %v1036 = vmul.f32 %v444, %v972
  %v1037 = vmul.f32 %v446, %v973
  %v1038 = vmul.f32 %v448, %v974
  %v1039 = vmul.f32 %v450, %v975
  %v1040 = vmul.f32 %v454, %v976
  %v1041 = vmul.f32 %v456, %v977
  %v1042 = vmul.f32 %v458, %v978
  %v1043 = vmul.f32 %v460, %v979
  %v1044 = vmul.f32 %v464, %v980
  %v1045 = vmul.f32 %v466, %v981
  %v1046 = vmul.f32 %v468, %v982
  %v1047 = vmul.f32 %v470, %v983
  %v1048 = vld [vmem:[#allocation2] sm:$0xff]
  %v1049 = vld [vmem:[#allocation2 + $0x8] sm:$0xff]
  %v1050 = vld [vmem:[#allocation2 + $0x10] sm:$0xff]
  %v1051 = vld [vmem:[#allocation2 + $0x18] sm:$0xff]
  %v1052 = vld [vmem:[#allocation2 + $0x20] sm:$0xff]
  %v1053 = vld [vmem:[#allocation2 + $0x28] sm:$0xff]
  %v1054 = vld [vmem:[#allocation2 + $0x30] sm:$0xff]
  %v1055 = vld [vmem:[#allocation2 + $0x38] sm:$0xff]
  %v1056 = vld [vmem:[#allocation2 + $0x40] sm:$0xff]
  %v1057 = vld [vmem:[#allocation2 + $0x48] sm:$0xff]
  %v1058 = vld [vmem:[#allocation2 + $0x50] sm:$0xff]
  %v1059 = vld [vmem:[#allocation2 + $0x58] sm:$0xff]
  %v1060 = vld [vmem:[#allocation2 + $0x60] sm:$0xff]
  %v1061 = vld [vmem:[#allocation2 + $0x68] sm:$0xff]
  %v1062 = vld [vmem:[#allocation2 + $0x70] sm:$0xff]
  %v1063 = vld [vmem:[#allocation2 + $0x78] sm:$0xff]
  %v1064 = vld [vmem:[#allocation2 + $0x80] sm:$0xff]
  %v1065 = vld [vmem:[#allocation2 + $0x88] sm:$0xff]
  %v1066 = vld [vmem:[#allocation2 + $0x90] sm:$0xff]
  %v1067 = vld [vmem:[#allocation2 + $0x98] sm:$0xff]
  %v1068 = vld [vmem:[#allocation2 + $0xa0] sm:$0xff]
  %v1069 = vld [vmem:[#allocation2 + $0xa8] sm:$0xff]
  %v1070 = vld [vmem:[#allocation2 + $0xb0] sm:$0xff]
  %v1071 = vld [vmem:[#allocation2 + $0xb8] sm:$0xff]
  %v1072 = vld [vmem:[#allocation2 + $0xc0] sm:$0xff]
  %v1073 = vld [vmem:[#allocation2 + $0xc8] sm:$0xff]
  %v1074 = vld [vmem:[#allocation2 + $0xd0] sm:$0xff]
  %v1075 = vld [vmem:[#allocation2 + $0xd8] sm:$0xff]
  %v1076 = vld [vmem:[#allocation2 + $0xe0] sm:$0xff]
  %v1077 = vld [vmem:[#allocation2 + $0xe8] sm:$0xff]
  %v1078 = vld [vmem:[#allocation2 + $0xf0] sm:$0xff]
  %v1079 = vld [vmem:[#allocation2 + $0xf8] sm:$0xff]
  %v1080 = vpack.c.bf16 %v986, %v984
  %v1081 = vpack.c.bf16 %v987, %v985
  %v1082 = vpack.c.bf16 %v990, %v988
  %v1083 = vpack.c.bf16 %v991, %v989
  %v1084 = vpack.c.bf16 %v994, %v992
  %v1085 = vpack.c.bf16 %v995, %v993
  %v1086 = vpack.c.bf16 %v998, %v996
  %v1087 = vpack.c.bf16 %v999, %v997
  %v1088 = vpack.c.bf16 %v1002, %v1000
  %v1089 = vpack.c.bf16 %v1003, %v1001
  %v1090 = vpack.c.bf16 %v1006, %v1004
  %v1091 = vpack.c.bf16 %v1007, %v1005
  %v1092 = vpack.c.bf16 %v1010, %v1008
  %v1093 = vpack.c.bf16 %v1011, %v1009
  %v1094 = vpack.c.bf16 %v1014, %v1012
  %v1095 = vpack.c.bf16 %v1015, %v1013
  %v1096 = vpack.c.bf16 %v1018, %v1016
  %v1097 = vpack.c.bf16 %v1019, %v1017
  %v1098 = vpack.c.bf16 %v1022, %v1020
  %v1099 = vpack.c.bf16 %v1023, %v1021
  %v1100 = vpack.c.bf16 %v1026, %v1024
  %v1101 = vpack.c.bf16 %v1027, %v1025
  %v1102 = vpack.c.bf16 %v1030, %v1028
  %v1103 = vpack.c.bf16 %v1031, %v1029
  %v1104 = vpack.c.bf16 %v1034, %v1032
  %v1105 = vpack.c.bf16 %v1035, %v1033
  %v1106 = vpack.c.bf16 %v1038, %v1036
  %v1107 = vpack.c.bf16 %v1039, %v1037
  %v1108 = vpack.c.bf16 %v1042, %v1040
  %v1109 = vpack.c.bf16 %v1043, %v1041
  %v1110 = vpack.c.bf16 %v1046, %v1044
  %v1111 = vpack.c.bf16 %v1047, %v1045
  %v1112 = vld [vmem:[%s3] sm:$0xf]
  %v1113 = vld [vmem:[%s3 + $0x4] sm:$0xf]
  %v1114 = vld [vmem:[%s3 + $0x8] sm:$0xf]
  %v1115 = vld [vmem:[%s3 + $0xc] sm:$0xf]
  %v1116 = vld [vmem:[%s3 + $0x10] sm:$0xf]
  %v1117 = vld [vmem:[%s3 + $0x14] sm:$0xf]
  %v1118 = vld [vmem:[%s3 + $0x18] sm:$0xf]
  %v1119 = vld [vmem:[%s3 + $0x1c] sm:$0xf]
  %v1120 = vld [vmem:[%s3 + $0x20] sm:$0xf]
  %v1121 = vld [vmem:[%s3 + $0x24] sm:$0xf]
  %v1122 = vld [vmem:[%s3 + $0x28] sm:$0xf]
  %v1123 = vld [vmem:[%s3 + $0x2c] sm:$0xf]
  %v1124 = vld [vmem:[%s3 + $0x30] sm:$0xf]
  %v1125 = vld [vmem:[%s3 + $0x34] sm:$0xf]
  %v1126 = vld [vmem:[%s3 + $0x38] sm:$0xf]
  %v1127 = vld [vmem:[%s3 + $0x3c] sm:$0xf]
  %v1128 = vld [vmem:[%s3 + $0x40] sm:$0xf]
  %v1129 = vld [vmem:[%s3 + $0x44] sm:$0xf]
  %v1130 = vld [vmem:[%s3 + $0x48] sm:$0xf]
  %v1131 = vld [vmem:[%s3 + $0x4c] sm:$0xf]
  %v1132 = vld [vmem:[%s3 + $0x50] sm:$0xf]
  %v1133 = vld [vmem:[%s3 + $0x54] sm:$0xf]
  %v1134 = vld [vmem:[%s3 + $0x58] sm:$0xf]
  %v1135 = vld [vmem:[%s3 + $0x5c] sm:$0xf]
  %v1136 = vld [vmem:[%s3 + $0x60] sm:$0xf]
  %v1137 = vld [vmem:[%s3 + $0x64] sm:$0xf]
  %v1138 = vld [vmem:[%s3 + $0x68] sm:$0xf]
  %v1139 = vld [vmem:[%s3 + $0x6c] sm:$0xf]
  %v1140 = vld [vmem:[%s3 + $0x70] sm:$0xf]
  %v1141 = vld [vmem:[%s3 + $0x74] sm:$0xf]
  %v1142 = vld [vmem:[%s3 + $0x78] sm:$0xf]
  %v1143 = vld [vmem:[%s3 + $0x7c] sm:$0xf]
  %v1176 = vunpack.c.l.b16 %v1112
  %v1177 = vunpack.c.l.b16 %v1113
  %v1178 = vunpack.c.l.b16 %v1114
  %v1179 = vunpack.c.l.b16 %v1115
  %v1180 = vunpack.c.l.b16 %v1116
  %v1181 = vunpack.c.l.b16 %v1117
  %v1182 = vunpack.c.l.b16 %v1118
  %v1183 = vunpack.c.l.b16 %v1119
  %v1184 = vunpack.c.l.b16 %v1120
  %v1185 = vunpack.c.l.b16 %v1121
  %v1186 = vunpack.c.l.b16 %v1122
  %v1187 = vunpack.c.l.b16 %v1123
  %v1188 = vunpack.c.l.b16 %v1124
  %v1189 = vunpack.c.l.b16 %v1125
  %v1190 = vunpack.c.l.b16 %v1126
  %v1191 = vunpack.c.l.b16 %v1127
  %v1192 = vunpack.c.l.b16 %v1128
  %v1193 = vunpack.c.l.b16 %v1129
  %v1194 = vunpack.c.l.b16 %v1130
  %v1195 = vunpack.c.l.b16 %v1131
  %v1196 = vunpack.c.l.b16 %v1132
  %v1197 = vunpack.c.l.b16 %v1133
  %v1198 = vunpack.c.l.b16 %v1134
  %v1199 = vunpack.c.l.b16 %v1135
  %v1200 = vunpack.c.l.b16 %v1136
  %v1201 = vunpack.c.l.b16 %v1137
  %v1202 = vunpack.c.l.b16 %v1138
  %v1203 = vunpack.c.l.b16 %v1139
  %v1204 = vunpack.c.l.b16 %v1140
  %v1205 = vunpack.c.l.b16 %v1141
  %v1206 = vunpack.c.l.b16 %v1142
  %v1207 = vunpack.c.l.b16 %v1143
  %v1208 = vpack.c.b16 %v1177, %v1176
  %v1209 = vpack.c.b16 %v1179, %v1178
  %v1210 = vpack.c.b16 %v1181, %v1180
  %v1211 = vpack.c.b16 %v1183, %v1182
  %v1212 = vpack.c.b16 %v1185, %v1184
  %v1213 = vpack.c.b16 %v1187, %v1186
  %v1214 = vpack.c.b16 %v1189, %v1188
  %v1215 = vpack.c.b16 %v1191, %v1190
  %v1216 = vpack.c.b16 %v1193, %v1192
  %v1217 = vpack.c.b16 %v1195, %v1194
  %v1218 = vpack.c.b16 %v1197, %v1196
  %v1219 = vpack.c.b16 %v1199, %v1198
  %v1220 = vpack.c.b16 %v1201, %v1200
  %v1221 = vpack.c.b16 %v1203, %v1202
  %v1222 = vpack.c.b16 %v1205, %v1204
  %v1223 = vpack.c.b16 %v1207, %v1206
  %1240 = vmatprep.subr.bf16.mxu0 0
  %1241 = vmatpush1.bf16.msra.mxu0 %v1208
  %1242 = vmatprep.subr.bf16.mxu0 0
  %1243 = vmatpush1.bf16.msra.mxu0 %v1209
  %1244 = vmatprep.subr.bf16.mxu0 0
  %1245 = vmatpush1.bf16.msra.mxu0 %v1210
  %1246 = vmatprep.subr.bf16.mxu0 0
  %1247 = vmatpush1.bf16.msra.mxu0 %v1211
  %1248 = vmatprep.subr.bf16.mxu0 0
  %1249 = vmatpush1.bf16.msra.mxu0 %v1212
  %1250 = vmatprep.subr.bf16.mxu0 0
  %1251 = vmatpush1.bf16.msra.mxu0 %v1213
  %1252 = vmatprep.subr.bf16.mxu0 0
  %1253 = vmatpush1.bf16.msra.mxu0 %v1214
  %1254 = vmatprep.subr.bf16.mxu0 0
  %1255 = vmatpush1.bf16.msra.mxu0 %v1215
  %1256 = vmatprep.subr.bf16.mxu0 0
  %1257 = vmatpush1.bf16.msra.mxu0 %v1216
  %1258 = vmatprep.subr.bf16.mxu0 0
  %1259 = vmatpush1.bf16.msra.mxu0 %v1217
  %1260 = vmatprep.subr.bf16.mxu0 0
  %1261 = vmatpush1.bf16.msra.mxu0 %v1218
  %1262 = vmatprep.subr.bf16.mxu0 0
  %1263 = vmatpush1.bf16.msra.mxu0 %v1219
  %1264 = vmatprep.subr.bf16.mxu0 0
  %1265 = vmatpush1.bf16.msra.mxu0 %v1220
  %1266 = vmatprep.subr.bf16.mxu0 0
  %1267 = vmatpush1.bf16.msra.mxu0 %v1221
  %1268 = vmatprep.subr.bf16.mxu0 0
  %1269 = vmatpush1.bf16.msra.mxu0 %v1222
  %1270 = vmatprep.subr.bf16.mxu0 0
  %1271 = vmatpush1.bf16.msra.mxu0 %v1223
  %1272 = vmatprep.mubr.bf16.mxu0 %v1081
  %1273 = vmatmul.mubr.bf16.gmra.mrb[0].mxu0 %v1080
  %v1274 = vpop.f32.mrb[0].mxu0
  %v1275 = vadd.f32 0.0, %v1274
  %v1276 = vpop.f32.mrb[0].mxu0
  %v1277 = vpop.f32.mrb[0].mxu0
  %v1278 = vadd.f32 0.0, %v1277
  %v1279 = vpop.f32.mrb[0].mxu0
  %1280 = vmatprep.mubr.bf16.mxu0 %v1083
  %1281 = vmatmul.mubr.bf16.gmra.mrb[0].mxu0 %v1082
  %v1282 = vpop.f32.mrb[0].mxu0
  %v1283 = vadd.f32 0.0, %v1282
  %v1284 = vpop.f32.mrb[0].mxu0
  %v1285 = vpop.f32.mrb[0].mxu0
  %v1286 = vadd.f32 0.0, %v1285
  %v1287 = vpop.f32.mrb[0].mxu0
  %1288 = vmatprep.mubr.bf16.mxu0 %v1085
  %1289 = vmatmul.mubr.bf16.gmra.mrb[0].mxu0 %v1084
  %v1290 = vpop.f32.mrb[0].mxu0
  %v1291 = vadd.f32 0.0, %v1290
  %v1292 = vpop.f32.mrb[0].mxu0
  %v1293 = vpop.f32.mrb[0].mxu0
  %v1294 = vadd.f32 0.0, %v1293
  %v1295 = vpop.f32.mrb[0].mxu0
  %1296 = vmatprep.mubr.bf16.mxu0 %v1087
  %1297 = vmatmul.mubr.bf16.gmra.mrb[0].mxu0 %v1086
  %v1298 = vpop.f32.mrb[0].mxu0
  %v1299 = vadd.f32 0.0, %v1298
  %v1300 = vpop.f32.mrb[0].mxu0
  %v1301 = vpop.f32.mrb[0].mxu0
  %v1302 = vadd.f32 0.0, %v1301
  %v1303 = vpop.f32.mrb[0].mxu0
  %1304 = vmatprep.mubr.bf16.mxu0 %v1089
  %1305 = vmatmul.mubr.bf16.gmra.mrb[0].mxu0 %v1088
  %v1306 = vpop.f32.mrb[0].mxu0
  %v1307 = vadd.f32 0.0, %v1306
  %v1308 = vpop.f32.mrb[0].mxu0
  %v1309 = vpop.f32.mrb[0].mxu0
  %v1310 = vadd.f32 0.0, %v1309
  %v1311 = vpop.f32.mrb[0].mxu0
  %1312 = vmatprep.mubr.bf16.mxu0 %v1091
  %1313 = vmatmul.mubr.bf16.gmra.mrb[0].mxu0 %v1090
  %v1314 = vpop.f32.mrb[0].mxu0
  %v1315 = vadd.f32 0.0, %v1314
  %v1316 = vpop.f32.mrb[0].mxu0
  %v1317 = vpop.f32.mrb[0].mxu0
  %v1318 = vadd.f32 0.0, %v1317
  %v1319 = vpop.f32.mrb[0].mxu0
  %1320 = vmatprep.mubr.bf16.mxu0 %v1093
  %1321 = vmatmul.mubr.bf16.gmra.mrb[0].mxu0 %v1092
  %v1322 = vpop.f32.mrb[0].mxu0
  %v1323 = vadd.f32 0.0, %v1322
  %v1324 = vpop.f32.mrb[0].mxu0
  %v1325 = vpop.f32.mrb[0].mxu0
  %v1326 = vadd.f32 0.0, %v1325
  %v1327 = vpop.f32.mrb[0].mxu0
  %1328 = vmatprep.mubr.bf16.mxu0 %v1095
  %1329 = vmatmul.mubr.bf16.gmra.mrb[0].mxu0 %v1094
  %v1330 = vpop.f32.mrb[0].mxu0
  %v1331 = vadd.f32 0.0, %v1330
  %v1332 = vpop.f32.mrb[0].mxu0
  %v1333 = vpop.f32.mrb[0].mxu0
  %v1334 = vadd.f32 0.0, %v1333
  %v1335 = vpop.f32.mrb[0].mxu0
  %1336 = vmatprep.mubr.bf16.mxu0 %v1097
  %1337 = vmatmul.mubr.bf16.gmra.mrb[0].mxu0 %v1096
  %v1338 = vpop.f32.mrb[0].mxu0
  %v1339 = vadd.f32 0.0, %v1338
  %v1340 = vpop.f32.mrb[0].mxu0
  %v1341 = vpop.f32.mrb[0].mxu0
  %v1342 = vadd.f32 0.0, %v1341
  %v1343 = vpop.f32.mrb[0].mxu0
  %1344 = vmatprep.mubr.bf16.mxu0 %v1099
  %1345 = vmatmul.mubr.bf16.gmra.mrb[0].mxu0 %v1098
  %v1346 = vpop.f32.mrb[0].mxu0
  %v1347 = vadd.f32 0.0, %v1346
  %v1348 = vpop.f32.mrb[0].mxu0
  %v1349 = vpop.f32.mrb[0].mxu0
  %v1350 = vadd.f32 0.0, %v1349
  %v1351 = vpop.f32.mrb[0].mxu0
  %1352 = vmatprep.mubr.bf16.mxu0 %v1101
  %1353 = vmatmul.mubr.bf16.gmra.mrb[0].mxu0 %v1100
  %v1354 = vpop.f32.mrb[0].mxu0
  %v1355 = vadd.f32 0.0, %v1354
  %v1356 = vpop.f32.mrb[0].mxu0
  %v1357 = vpop.f32.mrb[0].mxu0
  %v1358 = vadd.f32 0.0, %v1357
  %v1359 = vpop.f32.mrb[0].mxu0
  %1360 = vmatprep.mubr.bf16.mxu0 %v1103
  %1361 = vmatmul.mubr.bf16.gmra.mrb[0].mxu0 %v1102
  %v1362 = vpop.f32.mrb[0].mxu0
  %v1363 = vadd.f32 0.0, %v1362
  %v1364 = vpop.f32.mrb[0].mxu0
  %v1365 = vpop.f32.mrb[0].mxu0
  %v1366 = vadd.f32 0.0, %v1365
  %v1367 = vpop.f32.mrb[0].mxu0
  %1368 = vmatprep.mubr.bf16.mxu0 %v1105
  %1369 = vmatmul.mubr.bf16.gmra.mrb[0].mxu0 %v1104
  %v1370 = vpop.f32.mrb[0].mxu0
  %v1371 = vadd.f32 0.0, %v1370
  %v1372 = vpop.f32.mrb[0].mxu0
  %v1373 = vpop.f32.mrb[0].mxu0
  %v1374 = vadd.f32 0.0, %v1373
  %v1375 = vpop.f32.mrb[0].mxu0
  %1376 = vmatprep.mubr.bf16.mxu0 %v1107
  %1377 = vmatmul.mubr.bf16.gmra.mrb[0].mxu0 %v1106
  %v1378 = vpop.f32.mrb[0].mxu0
  %v1379 = vadd.f32 0.0, %v1378
  %v1380 = vpop.f32.mrb[0].mxu0
  %v1381 = vpop.f32.mrb[0].mxu0
  %v1382 = vadd.f32 0.0, %v1381
  %v1383 = vpop.f32.mrb[0].mxu0
  %1384 = vmatprep.mubr.bf16.mxu0 %v1109
  %1385 = vmatmul.mubr.bf16.gmra.mrb[0].mxu0 %v1108
  %v1386 = vpop.f32.mrb[0].mxu0
  %v1387 = vadd.f32 0.0, %v1386
  %v1388 = vpop.f32.mrb[0].mxu0
  %v1389 = vpop.f32.mrb[0].mxu0
  %v1390 = vadd.f32 0.0, %v1389
  %v1391 = vpop.f32.mrb[0].mxu0
  %1392 = vmatprep.mubr.bf16.mxu0 %v1111
  %1393 = vmatmul.mubr.bf16.gmra.mrb[0].mxu0 %v1110
  %v1394 = vpop.f32.mrb[0].mxu0
  %v1395 = vadd.f32 0.0, %v1394
  %v1396 = vpop.f32.mrb[0].mxu0
  %v1397 = vpop.f32.mrb[0].mxu0
  %v1398 = vadd.f32 0.0, %v1397
  %v1399 = vpop.f32.mrb[0].mxu0
  %1400 = vdwg.mxu0
  %v1401 = vadd.f32 %v1048, %v1275
  %v1402 = vadd.f32 %v1049, %v1278
  %v1403 = vadd.f32 %v1050, %v1283
  %v1404 = vadd.f32 %v1051, %v1286
  %v1405 = vadd.f32 %v1052, %v1291
  %v1406 = vadd.f32 %v1053, %v1294
  %v1407 = vadd.f32 %v1054, %v1299
  %v1408 = vadd.f32 %v1055, %v1302
  %v1409 = vadd.f32 %v1056, %v1307
  %v1410 = vadd.f32 %v1057, %v1310
  %v1411 = vadd.f32 %v1058, %v1315
  %v1412 = vadd.f32 %v1059, %v1318
  %v1413 = vadd.f32 %v1060, %v1323
  %v1414 = vadd.f32 %v1061, %v1326
  %v1415 = vadd.f32 %v1062, %v1331
  %v1416 = vadd.f32 %v1063, %v1334
  %v1417 = vadd.f32 %v1064, %v1339
  %v1418 = vadd.f32 %v1065, %v1342
  %v1419 = vadd.f32 %v1066, %v1347
  %v1420 = vadd.f32 %v1067, %v1350
  %v1421 = vadd.f32 %v1068, %v1355
  %v1422 = vadd.f32 %v1069, %v1358
  %v1423 = vadd.f32 %v1070, %v1363
  %v1424 = vadd.f32 %v1071, %v1366
  %v1425 = vadd.f32 %v1072, %v1371
  %v1426 = vadd.f32 %v1073, %v1374
  %v1427 = vadd.f32 %v1074, %v1379
  %v1428 = vadd.f32 %v1075, %v1382
  %v1429 = vadd.f32 %v1076, %v1387
  %v1430 = vadd.f32 %v1077, %v1390
  %v1431 = vadd.f32 %v1078, %v1395
  %v1432 = vadd.f32 %v1079, %v1398
  %1433 = vst.msk [vmem:[#allocation2] sm:$0xff] %vm230, %v1401
  %1434 = vst.msk [vmem:[#allocation2 + $0x8] sm:$0xff] %vm230, %v1402
  %1435 = vst.msk [vmem:[#allocation2 + $0x10] sm:$0xff] %vm230, %v1403
  %1436 = vst.msk [vmem:[#allocation2 + $0x18] sm:$0xff] %vm230, %v1404
  %1437 = vst.msk [vmem:[#allocation2 + $0x20] sm:$0xff] %vm230, %v1405
  %1438 = vst.msk [vmem:[#allocation2 + $0x28] sm:$0xff] %vm230, %v1406
  %1439 = vst.msk [vmem:[#allocation2 + $0x30] sm:$0xff] %vm230, %v1407
  %1440 = vst.msk [vmem:[#allocation2 + $0x38] sm:$0xff] %vm230, %v1408
  %1441 = vst.msk [vmem:[#allocation2 + $0x40] sm:$0xff] %vm230, %v1409
  %1442 = vst.msk [vmem:[#allocation2 + $0x48] sm:$0xff] %vm230, %v1410
  %1443 = vst.msk [vmem:[#allocation2 + $0x50] sm:$0xff] %vm230, %v1411
  %1444 = vst.msk [vmem:[#allocation2 + $0x58] sm:$0xff] %vm230, %v1412
  %1445 = vst.msk [vmem:[#allocation2 + $0x60] sm:$0xff] %vm230, %v1413
  %1446 = vst.msk [vmem:[#allocation2 + $0x68] sm:$0xff] %vm230, %v1414
  %1447 = vst.msk [vmem:[#allocation2 + $0x70] sm:$0xff] %vm230, %v1415
  %1448 = vst.msk [vmem:[#allocation2 + $0x78] sm:$0xff] %vm230, %v1416
  %1449 = vst.msk [vmem:[#allocation2 + $0x80] sm:$0xff] %vm230, %v1417
  %1450 = vst.msk [vmem:[#allocation2 + $0x88] sm:$0xff] %vm230, %v1418
  %1451 = vst.msk [vmem:[#allocation2 + $0x90] sm:$0xff] %vm230, %v1419
  %1452 = vst.msk [vmem:[#allocation2 + $0x98] sm:$0xff] %vm230, %v1420
  %1453 = vst.msk [vmem:[#allocation2 + $0xa0] sm:$0xff] %vm230, %v1421
  %1454 = vst.msk [vmem:[#allocation2 + $0xa8] sm:$0xff] %vm230, %v1422
  %1455 = vst.msk [vmem:[#allocation2 + $0xb0] sm:$0xff] %vm230, %v1423
  %1456 = vst.msk [vmem:[#allocation2 + $0xb8] sm:$0xff] %vm230, %v1424
  %1457 = vst.msk [vmem:[#allocation2 + $0xc0] sm:$0xff] %vm230, %v1425
  %1458 = vst.msk [vmem:[#allocation2 + $0xc8] sm:$0xff] %vm230, %v1426
  %1459 = vst.msk [vmem:[#allocation2 + $0xd0] sm:$0xff] %vm230, %v1427
  %1460 = vst.msk [vmem:[#allocation2 + $0xd8] sm:$0xff] %vm230, %v1428
  %1461 = vst.msk [vmem:[#allocation2 + $0xe0] sm:$0xff] %vm230, %v1429
  %1462 = vst.msk [vmem:[#allocation2 + $0xe8] sm:$0xff] %vm230, %v1430
  %1463 = vst.msk [vmem:[#allocation2 + $0xf0] sm:$0xff] %vm230, %v1431
  %1464 = vst.msk [vmem:[#allocation2 + $0xf8] sm:$0xff] %vm230, %v1432
  // Predicated region
  $region26: #{warp_attn_forward.14} parent=0 // pred_check
    %p1465 = pneg %p21
  $region27: #{warp_attn_forward.14} parent=0 // pred_check_branch
    %1467 = sbr.rel (%p1465) target = $region29
  $region28: #{warp_attn_forward.14} parent=0 // pred_region
    %v1468 = vld [vmem:[#allocation2] sm:$0xff]
    %v1469 = vld [vmem:[#allocation2 + $0x8] sm:$0xff]
    %v1470 = vld [vmem:[#allocation2 + $0x10] sm:$0xff]
    %v1471 = vld [vmem:[#allocation2 + $0x18] sm:$0xff]
    %v1472 = vld [vmem:[#allocation2 + $0x20] sm:$0xff]
    %v1473 = vld [vmem:[#allocation2 + $0x28] sm:$0xff]
    %v1474 = vld [vmem:[#allocation2 + $0x30] sm:$0xff]
    %v1475 = vld [vmem:[#allocation2 + $0x38] sm:$0xff]
    %v1476 = vld [vmem:[#allocation2 + $0x40] sm:$0xff]
    %v1477 = vld [vmem:[#allocation2 + $0x48] sm:$0xff]
    %v1478 = vld [vmem:[#allocation2 + $0x50] sm:$0xff]
    %v1479 = vld [vmem:[#allocation2 + $0x58] sm:$0xff]
    %v1480 = vld [vmem:[#allocation2 + $0x60] sm:$0xff]
    %v1481 = vld [vmem:[#allocation2 + $0x68] sm:$0xff]
    %v1482 = vld [vmem:[#allocation2 + $0x70] sm:$0xff]
    %v1483 = vld [vmem:[#allocation2 + $0x78] sm:$0xff]
    %v1484 = vld [vmem:[#allocation2 + $0x80] sm:$0xff]
    %v1485 = vld [vmem:[#allocation2 + $0x88] sm:$0xff]
    %v1486 = vld [vmem:[#allocation2 + $0x90] sm:$0xff]
    %v1487 = vld [vmem:[#allocation2 + $0x98] sm:$0xff]
    %v1488 = vld [vmem:[#allocation2 + $0xa0] sm:$0xff]
    %v1489 = vld [vmem:[#allocation2 + $0xa8] sm:$0xff]
    %v1490 = vld [vmem:[#allocation2 + $0xb0] sm:$0xff]
    %v1491 = vld [vmem:[#allocation2 + $0xb8] sm:$0xff]
    %v1492 = vld [vmem:[#allocation2 + $0xc0] sm:$0xff]
    %v1493 = vld [vmem:[#allocation2 + $0xc8] sm:$0xff]
    %v1494 = vld [vmem:[#allocation2 + $0xd0] sm:$0xff]
    %v1495 = vld [vmem:[#allocation2 + $0xd8] sm:$0xff]
    %v1496 = vld [vmem:[#allocation2 + $0xe0] sm:$0xff]
    %v1497 = vld [vmem:[#allocation2 + $0xe8] sm:$0xff]
    %v1498 = vld [vmem:[#allocation2 + $0xf0] sm:$0xff]
    %v1499 = vld [vmem:[#allocation2 + $0xf8] sm:$0xff]
    %v1500 = vld [vmem:[%s4] sm:$0x1]
    %v1502 = vlaneseq
    %v1503 = vshrl.u32 %v1502, 7
    %v1504 = vsub.s32 0, %v1503
    %v1505 = vrot.slane %v1500, %v1504
    %v1507 = vadd.f32 %v1468, %v1505
    %v1508 = vadd.f32 %v1469, %v1505
    %v1509 = vadd.f32 %v1470, %v1505
    %v1510 = vadd.f32 %v1471, %v1505
    %v1511 = vadd.f32 %v1472, %v1505
    %v1512 = vadd.f32 %v1473, %v1505
    %v1513 = vadd.f32 %v1474, %v1505
    %v1514 = vadd.f32 %v1475, %v1505
    %v1515 = vadd.f32 %v1476, %v1505
    %v1516 = vadd.f32 %v1477, %v1505
    %v1517 = vadd.f32 %v1478, %v1505
    %v1518 = vadd.f32 %v1479, %v1505
    %v1519 = vadd.f32 %v1480, %v1505
    %v1520 = vadd.f32 %v1481, %v1505
    %v1521 = vadd.f32 %v1482, %v1505
    %v1522 = vadd.f32 %v1483, %v1505
    %v1523 = vadd.f32 %v1484, %v1505
    %v1524 = vadd.f32 %v1485, %v1505
    %v1525 = vadd.f32 %v1486, %v1505
    %v1526 = vadd.f32 %v1487, %v1505
    %v1527 = vadd.f32 %v1488, %v1505
    %v1528 = vadd.f32 %v1489, %v1505
    %v1529 = vadd.f32 %v1490, %v1505
    %v1530 = vadd.f32 %v1491, %v1505
    %v1531 = vadd.f32 %v1492, %v1505
    %v1532 = vadd.f32 %v1493, %v1505
    %v1533 = vadd.f32 %v1494, %v1505
    %v1534 = vadd.f32 %v1495, %v1505
    %v1535 = vadd.f32 %v1496, %v1505
    %v1536 = vadd.f32 %v1497, %v1505
    %v1537 = vadd.f32 %v1498, %v1505
    %v1538 = vadd.f32 %v1499, %v1505
    %1539 = vst.msk [vmem:[%s5] sm:$0xff] %vm230, %v1507
    %1540 = vst.msk [vmem:[%s5 + $0x8] sm:$0xff] %vm230, %v1508
    %1541 = vst.msk [vmem:[%s5 + $0x10] sm:$0xff] %vm230, %v1509
    %1542 = vst.msk [vmem:[%s5 + $0x18] sm:$0xff] %vm230, %v1510
    %1543 = vst.msk [vmem:[%s5 + $0x20] sm:$0xff] %vm230, %v1511
    %1544 = vst.msk [vmem:[%s5 + $0x28] sm:$0xff] %vm230, %v1512
    %1545 = vst.msk [vmem:[%s5 + $0x30] sm:$0xff] %vm230, %v1513
    %1546 = vst.msk [vmem:[%s5 + $0x38] sm:$0xff] %vm230, %v1514
    %1547 = vst.msk [vmem:[%s5 + $0x40] sm:$0xff] %vm230, %v1515
    %1548 = vst.msk [vmem:[%s5 + $0x48] sm:$0xff] %vm230, %v1516
    %1549 = vst.msk [vmem:[%s5 + $0x50] sm:$0xff] %vm230, %v1517
    %1550 = vst.msk [vmem:[%s5 + $0x58] sm:$0xff] %vm230, %v1518
    %1551 = vst.msk [vmem:[%s5 + $0x60] sm:$0xff] %vm230, %v1519
    %1552 = vst.msk [vmem:[%s5 + $0x68] sm:$0xff] %vm230, %v1520
    %1553 = vst.msk [vmem:[%s5 + $0x70] sm:$0xff] %vm230, %v1521
    %1554 = vst.msk [vmem:[%s5 + $0x78] sm:$0xff] %vm230, %v1522
    %1555 = vst.msk [vmem:[%s5 + $0x80] sm:$0xff] %vm230, %v1523
    %1556 = vst.msk [vmem:[%s5 + $0x88] sm:$0xff] %vm230, %v1524
    %1557 = vst.msk [vmem:[%s5 + $0x90] sm:$0xff] %vm230, %v1525
    %1558 = vst.msk [vmem:[%s5 + $0x98] sm:$0xff] %vm230, %v1526
    %1559 = vst.msk [vmem:[%s5 + $0xa0] sm:$0xff] %vm230, %v1527
    %1560 = vst.msk [vmem:[%s5 + $0xa8] sm:$0xff] %vm230, %v1528
    %1561 = vst.msk [vmem:[%s5 + $0xb0] sm:$0xff] %vm230, %v1529
    %1562 = vst.msk [vmem:[%s5 + $0xb8] sm:$0xff] %vm230, %v1530
    %1563 = vst.msk [vmem:[%s5 + $0xc0] sm:$0xff] %vm230, %v1531
    %1564 = vst.msk [vmem:[%s5 + $0xc8] sm:$0xff] %vm230, %v1532
    %1565 = vst.msk [vmem:[%s5 + $0xd0] sm:$0xff] %vm230, %v1533
    %1566 = vst.msk [vmem:[%s5 + $0xd8] sm:$0xff] %vm230, %v1534
    %1567 = vst.msk [vmem:[%s5 + $0xe0] sm:$0xff] %vm230, %v1535
    %1568 = vst.msk [vmem:[%s5 + $0xe8] sm:$0xff] %vm230, %v1536
    %1569 = vst.msk [vmem:[%s5 + $0xf0] sm:$0xff] %vm230, %v1537
    %1570 = vst.msk [vmem:[%s5 + $0xf8] sm:$0xff] %vm230, %v1538
  $region29: #{warp_attn_forward.14} parent=0 // pred_fallthru
    _
  // Predicated region
  $region30: #{warp_attn_forward.14} parent=0 // pred_check
    _
  $region31: #{warp_attn_forward.14} parent=0 // pred_check_branch
    %1572 = sbr.rel (0) target = $region33
  $region32: #{warp_attn_forward.14} parent=0 // pred_region
    _
  $region33: #{warp_attn_forward.14} parent=0 // pred_fallthru
    _
  // Predicated region
  $region34: #{warp_attn_forward.14} parent=0 // pred_check
    _
  $region35: #{warp_attn_forward.14} parent=0 // pred_check_branch
    %1574 = sbr.rel (0) target = $region37
  $region36: #{warp_attn_forward.14} parent=0 // pred_region
    _
  $region37: #{warp_attn_forward.14} parent=0 // pred_fallthru
    _

// kernel: warp_attn_forward.12
$region0: #{warp_attn_forward.12}
  #allocation0 [shape = 'u32[]', space=smem, size = 0x4, offset = 0x4, fixed_abs, tag = 'smem constant byte address 0x4 - core index']
  #allocation1 [shape = 'u32[144,128]{1,0:T(1,128)}', space=vmem, size = 0x12000, scoped, tag = 'internal scratch']
  #allocation2 [shape = 'f32[2,128,1]{2,1,0:T(8,128)}', space=vmem, size = 0x20000, scoped, tag = 'scratch operand']
  #allocation3 [shape = 'f32[2,128,1]{2,1,0:T(8,128)}', space=vmem, size = 0x20000, scoped, tag = 'scratch operand']
  #allocation4 [shape = 'f32[2,128,32]{2,1,0:T(8,128)}', space=vmem, size = 0x20000, scoped, tag = 'scratch operand']
  #allocation5 [shape = 's32[1]{0}', space=sflag, size = 0x4, scoped, tag = 'scoped memory for warp_attn_forward.12']
  #allocation6 [shape = 's32[1,1]{1,0:T(1,128)S(6)}', space=smem, size = 0x200, scoped, tag = 'prefetched SMEM operand 0']
  %s0 = inlined_call_operand.<no memory space> [shape: s32[1,1], index: 0, kind: input, shape index: {}]
  %s1 = inlined_call_operand.vmem [shape: bf16[2,2,128,32], index: 1, kind: input, shape index: {}]
  %s2 = inlined_call_operand.vmem [shape: bf16[2,2,128,32], index: 2, kind: input, shape index: {}]
  %s3 = inlined_call_operand.vmem [shape: bf16[2,2,128,32], index: 3, kind: input, shape index: {}]
  %s4 = inlined_call_operand.vmem [shape: s8[1,128,128], index: 4, kind: input, shape index: {}]
  %s5 = inlined_call_operand.vmem [shape: bf16[2,128,64], index: 5, kind: output, shape index: {}]
  %s6 = sld [smem:[#allocation0]]
  $region65: #{warp_attn_forward.12} parent=0
    _
  %s8 = ssub.s32 1, %s6
  %s9 = scalar_select 0, %s8, %s6
  %10 = sst [smem:[#allocation6]] %s0
  loop: start=0, step=1, limit=4
  $region2: #{warp_attn_forward.12} parent=0 // loop_pre_header
    _
  $region3: #{warp_attn_forward.12} parent=0 // loop_header
    %s12 = sphi 0, %s16
    %p13 = scmp.ge.s32.totalorder %s12, 4
    %s19 = sphi 0, %s38
    %s20 = sphi 0, %s34
    %s21 = sphi 0, %s30
    %s22 = sphi 0, %s19
    %s23 = sphi 0, %s20
    %s24 = sphi 0, %s21
    %s25 = sphi 0, %s22
    %s26 = sphi 0, %s23
    %s27 = sphi 0, %s24
    %s43 = sphi 0, %s45
    %s46 = sphi 0, %s43
    %s47 = sphi 0, %s46
    %s63 = sphi 0, %s47
    %s71 = sphi 0, %s73
    %s74 = sphi 0, %s71
    %s75 = sphi 0, %s74
    %s91 = sphi 0, %s75
    %s99 = sphi 0, %s101
    %s102 = sphi 0, %s99
    %s103 = sphi 0, %s102
    %s119 = sphi 0, %s103
    %s127 = sphi 0, %s129
    %s130 = sphi 0, %s127
    %s131 = sphi 0, %s130
    %s147 = sphi 0, %s131
    %s155 = sphi 0, %s157
    %s158 = sphi 0, %s155
    %s159 = sphi 0, %s158
    %s175 = sphi 0, %s159
  $region4: #{warp_attn_forward.12} parent=0 // loop_header_branch
    %15 = sbr.rel (%p13) target = $region8
  $region5: #{warp_attn_forward.12} parent=0 // loop_body
    %s17 = ssub.s32 %s12, 1
    %s18 = ssub.s32 %s12, 2
    %s28 = sadd.s32 1, %s21
    %p29 = scmp.ge.s32.totalorder %s28, 1
    %s30 = scalar_select %p29, 0, %s28
    %s31 = sadd.s32 1, %s20
    %s32 = scalar_select %p29, %s31, %s20
    %p33 = scmp.ge.s32.totalorder %s32, 1
    %s34 = scalar_select %p33, 0, %s32
    %s35 = sadd.s32 1, %s19
    %s36 = scalar_select %p33, %s35, %s19
    %p37 = scmp.ge.s32.totalorder %s36, 2
    %s38 = scalar_select %p37, 0, %s36
    %s39 = ssub.s32 %s19, %s38
    %s40 = ssub.s32 %s20, %s34
    %s41 = sor.u32 %s39, %s40
    %p42 = scmp.eq.s32.totalorder %s41, 0
    %s44 = sadd.s32 %s43, 1
    %s45 = scalar_select %p42, %s43, %s44
    %p48 = pneg %p42
    %p49 = scmp.eq.s32.totalorder %s12, 1
    %p50 = por %p48, %p49
    %p51 = scmp.ne.s32.totalorder %s43, %s46
    %p52 = scmp.eq.s32.totalorder %s12, 0
    %p53 = por %p51, %p52
    %p54 = scmp.ne.s32.totalorder %s43, %s46
    %p55 = scmp.eq.s32.totalorder %s17, 1
    %p56 = por %p54, %p55
    %p57 = scmp.ne.s32.totalorder %s46, %s47
    %p58 = scmp.eq.s32.totalorder %s17, 0
    %p59 = por %p57, %p58
    %p60 = scmp.ne.s32.totalorder %s46, %s47
    %p61 = scmp.eq.s32.totalorder %s18, 1
    %p62 = por %p60, %p61
    %p64 = scmp.ne.s32.totalorder %s47, %s63
    %p65 = scmp.eq.s32.totalorder %s18, 0
    %p66 = por %p64, %p65
    %s67 = ssub.s32 %s19, %s38
    %s68 = ssub.s32 %s21, %s30
    %s69 = sor.u32 %s67, %s68
    %p70 = scmp.eq.s32.totalorder %s69, 0
    %s72 = sadd.s32 %s71, 1
    %s73 = scalar_select %p70, %s71, %s72
    %p76 = pneg %p70
    %p77 = scmp.eq.s32.totalorder %s12, 1
    %p78 = por %p76, %p77
    %p79 = scmp.ne.s32.totalorder %s71, %s74
    %p80 = scmp.eq.s32.totalorder %s12, 0
    %p81 = por %p79, %p80
    %p82 = scmp.ne.s32.totalorder %s71, %s74
    %p83 = scmp.eq.s32.totalorder %s17, 1
    %p84 = por %p82, %p83
    %p85 = scmp.ne.s32.totalorder %s74, %s75
    %p86 = scmp.eq.s32.totalorder %s17, 0
    %p87 = por %p85, %p86
    %p88 = scmp.ne.s32.totalorder %s74, %s75
    %p89 = scmp.eq.s32.totalorder %s18, 1
    %p90 = por %p88, %p89
    %p92 = scmp.ne.s32.totalorder %s75, %s91
    %p93 = scmp.eq.s32.totalorder %s18, 0
    %p94 = por %p92, %p93
    %s95 = ssub.s32 %s19, %s38
    %s96 = ssub.s32 %s21, %s30
    %s97 = sor.u32 %s95, %s96
    %p98 = scmp.eq.s32.totalorder %s97, 0
    %s100 = sadd.s32 %s99, 1
    %s101 = scalar_select %p98, %s99, %s100
    %p104 = pneg %p98
    %p105 = scmp.eq.s32.totalorder %s12, 1
    %p106 = por %p104, %p105
    %p107 = scmp.ne.s32.totalorder %s99, %s102
    %p108 = scmp.eq.s32.totalorder %s12, 0
    %p109 = por %p107, %p108
    %p110 = scmp.ne.s32.totalorder %s99, %s102
    %p111 = scmp.eq.s32.totalorder %s17, 1
    %p112 = por %p110, %p111
    %p113 = scmp.ne.s32.totalorder %s102, %s103
    %p114 = scmp.eq.s32.totalorder %s17, 0
    %p115 = por %p113, %p114
    %p116 = scmp.ne.s32.totalorder %s102, %s103
    %p117 = scmp.eq.s32.totalorder %s18, 1
    %p118 = por %p116, %p117
    %p120 = scmp.ne.s32.totalorder %s103, %s119
    %p121 = scmp.eq.s32.totalorder %s18, 0
    %p122 = por %p120, %p121
    %s123 = ssub.s32 %s20, %s34
    %s124 = ssub.s32 %s21, %s30
    %s125 = sor.u32 %s123, %s124
    %p126 = scmp.eq.s32.totalorder %s125, 0
    %s128 = sadd.s32 %s127, 1
    %s129 = scalar_select %p126, %s127, %s128
    %p132 = pneg %p126
    %p133 = scmp.eq.s32.totalorder %s12, 1
    %p134 = por %p132, %p133
    %p135 = scmp.ne.s32.totalorder %s127, %s130
    %p136 = scmp.eq.s32.totalorder %s12, 0
    %p137 = por %p135, %p136
    %p138 = scmp.ne.s32.totalorder %s127, %s130
    %p139 = scmp.eq.s32.totalorder %s17, 1
    %p140 = por %p138, %p139
    %p141 = scmp.ne.s32.totalorder %s130, %s131
    %p142 = scmp.eq.s32.totalorder %s17, 0
    %p143 = por %p141, %p142
    %p144 = scmp.ne.s32.totalorder %s130, %s131
    %p145 = scmp.eq.s32.totalorder %s18, 1
    %p146 = por %p144, %p145
    %p148 = scmp.ne.s32.totalorder %s131, %s147
    %p149 = scmp.eq.s32.totalorder %s18, 0
    %p150 = por %p148, %p149
    %s151 = ssub.s32 %s19, %s38
    %s152 = ssub.s32 %s20, %s34
    %s153 = sor.u32 %s151, %s152
    %p154 = scmp.eq.s32.totalorder %s153, 0
    %s156 = sadd.s32 %s155, 1
    %s157 = scalar_select %p154, %s155, %s156
    %p160 = pneg %p154
    %p161 = scmp.eq.s32.totalorder %s12, 1
    %p162 = por %p160, %p161
    %p163 = scmp.ne.s32.totalorder %s155, %s158
    %p164 = scmp.eq.s32.totalorder %s12, 0
    %p165 = por %p163, %p164
    %p166 = scmp.ne.s32.totalorder %s155, %s158
    %p167 = scmp.eq.s32.totalorder %s17, 1
    %p168 = por %p166, %p167
    %p169 = scmp.ne.s32.totalorder %s158, %s159
    %p170 = scmp.eq.s32.totalorder %s17, 0
    %p171 = por %p169, %p170
    %p172 = scmp.ne.s32.totalorder %s158, %s159
    %p173 = scmp.eq.s32.totalorder %s18, 1
    %p174 = por %p172, %p173
    %p176 = scmp.ne.s32.totalorder %s159, %s175
    %p177 = scmp.eq.s32.totalorder %s18, 0
    %p178 = por %p176, %p177
    %p179 = scmp.le.s32.totalorder 1, %s12
    %p180 = scmp.lt.s32.totalorder %s12, 3
    %p181 = pnand %p179, %p180
    %p182 = pneg %p181
    // Predicated region
    $region9: #{warp_attn_forward.12} parent=5 // pred_check
      _
    $region10: #{warp_attn_forward.12} parent=5 // pred_check_branch
      %184 = sbr.rel (%p181) target = $region12
    $region11: #{warp_attn_forward.12} parent=5 // pred_region
      %s185 = ssub.s32 %s12, 1
      // Predicated region
      $region13: #{warp_attn_forward.12} parent=11 // pred_check
        %p186 = pneg %p143
      $region14: #{warp_attn_forward.12} parent=11 // pred_check_branch
        %188 = sbr.rel (%p186) target = $region16
      $region15: #{warp_attn_forward.12} parent=11 // pred_region
        %s189 = smul.u32 4, %s23
        %p190 = scmp.lt.s32.totalorder %s189, 3
        %s191 = scalar_select %p190, %s189, 3
        %p192 = scmp.lt.s32.totalorder %s24, 0
        %s193 = scalar_select %p192, %s24, 0
        %s194 = sadd.s32 %s193, %s191
        %s195 = smul.addr %s194, 8
        %s196 = scalar_lea.vmem %s4, %s195
        %s197 = smul.u32 4, %s23
      $region16: #{warp_attn_forward.12} parent=11 // pred_fallthru
        _
    $region12: #{warp_attn_forward.12} parent=5 // pred_fallthru
      _
    %p198 = scmp.lt.s32.totalorder %s12, 2
    // Predicated region
    $region17: #{warp_attn_forward.12} parent=5 // pred_check
      %p199 = pneg %p198
    $region18: #{warp_attn_forward.12} parent=5 // pred_check_branch
      %201 = sbr.rel (%p199) target = $region20
    $region19: #{warp_attn_forward.12} parent=5 // pred_region
      // Predicated region
      $region21: #{warp_attn_forward.12} parent=19 // pred_check
        %p202 = pneg %p53
      $region22: #{warp_attn_forward.12} parent=19 // pred_check_branch
        %204 = sbr.rel (%p202) target = $region24
      $region23: #{warp_attn_forward.12} parent=19 // pred_region
        %s205 = smul.u32 16, %s20
        %p206 = scmp.lt.s32.totalorder %s19, 1
        %s207 = scalar_select %p206, %s19, 1
        %p208 = scmp.lt.s32.totalorder %s205, 15
        %s209 = scalar_select %p208, %s205, 15
        %s210 = smul.addr %s207, 32
        %s211 = sadd.s32 %s209, %s210
        %s212 = smul.addr %s211, 4
        %s213 = scalar_lea.vmem %s1, %s212
        %s214 = smul.u32 16, %s20
      $region24: #{warp_attn_forward.12} parent=19 // pred_fallthru
        _
      // Predicated region
      $region25: #{warp_attn_forward.12} parent=19 // pred_check
        %p215 = pneg %p81
      $region26: #{warp_attn_forward.12} parent=19 // pred_check_branch
        %217 = sbr.rel (%p215) target = $region28
      $region27: #{warp_attn_forward.12} parent=19 // pred_region
        %s218 = smul.u32 16, %s21
        %p219 = scmp.lt.s32.totalorder %s19, 1
        %s220 = scalar_select %p219, %s19, 1
        %p221 = scmp.lt.s32.totalorder %s218, 15
        %s222 = scalar_select %p221, %s218, 15
        %s223 = smul.addr %s220, 32
        %s224 = sadd.s32 %s222, %s223
        %s225 = smul.addr %s224, 4
        %s226 = scalar_lea.vmem %s2, %s225
        %s227 = smul.u32 16, %s21
      $region28: #{warp_attn_forward.12} parent=19 // pred_fallthru
        _
      // Predicated region
      $region29: #{warp_attn_forward.12} parent=19 // pred_check
        %p228 = pneg %p109
      $region30: #{warp_attn_forward.12} parent=19 // pred_check_branch
        %230 = sbr.rel (%p228) target = $region32
      $region31: #{warp_attn_forward.12} parent=19 // pred_region
        %s231 = smul.u32 16, %s21
        %p232 = scmp.lt.s32.totalorder %s19, 1
        %s233 = scalar_select %p232, %s19, 1
        %p234 = scmp.lt.s32.totalorder %s231, 15
        %s235 = scalar_select %p234, %s231, 15
        %s236 = smul.addr %s233, 32
        %s237 = sadd.s32 %s235, %s236
        %s238 = smul.addr %s237, 4
        %s239 = scalar_lea.vmem %s3, %s238
        %s240 = smul.u32 16, %s21
      $region32: #{warp_attn_forward.12} parent=19 // pred_fallthru
        _
    $region20: #{warp_attn_forward.12} parent=5 // pred_fallthru
      _
    %p241 = scmp.le.s32.totalorder 1, %s12
    %p242 = scmp.lt.s32.totalorder %s12, 3
    %p243 = pnand %p241, %p242
    %p244 = pneg %p243
    // Predicated region
    $region33: #{warp_attn_forward.12} parent=5 // pred_check
      _
    $region34: #{warp_attn_forward.12} parent=5 // pred_check_branch
      %246 = sbr.rel (%p243) target = $region36
    $region35: #{warp_attn_forward.12} parent=5 // pred_region
      %s247 = ssub.s32 %s12, 1
      %s248 = smul.u32 16, %s23
      %p249 = scmp.lt.s32.totalorder %s22, 1
      %s250 = scalar_select %p249, %s22, 1
      %p251 = scmp.lt.s32.totalorder %s248, 15
      %s252 = scalar_select %p251, %s248, 15
      %s253 = smul.addr %s250, 32
      %s254 = sadd.s32 %s252, %s253
      %s255 = smul.addr %s254, 4
      %s256 = scalar_lea.vmem %s1, %s255
      %p257 = pneg %p59
      %p258 = pneg %p56
      %s259 = smul.u32 16, %s24
      %p260 = scmp.lt.s32.totalorder %s22, 1
      %s261 = scalar_select %p260, %s22, 1
      %p262 = scmp.lt.s32.totalorder %s259, 15
      %s263 = scalar_select %p262, %s259, 15
      %s264 = smul.addr %s261, 32
      %s265 = sadd.s32 %s263, %s264
      %s266 = smul.addr %s265, 4
      %s267 = scalar_lea.vmem %s2, %s266
      %p268 = pneg %p87
      %p269 = pneg %p84
      %s270 = smul.u32 16, %s24
      %p271 = scmp.lt.s32.totalorder %s22, 1
      %s272 = scalar_select %p271, %s22, 1
      %p273 = scmp.lt.s32.totalorder %s270, 15
      %s274 = scalar_select %p273, %s270, 15
      %s275 = smul.addr %s272, 32
      %s276 = sadd.s32 %s274, %s275
      %s277 = smul.addr %s276, 4
      %s278 = scalar_lea.vmem %s3, %s277
      %p279 = pneg %p115
      %p280 = pneg %p112
      %s281 = smul.u32 4, %s23
      %p282 = scmp.lt.s32.totalorder %s281, 3
      %s283 = scalar_select %p282, %s281, 3
      %p284 = scmp.lt.s32.totalorder %s24, 0
      %s285 = scalar_select %p284, %s24, 0
      %s286 = sadd.s32 %s285, %s283
      %s287 = smul.addr %s286, 8
      %s288 = scalar_lea.vmem %s4, %s287
      %p289 = pneg %p143
      %p290 = pneg %p140
      %p291 = pneg %p171
      %p292 = pneg %p168
      %s293 = smul.u32 16, %s23
      %p294 = scmp.lt.s32.totalorder %s22, 1
      %s295 = scalar_select %p294, %s22, 1
      %p296 = scmp.lt.s32.totalorder %s293, 15
      %s297 = scalar_select %p296, %s293, 15
      %s298 = smul.addr %s295, 16
      %s299 = sadd.s32 %s297, %s298
      %s300 = smul.addr %s299, 4
      %s301 = scalar_lea.vmem %s5, %s300
      %s302 = smul.u32 16, %s23
      %p303 = scmp.lt.s32.totalorder %s22, 1
      %s304 = scalar_select %p303, %s22, 1
      %p305 = scmp.lt.s32.totalorder %s302, 15
      %s306 = scalar_select %p305, %s302, 15
      %s307 = smul.addr %s304, 32
      %s308 = sadd.s32 %s306, %s307
      %s309 = smul.addr %s308, 4
      %s310 = scalar_lea.vmem %s1, %s309
      %s311 = smul.u32 16, %s23
      %s312 = smul.u32 16, %s24
      %p313 = scmp.lt.s32.totalorder %s22, 1
      %s314 = scalar_select %p313, %s22, 1
      %p315 = scmp.lt.s32.totalorder %s312, 15
      %s316 = scalar_select %p315, %s312, 15
      %s317 = smul.addr %s314, 32
      %s318 = sadd.s32 %s316, %s317
      %s319 = smul.addr %s318, 4
      %s320 = scalar_lea.vmem %s2, %s319
      %s321 = smul.u32 16, %s24
      %s322 = smul.u32 16, %s24
      %p323 = scmp.lt.s32.totalorder %s22, 1
      %s324 = scalar_select %p323, %s22, 1
      %p325 = scmp.lt.s32.totalorder %s322, 15
      %s326 = scalar_select %p325, %s322, 15
      %s327 = smul.addr %s324, 32
      %s328 = sadd.s32 %s326, %s327
      %s329 = smul.addr %s328, 4
      %s330 = scalar_lea.vmem %s3, %s329
      %s331 = smul.u32 16, %s24
      %s332 = smul.u32 4, %s23
      %p333 = scmp.lt.s32.totalorder %s332, 3
      %s334 = scalar_select %p333, %s332, 3
      %p335 = scmp.lt.s32.totalorder %s24, 0
      %s336 = scalar_select %p335, %s24, 0
      %s337 = sadd.s32 %s336, %s334
      %s338 = smul.addr %s337, 8
      %s339 = scalar_lea.vmem %s4, %s338
      %s340 = smul.u32 4, %s23
      %s341 = smul.u32 16, %s23
      %p342 = scmp.lt.s32.totalorder %s22, 1
      %s343 = scalar_select %p342, %s22, 1
      %p344 = scmp.lt.s32.totalorder %s341, 15
      %s345 = scalar_select %p344, %s341, 15
      %s346 = smul.addr %s343, 16
      %s347 = sadd.s32 %s345, %s346
      %s348 = smul.addr %s347, 4
      %s349 = scalar_lea.vmem %s5, %s348
      %s350 = smul.u32 16, %s23
      %s354 = sshra.s32 %s24, 7
      %s355 = sand.u32 %s24, 127
      %s356 = sadd.s32 %s354, %s23
      %s357 = smul.u32 %s356, 128
      %s358 = sshra.s32 %s24, 7
      %s359 = sand.u32 %s24, 127
      %s360 = sadd.s32 %s357, %s359
      %s361 = sld [smem:[#allocation6 + %s360]]
      %p362 = scmp.eq.s32.totalorder %s24, 0
      // Predicated region
      $region37: #{warp_attn_forward.12} parent=35 // pred_check
        %p363 = pneg %p362
      $region38: #{warp_attn_forward.12} parent=35 // pred_check_branch
        %365 = sbr.rel (%p363) target = $region40
      $region39: #{warp_attn_forward.12} parent=35 // pred_region
        %vm366 = vcmask 7168
        %367 = vst.msk [vmem:[#allocation2] sm:$0xff] %vm366, -1e+30
        %368 = vst.msk [vmem:[#allocation2 + $0x8] sm:$0xff] %vm366, -1e+30
        %369 = vst.msk [vmem:[#allocation2 + $0x10] sm:$0xff] %vm366, -1e+30
        %370 = vst.msk [vmem:[#allocation2 + $0x18] sm:$0xff] %vm366, -1e+30
        %371 = vst.msk [vmem:[#allocation2 + $0x20] sm:$0xff] %vm366, -1e+30
        %372 = vst.msk [vmem:[#allocation2 + $0x28] sm:$0xff] %vm366, -1e+30
        %373 = vst.msk [vmem:[#allocation2 + $0x30] sm:$0xff] %vm366, -1e+30
        %374 = vst.msk [vmem:[#allocation2 + $0x38] sm:$0xff] %vm366, -1e+30
        %375 = vst.msk [vmem:[#allocation2 + $0x40] sm:$0xff] %vm366, -1e+30
        %376 = vst.msk [vmem:[#allocation2 + $0x48] sm:$0xff] %vm366, -1e+30
        %377 = vst.msk [vmem:[#allocation2 + $0x50] sm:$0xff] %vm366, -1e+30
        %378 = vst.msk [vmem:[#allocation2 + $0x58] sm:$0xff] %vm366, -1e+30
        %379 = vst.msk [vmem:[#allocation2 + $0x60] sm:$0xff] %vm366, -1e+30
        %380 = vst.msk [vmem:[#allocation2 + $0x68] sm:$0xff] %vm366, -1e+30
        %381 = vst.msk [vmem:[#allocation2 + $0x70] sm:$0xff] %vm366, -1e+30
        %382 = vst.msk [vmem:[#allocation2 + $0x78] sm:$0xff] %vm366, -1e+30
        %383 = vst.msk [vmem:[#allocation2 + $0x80] sm:$0xff] %vm366, -1e+30
        %384 = vst.msk [vmem:[#allocation2 + $0x88] sm:$0xff] %vm366, -1e+30
        %385 = vst.msk [vmem:[#allocation2 + $0x90] sm:$0xff] %vm366, -1e+30
        %386 = vst.msk [vmem:[#allocation2 + $0x98] sm:$0xff] %vm366, -1e+30
        %387 = vst.msk [vmem:[#allocation2 + $0xa0] sm:$0xff] %vm366, -1e+30
        %388 = vst.msk [vmem:[#allocation2 + $0xa8] sm:$0xff] %vm366, -1e+30
        %389 = vst.msk [vmem:[#allocation2 + $0xb0] sm:$0xff] %vm366, -1e+30
        %390 = vst.msk [vmem:[#allocation2 + $0xb8] sm:$0xff] %vm366, -1e+30
        %391 = vst.msk [vmem:[#allocation2 + $0xc0] sm:$0xff] %vm366, -1e+30
        %392 = vst.msk [vmem:[#allocation2 + $0xc8] sm:$0xff] %vm366, -1e+30
        %393 = vst.msk [vmem:[#allocation2 + $0xd0] sm:$0xff] %vm366, -1e+30
        %394 = vst.msk [vmem:[#allocation2 + $0xd8] sm:$0xff] %vm366, -1e+30
        %395 = vst.msk [vmem:[#allocation2 + $0xe0] sm:$0xff] %vm366, -1e+30
        %396 = vst.msk [vmem:[#allocation2 + $0xe8] sm:$0xff] %vm366, -1e+30
        %397 = vst.msk [vmem:[#allocation2 + $0xf0] sm:$0xff] %vm366, -1e+30
        %398 = vst.msk [vmem:[#allocation2 + $0xf8] sm:$0xff] %vm366, -1e+30
        %399 = vst.msk [vmem:[#allocation3] sm:$0xff] %vm366, 0.0
        %400 = vst.msk [vmem:[#allocation3 + $0x8] sm:$0xff] %vm366, 0.0
        %401 = vst.msk [vmem:[#allocation3 + $0x10] sm:$0xff] %vm366, 0.0
        %402 = vst.msk [vmem:[#allocation3 + $0x18] sm:$0xff] %vm366, 0.0
        %403 = vst.msk [vmem:[#allocation3 + $0x20] sm:$0xff] %vm366, 0.0
        %404 = vst.msk [vmem:[#allocation3 + $0x28] sm:$0xff] %vm366, 0.0
        %405 = vst.msk [vmem:[#allocation3 + $0x30] sm:$0xff] %vm366, 0.0
        %406 = vst.msk [vmem:[#allocation3 + $0x38] sm:$0xff] %vm366, 0.0
        %407 = vst.msk [vmem:[#allocation3 + $0x40] sm:$0xff] %vm366, 0.0
        %408 = vst.msk [vmem:[#allocation3 + $0x48] sm:$0xff] %vm366, 0.0
        %409 = vst.msk [vmem:[#allocation3 + $0x50] sm:$0xff] %vm366, 0.0
        %410 = vst.msk [vmem:[#allocation3 + $0x58] sm:$0xff] %vm366, 0.0
        %411 = vst.msk [vmem:[#allocation3 + $0x60] sm:$0xff] %vm366, 0.0
        %412 = vst.msk [vmem:[#allocation3 + $0x68] sm:$0xff] %vm366, 0.0
        %413 = vst.msk [vmem:[#allocation3 + $0x70] sm:$0xff] %vm366, 0.0
        %414 = vst.msk [vmem:[#allocation3 + $0x78] sm:$0xff] %vm366, 0.0
        %415 = vst.msk [vmem:[#allocation3 + $0x80] sm:$0xff] %vm366, 0.0
        %416 = vst.msk [vmem:[#allocation3 + $0x88] sm:$0xff] %vm366, 0.0
        %417 = vst.msk [vmem:[#allocation3 + $0x90] sm:$0xff] %vm366, 0.0
        %418 = vst.msk [vmem:[#allocation3 + $0x98] sm:$0xff] %vm366, 0.0
        %419 = vst.msk [vmem:[#allocation3 + $0xa0] sm:$0xff] %vm366, 0.0
        %420 = vst.msk [vmem:[#allocation3 + $0xa8] sm:$0xff] %vm366, 0.0
        %421 = vst.msk [vmem:[#allocation3 + $0xb0] sm:$0xff] %vm366, 0.0
        %422 = vst.msk [vmem:[#allocation3 + $0xb8] sm:$0xff] %vm366, 0.0
        %423 = vst.msk [vmem:[#allocation3 + $0xc0] sm:$0xff] %vm366, 0.0
        %424 = vst.msk [vmem:[#allocation3 + $0xc8] sm:$0xff] %vm366, 0.0
        %425 = vst.msk [vmem:[#allocation3 + $0xd0] sm:$0xff] %vm366, 0.0
        %426 = vst.msk [vmem:[#allocation3 + $0xd8] sm:$0xff] %vm366, 0.0
        %427 = vst.msk [vmem:[#allocation3 + $0xe0] sm:$0xff] %vm366, 0.0
        %428 = vst.msk [vmem:[#allocation3 + $0xe8] sm:$0xff] %vm366, 0.0
        %429 = vst.msk [vmem:[#allocation3 + $0xf0] sm:$0xff] %vm366, 0.0
        %430 = vst.msk [vmem:[#allocation3 + $0xf8] sm:$0xff] %vm366, 0.0
        %vm431 = vcmask 261120
        %432 = vst.msk [vmem:[#allocation4] sm:$0xff] %vm431, 0.0
        %433 = vst.msk [vmem:[#allocation4 + $0x8] sm:$0xff] %vm431, 0.0
        %434 = vst.msk [vmem:[#allocation4 + $0x10] sm:$0xff] %vm431, 0.0
        %435 = vst.msk [vmem:[#allocation4 + $0x18] sm:$0xff] %vm431, 0.0
        %436 = vst.msk [vmem:[#allocation4 + $0x20] sm:$0xff] %vm431, 0.0
        %437 = vst.msk [vmem:[#allocation4 + $0x28] sm:$0xff] %vm431, 0.0
        %438 = vst.msk [vmem:[#allocation4 + $0x30] sm:$0xff] %vm431, 0.0
        %439 = vst.msk [vmem:[#allocation4 + $0x38] sm:$0xff] %vm431, 0.0
        %440 = vst.msk [vmem:[#allocation4 + $0x40] sm:$0xff] %vm431, 0.0
        %441 = vst.msk [vmem:[#allocation4 + $0x48] sm:$0xff] %vm431, 0.0
        %442 = vst.msk [vmem:[#allocation4 + $0x50] sm:$0xff] %vm431, 0.0
        %443 = vst.msk [vmem:[#allocation4 + $0x58] sm:$0xff] %vm431, 0.0
        %444 = vst.msk [vmem:[#allocation4 + $0x60] sm:$0xff] %vm431, 0.0
        %445 = vst.msk [vmem:[#allocation4 + $0x68] sm:$0xff] %vm431, 0.0
        %446 = vst.msk [vmem:[#allocation4 + $0x70] sm:$0xff] %vm431, 0.0
        %447 = vst.msk [vmem:[#allocation4 + $0x78] sm:$0xff] %vm431, 0.0
        %448 = vst.msk [vmem:[#allocation4 + $0x80] sm:$0xff] %vm431, 0.0
        %449 = vst.msk [vmem:[#allocation4 + $0x88] sm:$0xff] %vm431, 0.0
        %450 = vst.msk [vmem:[#allocation4 + $0x90] sm:$0xff] %vm431, 0.0
        %451 = vst.msk [vmem:[#allocation4 + $0x98] sm:$0xff] %vm431, 0.0
        %452 = vst.msk [vmem:[#allocation4 + $0xa0] sm:$0xff] %vm431, 0.0
        %453 = vst.msk [vmem:[#allocation4 + $0xa8] sm:$0xff] %vm431, 0.0
        %454 = vst.msk [vmem:[#allocation4 + $0xb0] sm:$0xff] %vm431, 0.0
        %455 = vst.msk [vmem:[#allocation4 + $0xb8] sm:$0xff] %vm431, 0.0
        %456 = vst.msk [vmem:[#allocation4 + $0xc0] sm:$0xff] %vm431, 0.0
        %457 = vst.msk [vmem:[#allocation4 + $0xc8] sm:$0xff] %vm431, 0.0
        %458 = vst.msk [vmem:[#allocation4 + $0xd0] sm:$0xff] %vm431, 0.0
        %459 = vst.msk [vmem:[#allocation4 + $0xd8] sm:$0xff] %vm431, 0.0
        %460 = vst.msk [vmem:[#allocation4 + $0xe0] sm:$0xff] %vm431, 0.0
        %461 = vst.msk [vmem:[#allocation4 + $0xe8] sm:$0xff] %vm431, 0.0
        %462 = vst.msk [vmem:[#allocation4 + $0xf0] sm:$0xff] %vm431, 0.0
        %463 = vst.msk [vmem:[#allocation4 + $0xf8] sm:$0xff] %vm431, 0.0
      $region40: #{warp_attn_forward.12} parent=35 // pred_fallthru
        _
      %p464 = scmp.eq.s32.totalorder %s361, 1
      // Predicated region
      $region41: #{warp_attn_forward.12} parent=35 // pred_check
        %p465 = pneg %p464
      $region42: #{warp_attn_forward.12} parent=35 // pred_check_branch
        %467 = sbr.rel (%p465) target = $region44
      $region43: #{warp_attn_forward.12} parent=35 // pred_region
        %v468 = vld [vmem:[%s310] sm:$0xf]
        %v469 = vld [vmem:[%s310 + $0x4] sm:$0xf]
        %v470 = vld [vmem:[%s310 + $0x8] sm:$0xf]
        %v471 = vld [vmem:[%s310 + $0xc] sm:$0xf]
        %v472 = vld [vmem:[%s310 + $0x10] sm:$0xf]
        %v473 = vld [vmem:[%s310 + $0x14] sm:$0xf]
        %v474 = vld [vmem:[%s310 + $0x18] sm:$0xf]
        %v475 = vld [vmem:[%s310 + $0x1c] sm:$0xf]
        %v476 = vld [vmem:[%s310 + $0x20] sm:$0xf]
        %v477 = vld [vmem:[%s310 + $0x24] sm:$0xf]
        %v478 = vld [vmem:[%s310 + $0x28] sm:$0xf]
        %v479 = vld [vmem:[%s310 + $0x2c] sm:$0xf]
        %v480 = vld [vmem:[%s310 + $0x30] sm:$0xf]
        %v481 = vld [vmem:[%s310 + $0x34] sm:$0xf]
        %v482 = vld [vmem:[%s310 + $0x38] sm:$0xf]
        %v483 = vld [vmem:[%s310 + $0x3c] sm:$0xf]
        %v484 = vld [vmem:[%s310 + $0x40] sm:$0xf]
        %v485 = vld [vmem:[%s310 + $0x44] sm:$0xf]
        %v486 = vld [vmem:[%s310 + $0x48] sm:$0xf]
        %v487 = vld [vmem:[%s310 + $0x4c] sm:$0xf]
        %v488 = vld [vmem:[%s310 + $0x50] sm:$0xf]
        %v489 = vld [vmem:[%s310 + $0x54] sm:$0xf]
        %v490 = vld [vmem:[%s310 + $0x58] sm:$0xf]
        %v491 = vld [vmem:[%s310 + $0x5c] sm:$0xf]
        %v492 = vld [vmem:[%s310 + $0x60] sm:$0xf]
        %v493 = vld [vmem:[%s310 + $0x64] sm:$0xf]
        %v494 = vld [vmem:[%s310 + $0x68] sm:$0xf]
        %v495 = vld [vmem:[%s310 + $0x6c] sm:$0xf]
        %v496 = vld [vmem:[%s310 + $0x70] sm:$0xf]
        %v497 = vld [vmem:[%s310 + $0x74] sm:$0xf]
        %v498 = vld [vmem:[%s310 + $0x78] sm:$0xf]
        %v499 = vld [vmem:[%s310 + $0x7c] sm:$0xf]
        %v500 = vld [vmem:[%s320] sm:$0xf]
        %v501 = vld [vmem:[%s320 + $0x4] sm:$0xf]
        %v502 = vld [vmem:[%s320 + $0x8] sm:$0xf]
        %v503 = vld [vmem:[%s320 + $0xc] sm:$0xf]
        %v504 = vld [vmem:[%s320 + $0x10] sm:$0xf]
        %v505 = vld [vmem:[%s320 + $0x14] sm:$0xf]
        %v506 = vld [vmem:[%s320 + $0x18] sm:$0xf]
        %v507 = vld [vmem:[%s320 + $0x1c] sm:$0xf]
        %v508 = vld [vmem:[%s320 + $0x20] sm:$0xf]
        %v509 = vld [vmem:[%s320 + $0x24] sm:$0xf]
        %v510 = vld [vmem:[%s320 + $0x28] sm:$0xf]
        %v511 = vld [vmem:[%s320 + $0x2c] sm:$0xf]
        %v512 = vld [vmem:[%s320 + $0x30] sm:$0xf]
        %v513 = vld [vmem:[%s320 + $0x34] sm:$0xf]
        %v514 = vld [vmem:[%s320 + $0x38] sm:$0xf]
        %v515 = vld [vmem:[%s320 + $0x3c] sm:$0xf]
        %v516 = vld [vmem:[%s320 + $0x40] sm:$0xf]
        %v517 = vld [vmem:[%s320 + $0x44] sm:$0xf]
        %v518 = vld [vmem:[%s320 + $0x48] sm:$0xf]
        %v519 = vld [vmem:[%s320 + $0x4c] sm:$0xf]
        %v520 = vld [vmem:[%s320 + $0x50] sm:$0xf]
        %v521 = vld [vmem:[%s320 + $0x54] sm:$0xf]
        %v522 = vld [vmem:[%s320 + $0x58] sm:$0xf]
        %v523 = vld [vmem:[%s320 + $0x5c] sm:$0xf]
        %v524 = vld [vmem:[%s320 + $0x60] sm:$0xf]
        %v525 = vld [vmem:[%s320 + $0x64] sm:$0xf]
        %v526 = vld [vmem:[%s320 + $0x68] sm:$0xf]
        %v527 = vld [vmem:[%s320 + $0x6c] sm:$0xf]
        %v528 = vld [vmem:[%s320 + $0x70] sm:$0xf]
        %v529 = vld [vmem:[%s320 + $0x74] sm:$0xf]
        %v530 = vld [vmem:[%s320 + $0x78] sm:$0xf]
        %v531 = vld [vmem:[%s320 + $0x7c] sm:$0xf]
        %v532 = vld [vmem:[%s330] sm:$0xf]
        %v533 = vld [vmem:[%s330 + $0x4] sm:$0xf]
        %v534 = vld [vmem:[%s330 + $0x8] sm:$0xf]
        %v535 = vld [vmem:[%s330 + $0xc] sm:$0xf]
        %v536 = vld [vmem:[%s330 + $0x10] sm:$0xf]
        %v537 = vld [vmem:[%s330 + $0x14] sm:$0xf]
        %v538 = vld [vmem:[%s330 + $0x18] sm:$0xf]
        %v539 = vld [vmem:[%s330 + $0x1c] sm:$0xf]
        %v540 = vld [vmem:[%s330 + $0x20] sm:$0xf]
        %v541 = vld [vmem:[%s330 + $0x24] sm:$0xf]
        %v542 = vld [vmem:[%s330 + $0x28] sm:$0xf]
        %v543 = vld [vmem:[%s330 + $0x2c] sm:$0xf]
        %v544 = vld [vmem:[%s330 + $0x30] sm:$0xf]
        %v545 = vld [vmem:[%s330 + $0x34] sm:$0xf]
        %v546 = vld [vmem:[%s330 + $0x38] sm:$0xf]
        %v547 = vld [vmem:[%s330 + $0x3c] sm:$0xf]
        %v548 = vld [vmem:[%s330 + $0x40] sm:$0xf]
        %v549 = vld [vmem:[%s330 + $0x44] sm:$0xf]
        %v550 = vld [vmem:[%s330 + $0x48] sm:$0xf]
        %v551 = vld [vmem:[%s330 + $0x4c] sm:$0xf]
        %v552 = vld [vmem:[%s330 + $0x50] sm:$0xf]
        %v553 = vld [vmem:[%s330 + $0x54] sm:$0xf]
        %v554 = vld [vmem:[%s330 + $0x58] sm:$0xf]
        %v555 = vld [vmem:[%s330 + $0x5c] sm:$0xf]
        %v556 = vld [vmem:[%s330 + $0x60] sm:$0xf]
        %v557 = vld [vmem:[%s330 + $0x64] sm:$0xf]
        %v558 = vld [vmem:[%s330 + $0x68] sm:$0xf]
        %v559 = vld [vmem:[%s330 + $0x6c] sm:$0xf]
        %v560 = vld [vmem:[%s330 + $0x70] sm:$0xf]
        %v561 = vld [vmem:[%s330 + $0x74] sm:$0xf]
        %v562 = vld [vmem:[%s330 + $0x78] sm:$0xf]
        %v563 = vld [vmem:[%s330 + $0x7c] sm:$0xf]
        %v580 = vunpack.c.l.b16 %v468
        %v581 = vunpack.c.l.b16 %v469
        %v582 = vunpack.c.l.b16 %v470
        %v583 = vunpack.c.l.b16 %v471
        %v584 = vunpack.c.l.b16 %v472
        %v585 = vunpack.c.l.b16 %v473
        %v586 = vunpack.c.l.b16 %v474
        %v587 = vunpack.c.l.b16 %v475
        %v588 = vunpack.c.l.b16 %v476
        %v589 = vunpack.c.l.b16 %v477
        %v590 = vunpack.c.l.b16 %v478
        %v591 = vunpack.c.l.b16 %v479
        %v592 = vunpack.c.l.b16 %v480
        %v593 = vunpack.c.l.b16 %v481
        %v594 = vunpack.c.l.b16 %v482
        %v595 = vunpack.c.l.b16 %v483
        %v596 = vpack.c.b16 %v581, %v580
        %v597 = vpack.c.b16 %v583, %v582
        %v598 = vpack.c.b16 %v585, %v584
        %v599 = vpack.c.b16 %v587, %v586
        %v600 = vpack.c.b16 %v589, %v588
        %v601 = vpack.c.b16 %v591, %v590
        %v602 = vpack.c.b16 %v593, %v592
        %v603 = vpack.c.b16 %v595, %v594
        %v620 = vunpack.c.l.b16 %v500
        %v621 = vunpack.c.l.b16 %v501
        %v622 = vunpack.c.l.b16 %v502
        %v623 = vunpack.c.l.b16 %v503
        %v624 = vunpack.c.l.b16 %v504
        %v625 = vunpack.c.l.b16 %v505
        %v626 = vunpack.c.l.b16 %v506
        %v627 = vunpack.c.l.b16 %v507
        %v628 = vunpack.c.l.b16 %v508
        %v629 = vunpack.c.l.b16 %v509
        %v630 = vunpack.c.l.b16 %v510
        %v631 = vunpack.c.l.b16 %v511
        %v632 = vunpack.c.l.b16 %v512
        %v633 = vunpack.c.l.b16 %v513
        %v634 = vunpack.c.l.b16 %v514
        %v635 = vunpack.c.l.b16 %v515
        %v636 = vpack.c.b16 %v621, %v620
        %v637 = vpack.c.b16 %v623, %v622
        %v638 = vpack.c.b16 %v625, %v624
        %v639 = vpack.c.b16 %v627, %v626
        %v640 = vpack.c.b16 %v629, %v628
        %v641 = vpack.c.b16 %v631, %v630
        %v642 = vpack.c.b16 %v633, %v632
        %v643 = vpack.c.b16 %v635, %v634
        %vm644 = vcmask 261120
        %v646 = vsel %vm644, %v596, 0
        %v649 = vsel %vm644, %v597, 0
        %v652 = vsel %vm644, %v598, 0
        %v655 = vsel %vm644, %v599, 0
        %v658 = vsel %vm644, %v600, 0
        %v661 = vsel %vm644, %v601, 0
        %v664 = vsel %vm644, %v602, 0
        %v667 = vsel %vm644, %v603, 0
        %v670 = vsel %vm644, %v636, 0
        %v673 = vsel %vm644, %v637, 0
        %v676 = vsel %vm644, %v638, 0
        %v679 = vsel %vm644, %v639, 0
        %v682 = vsel %vm644, %v640, 0
        %v685 = vsel %vm644, %v641, 0
        %v688 = vsel %vm644, %v642, 0
        %v691 = vsel %vm644, %v643, 0
        %693 = vmatprep.subr.bf16.mxu0 0
        %694 = vmatpush1.bf16.xpose.msra.mxu0 %v670
        %695 = vmatprep.subr.bf16.mxu0 0
        %696 = vmatpush1.bf16.xpose.msra.mxu0 %v673
        %697 = vmatprep.subr.bf16.mxu0 0
        %698 = vmatpush1.bf16.xpose.msra.mxu0 %v676
        %699 = vmatprep.subr.bf16.mxu0 0
        %700 = vmatpush1.bf16.xpose.msra.mxu0 %v679
        %701 = vmatprep.subr.bf16.mxu0 0
        %702 = vmatpush1.bf16.xpose.msra.mxu0 %v682
        %703 = vmatprep.subr.bf16.mxu0 0
        %704 = vmatpush1.bf16.xpose.msra.mxu0 %v685
        %705 = vmatprep.subr.bf16.mxu0 0
        %706 = vmatpush1.bf16.xpose.msra.mxu0 %v688
        %707 = vmatprep.subr.bf16.mxu0 0
        %708 = vmatpush1.bf16.xpose.msra.mxu0 %v691
        %709 = vmatprep.subr.bf16.mxu0 0
        %710 = vmatpush1.bf16.xpose.msra.mxu0 0
        %711 = vmatprep.subr.bf16.mxu0 0
        %712 = vmatpush1.bf16.xpose.msra.mxu0 0
        %713 = vmatprep.subr.bf16.mxu0 0
        %714 = vmatpush1.bf16.xpose.msra.mxu0 0
        %715 = vmatprep.subr.bf16.mxu0 0
        %716 = vmatpush1.bf16.xpose.msra.mxu0 0
        %717 = vmatprep.subr.bf16.mxu0 0
        %718 = vmatpush1.bf16.xpose.msra.mxu0 0
        %719 = vmatprep.subr.bf16.mxu0 0
        %720 = vmatpush1.bf16.xpose.msra.mxu0 0
        %721 = vmatprep.subr.bf16.mxu0 0
        %722 = vmatpush1.bf16.xpose.msra.mxu0 0
        %723 = vmatprep.subr.bf16.mxu0 0
        %724 = vmatpush1.bf16.xpose.msra.mxu0 0
        %725 = vmatprep.mubr.bf16.mxu0 0
        %726 = vmatmul.mubr.bf16.gmra.mrb[0].mxu0 %v646
        %v727 = vpop.f32.mrb[0].mxu0
        %v728 = vadd.f32 0.0, %v727
        %v729 = vpop.f32.mrb[0].mxu0
        %v730 = vpop.f32.mrb[0].mxu0
        %v731 = vadd.f32 0.0, %v730
        %v732 = vpop.f32.mrb[0].mxu0
        %733 = vmatprep.mubr.bf16.mxu0 0
        %734 = vmatmul.mubr.bf16.gmra.mrb[0].mxu0 %v649
        %v735 = vpop.f32.mrb[0].mxu0
        %v736 = vadd.f32 0.0, %v735
        %v737 = vpop.f32.mrb[0].mxu0
        %v738 = vpop.f32.mrb[0].mxu0
        %v739 = vadd.f32 0.0, %v738
        %v740 = vpop.f32.mrb[0].mxu0
        %741 = vmatprep.mubr.bf16.mxu0 0
        %742 = vmatmul.mubr.bf16.gmra.mrb[0].mxu0 %v652
        %v743 = vpop.f32.mrb[0].mxu0
        %v744 = vadd.f32 0.0, %v743
        %v745 = vpop.f32.mrb[0].mxu0
        %v746 = vpop.f32.mrb[0].mxu0
        %v747 = vadd.f32 0.0, %v746
        %v748 = vpop.f32.mrb[0].mxu0
        %749 = vmatprep.mubr.bf16.mxu0 0
        %750 = vmatmul.mubr.bf16.gmra.mrb[0].mxu0 %v655
        %v751 = vpop.f32.mrb[0].mxu0
        %v752 = vadd.f32 0.0, %v751
        %v753 = vpop.f32.mrb[0].mxu0
        %v754 = vpop.f32.mrb[0].mxu0
        %v755 = vadd.f32 0.0, %v754
        %v756 = vpop.f32.mrb[0].mxu0
        %757 = vmatprep.mubr.bf16.mxu0 0
        %758 = vmatmul.mubr.bf16.gmra.mrb[0].mxu0 %v658
        %v759 = vpop.f32.mrb[0].mxu0
        %v760 = vadd.f32 0.0, %v759
        %v761 = vpop.f32.mrb[0].mxu0
        %v762 = vpop.f32.mrb[0].mxu0
        %v763 = vadd.f32 0.0, %v762
        %v764 = vpop.f32.mrb[0].mxu0
        %765 = vmatprep.mubr.bf16.mxu0 0
        %766 = vmatmul.mubr.bf16.gmra.mrb[0].mxu0 %v661
        %v767 = vpop.f32.mrb[0].mxu0
        %v768 = vadd.f32 0.0, %v767
        %v769 = vpop.f32.mrb[0].mxu0
        %v770 = vpop.f32.mrb[0].mxu0
        %v771 = vadd.f32 0.0, %v770
        %v772 = vpop.f32.mrb[0].mxu0
        %773 = vmatprep.mubr.bf16.mxu0 0
        %774 = vmatmul.mubr.bf16.gmra.mrb[0].mxu0 %v664
        %v775 = vpop.f32.mrb[0].mxu0
        %v776 = vadd.f32 0.0, %v775
        %v777 = vpop.f32.mrb[0].mxu0
        %v778 = vpop.f32.mrb[0].mxu0
        %v779 = vadd.f32 0.0, %v778
        %v780 = vpop.f32.mrb[0].mxu0
        %781 = vmatprep.mubr.bf16.mxu0 0
        %782 = vmatmul.mubr.bf16.gmra.mrb[0].mxu0 %v667
        %v783 = vpop.f32.mrb[0].mxu0
        %v784 = vadd.f32 0.0, %v783
        %v785 = vpop.f32.mrb[0].mxu0
        %v786 = vpop.f32.mrb[0].mxu0
        %v787 = vadd.f32 0.0, %v786
        %v788 = vpop.f32.mrb[0].mxu0
        %789 = vdwg.mxu0
        %v806 = vunpack.c.l.b16 %v484
        %v807 = vunpack.c.l.b16 %v485
        %v808 = vunpack.c.l.b16 %v486
        %v809 = vunpack.c.l.b16 %v487
        %v810 = vunpack.c.l.b16 %v488
        %v811 = vunpack.c.l.b16 %v489
        %v812 = vunpack.c.l.b16 %v490
        %v813 = vunpack.c.l.b16 %v491
        %v814 = vunpack.c.l.b16 %v492
        %v815 = vunpack.c.l.b16 %v493
        %v816 = vunpack.c.l.b16 %v494
        %v817 = vunpack.c.l.b16 %v495
        %v818 = vunpack.c.l.b16 %v496
        %v819 = vunpack.c.l.b16 %v497
        %v820 = vunpack.c.l.b16 %v498
        %v821 = vunpack.c.l.b16 %v499
        %v822 = vpack.c.b16 %v807, %v806
        %v823 = vpack.c.b16 %v809, %v808
        %v824 = vpack.c.b16 %v811, %v810
        %v825 = vpack.c.b16 %v813, %v812
        %v826 = vpack.c.b16 %v815, %v814
        %v827 = vpack.c.b16 %v817, %v816
        %v828 = vpack.c.b16 %v819, %v818
        %v829 = vpack.c.b16 %v821, %v820
        %v846 = vunpack.c.l.b16 %v516
        %v847 = vunpack.c.l.b16 %v517
        %v848 = vunpack.c.l.b16 %v518
        %v849 = vunpack.c.l.b16 %v519
        %v850 = vunpack.c.l.b16 %v520
        %v851 = vunpack.c.l.b16 %v521
        %v852 = vunpack.c.l.b16 %v522
        %v853 = vunpack.c.l.b16 %v523
        %v854 = vunpack.c.l.b16 %v524
        %v855 = vunpack.c.l.b16 %v525
        %v856 = vunpack.c.l.b16 %v526
        %v857 = vunpack.c.l.b16 %v527
        %v858 = vunpack.c.l.b16 %v528
        %v859 = vunpack.c.l.b16 %v529
        %v860 = vunpack.c.l.b16 %v530
        %v861 = vunpack.c.l.b16 %v531
        %v862 = vpack.c.b16 %v847, %v846
        %v863 = vpack.c.b16 %v849, %v848
        %v864 = vpack.c.b16 %v851, %v850
        %v865 = vpack.c.b16 %v853, %v852
        %v866 = vpack.c.b16 %v855, %v854
        %v867 = vpack.c.b16 %v857, %v856
        %v868 = vpack.c.b16 %v859, %v858
        %v869 = vpack.c.b16 %v861, %v860
        %v871 = vsel %vm644, %v822, 0
        %v874 = vsel %vm644, %v823, 0
        %v877 = vsel %vm644, %v824, 0
        %v880 = vsel %vm644, %v825, 0
        %v883 = vsel %vm644, %v826, 0
        %v886 = vsel %vm644, %v827, 0
        %v889 = vsel %vm644, %v828, 0
        %v892 = vsel %vm644, %v829, 0
        %v895 = vsel %vm644, %v862, 0
        %v898 = vsel %vm644, %v863, 0
        %v901 = vsel %vm644, %v864, 0
        %v904 = vsel %vm644, %v865, 0
        %v907 = vsel %vm644, %v866, 0
        %v910 = vsel %vm644, %v867, 0
        %v913 = vsel %vm644, %v868, 0
        %v916 = vsel %vm644, %v869, 0
        %918 = vmatprep.subr.bf16.mxu0 0
        %919 = vmatpush1.bf16.xpose.msra.mxu0 %v895
        %920 = vmatprep.subr.bf16.mxu0 0
        %921 = vmatpush1.bf16.xpose.msra.mxu0 %v898
        %922 = vmatprep.subr.bf16.mxu0 0
        %923 = vmatpush1.bf16.xpose.msra.mxu0 %v901
        %924 = vmatprep.subr.bf16.mxu0 0
        %925 = vmatpush1.bf16.xpose.msra.mxu0 %v904
        %926 = vmatprep.subr.bf16.mxu0 0
        %927 = vmatpush1.bf16.xpose.msra.mxu0 %v907
        %928 = vmatprep.subr.bf16.mxu0 0
        %929 = vmatpush1.bf16.xpose.msra.mxu0 %v910
        %930 = vmatprep.subr.bf16.mxu0 0
        %931 = vmatpush1.bf16.xpose.msra.mxu0 %v913
        %932 = vmatprep.subr.bf16.mxu0 0
        %933 = vmatpush1.bf16.xpose.msra.mxu0 %v916
        %934 = vmatprep.subr.bf16.mxu0 0
        %935 = vmatpush1.bf16.xpose.msra.mxu0 0
        %936 = vmatprep.subr.bf16.mxu0 0
        %937 = vmatpush1.bf16.xpose.msra.mxu0 0
        %938 = vmatprep.subr.bf16.mxu0 0
        %939 = vmatpush1.bf16.xpose.msra.mxu0 0
        %940 = vmatprep.subr.bf16.mxu0 0
        %941 = vmatpush1.bf16.xpose.msra.mxu0 0
        %942 = vmatprep.subr.bf16.mxu0 0
        %943 = vmatpush1.bf16.xpose.msra.mxu0 0
        %944 = vmatprep.subr.bf16.mxu0 0
        %945 = vmatpush1.bf16.xpose.msra.mxu0 0
        %946 = vmatprep.subr.bf16.mxu0 0
        %947 = vmatpush1.bf16.xpose.msra.mxu0 0
        %948 = vmatprep.subr.bf16.mxu0 0
        %949 = vmatpush1.bf16.xpose.msra.mxu0 0
        %950 = vmatprep.mubr.bf16.mxu0 0
        %951 = vmatmul.mubr.bf16.gmra.mrb[0].mxu0 %v871
        %v952 = vpop.f32.mrb[0].mxu0
        %v953 = vadd.f32 0.0, %v952
        %v954 = vpop.f32.mrb[0].mxu0
        %v955 = vpop.f32.mrb[0].mxu0
        %v956 = vadd.f32 0.0, %v955
        %v957 = vpop.f32.mrb[0].mxu0
        %958 = vmatprep.mubr.bf16.mxu0 0
        %959 = vmatmul.mubr.bf16.gmra.mrb[0].mxu0 %v874
        %v960 = vpop.f32.mrb[0].mxu0
        %v961 = vadd.f32 0.0, %v960
        %v962 = vpop.f32.mrb[0].mxu0
        %v963 = vpop.f32.mrb[0].mxu0
        %v964 = vadd.f32 0.0, %v963
        %v965 = vpop.f32.mrb[0].mxu0
        %966 = vmatprep.mubr.bf16.mxu0 0
        %967 = vmatmul.mubr.bf16.gmra.mrb[0].mxu0 %v877
        %v968 = vpop.f32.mrb[0].mxu0
        %v969 = vadd.f32 0.0, %v968
        %v970 = vpop.f32.mrb[0].mxu0
        %v971 = vpop.f32.mrb[0].mxu0
        %v972 = vadd.f32 0.0, %v971
        %v973 = vpop.f32.mrb[0].mxu0
        %974 = vmatprep.mubr.bf16.mxu0 0
        %975 = vmatmul.mubr.bf16.gmra.mrb[0].mxu0 %v880
        %v976 = vpop.f32.mrb[0].mxu0
        %v977 = vadd.f32 0.0, %v976
        %v978 = vpop.f32.mrb[0].mxu0
        %v979 = vpop.f32.mrb[0].mxu0
        %v980 = vadd.f32 0.0, %v979
        %v981 = vpop.f32.mrb[0].mxu0
        %982 = vmatprep.mubr.bf16.mxu0 0
        %983 = vmatmul.mubr.bf16.gmra.mrb[0].mxu0 %v883
        %v984 = vpop.f32.mrb[0].mxu0
        %v985 = vadd.f32 0.0, %v984
        %v986 = vpop.f32.mrb[0].mxu0
        %v987 = vpop.f32.mrb[0].mxu0
        %v988 = vadd.f32 0.0, %v987
        %v989 = vpop.f32.mrb[0].mxu0
        %990 = vmatprep.mubr.bf16.mxu0 0
        %991 = vmatmul.mubr.bf16.gmra.mrb[0].mxu0 %v886
        %v992 = vpop.f32.mrb[0].mxu0
        %v993 = vadd.f32 0.0, %v992
        %v994 = vpop.f32.mrb[0].mxu0
        %v995 = vpop.f32.mrb[0].mxu0
        %v996 = vadd.f32 0.0, %v995
        %v997 = vpop.f32.mrb[0].mxu0
        %998 = vmatprep.mubr.bf16.mxu0 0
        %999 = vmatmul.mubr.bf16.gmra.mrb[0].mxu0 %v889
        %v1000 = vpop.f32.mrb[0].mxu0
        %v1001 = vadd.f32 0.0, %v1000
        %v1002 = vpop.f32.mrb[0].mxu0
        %v1003 = vpop.f32.mrb[0].mxu0
        %v1004 = vadd.f32 0.0, %v1003
        %v1005 = vpop.f32.mrb[0].mxu0
        %1006 = vmatprep.mubr.bf16.mxu0 0
        %1007 = vmatmul.mubr.bf16.gmra.mrb[0].mxu0 %v892
        %v1008 = vpop.f32.mrb[0].mxu0
        %v1009 = vadd.f32 0.0, %v1008
        %v1010 = vpop.f32.mrb[0].mxu0
        %v1011 = vpop.f32.mrb[0].mxu0
        %v1012 = vadd.f32 0.0, %v1011
        %v1013 = vpop.f32.mrb[0].mxu0
        %1014 = vdwg.mxu0
        %v1015 = vld [vmem:[%s339] sm:$0xff]
        %v1016 = vld [vmem:[%s339 + $0x8] sm:$0xff]
        %v1017 = vld [vmem:[%s339 + $0x10] sm:$0xff]
        %v1018 = vld [vmem:[%s339 + $0x18] sm:$0xff]
        %vm1019 = vnez %v1015
        %vm1020 = vnez %v1016
        %vm1021 = vnez %v1017
        %vm1022 = vnez %v1018
        %v1023 = vsel %vm1019, 16843009, 0
        %v1024 = vsel %vm1020, 16843009, 0
        %v1025 = vsel %vm1021, 16843009, 0
        %v1026 = vsel %vm1022, 16843009, 0
        %v1027 = vunpack.c.0.s8 %v1023
        %v1028 = vunpack.c.1.s8 %v1023
        %v1029 = vunpack.c.2.s8 %v1023
        %v1030 = vunpack.c.3.s8 %v1023
        %v1031 = vunpack.c.0.s8 %v1024
        %v1032 = vunpack.c.1.s8 %v1024
        %v1033 = vunpack.c.2.s8 %v1024
        %v1034 = vunpack.c.3.s8 %v1024
        %v1035 = vunpack.c.0.s8 %v1025
        %v1036 = vunpack.c.1.s8 %v1025
        %v1037 = vunpack.c.2.s8 %v1025
        %v1038 = vunpack.c.3.s8 %v1025
        %v1039 = vunpack.c.0.s8 %v1026
        %v1040 = vunpack.c.1.s8 %v1026
        %v1041 = vunpack.c.2.s8 %v1026
        %v1042 = vunpack.c.3.s8 %v1026
        %v1043 = vpack.c.b16 %v1027, %v1027
        %v1044 = vpack.c.b8 %v1043, %v1043
        %v1045 = vpack.c.b16 %v1028, %v1028
        %v1046 = vpack.c.b8 %v1045, %v1045
        %v1047 = vpack.c.b16 %v1029, %v1029
        %v1048 = vpack.c.b8 %v1047, %v1047
        %v1049 = vpack.c.b16 %v1030, %v1030
        %v1050 = vpack.c.b8 %v1049, %v1049
        %v1051 = vpack.c.b16 %v1031, %v1031
        %v1052 = vpack.c.b8 %v1051, %v1051
        %v1053 = vpack.c.b16 %v1032, %v1032
        %v1054 = vpack.c.b8 %v1053, %v1053
        %v1055 = vpack.c.b16 %v1033, %v1033
        %v1056 = vpack.c.b8 %v1055, %v1055
        %v1057 = vpack.c.b16 %v1034, %v1034
        %v1058 = vpack.c.b8 %v1057, %v1057
        %v1059 = vpack.c.b16 %v1035, %v1035
        %v1060 = vpack.c.b8 %v1059, %v1059
        %v1061 = vpack.c.b16 %v1036, %v1036
        %v1062 = vpack.c.b8 %v1061, %v1061
        %v1063 = vpack.c.b16 %v1037, %v1037
        %v1064 = vpack.c.b8 %v1063, %v1063
        %v1065 = vpack.c.b16 %v1038, %v1038
        %v1066 = vpack.c.b8 %v1065, %v1065
        %v1067 = vpack.c.b16 %v1039, %v1039
        %v1068 = vpack.c.b8 %v1067, %v1067
        %v1069 = vpack.c.b16 %v1040, %v1040
        %v1070 = vpack.c.b8 %v1069, %v1069
        %v1071 = vpack.c.b16 %v1041, %v1041
        %v1072 = vpack.c.b8 %v1071, %v1071
        %v1073 = vpack.c.b16 %v1042, %v1042
        %v1074 = vpack.c.b8 %v1073, %v1073
        %vm1075 = vnez %v1044
        %vm1076 = vnez %v1046
        %vm1077 = vnez %v1048
        %vm1078 = vnez %v1050
        %vm1079 = vnez %v1052
        %vm1080 = vnez %v1054
        %vm1081 = vnez %v1056
        %vm1082 = vnez %v1058
        %vm1083 = vnez %v1060
        %vm1084 = vnez %v1062
        %vm1085 = vnez %v1064
        %vm1086 = vnez %v1066
        %vm1087 = vnez %v1068
        %vm1088 = vnez %v1070
        %vm1089 = vnez %v1072
        %vm1090 = vnez %v1074
        %v1091 = vsel %vm1075, 16843009, 0
        %v1092 = vsel %vm1076, 16843009, 0
        %v1093 = vsel %vm1077, 16843009, 0
        %v1094 = vsel %vm1078, 16843009, 0
        %v1095 = vsel %vm1079, 16843009, 0
        %v1096 = vsel %vm1080, 16843009, 0
        %v1097 = vsel %vm1081, 16843009, 0
        %v1098 = vsel %vm1082, 16843009, 0
        %v1099 = vsel %vm1083, 16843009, 0
        %v1100 = vsel %vm1084, 16843009, 0
        %v1101 = vsel %vm1085, 16843009, 0
        %v1102 = vsel %vm1086, 16843009, 0
        %v1103 = vsel %vm1087, 16843009, 0
        %v1104 = vsel %vm1088, 16843009, 0
        %v1105 = vsel %vm1089, 16843009, 0
        %v1106 = vsel %vm1090, 16843009, 0
        %v1107 = vunpack.c.0.s8 %v1091
        %v1108 = vunpack.c.0.s8 %v1092
        %v1109 = vunpack.c.0.s8 %v1093
        %v1110 = vunpack.c.0.s8 %v1094
        %v1111 = vunpack.c.0.s8 %v1095
        %v1112 = vunpack.c.0.s8 %v1096
        %v1113 = vunpack.c.0.s8 %v1097
        %v1114 = vunpack.c.0.s8 %v1098
        %v1115 = vunpack.c.0.s8 %v1099
        %v1116 = vunpack.c.0.s8 %v1100
        %v1117 = vunpack.c.0.s8 %v1101
        %v1118 = vunpack.c.0.s8 %v1102
        %v1119 = vunpack.c.0.s8 %v1103
        %v1120 = vunpack.c.0.s8 %v1104
        %v1121 = vunpack.c.0.s8 %v1105
        %v1122 = vunpack.c.0.s8 %v1106
        %vm1123 = vcmp.ne.s32.totalorder %v1107, 0
        %vm1124 = vcmp.ne.s32.totalorder %v1108, 0
        %vm1125 = vcmp.ne.s32.totalorder %v1109, 0
        %vm1126 = vcmp.ne.s32.totalorder %v1110, 0
        %vm1127 = vcmp.ne.s32.totalorder %v1111, 0
        %vm1128 = vcmp.ne.s32.totalorder %v1112, 0
        %vm1129 = vcmp.ne.s32.totalorder %v1113, 0
        %vm1130 = vcmp.ne.s32.totalorder %v1114, 0
        %vm1131 = vcmp.ne.s32.totalorder %v1115, 0
        %vm1132 = vcmp.ne.s32.totalorder %v1116, 0
        %vm1133 = vcmp.ne.s32.totalorder %v1117, 0
        %vm1134 = vcmp.ne.s32.totalorder %v1118, 0
        %vm1135 = vcmp.ne.s32.totalorder %v1119, 0
        %vm1136 = vcmp.ne.s32.totalorder %v1120, 0
        %vm1137 = vcmp.ne.s32.totalorder %v1121, 0
        %vm1138 = vcmp.ne.s32.totalorder %v1122, 0
        %v1139 = vsel %vm1123, 1, 0
        %v1140 = vsel %vm1124, 1, 0
        %v1141 = vsel %vm1125, 1, 0
        %v1142 = vsel %vm1126, 1, 0
        %v1143 = vsel %vm1127, 1, 0
        %v1144 = vsel %vm1128, 1, 0
        %v1145 = vsel %vm1129, 1, 0
        %v1146 = vsel %vm1130, 1, 0
        %v1147 = vsel %vm1131, 1, 0
        %v1148 = vsel %vm1132, 1, 0
        %v1149 = vsel %vm1133, 1, 0
        %v1150 = vsel %vm1134, 1, 0
        %v1151 = vsel %vm1135, 1, 0
        %v1152 = vsel %vm1136, 1, 0
        %v1153 = vsel %vm1137, 1, 0
        %v1154 = vsel %vm1138, 1, 0
        %vm1155 = vcmp.eq.s32.totalorder %v1139, 1
        %vm1156 = vcmp.eq.s32.totalorder %v1140, 1
        %vm1157 = vcmp.eq.s32.totalorder %v1141, 1
        %vm1158 = vcmp.eq.s32.totalorder %v1142, 1
        %vm1159 = vcmp.eq.s32.totalorder %v1143, 1
        %vm1160 = vcmp.eq.s32.totalorder %v1144, 1
        %vm1161 = vcmp.eq.s32.totalorder %v1145, 1
        %vm1162 = vcmp.eq.s32.totalorder %v1146, 1
        %vm1163 = vcmp.eq.s32.totalorder %v1147, 1
        %vm1164 = vcmp.eq.s32.totalorder %v1148, 1
        %vm1165 = vcmp.eq.s32.totalorder %v1149, 1
        %vm1166 = vcmp.eq.s32.totalorder %v1150, 1
        %vm1167 = vcmp.eq.s32.totalorder %v1151, 1
        %vm1168 = vcmp.eq.s32.totalorder %v1152, 1
        %vm1169 = vcmp.eq.s32.totalorder %v1153, 1
        %vm1170 = vcmp.eq.s32.totalorder %v1154, 1
        %v1171 = vsel %vm1155, %v728, -1e+30
        %v1172 = vsel %vm1156, %v731, -1e+30
        %v1173 = vsel %vm1157, %v736, -1e+30
        %v1174 = vsel %vm1158, %v739, -1e+30
        %v1175 = vsel %vm1159, %v744, -1e+30
        %v1176 = vsel %vm1160, %v747, -1e+30
        %v1177 = vsel %vm1161, %v752, -1e+30
        %v1178 = vsel %vm1162, %v755, -1e+30
        %v1179 = vsel %vm1163, %v760, -1e+30
        %v1180 = vsel %vm1164, %v763, -1e+30
        %v1181 = vsel %vm1165, %v768, -1e+30
        %v1182 = vsel %vm1166, %v771, -1e+30
        %v1183 = vsel %vm1167, %v776, -1e+30
        %v1184 = vsel %vm1168, %v779, -1e+30
        %v1185 = vsel %vm1169, %v784, -1e+30
        %v1186 = vsel %vm1170, %v787, -1e+30
        %v1187 = vsel %vm1155, %v953, -1e+30
        %v1188 = vsel %vm1156, %v956, -1e+30
        %v1189 = vsel %vm1157, %v961, -1e+30
        %v1190 = vsel %vm1158, %v964, -1e+30
        %v1191 = vsel %vm1159, %v969, -1e+30
        %v1192 = vsel %vm1160, %v972, -1e+30
        %v1193 = vsel %vm1161, %v977, -1e+30
        %v1194 = vsel %vm1162, %v980, -1e+30
        %v1195 = vsel %vm1163, %v985, -1e+30
        %v1196 = vsel %vm1164, %v988, -1e+30
        %v1197 = vsel %vm1165, %v993, -1e+30
        %v1198 = vsel %vm1166, %v996, -1e+30
        %v1199 = vsel %vm1167, %v1001, -1e+30
        %v1200 = vsel %vm1168, %v1004, -1e+30
        %v1201 = vsel %vm1169, %v1009, -1e+30
        %v1202 = vsel %vm1170, %v1012, -1e+30
        %v1203 = vld [vmem:[#allocation2] sm:$0xff]
        %v1204 = vld [vmem:[#allocation2 + $0x8] sm:$0xff]
        %v1205 = vld [vmem:[#allocation2 + $0x10] sm:$0xff]
        %v1206 = vld [vmem:[#allocation2 + $0x18] sm:$0xff]
        %v1207 = vld [vmem:[#allocation2 + $0x20] sm:$0xff]
        %v1208 = vld [vmem:[#allocation2 + $0x28] sm:$0xff]
        %v1209 = vld [vmem:[#allocation2 + $0x30] sm:$0xff]
        %v1210 = vld [vmem:[#allocation2 + $0x38] sm:$0xff]
        %v1211 = vld [vmem:[#allocation2 + $0x40] sm:$0xff]
        %v1212 = vld [vmem:[#allocation2 + $0x48] sm:$0xff]
        %v1213 = vld [vmem:[#allocation2 + $0x50] sm:$0xff]
        %v1214 = vld [vmem:[#allocation2 + $0x58] sm:$0xff]
        %v1215 = vld [vmem:[#allocation2 + $0x60] sm:$0xff]
        %v1216 = vld [vmem:[#allocation2 + $0x68] sm:$0xff]
        %v1217 = vld [vmem:[#allocation2 + $0x70] sm:$0xff]
        %v1218 = vld [vmem:[#allocation2 + $0x78] sm:$0xff]
        %v1219 = vld [vmem:[#allocation2 + $0x80] sm:$0xff]
        %v1220 = vld [vmem:[#allocation2 + $0x88] sm:$0xff]
        %v1221 = vld [vmem:[#allocation2 + $0x90] sm:$0xff]
        %v1222 = vld [vmem:[#allocation2 + $0x98] sm:$0xff]
        %v1223 = vld [vmem:[#allocation2 + $0xa0] sm:$0xff]
        %v1224 = vld [vmem:[#allocation2 + $0xa8] sm:$0xff]
        %v1225 = vld [vmem:[#allocation2 + $0xb0] sm:$0xff]
        %v1226 = vld [vmem:[#allocation2 + $0xb8] sm:$0xff]
        %v1227 = vld [vmem:[#allocation2 + $0xc0] sm:$0xff]
        %v1228 = vld [vmem:[#allocation2 + $0xc8] sm:$0xff]
        %v1229 = vld [vmem:[#allocation2 + $0xd0] sm:$0xff]
        %v1230 = vld [vmem:[#allocation2 + $0xd8] sm:$0xff]
        %v1231 = vld [vmem:[#allocation2 + $0xe0] sm:$0xff]
        %v1232 = vld [vmem:[#allocation2 + $0xe8] sm:$0xff]
        %v1233 = vld [vmem:[#allocation2 + $0xf0] sm:$0xff]
        %v1234 = vld [vmem:[#allocation2 + $0xf8] sm:$0xff]
        %1235 = vmax.xlane.f32.xlu0 %v1171
        %v1236 = vpop.xlane.xlu0 %1235
        %1237 = vmax.xlane.f32.xlu0 %v1172
        %v1238 = vpop.xlane.xlu0 %1237
        %1239 = vmax.xlane.f32.xlu0 %v1173
        %v1240 = vpop.xlane.xlu0 %1239
        %1241 = vmax.xlane.f32.xlu0 %v1174
        %v1242 = vpop.xlane.xlu0 %1241
        %1243 = vmax.xlane.f32.xlu0 %v1175
        %v1244 = vpop.xlane.xlu0 %1243
        %1245 = vmax.xlane.f32.xlu0 %v1176
        %v1246 = vpop.xlane.xlu0 %1245
        %1247 = vmax.xlane.f32.xlu0 %v1177
        %v1248 = vpop.xlane.xlu0 %1247
        %1249 = vmax.xlane.f32.xlu0 %v1178
        %v1250 = vpop.xlane.xlu0 %1249
        %1251 = vmax.xlane.f32.xlu0 %v1179
        %v1252 = vpop.xlane.xlu0 %1251
        %1253 = vmax.xlane.f32.xlu0 %v1180
        %v1254 = vpop.xlane.xlu0 %1253
        %1255 = vmax.xlane.f32.xlu0 %v1181
        %v1256 = vpop.xlane.xlu0 %1255
        %1257 = vmax.xlane.f32.xlu0 %v1182
        %v1258 = vpop.xlane.xlu0 %1257
        %1259 = vmax.xlane.f32.xlu0 %v1183
        %v1260 = vpop.xlane.xlu0 %1259
        %1261 = vmax.xlane.f32.xlu0 %v1184
        %v1262 = vpop.xlane.xlu0 %1261
        %1263 = vmax.xlane.f32.xlu0 %v1185
        %v1264 = vpop.xlane.xlu0 %1263
        %1265 = vmax.xlane.f32.xlu0 %v1186
        %v1266 = vpop.xlane.xlu0 %1265
        %1267 = vmax.xlane.f32.xlu0 %v1187
        %v1268 = vpop.xlane.xlu0 %1267
        %1269 = vmax.xlane.f32.xlu0 %v1188
        %v1270 = vpop.xlane.xlu0 %1269
        %1271 = vmax.xlane.f32.xlu0 %v1189
        %v1272 = vpop.xlane.xlu0 %1271
        %1273 = vmax.xlane.f32.xlu0 %v1190
        %v1274 = vpop.xlane.xlu0 %1273
        %1275 = vmax.xlane.f32.xlu0 %v1191
        %v1276 = vpop.xlane.xlu0 %1275
        %1277 = vmax.xlane.f32.xlu0 %v1192
        %v1278 = vpop.xlane.xlu0 %1277
        %1279 = vmax.xlane.f32.xlu0 %v1193
        %v1280 = vpop.xlane.xlu0 %1279
        %1281 = vmax.xlane.f32.xlu0 %v1194
        %v1282 = vpop.xlane.xlu0 %1281
        %1283 = vmax.xlane.f32.xlu0 %v1195
        %v1284 = vpop.xlane.xlu0 %1283
        %1285 = vmax.xlane.f32.xlu0 %v1196
        %v1286 = vpop.xlane.xlu0 %1285
        %1287 = vmax.xlane.f32.xlu0 %v1197
        %v1288 = vpop.xlane.xlu0 %1287
        %1289 = vmax.xlane.f32.xlu0 %v1198
        %v1290 = vpop.xlane.xlu0 %1289
        %1291 = vmax.xlane.f32.xlu0 %v1199
        %v1292 = vpop.xlane.xlu0 %1291
        %1293 = vmax.xlane.f32.xlu0 %v1200
        %v1294 = vpop.xlane.xlu0 %1293
        %1295 = vmax.xlane.f32.xlu0 %v1201
        %v1296 = vpop.xlane.xlu0 %1295
        %1297 = vmax.xlane.f32.xlu0 %v1202
        %v1298 = vpop.xlane.xlu0 %1297
        %v1299 = vmax.f32 %v1203, %v1236
        %v1300 = vmax.f32 %v1204, %v1238
        %v1301 = vmax.f32 %v1205, %v1240
        %v1302 = vmax.f32 %v1206, %v1242
        %v1303 = vmax.f32 %v1207, %v1244
        %v1304 = vmax.f32 %v1208, %v1246
        %v1305 = vmax.f32 %v1209, %v1248
        %v1306 = vmax.f32 %v1210, %v1250
        %v1307 = vmax.f32 %v1211, %v1252
        %v1308 = vmax.f32 %v1212, %v1254
        %v1309 = vmax.f32 %v1213, %v1256
        %v1310 = vmax.f32 %v1214, %v1258
        %v1311 = vmax.f32 %v1215, %v1260
        %v1312 = vmax.f32 %v1216, %v1262
        %v1313 = vmax.f32 %v1217, %v1264
        %v1314 = vmax.f32 %v1218, %v1266
        %v1315 = vmax.f32 %v1219, %v1268
        %v1316 = vmax.f32 %v1220, %v1270
        %v1317 = vmax.f32 %v1221, %v1272
        %v1318 = vmax.f32 %v1222, %v1274
        %v1319 = vmax.f32 %v1223, %v1276
        %v1320 = vmax.f32 %v1224, %v1278
        %v1321 = vmax.f32 %v1225, %v1280
        %v1322 = vmax.f32 %v1226, %v1282
        %v1323 = vmax.f32 %v1227, %v1284
        %v1324 = vmax.f32 %v1228, %v1286
        %v1325 = vmax.f32 %v1229, %v1288
        %v1326 = vmax.f32 %v1230, %v1290
        %v1327 = vmax.f32 %v1231, %v1292
        %v1328 = vmax.f32 %v1232, %v1294
        %v1329 = vmax.f32 %v1233, %v1296
        %v1330 = vmax.f32 %v1234, %v1298
        %v1331 = vsub.f32 %v1203, %v1299
        %v1332 = vsub.f32 %v1204, %v1300
        %v1333 = vsub.f32 %v1205, %v1301
        %v1334 = vsub.f32 %v1206, %v1302
        %v1335 = vsub.f32 %v1207, %v1303
        %v1336 = vsub.f32 %v1208, %v1304
        %v1337 = vsub.f32 %v1209, %v1305
        %v1338 = vsub.f32 %v1210, %v1306
        %v1339 = vsub.f32 %v1211, %v1307
        %v1340 = vsub.f32 %v1212, %v1308
        %v1341 = vsub.f32 %v1213, %v1309
        %v1342 = vsub.f32 %v1214, %v1310
        %v1343 = vsub.f32 %v1215, %v1311
        %v1344 = vsub.f32 %v1216, %v1312
        %v1345 = vsub.f32 %v1217, %v1313
        %v1346 = vsub.f32 %v1218, %v1314
        %v1347 = vsub.f32 %v1219, %v1315
        %v1348 = vsub.f32 %v1220, %v1316
        %v1349 = vsub.f32 %v1221, %v1317
        %v1350 = vsub.f32 %v1222, %v1318
        %v1351 = vsub.f32 %v1223, %v1319
        %v1352 = vsub.f32 %v1224, %v1320
        %v1353 = vsub.f32 %v1225, %v1321
        %v1354 = vsub.f32 %v1226, %v1322
        %v1355 = vsub.f32 %v1227, %v1323
        %v1356 = vsub.f32 %v1228, %v1324
        %v1357 = vsub.f32 %v1229, %v1325
        %v1358 = vsub.f32 %v1230, %v1326
        %v1359 = vsub.f32 %v1231, %v1327
        %v1360 = vsub.f32 %v1232, %v1328
        %v1361 = vsub.f32 %v1233, %v1329
        %v1362 = vsub.f32 %v1234, %v1330
        %v1363 = vmul.f32 %v1331, 1.442695
        %v1364 = vpow.pop %v1363
        %v1365 = vmul.f32 %v1332, 1.442695
        %v1366 = vpow.pop %v1365
        %v1367 = vmul.f32 %v1333, 1.442695
        %v1368 = vpow.pop %v1367
        %v1369 = vmul.f32 %v1334, 1.442695
        %v1370 = vpow.pop %v1369
        %v1371 = vmul.f32 %v1335, 1.442695
        %v1372 = vpow.pop %v1371
        %v1373 = vmul.f32 %v1336, 1.442695
        %v1374 = vpow.pop %v1373
        %v1375 = vmul.f32 %v1337, 1.442695
        %v1376 = vpow.pop %v1375
        %v1377 = vmul.f32 %v1338, 1.442695
        %v1378 = vpow.pop %v1377
        %v1379 = vmul.f32 %v1339, 1.442695
        %v1380 = vpow.pop %v1379
        %v1381 = vmul.f32 %v1340, 1.442695
        %v1382 = vpow.pop %v1381
        %v1383 = vmul.f32 %v1341, 1.442695
        %v1384 = vpow.pop %v1383
        %v1385 = vmul.f32 %v1342, 1.442695
        %v1386 = vpow.pop %v1385
        %v1387 = vmul.f32 %v1343, 1.442695
        %v1388 = vpow.pop %v1387
        %v1389 = vmul.f32 %v1344, 1.442695
        %v1390 = vpow.pop %v1389
        %v1391 = vmul.f32 %v1345, 1.442695
        %v1392 = vpow.pop %v1391
        %v1393 = vmul.f32 %v1346, 1.442695
        %v1394 = vpow.pop %v1393
        %v1395 = vmul.f32 %v1347, 1.442695
        %v1396 = vpow.pop %v1395
        %v1397 = vmul.f32 %v1348, 1.442695
        %v1398 = vpow.pop %v1397
        %v1399 = vmul.f32 %v1349, 1.442695
        %v1400 = vpow.pop %v1399
        %v1401 = vmul.f32 %v1350, 1.442695
        %v1402 = vpow.pop %v1401
        %v1403 = vmul.f32 %v1351, 1.442695
        %v1404 = vpow.pop %v1403
        %v1405 = vmul.f32 %v1352, 1.442695
        %v1406 = vpow.pop %v1405
        %v1407 = vmul.f32 %v1353, 1.442695
        %v1408 = vpow.pop %v1407
        %v1409 = vmul.f32 %v1354, 1.442695
        %v1410 = vpow.pop %v1409
        %v1411 = vmul.f32 %v1355, 1.442695
        %v1412 = vpow.pop %v1411
        %v1413 = vmul.f32 %v1356, 1.442695
        %v1414 = vpow.pop %v1413
        %v1415 = vmul.f32 %v1357, 1.442695
        %v1416 = vpow.pop %v1415
        %v1417 = vmul.f32 %v1358, 1.442695
        %v1418 = vpow.pop %v1417
        %v1419 = vmul.f32 %v1359, 1.442695
        %v1420 = vpow.pop %v1419
        %v1421 = vmul.f32 %v1360, 1.442695
        %v1422 = vpow.pop %v1421
        %v1423 = vmul.f32 %v1361, 1.442695
        %v1424 = vpow.pop %v1423
        %v1425 = vmul.f32 %v1362, 1.442695
        %v1426 = vpow.pop %v1425
        %1428 = vset.pattern.permute.xlu0 0
        %1429 = vperm.xlu0 %1428, %v1299
        %v1430 = vpop.permute.xlu0 %1429
        %1433 = vset.pattern.permute.xlu0 0
        %1434 = vperm.xlu0 %1433, %v1300
        %v1435 = vpop.permute.xlu0 %1434
        %1438 = vset.pattern.permute.xlu0 0
        %1439 = vperm.xlu0 %1438, %v1301
        %v1440 = vpop.permute.xlu0 %1439
        %1443 = vset.pattern.permute.xlu0 0
        %1444 = vperm.xlu0 %1443, %v1302
        %v1445 = vpop.permute.xlu0 %1444
        %1448 = vset.pattern.permute.xlu0 0
        %1449 = vperm.xlu0 %1448, %v1303
        %v1450 = vpop.permute.xlu0 %1449
        %1453 = vset.pattern.permute.xlu0 0
        %1454 = vperm.xlu0 %1453, %v1304
        %v1455 = vpop.permute.xlu0 %1454
        %1458 = vset.pattern.permute.xlu0 0
        %1459 = vperm.xlu0 %1458, %v1305
        %v1460 = vpop.permute.xlu0 %1459
        %1463 = vset.pattern.permute.xlu0 0
        %1464 = vperm.xlu0 %1463, %v1306
        %v1465 = vpop.permute.xlu0 %1464
        %1468 = vset.pattern.permute.xlu0 0
        %1469 = vperm.xlu0 %1468, %v1307
        %v1470 = vpop.permute.xlu0 %1469
        %1473 = vset.pattern.permute.xlu0 0
        %1474 = vperm.xlu0 %1473, %v1308
        %v1475 = vpop.permute.xlu0 %1474
        %1478 = vset.pattern.permute.xlu0 0
        %1479 = vperm.xlu0 %1478, %v1309
        %v1480 = vpop.permute.xlu0 %1479
        %1483 = vset.pattern.permute.xlu0 0
        %1484 = vperm.xlu0 %1483, %v1310
        %v1485 = vpop.permute.xlu0 %1484
        %1488 = vset.pattern.permute.xlu0 0
        %1489 = vperm.xlu0 %1488, %v1311
        %v1490 = vpop.permute.xlu0 %1489
        %1493 = vset.pattern.permute.xlu0 0
        %1494 = vperm.xlu0 %1493, %v1312
        %v1495 = vpop.permute.xlu0 %1494
        %1498 = vset.pattern.permute.xlu0 0
        %1499 = vperm.xlu0 %1498, %v1313
        %v1500 = vpop.permute.xlu0 %1499
        %1503 = vset.pattern.permute.xlu0 0
        %1504 = vperm.xlu0 %1503, %v1314
        %v1505 = vpop.permute.xlu0 %1504
        %1508 = vset.pattern.permute.xlu0 0
        %1509 = vperm.xlu0 %1508, %v1315
        %v1510 = vpop.permute.xlu0 %1509
        %1513 = vset.pattern.permute.xlu0 0
        %1514 = vperm.xlu0 %1513, %v1316
        %v1515 = vpop.permute.xlu0 %1514
        %1518 = vset.pattern.permute.xlu0 0
        %1519 = vperm.xlu0 %1518, %v1317
        %v1520 = vpop.permute.xlu0 %1519
        %1523 = vset.pattern.permute.xlu0 0
        %1524 = vperm.xlu0 %1523, %v1318
        %v1525 = vpop.permute.xlu0 %1524
        %1528 = vset.pattern.permute.xlu0 0
        %1529 = vperm.xlu0 %1528, %v1319
        %v1530 = vpop.permute.xlu0 %1529
        %1533 = vset.pattern.permute.xlu0 0
        %1534 = vperm.xlu0 %1533, %v1320
        %v1535 = vpop.permute.xlu0 %1534
        %1538 = vset.pattern.permute.xlu0 0
        %1539 = vperm.xlu0 %1538, %v1321
        %v1540 = vpop.permute.xlu0 %1539
        %1543 = vset.pattern.permute.xlu0 0
        %1544 = vperm.xlu0 %1543, %v1322
        %v1545 = vpop.permute.xlu0 %1544
        %1548 = vset.pattern.permute.xlu0 0
        %1549 = vperm.xlu0 %1548, %v1323
        %v1550 = vpop.permute.xlu0 %1549
        %1553 = vset.pattern.permute.xlu0 0
        %1554 = vperm.xlu0 %1553, %v1324
        %v1555 = vpop.permute.xlu0 %1554
        %1558 = vset.pattern.permute.xlu0 0
        %1559 = vperm.xlu0 %1558, %v1325
        %v1560 = vpop.permute.xlu0 %1559
        %1563 = vset.pattern.permute.xlu0 0
        %1564 = vperm.xlu0 %1563, %v1326
        %v1565 = vpop.permute.xlu0 %1564
        %1568 = vset.pattern.permute.xlu0 0
        %1569 = vperm.xlu0 %1568, %v1327
        %v1570 = vpop.permute.xlu0 %1569
        %1573 = vset.pattern.permute.xlu0 0
        %1574 = vperm.xlu0 %1573, %v1328
        %v1575 = vpop.permute.xlu0 %1574
        %1578 = vset.pattern.permute.xlu0 0
        %1579 = vperm.xlu0 %1578, %v1329
        %v1580 = vpop.permute.xlu0 %1579
        %1583 = vset.pattern.permute.xlu0 0
        %1584 = vperm.xlu0 %1583, %v1330
        %v1585 = vpop.permute.xlu0 %1584
        %v1587 = vsub.f32 %v1171, %v1430
        %v1588 = vsub.f32 %v1172, %v1435
        %v1589 = vsub.f32 %v1173, %v1440
        %v1590 = vsub.f32 %v1174, %v1445
        %v1591 = vsub.f32 %v1175, %v1450
        %v1592 = vsub.f32 %v1176, %v1455
        %v1593 = vsub.f32 %v1177, %v1460
        %v1594 = vsub.f32 %v1178, %v1465
        %v1595 = vsub.f32 %v1179, %v1470
        %v1596 = vsub.f32 %v1180, %v1475
        %v1597 = vsub.f32 %v1181, %v1480
        %v1598 = vsub.f32 %v1182, %v1485
        %v1599 = vsub.f32 %v1183, %v1490
        %v1600 = vsub.f32 %v1184, %v1495
        %v1601 = vsub.f32 %v1185, %v1500
        %v1602 = vsub.f32 %v1186, %v1505
        %v1603 = vsub.f32 %v1187, %v1510
        %v1604 = vsub.f32 %v1188, %v1515
        %v1605 = vsub.f32 %v1189, %v1520
        %v1606 = vsub.f32 %v1190, %v1525
        %v1607 = vsub.f32 %v1191, %v1530
        %v1608 = vsub.f32 %v1192, %v1535
        %v1609 = vsub.f32 %v1193, %v1540
        %v1610 = vsub.f32 %v1194, %v1545
        %v1611 = vsub.f32 %v1195, %v1550
        %v1612 = vsub.f32 %v1196, %v1555
        %v1613 = vsub.f32 %v1197, %v1560
        %v1614 = vsub.f32 %v1198, %v1565
        %v1615 = vsub.f32 %v1199, %v1570
        %v1616 = vsub.f32 %v1200, %v1575
        %v1617 = vsub.f32 %v1201, %v1580
        %v1618 = vsub.f32 %v1202, %v1585
        %v1619 = vmul.f32 %v1587, 1.442695
        %v1620 = vpow.pop %v1619
        %v1621 = vmul.f32 %v1588, 1.442695
        %v1622 = vpow.pop %v1621
        %v1623 = vmul.f32 %v1589, 1.442695
        %v1624 = vpow.pop %v1623
        %v1625 = vmul.f32 %v1590, 1.442695
        %v1626 = vpow.pop %v1625
        %v1627 = vmul.f32 %v1591, 1.442695
        %v1628 = vpow.pop %v1627
        %v1629 = vmul.f32 %v1592, 1.442695
        %v1630 = vpow.pop %v1629
        %v1631 = vmul.f32 %v1593, 1.442695
        %v1632 = vpow.pop %v1631
        %v1633 = vmul.f32 %v1594, 1.442695
        %v1634 = vpow.pop %v1633
        %v1635 = vmul.f32 %v1595, 1.442695
        %v1636 = vpow.pop %v1635
        %v1637 = vmul.f32 %v1596, 1.442695
        %v1638 = vpow.pop %v1637
        %v1639 = vmul.f32 %v1597, 1.442695
        %v1640 = vpow.pop %v1639
        %v1641 = vmul.f32 %v1598, 1.442695
        %v1642 = vpow.pop %v1641
        %v1643 = vmul.f32 %v1599, 1.442695
        %v1644 = vpow.pop %v1643
        %v1645 = vmul.f32 %v1600, 1.442695
        %v1646 = vpow.pop %v1645
        %v1647 = vmul.f32 %v1601, 1.442695
        %v1648 = vpow.pop %v1647
        %v1649 = vmul.f32 %v1602, 1.442695
        %v1650 = vpow.pop %v1649
        %v1651 = vmul.f32 %v1603, 1.442695
        %v1652 = vpow.pop %v1651
        %v1653 = vmul.f32 %v1604, 1.442695
        %v1654 = vpow.pop %v1653
        %v1655 = vmul.f32 %v1605, 1.442695
        %v1656 = vpow.pop %v1655
        %v1657 = vmul.f32 %v1606, 1.442695
        %v1658 = vpow.pop %v1657
        %v1659 = vmul.f32 %v1607, 1.442695
        %v1660 = vpow.pop %v1659
        %v1661 = vmul.f32 %v1608, 1.442695
        %v1662 = vpow.pop %v1661
        %v1663 = vmul.f32 %v1609, 1.442695
        %v1664 = vpow.pop %v1663
        %v1665 = vmul.f32 %v1610, 1.442695
        %v1666 = vpow.pop %v1665
        %v1667 = vmul.f32 %v1611, 1.442695
        %v1668 = vpow.pop %v1667
        %v1669 = vmul.f32 %v1612, 1.442695
        %v1670 = vpow.pop %v1669
        %v1671 = vmul.f32 %v1613, 1.442695
        %v1672 = vpow.pop %v1671
        %v1673 = vmul.f32 %v1614, 1.442695
        %v1674 = vpow.pop %v1673
        %v1675 = vmul.f32 %v1615, 1.442695
        %v1676 = vpow.pop %v1675
        %v1677 = vmul.f32 %v1616, 1.442695
        %v1678 = vpow.pop %v1677
        %v1679 = vmul.f32 %v1617, 1.442695
        %v1680 = vpow.pop %v1679
        %v1681 = vmul.f32 %v1618, 1.442695
        %v1682 = vpow.pop %v1681
        %v1683 = vld [vmem:[#allocation3] sm:$0xff]
        %v1684 = vld [vmem:[#allocation3 + $0x8] sm:$0xff]
        %v1685 = vld [vmem:[#allocation3 + $0x10] sm:$0xff]
        %v1686 = vld [vmem:[#allocation3 + $0x18] sm:$0xff]
        %v1687 = vld [vmem:[#allocation3 + $0x20] sm:$0xff]
        %v1688 = vld [vmem:[#allocation3 + $0x28] sm:$0xff]
        %v1689 = vld [vmem:[#allocation3 + $0x30] sm:$0xff]
        %v1690 = vld [vmem:[#allocation3 + $0x38] sm:$0xff]
        %v1691 = vld [vmem:[#allocation3 + $0x40] sm:$0xff]
        %v1692 = vld [vmem:[#allocation3 + $0x48] sm:$0xff]
        %v1693 = vld [vmem:[#allocation3 + $0x50] sm:$0xff]
        %v1694 = vld [vmem:[#allocation3 + $0x58] sm:$0xff]
        %v1695 = vld [vmem:[#allocation3 + $0x60] sm:$0xff]
        %v1696 = vld [vmem:[#allocation3 + $0x68] sm:$0xff]
        %v1697 = vld [vmem:[#allocation3 + $0x70] sm:$0xff]
        %v1698 = vld [vmem:[#allocation3 + $0x78] sm:$0xff]
        %v1699 = vld [vmem:[#allocation3 + $0x80] sm:$0xff]
        %v1700 = vld [vmem:[#allocation3 + $0x88] sm:$0xff]
        %v1701 = vld [vmem:[#allocation3 + $0x90] sm:$0xff]
        %v1702 = vld [vmem:[#allocation3 + $0x98] sm:$0xff]
        %v1703 = vld [vmem:[#allocation3 + $0xa0] sm:$0xff]
        %v1704 = vld [vmem:[#allocation3 + $0xa8] sm:$0xff]
        %v1705 = vld [vmem:[#allocation3 + $0xb0] sm:$0xff]
        %v1706 = vld [vmem:[#allocation3 + $0xb8] sm:$0xff]
        %v1707 = vld [vmem:[#allocation3 + $0xc0] sm:$0xff]
        %v1708 = vld [vmem:[#allocation3 + $0xc8] sm:$0xff]
        %v1709 = vld [vmem:[#allocation3 + $0xd0] sm:$0xff]
        %v1710 = vld [vmem:[#allocation3 + $0xd8] sm:$0xff]
        %v1711 = vld [vmem:[#allocation3 + $0xe0] sm:$0xff]
        %v1712 = vld [vmem:[#allocation3 + $0xe8] sm:$0xff]
        %v1713 = vld [vmem:[#allocation3 + $0xf0] sm:$0xff]
        %v1714 = vld [vmem:[#allocation3 + $0xf8] sm:$0xff]
        %v1715 = vmul.f32 %v1364, %v1683
        %v1716 = vmul.f32 %v1366, %v1684
        %v1717 = vmul.f32 %v1368, %v1685
        %v1718 = vmul.f32 %v1370, %v1686
        %v1719 = vmul.f32 %v1372, %v1687
        %v1720 = vmul.f32 %v1374, %v1688
        %v1721 = vmul.f32 %v1376, %v1689
        %v1722 = vmul.f32 %v1378, %v1690
        %v1723 = vmul.f32 %v1380, %v1691
        %v1724 = vmul.f32 %v1382, %v1692
        %v1725 = vmul.f32 %v1384, %v1693
        %v1726 = vmul.f32 %v1386, %v1694
        %v1727 = vmul.f32 %v1388, %v1695
        %v1728 = vmul.f32 %v1390, %v1696
        %v1729 = vmul.f32 %v1392, %v1697
        %v1730 = vmul.f32 %v1394, %v1698
        %v1731 = vmul.f32 %v1396, %v1699
        %v1732 = vmul.f32 %v1398, %v1700
        %v1733 = vmul.f32 %v1400, %v1701
        %v1734 = vmul.f32 %v1402, %v1702
        %v1735 = vmul.f32 %v1404, %v1703
        %v1736 = vmul.f32 %v1406, %v1704
        %v1737 = vmul.f32 %v1408, %v1705
        %v1738 = vmul.f32 %v1410, %v1706
        %v1739 = vmul.f32 %v1412, %v1707
        %v1740 = vmul.f32 %v1414, %v1708
        %v1741 = vmul.f32 %v1416, %v1709
        %v1742 = vmul.f32 %v1418, %v1710
        %v1743 = vmul.f32 %v1420, %v1711
        %v1744 = vmul.f32 %v1422, %v1712
        %v1745 = vmul.f32 %v1424, %v1713
        %v1746 = vmul.f32 %v1426, %v1714
        %1747 = vadd.xlane.f32.xlu0 %v1620
        %v1748 = vpop.xlane.xlu0 %1747
        %1749 = vadd.xlane.f32.xlu0 %v1622
        %v1750 = vpop.xlane.xlu0 %1749
        %1751 = vadd.xlane.f32.xlu0 %v1624
        %v1752 = vpop.xlane.xlu0 %1751
        %1753 = vadd.xlane.f32.xlu0 %v1626
        %v1754 = vpop.xlane.xlu0 %1753
        %1755 = vadd.xlane.f32.xlu0 %v1628
        %v1756 = vpop.xlane.xlu0 %1755
        %1757 = vadd.xlane.f32.xlu0 %v1630
        %v1758 = vpop.xlane.xlu0 %1757
        %1759 = vadd.xlane.f32.xlu0 %v1632
        %v1760 = vpop.xlane.xlu0 %1759
        %1761 = vadd.xlane.f32.xlu0 %v1634
        %v1762 = vpop.xlane.xlu0 %1761
        %1763 = vadd.xlane.f32.xlu0 %v1636
        %v1764 = vpop.xlane.xlu0 %1763
        %1765 = vadd.xlane.f32.xlu0 %v1638
        %v1766 = vpop.xlane.xlu0 %1765
        %1767 = vadd.xlane.f32.xlu0 %v1640
        %v1768 = vpop.xlane.xlu0 %1767
        %1769 = vadd.xlane.f32.xlu0 %v1642
        %v1770 = vpop.xlane.xlu0 %1769
        %1771 = vadd.xlane.f32.xlu0 %v1644
        %v1772 = vpop.xlane.xlu0 %1771
        %1773 = vadd.xlane.f32.xlu0 %v1646
        %v1774 = vpop.xlane.xlu0 %1773
        %1775 = vadd.xlane.f32.xlu0 %v1648
        %v1776 = vpop.xlane.xlu0 %1775
        %1777 = vadd.xlane.f32.xlu0 %v1650
        %v1778 = vpop.xlane.xlu0 %1777
        %1779 = vadd.xlane.f32.xlu0 %v1652
        %v1780 = vpop.xlane.xlu0 %1779
        %1781 = vadd.xlane.f32.xlu0 %v1654
        %v1782 = vpop.xlane.xlu0 %1781
        %1783 = vadd.xlane.f32.xlu0 %v1656
        %v1784 = vpop.xlane.xlu0 %1783
        %1785 = vadd.xlane.f32.xlu0 %v1658
        %v1786 = vpop.xlane.xlu0 %1785
        %1787 = vadd.xlane.f32.xlu0 %v1660
        %v1788 = vpop.xlane.xlu0 %1787
        %1789 = vadd.xlane.f32.xlu0 %v1662
        %v1790 = vpop.xlane.xlu0 %1789
        %1791 = vadd.xlane.f32.xlu0 %v1664
        %v1792 = vpop.xlane.xlu0 %1791
        %1793 = vadd.xlane.f32.xlu0 %v1666
        %v1794 = vpop.xlane.xlu0 %1793
        %1795 = vadd.xlane.f32.xlu0 %v1668
        %v1796 = vpop.xlane.xlu0 %1795
        %1797 = vadd.xlane.f32.xlu0 %v1670
        %v1798 = vpop.xlane.xlu0 %1797
        %1799 = vadd.xlane.f32.xlu0 %v1672
        %v1800 = vpop.xlane.xlu0 %1799
        %1801 = vadd.xlane.f32.xlu0 %v1674
        %v1802 = vpop.xlane.xlu0 %1801
        %1803 = vadd.xlane.f32.xlu0 %v1676
        %v1804 = vpop.xlane.xlu0 %1803
        %1805 = vadd.xlane.f32.xlu0 %v1678
        %v1806 = vpop.xlane.xlu0 %1805
        %1807 = vadd.xlane.f32.xlu0 %v1680
        %v1808 = vpop.xlane.xlu0 %1807
        %1809 = vadd.xlane.f32.xlu0 %v1682
        %v1810 = vpop.xlane.xlu0 %1809
        %v1811 = vadd.f32 %v1715, %v1748
        %v1812 = vadd.f32 %v1716, %v1750
        %v1813 = vadd.f32 %v1717, %v1752
        %v1814 = vadd.f32 %v1718, %v1754
        %v1815 = vadd.f32 %v1719, %v1756
        %v1816 = vadd.f32 %v1720, %v1758
        %v1817 = vadd.f32 %v1721, %v1760
        %v1818 = vadd.f32 %v1722, %v1762
        %v1819 = vadd.f32 %v1723, %v1764
        %v1820 = vadd.f32 %v1724, %v1766
        %v1821 = vadd.f32 %v1725, %v1768
        %v1822 = vadd.f32 %v1726, %v1770
        %v1823 = vadd.f32 %v1727, %v1772
        %v1824 = vadd.f32 %v1728, %v1774
        %v1825 = vadd.f32 %v1729, %v1776
        %v1826 = vadd.f32 %v1730, %v1778
        %v1827 = vadd.f32 %v1731, %v1780
        %v1828 = vadd.f32 %v1732, %v1782
        %v1829 = vadd.f32 %v1733, %v1784
        %v1830 = vadd.f32 %v1734, %v1786
        %v1831 = vadd.f32 %v1735, %v1788
        %v1832 = vadd.f32 %v1736, %v1790
        %v1833 = vadd.f32 %v1737, %v1792
        %v1834 = vadd.f32 %v1738, %v1794
        %v1835 = vadd.f32 %v1739, %v1796
        %v1836 = vadd.f32 %v1740, %v1798
        %v1837 = vadd.f32 %v1741, %v1800
        %v1838 = vadd.f32 %v1742, %v1802
        %v1839 = vadd.f32 %v1743, %v1804
        %v1840 = vadd.f32 %v1744, %v1806
        %v1841 = vadd.f32 %v1745, %v1808
        %v1842 = vadd.f32 %v1746, %v1810
        %vm1843 = vcmask 7168
        %1844 = vst.msk [vmem:[#allocation3] sm:$0xff] %vm1843, %v1811
        %1845 = vst.msk [vmem:[#allocation3 + $0x8] sm:$0xff] %vm1843, %v1812
        %1846 = vst.msk [vmem:[#allocation3 + $0x10] sm:$0xff] %vm1843, %v1813
        %1847 = vst.msk [vmem:[#allocation3 + $0x18] sm:$0xff] %vm1843, %v1814
        %1848 = vst.msk [vmem:[#allocation3 + $0x20] sm:$0xff] %vm1843, %v1815
        %1849 = vst.msk [vmem:[#allocation3 + $0x28] sm:$0xff] %vm1843, %v1816
        %1850 = vst.msk [vmem:[#allocation3 + $0x30] sm:$0xff] %vm1843, %v1817
        %1851 = vst.msk [vmem:[#allocation3 + $0x38] sm:$0xff] %vm1843, %v1818
        %1852 = vst.msk [vmem:[#allocation3 + $0x40] sm:$0xff] %vm1843, %v1819
        %1853 = vst.msk [vmem:[#allocation3 + $0x48] sm:$0xff] %vm1843, %v1820
        %1854 = vst.msk [vmem:[#allocation3 + $0x50] sm:$0xff] %vm1843, %v1821
        %1855 = vst.msk [vmem:[#allocation3 + $0x58] sm:$0xff] %vm1843, %v1822
        %1856 = vst.msk [vmem:[#allocation3 + $0x60] sm:$0xff] %vm1843, %v1823
        %1857 = vst.msk [vmem:[#allocation3 + $0x68] sm:$0xff] %vm1843, %v1824
        %1858 = vst.msk [vmem:[#allocation3 + $0x70] sm:$0xff] %vm1843, %v1825
        %1859 = vst.msk [vmem:[#allocation3 + $0x78] sm:$0xff] %vm1843, %v1826
        %1860 = vst.msk [vmem:[#allocation3 + $0x80] sm:$0xff] %vm1843, %v1827
        %1861 = vst.msk [vmem:[#allocation3 + $0x88] sm:$0xff] %vm1843, %v1828
        %1862 = vst.msk [vmem:[#allocation3 + $0x90] sm:$0xff] %vm1843, %v1829
        %1863 = vst.msk [vmem:[#allocation3 + $0x98] sm:$0xff] %vm1843, %v1830
        %1864 = vst.msk [vmem:[#allocation3 + $0xa0] sm:$0xff] %vm1843, %v1831
        %1865 = vst.msk [vmem:[#allocation3 + $0xa8] sm:$0xff] %vm1843, %v1832
        %1866 = vst.msk [vmem:[#allocation3 + $0xb0] sm:$0xff] %vm1843, %v1833
        %1867 = vst.msk [vmem:[#allocation3 + $0xb8] sm:$0xff] %vm1843, %v1834
        %1868 = vst.msk [vmem:[#allocation3 + $0xc0] sm:$0xff] %vm1843, %v1835
        %1869 = vst.msk [vmem:[#allocation3 + $0xc8] sm:$0xff] %vm1843, %v1836
        %1870 = vst.msk [vmem:[#allocation3 + $0xd0] sm:$0xff] %vm1843, %v1837
        %1871 = vst.msk [vmem:[#allocation3 + $0xd8] sm:$0xff] %vm1843, %v1838
        %1872 = vst.msk [vmem:[#allocation3 + $0xe0] sm:$0xff] %vm1843, %v1839
        %1873 = vst.msk [vmem:[#allocation3 + $0xe8] sm:$0xff] %vm1843, %v1840
        %1874 = vst.msk [vmem:[#allocation3 + $0xf0] sm:$0xff] %vm1843, %v1841
        %1875 = vst.msk [vmem:[#allocation3 + $0xf8] sm:$0xff] %vm1843, %v1842
        %v1876 = vld [vmem:[#allocation4] sm:$0xff]
        %v1877 = vld [vmem:[#allocation4 + $0x8] sm:$0xff]
        %v1878 = vld [vmem:[#allocation4 + $0x10] sm:$0xff]
        %v1879 = vld [vmem:[#allocation4 + $0x18] sm:$0xff]
        %v1880 = vld [vmem:[#allocation4 + $0x20] sm:$0xff]
        %v1881 = vld [vmem:[#allocation4 + $0x28] sm:$0xff]
        %v1882 = vld [vmem:[#allocation4 + $0x30] sm:$0xff]
        %v1883 = vld [vmem:[#allocation4 + $0x38] sm:$0xff]
        %v1884 = vld [vmem:[#allocation4 + $0x40] sm:$0xff]
        %v1885 = vld [vmem:[#allocation4 + $0x48] sm:$0xff]
        %v1886 = vld [vmem:[#allocation4 + $0x50] sm:$0xff]
        %v1887 = vld [vmem:[#allocation4 + $0x58] sm:$0xff]
        %v1888 = vld [vmem:[#allocation4 + $0x60] sm:$0xff]
        %v1889 = vld [vmem:[#allocation4 + $0x68] sm:$0xff]
        %v1890 = vld [vmem:[#allocation4 + $0x70] sm:$0xff]
        %v1891 = vld [vmem:[#allocation4 + $0x78] sm:$0xff]
        %v1892 = vld [vmem:[#allocation4 + $0x80] sm:$0xff]
        %v1893 = vld [vmem:[#allocation4 + $0x88] sm:$0xff]
        %v1894 = vld [vmem:[#allocation4 + $0x90] sm:$0xff]
        %v1895 = vld [vmem:[#allocation4 + $0x98] sm:$0xff]
        %v1896 = vld [vmem:[#allocation4 + $0xa0] sm:$0xff]
        %v1897 = vld [vmem:[#allocation4 + $0xa8] sm:$0xff]
        %v1898 = vld [vmem:[#allocation4 + $0xb0] sm:$0xff]
        %v1899 = vld [vmem:[#allocation4 + $0xb8] sm:$0xff]
        %v1900 = vld [vmem:[#allocation4 + $0xc0] sm:$0xff]
        %v1901 = vld [vmem:[#allocation4 + $0xc8] sm:$0xff]
        %v1902 = vld [vmem:[#allocation4 + $0xd0] sm:$0xff]
        %v1903 = vld [vmem:[#allocation4 + $0xd8] sm:$0xff]
        %v1904 = vld [vmem:[#allocation4 + $0xe0] sm:$0xff]
        %v1905 = vld [vmem:[#allocation4 + $0xe8] sm:$0xff]
        %v1906 = vld [vmem:[#allocation4 + $0xf0] sm:$0xff]
        %v1907 = vld [vmem:[#allocation4 + $0xf8] sm:$0xff]
        %1909 = vset.pattern.permute.xlu0 0
        %1910 = vperm.xlu0 %1909, %v1364
        %v1911 = vpop.permute.xlu0 %1910
        %1914 = vset.pattern.permute.xlu0 0
        %1915 = vperm.xlu0 %1914, %v1366
        %v1916 = vpop.permute.xlu0 %1915
        %1919 = vset.pattern.permute.xlu0 0
        %1920 = vperm.xlu0 %1919, %v1368
        %v1921 = vpop.permute.xlu0 %1920
        %1924 = vset.pattern.permute.xlu0 0
        %1925 = vperm.xlu0 %1924, %v1370
        %v1926 = vpop.permute.xlu0 %1925
        %1929 = vset.pattern.permute.xlu0 0
        %1930 = vperm.xlu0 %1929, %v1372
        %v1931 = vpop.permute.xlu0 %1930
        %1934 = vset.pattern.permute.xlu0 0
        %1935 = vperm.xlu0 %1934, %v1374
        %v1936 = vpop.permute.xlu0 %1935
        %1939 = vset.pattern.permute.xlu0 0
        %1940 = vperm.xlu0 %1939, %v1376
        %v1941 = vpop.permute.xlu0 %1940
        %1944 = vset.pattern.permute.xlu0 0
        %1945 = vperm.xlu0 %1944, %v1378
        %v1946 = vpop.permute.xlu0 %1945
        %1949 = vset.pattern.permute.xlu0 0
        %1950 = vperm.xlu0 %1949, %v1380
        %v1951 = vpop.permute.xlu0 %1950
        %1954 = vset.pattern.permute.xlu0 0
        %1955 = vperm.xlu0 %1954, %v1382
        %v1956 = vpop.permute.xlu0 %1955
        %1959 = vset.pattern.permute.xlu0 0
        %1960 = vperm.xlu0 %1959, %v1384
        %v1961 = vpop.permute.xlu0 %1960
        %1964 = vset.pattern.permute.xlu0 0
        %1965 = vperm.xlu0 %1964, %v1386
        %v1966 = vpop.permute.xlu0 %1965
        %1969 = vset.pattern.permute.xlu0 0
        %1970 = vperm.xlu0 %1969, %v1388
        %v1971 = vpop.permute.xlu0 %1970
        %1974 = vset.pattern.permute.xlu0 0
        %1975 = vperm.xlu0 %1974, %v1390
        %v1976 = vpop.permute.xlu0 %1975
        %1979 = vset.pattern.permute.xlu0 0
        %1980 = vperm.xlu0 %1979, %v1392
        %v1981 = vpop.permute.xlu0 %1980
        %1984 = vset.pattern.permute.xlu0 0
        %1985 = vperm.xlu0 %1984, %v1394
        %v1986 = vpop.permute.xlu0 %1985
        %1989 = vset.pattern.permute.xlu0 0
        %1990 = vperm.xlu0 %1989, %v1396
        %v1991 = vpop.permute.xlu0 %1990
        %1994 = vset.pattern.permute.xlu0 0
        %1995 = vperm.xlu0 %1994, %v1398
        %v1996 = vpop.permute.xlu0 %1995
        %1999 = vset.pattern.permute.xlu0 0
        %2000 = vperm.xlu0 %1999, %v1400
        %v2001 = vpop.permute.xlu0 %2000
        %2004 = vset.pattern.permute.xlu0 0
        %2005 = vperm.xlu0 %2004, %v1402
        %v2006 = vpop.permute.xlu0 %2005
        %2009 = vset.pattern.permute.xlu0 0
        %2010 = vperm.xlu0 %2009, %v1404
        %v2011 = vpop.permute.xlu0 %2010
        %2014 = vset.pattern.permute.xlu0 0
        %2015 = vperm.xlu0 %2014, %v1406
        %v2016 = vpop.permute.xlu0 %2015
        %2019 = vset.pattern.permute.xlu0 0
        %2020 = vperm.xlu0 %2019, %v1408
        %v2021 = vpop.permute.xlu0 %2020
        %2024 = vset.pattern.permute.xlu0 0
        %2025 = vperm.xlu0 %2024, %v1410
        %v2026 = vpop.permute.xlu0 %2025
        %2029 = vset.pattern.permute.xlu0 0
        %2030 = vperm.xlu0 %2029, %v1412
        %v2031 = vpop.permute.xlu0 %2030
        %2034 = vset.pattern.permute.xlu0 0
        %2035 = vperm.xlu0 %2034, %v1414
        %v2036 = vpop.permute.xlu0 %2035
        %2039 = vset.pattern.permute.xlu0 0
        %2040 = vperm.xlu0 %2039, %v1416
        %v2041 = vpop.permute.xlu0 %2040
        %2044 = vset.pattern.permute.xlu0 0
        %2045 = vperm.xlu0 %2044, %v1418
        %v2046 = vpop.permute.xlu0 %2045
        %2049 = vset.pattern.permute.xlu0 0
        %2050 = vperm.xlu0 %2049, %v1420
        %v2051 = vpop.permute.xlu0 %2050
        %2054 = vset.pattern.permute.xlu0 0
        %2055 = vperm.xlu0 %2054, %v1422
        %v2056 = vpop.permute.xlu0 %2055
        %2059 = vset.pattern.permute.xlu0 0
        %2060 = vperm.xlu0 %2059, %v1424
        %v2061 = vpop.permute.xlu0 %2060
        %2064 = vset.pattern.permute.xlu0 0
        %2065 = vperm.xlu0 %2064, %v1426
        %v2066 = vpop.permute.xlu0 %2065
        %v2068 = vmul.f32 %v1911, %v1876
        %v2069 = vmul.f32 %v1916, %v1877
        %v2070 = vmul.f32 %v1921, %v1878
        %v2071 = vmul.f32 %v1926, %v1879
        %v2072 = vmul.f32 %v1931, %v1880
        %v2073 = vmul.f32 %v1936, %v1881
        %v2074 = vmul.f32 %v1941, %v1882
        %v2075 = vmul.f32 %v1946, %v1883
        %v2076 = vmul.f32 %v1951, %v1884
        %v2077 = vmul.f32 %v1956, %v1885
        %v2078 = vmul.f32 %v1961, %v1886
        %v2079 = vmul.f32 %v1966, %v1887
        %v2080 = vmul.f32 %v1971, %v1888
        %v2081 = vmul.f32 %v1976, %v1889
        %v2082 = vmul.f32 %v1981, %v1890
        %v2083 = vmul.f32 %v1986, %v1891
        %v2084 = vmul.f32 %v1991, %v1892
        %v2085 = vmul.f32 %v1996, %v1893
        %v2086 = vmul.f32 %v2001, %v1894
        %v2087 = vmul.f32 %v2006, %v1895
        %v2088 = vmul.f32 %v2011, %v1896
        %v2089 = vmul.f32 %v2016, %v1897
        %v2090 = vmul.f32 %v2021, %v1898
        %v2091 = vmul.f32 %v2026, %v1899
        %v2092 = vmul.f32 %v2031, %v1900
        %v2093 = vmul.f32 %v2036, %v1901
        %v2094 = vmul.f32 %v2041, %v1902
        %v2095 = vmul.f32 %v2046, %v1903
        %v2096 = vmul.f32 %v2051, %v1904
        %v2097 = vmul.f32 %v2056, %v1905
        %v2098 = vmul.f32 %v2061, %v1906
        %v2099 = vmul.f32 %v2066, %v1907
        %v2100 = vpack.c.bf16 %v1622, %v1620
        %v2101 = vpack.c.bf16 %v1626, %v1624
        %v2102 = vpack.c.bf16 %v1630, %v1628
        %v2103 = vpack.c.bf16 %v1634, %v1632
        %v2104 = vpack.c.bf16 %v1638, %v1636
        %v2105 = vpack.c.bf16 %v1642, %v1640
        %v2106 = vpack.c.bf16 %v1646, %v1644
        %v2107 = vpack.c.bf16 %v1650, %v1648
        %v2108 = vpack.c.bf16 %v1654, %v1652
        %v2109 = vpack.c.bf16 %v1658, %v1656
        %v2110 = vpack.c.bf16 %v1662, %v1660
        %v2111 = vpack.c.bf16 %v1666, %v1664
        %v2112 = vpack.c.bf16 %v1670, %v1668
        %v2113 = vpack.c.bf16 %v1674, %v1672
        %v2114 = vpack.c.bf16 %v1678, %v1676
        %v2115 = vpack.c.bf16 %v1682, %v1680
        %v2132 = vunpack.c.l.b16 %v532
        %v2133 = vunpack.c.l.b16 %v533
        %v2134 = vunpack.c.l.b16 %v534
        %v2135 = vunpack.c.l.b16 %v535
        %v2136 = vunpack.c.l.b16 %v536
        %v2137 = vunpack.c.l.b16 %v537
        %v2138 = vunpack.c.l.b16 %v538
        %v2139 = vunpack.c.l.b16 %v539
        %v2140 = vunpack.c.l.b16 %v540
        %v2141 = vunpack.c.l.b16 %v541
        %v2142 = vunpack.c.l.b16 %v542
        %v2143 = vunpack.c.l.b16 %v543
        %v2144 = vunpack.c.l.b16 %v544
        %v2145 = vunpack.c.l.b16 %v545
        %v2146 = vunpack.c.l.b16 %v546
        %v2147 = vunpack.c.l.b16 %v547
        %v2148 = vpack.c.b16 %v2133, %v2132
        %v2149 = vpack.c.b16 %v2135, %v2134
        %v2150 = vpack.c.b16 %v2137, %v2136
        %v2151 = vpack.c.b16 %v2139, %v2138
        %v2152 = vpack.c.b16 %v2141, %v2140
        %v2153 = vpack.c.b16 %v2143, %v2142
        %v2154 = vpack.c.b16 %v2145, %v2144
        %v2155 = vpack.c.b16 %v2147, %v2146
        %2164 = vmatprep.subr.bf16.mxu0 0
        %2165 = vmatpush1.bf16.msra.mxu0 %v2148
        %2166 = vmatprep.subr.bf16.mxu0 0
        %2167 = vmatpush1.bf16.msra.mxu0 %v2149
        %2168 = vmatprep.subr.bf16.mxu0 0
        %2169 = vmatpush1.bf16.msra.mxu0 %v2150
        %2170 = vmatprep.subr.bf16.mxu0 0
        %2171 = vmatpush1.bf16.msra.mxu0 %v2151
        %2172 = vmatprep.subr.bf16.mxu0 0
        %2173 = vmatpush1.bf16.msra.mxu0 %v2152
        %2174 = vmatprep.subr.bf16.mxu0 0
        %2175 = vmatpush1.bf16.msra.mxu0 %v2153
        %2176 = vmatprep.subr.bf16.mxu0 0
        %2177 = vmatpush1.bf16.msra.mxu0 %v2154
        %2178 = vmatprep.subr.bf16.mxu0 0
        %2179 = vmatpush1.bf16.msra.mxu0 %v2155
        %2180 = vmatprep.subr.bf16.mxu0 0
        %2181 = vmatpush1.bf16.msra.mxu0 0
        %2182 = vmatprep.subr.bf16.mxu0 0
        %2183 = vmatpush1.bf16.msra.mxu0 0
        %2184 = vmatprep.subr.bf16.mxu0 0
        %2185 = vmatpush1.bf16.msra.mxu0 0
        %2186 = vmatprep.subr.bf16.mxu0 0
        %2187 = vmatpush1.bf16.msra.mxu0 0
        %2188 = vmatprep.subr.bf16.mxu0 0
        %2189 = vmatpush1.bf16.msra.mxu0 0
        %2190 = vmatprep.subr.bf16.mxu0 0
        %2191 = vmatpush1.bf16.msra.mxu0 0
        %2192 = vmatprep.subr.bf16.mxu0 0
        %2193 = vmatpush1.bf16.msra.mxu0 0
        %2194 = vmatprep.subr.bf16.mxu0 0
        %2195 = vmatpush1.bf16.msra.mxu0 0
        %2196 = vmatprep.mubr.bf16.mxu0 0
        %2197 = vmatmul.mubr.bf16.gmra.mrb[0].mxu0 %v2100
        %v2198 = vpop.f32.mrb[0].mxu0
        %v2199 = vadd.f32 0.0, %v2198
        %v2200 = vpop.f32.mrb[0].mxu0
        %v2201 = vpop.f32.mrb[0].mxu0
        %v2202 = vadd.f32 0.0, %v2201
        %v2203 = vpop.f32.mrb[0].mxu0
        %2204 = vmatprep.mubr.bf16.mxu0 0
        %2205 = vmatmul.mubr.bf16.gmra.mrb[0].mxu0 %v2101
        %v2206 = vpop.f32.mrb[0].mxu0
        %v2207 = vadd.f32 0.0, %v2206
        %v2208 = vpop.f32.mrb[0].mxu0
        %v2209 = vpop.f32.mrb[0].mxu0
        %v2210 = vadd.f32 0.0, %v2209
        %v2211 = vpop.f32.mrb[0].mxu0
        %2212 = vmatprep.mubr.bf16.mxu0 0
        %2213 = vmatmul.mubr.bf16.gmra.mrb[0].mxu0 %v2102
        %v2214 = vpop.f32.mrb[0].mxu0
        %v2215 = vadd.f32 0.0, %v2214
        %v2216 = vpop.f32.mrb[0].mxu0
        %v2217 = vpop.f32.mrb[0].mxu0
        %v2218 = vadd.f32 0.0, %v2217
        %v2219 = vpop.f32.mrb[0].mxu0
        %2220 = vmatprep.mubr.bf16.mxu0 0
        %2221 = vmatmul.mubr.bf16.gmra.mrb[0].mxu0 %v2103
        %v2222 = vpop.f32.mrb[0].mxu0
        %v2223 = vadd.f32 0.0, %v2222
        %v2224 = vpop.f32.mrb[0].mxu0
        %v2225 = vpop.f32.mrb[0].mxu0
        %v2226 = vadd.f32 0.0, %v2225
        %v2227 = vpop.f32.mrb[0].mxu0
        %2228 = vmatprep.mubr.bf16.mxu0 0
        %2229 = vmatmul.mubr.bf16.gmra.mrb[0].mxu0 %v2104
        %v2230 = vpop.f32.mrb[0].mxu0
        %v2231 = vadd.f32 0.0, %v2230
        %v2232 = vpop.f32.mrb[0].mxu0
        %v2233 = vpop.f32.mrb[0].mxu0
        %v2234 = vadd.f32 0.0, %v2233
        %v2235 = vpop.f32.mrb[0].mxu0
        %2236 = vmatprep.mubr.bf16.mxu0 0
        %2237 = vmatmul.mubr.bf16.gmra.mrb[0].mxu0 %v2105
        %v2238 = vpop.f32.mrb[0].mxu0
        %v2239 = vadd.f32 0.0, %v2238
        %v2240 = vpop.f32.mrb[0].mxu0
        %v2241 = vpop.f32.mrb[0].mxu0
        %v2242 = vadd.f32 0.0, %v2241
        %v2243 = vpop.f32.mrb[0].mxu0
        %2244 = vmatprep.mubr.bf16.mxu0 0
        %2245 = vmatmul.mubr.bf16.gmra.mrb[0].mxu0 %v2106
        %v2246 = vpop.f32.mrb[0].mxu0
        %v2247 = vadd.f32 0.0, %v2246
        %v2248 = vpop.f32.mrb[0].mxu0
        %v2249 = vpop.f32.mrb[0].mxu0
        %v2250 = vadd.f32 0.0, %v2249
        %v2251 = vpop.f32.mrb[0].mxu0
        %2252 = vmatprep.mubr.bf16.mxu0 0
        %2253 = vmatmul.mubr.bf16.gmra.mrb[0].mxu0 %v2107
        %v2254 = vpop.f32.mrb[0].mxu0
        %v2255 = vadd.f32 0.0, %v2254
        %v2256 = vpop.f32.mrb[0].mxu0
        %v2257 = vpop.f32.mrb[0].mxu0
        %v2258 = vadd.f32 0.0, %v2257
        %v2259 = vpop.f32.mrb[0].mxu0
        %2260 = vdwg.mxu0
        %v2277 = vunpack.c.l.b16 %v548
        %v2278 = vunpack.c.l.b16 %v549
        %v2279 = vunpack.c.l.b16 %v550
        %v2280 = vunpack.c.l.b16 %v551
        %v2281 = vunpack.c.l.b16 %v552
        %v2282 = vunpack.c.l.b16 %v553
        %v2283 = vunpack.c.l.b16 %v554
        %v2284 = vunpack.c.l.b16 %v555
        %v2285 = vunpack.c.l.b16 %v556
        %v2286 = vunpack.c.l.b16 %v557
        %v2287 = vunpack.c.l.b16 %v558
        %v2288 = vunpack.c.l.b16 %v559
        %v2289 = vunpack.c.l.b16 %v560
        %v2290 = vunpack.c.l.b16 %v561
        %v2291 = vunpack.c.l.b16 %v562
        %v2292 = vunpack.c.l.b16 %v563
        %v2293 = vpack.c.b16 %v2278, %v2277
        %v2294 = vpack.c.b16 %v2280, %v2279
        %v2295 = vpack.c.b16 %v2282, %v2281
        %v2296 = vpack.c.b16 %v2284, %v2283
        %v2297 = vpack.c.b16 %v2286, %v2285
        %v2298 = vpack.c.b16 %v2288, %v2287
        %v2299 = vpack.c.b16 %v2290, %v2289
        %v2300 = vpack.c.b16 %v2292, %v2291
        %2309 = vmatprep.subr.bf16.mxu0 0
        %2310 = vmatpush1.bf16.msra.mxu0 %v2293
        %2311 = vmatprep.subr.bf16.mxu0 0
        %2312 = vmatpush1.bf16.msra.mxu0 %v2294
        %2313 = vmatprep.subr.bf16.mxu0 0
        %2314 = vmatpush1.bf16.msra.mxu0 %v2295
        %2315 = vmatprep.subr.bf16.mxu0 0
        %2316 = vmatpush1.bf16.msra.mxu0 %v2296
        %2317 = vmatprep.subr.bf16.mxu0 0
        %2318 = vmatpush1.bf16.msra.mxu0 %v2297
        %2319 = vmatprep.subr.bf16.mxu0 0
        %2320 = vmatpush1.bf16.msra.mxu0 %v2298
        %2321 = vmatprep.subr.bf16.mxu0 0
        %2322 = vmatpush1.bf16.msra.mxu0 %v2299
        %2323 = vmatprep.subr.bf16.mxu0 0
        %2324 = vmatpush1.bf16.msra.mxu0 %v2300
        %2325 = vmatprep.subr.bf16.mxu0 0
        %2326 = vmatpush1.bf16.msra.mxu0 0
        %2327 = vmatprep.subr.bf16.mxu0 0
        %2328 = vmatpush1.bf16.msra.mxu0 0
        %2329 = vmatprep.subr.bf16.mxu0 0
        %2330 = vmatpush1.bf16.msra.mxu0 0
        %2331 = vmatprep.subr.bf16.mxu0 0
        %2332 = vmatpush1.bf16.msra.mxu0 0
        %2333 = vmatprep.subr.bf16.mxu0 0
        %2334 = vmatpush1.bf16.msra.mxu0 0
        %2335 = vmatprep.subr.bf16.mxu0 0
        %2336 = vmatpush1.bf16.msra.mxu0 0
        %2337 = vmatprep.subr.bf16.mxu0 0
        %2338 = vmatpush1.bf16.msra.mxu0 0
        %2339 = vmatprep.subr.bf16.mxu0 0
        %2340 = vmatpush1.bf16.msra.mxu0 0
        %2341 = vmatprep.mubr.bf16.mxu0 0
        %2342 = vmatmul.mubr.bf16.gmra.mrb[0].mxu0 %v2108
        %v2343 = vpop.f32.mrb[0].mxu0
        %v2344 = vadd.f32 0.0, %v2343
        %v2345 = vpop.f32.mrb[0].mxu0
        %v2346 = vpop.f32.mrb[0].mxu0
        %v2347 = vadd.f32 0.0, %v2346
        %v2348 = vpop.f32.mrb[0].mxu0
        %2349 = vmatprep.mubr.bf16.mxu0 0
        %2350 = vmatmul.mubr.bf16.gmra.mrb[0].mxu0 %v2109
        %v2351 = vpop.f32.mrb[0].mxu0
        %v2352 = vadd.f32 0.0, %v2351
        %v2353 = vpop.f32.mrb[0].mxu0
        %v2354 = vpop.f32.mrb[0].mxu0
        %v2355 = vadd.f32 0.0, %v2354
        %v2356 = vpop.f32.mrb[0].mxu0
        %2357 = vmatprep.mubr.bf16.mxu0 0
        %2358 = vmatmul.mubr.bf16.gmra.mrb[0].mxu0 %v2110
        %v2359 = vpop.f32.mrb[0].mxu0
        %v2360 = vadd.f32 0.0, %v2359
        %v2361 = vpop.f32.mrb[0].mxu0
        %v2362 = vpop.f32.mrb[0].mxu0
        %v2363 = vadd.f32 0.0, %v2362
        %v2364 = vpop.f32.mrb[0].mxu0
        %2365 = vmatprep.mubr.bf16.mxu0 0
        %2366 = vmatmul.mubr.bf16.gmra.mrb[0].mxu0 %v2111
        %v2367 = vpop.f32.mrb[0].mxu0
        %v2368 = vadd.f32 0.0, %v2367
        %v2369 = vpop.f32.mrb[0].mxu0
        %v2370 = vpop.f32.mrb[0].mxu0
        %v2371 = vadd.f32 0.0, %v2370
        %v2372 = vpop.f32.mrb[0].mxu0
        %2373 = vmatprep.mubr.bf16.mxu0 0
        %2374 = vmatmul.mubr.bf16.gmra.mrb[0].mxu0 %v2112
        %v2375 = vpop.f32.mrb[0].mxu0
        %v2376 = vadd.f32 0.0, %v2375
        %v2377 = vpop.f32.mrb[0].mxu0
        %v2378 = vpop.f32.mrb[0].mxu0
        %v2379 = vadd.f32 0.0, %v2378
        %v2380 = vpop.f32.mrb[0].mxu0
        %2381 = vmatprep.mubr.bf16.mxu0 0
        %2382 = vmatmul.mubr.bf16.gmra.mrb[0].mxu0 %v2113
        %v2383 = vpop.f32.mrb[0].mxu0
        %v2384 = vadd.f32 0.0, %v2383
        %v2385 = vpop.f32.mrb[0].mxu0
        %v2386 = vpop.f32.mrb[0].mxu0
        %v2387 = vadd.f32 0.0, %v2386
        %v2388 = vpop.f32.mrb[0].mxu0
        %2389 = vmatprep.mubr.bf16.mxu0 0
        %2390 = vmatmul.mubr.bf16.gmra.mrb[0].mxu0 %v2114
        %v2391 = vpop.f32.mrb[0].mxu0
        %v2392 = vadd.f32 0.0, %v2391
        %v2393 = vpop.f32.mrb[0].mxu0
        %v2394 = vpop.f32.mrb[0].mxu0
        %v2395 = vadd.f32 0.0, %v2394
        %v2396 = vpop.f32.mrb[0].mxu0
        %2397 = vmatprep.mubr.bf16.mxu0 0
        %2398 = vmatmul.mubr.bf16.gmra.mrb[0].mxu0 %v2115
        %v2399 = vpop.f32.mrb[0].mxu0
        %v2400 = vadd.f32 0.0, %v2399
        %v2401 = vpop.f32.mrb[0].mxu0
        %v2402 = vpop.f32.mrb[0].mxu0
        %v2403 = vadd.f32 0.0, %v2402
        %v2404 = vpop.f32.mrb[0].mxu0
        %2405 = vdwg.mxu0
        %v2406 = vadd.f32 %v2068, %v2199
        %v2407 = vadd.f32 %v2069, %v2202
        %v2408 = vadd.f32 %v2070, %v2207
        %v2409 = vadd.f32 %v2071, %v2210
        %v2410 = vadd.f32 %v2072, %v2215
        %v2411 = vadd.f32 %v2073, %v2218
        %v2412 = vadd.f32 %v2074, %v2223
        %v2413 = vadd.f32 %v2075, %v2226
        %v2414 = vadd.f32 %v2076, %v2231
        %v2415 = vadd.f32 %v2077, %v2234
        %v2416 = vadd.f32 %v2078, %v2239
        %v2417 = vadd.f32 %v2079, %v2242
        %v2418 = vadd.f32 %v2080, %v2247
        %v2419 = vadd.f32 %v2081, %v2250
        %v2420 = vadd.f32 %v2082, %v2255
        %v2421 = vadd.f32 %v2083, %v2258
        %v2422 = vadd.f32 %v2084, %v2344
        %v2423 = vadd.f32 %v2085, %v2347
        %v2424 = vadd.f32 %v2086, %v2352
        %v2425 = vadd.f32 %v2087, %v2355
        %v2426 = vadd.f32 %v2088, %v2360
        %v2427 = vadd.f32 %v2089, %v2363
        %v2428 = vadd.f32 %v2090, %v2368
        %v2429 = vadd.f32 %v2091, %v2371
        %v2430 = vadd.f32 %v2092, %v2376
        %v2431 = vadd.f32 %v2093, %v2379
        %v2432 = vadd.f32 %v2094, %v2384
        %v2433 = vadd.f32 %v2095, %v2387
        %v2434 = vadd.f32 %v2096, %v2392
        %v2435 = vadd.f32 %v2097, %v2395
        %v2436 = vadd.f32 %v2098, %v2400
        %v2437 = vadd.f32 %v2099, %v2403
        %2438 = vst.msk [vmem:[#allocation4] sm:$0xff] %vm644, %v2406
        %2439 = vst.msk [vmem:[#allocation4 + $0x8] sm:$0xff] %vm644, %v2407
        %2440 = vst.msk [vmem:[#allocation4 + $0x10] sm:$0xff] %vm644, %v2408
        %2441 = vst.msk [vmem:[#allocation4 + $0x18] sm:$0xff] %vm644, %v2409
        %2442 = vst.msk [vmem:[#allocation4 + $0x20] sm:$0xff] %vm644, %v2410
        %2443 = vst.msk [vmem:[#allocation4 + $0x28] sm:$0xff] %vm644, %v2411
        %2444 = vst.msk [vmem:[#allocation4 + $0x30] sm:$0xff] %vm644, %v2412
        %2445 = vst.msk [vmem:[#allocation4 + $0x38] sm:$0xff] %vm644, %v2413
        %2446 = vst.msk [vmem:[#allocation4 + $0x40] sm:$0xff] %vm644, %v2414
        %2447 = vst.msk [vmem:[#allocation4 + $0x48] sm:$0xff] %vm644, %v2415
        %2448 = vst.msk [vmem:[#allocation4 + $0x50] sm:$0xff] %vm644, %v2416
        %2449 = vst.msk [vmem:[#allocation4 + $0x58] sm:$0xff] %vm644, %v2417
        %2450 = vst.msk [vmem:[#allocation4 + $0x60] sm:$0xff] %vm644, %v2418
        %2451 = vst.msk [vmem:[#allocation4 + $0x68] sm:$0xff] %vm644, %v2419
        %2452 = vst.msk [vmem:[#allocation4 + $0x70] sm:$0xff] %vm644, %v2420
        %2453 = vst.msk [vmem:[#allocation4 + $0x78] sm:$0xff] %vm644, %v2421
        %2454 = vst.msk [vmem:[#allocation4 + $0x80] sm:$0xff] %vm644, %v2422
        %2455 = vst.msk [vmem:[#allocation4 + $0x88] sm:$0xff] %vm644, %v2423
        %2456 = vst.msk [vmem:[#allocation4 + $0x90] sm:$0xff] %vm644, %v2424
        %2457 = vst.msk [vmem:[#allocation4 + $0x98] sm:$0xff] %vm644, %v2425
        %2458 = vst.msk [vmem:[#allocation4 + $0xa0] sm:$0xff] %vm644, %v2426
        %2459 = vst.msk [vmem:[#allocation4 + $0xa8] sm:$0xff] %vm644, %v2427
        %2460 = vst.msk [vmem:[#allocation4 + $0xb0] sm:$0xff] %vm644, %v2428
        %2461 = vst.msk [vmem:[#allocation4 + $0xb8] sm:$0xff] %vm644, %v2429
        %2462 = vst.msk [vmem:[#allocation4 + $0xc0] sm:$0xff] %vm644, %v2430
        %2463 = vst.msk [vmem:[#allocation4 + $0xc8] sm:$0xff] %vm644, %v2431
        %2464 = vst.msk [vmem:[#allocation4 + $0xd0] sm:$0xff] %vm644, %v2432
        %2465 = vst.msk [vmem:[#allocation4 + $0xd8] sm:$0xff] %vm644, %v2433
        %2466 = vst.msk [vmem:[#allocation4 + $0xe0] sm:$0xff] %vm644, %v2434
        %2467 = vst.msk [vmem:[#allocation4 + $0xe8] sm:$0xff] %vm644, %v2435
        %2468 = vst.msk [vmem:[#allocation4 + $0xf0] sm:$0xff] %vm644, %v2436
        %2469 = vst.msk [vmem:[#allocation4 + $0xf8] sm:$0xff] %vm644, %v2437
        %2470 = vst.msk [vmem:[#allocation2] sm:$0xff] %vm1843, %v1299
        %2471 = vst.msk [vmem:[#allocation2 + $0x8] sm:$0xff] %vm1843, %v1300
        %2472 = vst.msk [vmem:[#allocation2 + $0x10] sm:$0xff] %vm1843, %v1301
        %2473 = vst.msk [vmem:[#allocation2 + $0x18] sm:$0xff] %vm1843, %v1302
        %2474 = vst.msk [vmem:[#allocation2 + $0x20] sm:$0xff] %vm1843, %v1303
        %2475 = vst.msk [vmem:[#allocation2 + $0x28] sm:$0xff] %vm1843, %v1304
        %2476 = vst.msk [vmem:[#allocation2 + $0x30] sm:$0xff] %vm1843, %v1305
        %2477 = vst.msk [vmem:[#allocation2 + $0x38] sm:$0xff] %vm1843, %v1306
        %2478 = vst.msk [vmem:[#allocation2 + $0x40] sm:$0xff] %vm1843, %v1307
        %2479 = vst.msk [vmem:[#allocation2 + $0x48] sm:$0xff] %vm1843, %v1308
        %2480 = vst.msk [vmem:[#allocation2 + $0x50] sm:$0xff] %vm1843, %v1309
        %2481 = vst.msk [vmem:[#allocation2 + $0x58] sm:$0xff] %vm1843, %v1310
        %2482 = vst.msk [vmem:[#allocation2 + $0x60] sm:$0xff] %vm1843, %v1311
        %2483 = vst.msk [vmem:[#allocation2 + $0x68] sm:$0xff] %vm1843, %v1312
        %2484 = vst.msk [vmem:[#allocation2 + $0x70] sm:$0xff] %vm1843, %v1313
        %2485 = vst.msk [vmem:[#allocation2 + $0x78] sm:$0xff] %vm1843, %v1314
        %2486 = vst.msk [vmem:[#allocation2 + $0x80] sm:$0xff] %vm1843, %v1315
        %2487 = vst.msk [vmem:[#allocation2 + $0x88] sm:$0xff] %vm1843, %v1316
        %2488 = vst.msk [vmem:[#allocation2 + $0x90] sm:$0xff] %vm1843, %v1317
        %2489 = vst.msk [vmem:[#allocation2 + $0x98] sm:$0xff] %vm1843, %v1318
        %2490 = vst.msk [vmem:[#allocation2 + $0xa0] sm:$0xff] %vm1843, %v1319
        %2491 = vst.msk [vmem:[#allocation2 + $0xa8] sm:$0xff] %vm1843, %v1320
        %2492 = vst.msk [vmem:[#allocation2 + $0xb0] sm:$0xff] %vm1843, %v1321
        %2493 = vst.msk [vmem:[#allocation2 + $0xb8] sm:$0xff] %vm1843, %v1322
        %2494 = vst.msk [vmem:[#allocation2 + $0xc0] sm:$0xff] %vm1843, %v1323
        %2495 = vst.msk [vmem:[#allocation2 + $0xc8] sm:$0xff] %vm1843, %v1324
        %2496 = vst.msk [vmem:[#allocation2 + $0xd0] sm:$0xff] %vm1843, %v1325
        %2497 = vst.msk [vmem:[#allocation2 + $0xd8] sm:$0xff] %vm1843, %v1326
        %2498 = vst.msk [vmem:[#allocation2 + $0xe0] sm:$0xff] %vm1843, %v1327
        %2499 = vst.msk [vmem:[#allocation2 + $0xe8] sm:$0xff] %vm1843, %v1328
        %2500 = vst.msk [vmem:[#allocation2 + $0xf0] sm:$0xff] %vm1843, %v1329
        %2501 = vst.msk [vmem:[#allocation2 + $0xf8] sm:$0xff] %vm1843, %v1330
      $region44: #{warp_attn_forward.12} parent=35 // pred_fallthru
        _
      %p2502 = scmp.eq.s32.totalorder %s361, 2
      // Predicated region
      $region45: #{warp_attn_forward.12} parent=35 // pred_check
        %p2503 = pneg %p2502
      $region46: #{warp_attn_forward.12} parent=35 // pred_check_branch
        %2505 = sbr.rel (%p2503) target = $region48
      $region47: #{warp_attn_forward.12} parent=35 // pred_region
        %v2506 = vld [vmem:[%s310] sm:$0xf]
        %v2507 = vld [vmem:[%s310 + $0x4] sm:$0xf]
        %v2508 = vld [vmem:[%s310 + $0x8] sm:$0xf]
        %v2509 = vld [vmem:[%s310 + $0xc] sm:$0xf]
        %v2510 = vld [vmem:[%s310 + $0x10] sm:$0xf]
        %v2511 = vld [vmem:[%s310 + $0x14] sm:$0xf]
        %v2512 = vld [vmem:[%s310 + $0x18] sm:$0xf]
        %v2513 = vld [vmem:[%s310 + $0x1c] sm:$0xf]
        %v2514 = vld [vmem:[%s310 + $0x20] sm:$0xf]
        %v2515 = vld [vmem:[%s310 + $0x24] sm:$0xf]
        %v2516 = vld [vmem:[%s310 + $0x28] sm:$0xf]
        %v2517 = vld [vmem:[%s310 + $0x2c] sm:$0xf]
        %v2518 = vld [vmem:[%s310 + $0x30] sm:$0xf]
        %v2519 = vld [vmem:[%s310 + $0x34] sm:$0xf]
        %v2520 = vld [vmem:[%s310 + $0x38] sm:$0xf]
        %v2521 = vld [vmem:[%s310 + $0x3c] sm:$0xf]
        %v2522 = vld [vmem:[%s310 + $0x40] sm:$0xf]
        %v2523 = vld [vmem:[%s310 + $0x44] sm:$0xf]
        %v2524 = vld [vmem:[%s310 + $0x48] sm:$0xf]
        %v2525 = vld [vmem:[%s310 + $0x4c] sm:$0xf]
        %v2526 = vld [vmem:[%s310 + $0x50] sm:$0xf]
        %v2527 = vld [vmem:[%s310 + $0x54] sm:$0xf]
        %v2528 = vld [vmem:[%s310 + $0x58] sm:$0xf]
        %v2529 = vld [vmem:[%s310 + $0x5c] sm:$0xf]
        %v2530 = vld [vmem:[%s310 + $0x60] sm:$0xf]
        %v2531 = vld [vmem:[%s310 + $0x64] sm:$0xf]
        %v2532 = vld [vmem:[%s310 + $0x68] sm:$0xf]
        %v2533 = vld [vmem:[%s310 + $0x6c] sm:$0xf]
        %v2534 = vld [vmem:[%s310 + $0x70] sm:$0xf]
        %v2535 = vld [vmem:[%s310 + $0x74] sm:$0xf]
        %v2536 = vld [vmem:[%s310 + $0x78] sm:$0xf]
        %v2537 = vld [vmem:[%s310 + $0x7c] sm:$0xf]
        %v2538 = vld [vmem:[%s320] sm:$0xf]
        %v2539 = vld [vmem:[%s320 + $0x4] sm:$0xf]
        %v2540 = vld [vmem:[%s320 + $0x8] sm:$0xf]
        %v2541 = vld [vmem:[%s320 + $0xc] sm:$0xf]
        %v2542 = vld [vmem:[%s320 + $0x10] sm:$0xf]
        %v2543 = vld [vmem:[%s320 + $0x14] sm:$0xf]
        %v2544 = vld [vmem:[%s320 + $0x18] sm:$0xf]
        %v2545 = vld [vmem:[%s320 + $0x1c] sm:$0xf]
        %v2546 = vld [vmem:[%s320 + $0x20] sm:$0xf]
        %v2547 = vld [vmem:[%s320 + $0x24] sm:$0xf]
        %v2548 = vld [vmem:[%s320 + $0x28] sm:$0xf]
        %v2549 = vld [vmem:[%s320 + $0x2c] sm:$0xf]
        %v2550 = vld [vmem:[%s320 + $0x30] sm:$0xf]
        %v2551 = vld [vmem:[%s320 + $0x34] sm:$0xf]
        %v2552 = vld [vmem:[%s320 + $0x38] sm:$0xf]
        %v2553 = vld [vmem:[%s320 + $0x3c] sm:$0xf]
        %v2554 = vld [vmem:[%s320 + $0x40] sm:$0xf]
        %v2555 = vld [vmem:[%s320 + $0x44] sm:$0xf]
        %v2556 = vld [vmem:[%s320 + $0x48] sm:$0xf]
        %v2557 = vld [vmem:[%s320 + $0x4c] sm:$0xf]
        %v2558 = vld [vmem:[%s320 + $0x50] sm:$0xf]
        %v2559 = vld [vmem:[%s320 + $0x54] sm:$0xf]
        %v2560 = vld [vmem:[%s320 + $0x58] sm:$0xf]
        %v2561 = vld [vmem:[%s320 + $0x5c] sm:$0xf]
        %v2562 = vld [vmem:[%s320 + $0x60] sm:$0xf]
        %v2563 = vld [vmem:[%s320 + $0x64] sm:$0xf]
        %v2564 = vld [vmem:[%s320 + $0x68] sm:$0xf]
        %v2565 = vld [vmem:[%s320 + $0x6c] sm:$0xf]
        %v2566 = vld [vmem:[%s320 + $0x70] sm:$0xf]
        %v2567 = vld [vmem:[%s320 + $0x74] sm:$0xf]
        %v2568 = vld [vmem:[%s320 + $0x78] sm:$0xf]
        %v2569 = vld [vmem:[%s320 + $0x7c] sm:$0xf]
        %v2570 = vld [vmem:[%s330] sm:$0xf]
        %v2571 = vld [vmem:[%s330 + $0x4] sm:$0xf]
        %v2572 = vld [vmem:[%s330 + $0x8] sm:$0xf]
        %v2573 = vld [vmem:[%s330 + $0xc] sm:$0xf]
        %v2574 = vld [vmem:[%s330 + $0x10] sm:$0xf]
        %v2575 = vld [vmem:[%s330 + $0x14] sm:$0xf]
        %v2576 = vld [vmem:[%s330 + $0x18] sm:$0xf]
        %v2577 = vld [vmem:[%s330 + $0x1c] sm:$0xf]
        %v2578 = vld [vmem:[%s330 + $0x20] sm:$0xf]
        %v2579 = vld [vmem:[%s330 + $0x24] sm:$0xf]
        %v2580 = vld [vmem:[%s330 + $0x28] sm:$0xf]
        %v2581 = vld [vmem:[%s330 + $0x2c] sm:$0xf]
        %v2582 = vld [vmem:[%s330 + $0x30] sm:$0xf]
        %v2583 = vld [vmem:[%s330 + $0x34] sm:$0xf]
        %v2584 = vld [vmem:[%s330 + $0x38] sm:$0xf]
        %v2585 = vld [vmem:[%s330 + $0x3c] sm:$0xf]
        %v2586 = vld [vmem:[%s330 + $0x40] sm:$0xf]
        %v2587 = vld [vmem:[%s330 + $0x44] sm:$0xf]
        %v2588 = vld [vmem:[%s330 + $0x48] sm:$0xf]
        %v2589 = vld [vmem:[%s330 + $0x4c] sm:$0xf]
        %v2590 = vld [vmem:[%s330 + $0x50] sm:$0xf]
        %v2591 = vld [vmem:[%s330 + $0x54] sm:$0xf]
        %v2592 = vld [vmem:[%s330 + $0x58] sm:$0xf]
        %v2593 = vld [vmem:[%s330 + $0x5c] sm:$0xf]
        %v2594 = vld [vmem:[%s330 + $0x60] sm:$0xf]
        %v2595 = vld [vmem:[%s330 + $0x64] sm:$0xf]
        %v2596 = vld [vmem:[%s330 + $0x68] sm:$0xf]
        %v2597 = vld [vmem:[%s330 + $0x6c] sm:$0xf]
        %v2598 = vld [vmem:[%s330 + $0x70] sm:$0xf]
        %v2599 = vld [vmem:[%s330 + $0x74] sm:$0xf]
        %v2600 = vld [vmem:[%s330 + $0x78] sm:$0xf]
        %v2601 = vld [vmem:[%s330 + $0x7c] sm:$0xf]
        %v2618 = vunpack.c.l.b16 %v2506
        %v2619 = vunpack.c.l.b16 %v2507
        %v2620 = vunpack.c.l.b16 %v2508
        %v2621 = vunpack.c.l.b16 %v2509
        %v2622 = vunpack.c.l.b16 %v2510
        %v2623 = vunpack.c.l.b16 %v2511
        %v2624 = vunpack.c.l.b16 %v2512
        %v2625 = vunpack.c.l.b16 %v2513
        %v2626 = vunpack.c.l.b16 %v2514
        %v2627 = vunpack.c.l.b16 %v2515
        %v2628 = vunpack.c.l.b16 %v2516
        %v2629 = vunpack.c.l.b16 %v2517
        %v2630 = vunpack.c.l.b16 %v2518
        %v2631 = vunpack.c.l.b16 %v2519
        %v2632 = vunpack.c.l.b16 %v2520
        %v2633 = vunpack.c.l.b16 %v2521
        %v2634 = vpack.c.b16 %v2619, %v2618
        %v2635 = vpack.c.b16 %v2621, %v2620
        %v2636 = vpack.c.b16 %v2623, %v2622
        %v2637 = vpack.c.b16 %v2625, %v2624
        %v2638 = vpack.c.b16 %v2627, %v2626
        %v2639 = vpack.c.b16 %v2629, %v2628
        %v2640 = vpack.c.b16 %v2631, %v2630
        %v2641 = vpack.c.b16 %v2633, %v2632
        %v2658 = vunpack.c.l.b16 %v2538
        %v2659 = vunpack.c.l.b16 %v2539
        %v2660 = vunpack.c.l.b16 %v2540
        %v2661 = vunpack.c.l.b16 %v2541
        %v2662 = vunpack.c.l.b16 %v2542
        %v2663 = vunpack.c.l.b16 %v2543
        %v2664 = vunpack.c.l.b16 %v2544
        %v2665 = vunpack.c.l.b16 %v2545
        %v2666 = vunpack.c.l.b16 %v2546
        %v2667 = vunpack.c.l.b16 %v2547
        %v2668 = vunpack.c.l.b16 %v2548
        %v2669 = vunpack.c.l.b16 %v2549
        %v2670 = vunpack.c.l.b16 %v2550
        %v2671 = vunpack.c.l.b16 %v2551
        %v2672 = vunpack.c.l.b16 %v2552
        %v2673 = vunpack.c.l.b16 %v2553
        %v2674 = vpack.c.b16 %v2659, %v2658
        %v2675 = vpack.c.b16 %v2661, %v2660
        %v2676 = vpack.c.b16 %v2663, %v2662
        %v2677 = vpack.c.b16 %v2665, %v2664
        %v2678 = vpack.c.b16 %v2667, %v2666
        %v2679 = vpack.c.b16 %v2669, %v2668
        %v2680 = vpack.c.b16 %v2671, %v2670
        %v2681 = vpack.c.b16 %v2673, %v2672
        %vm2682 = vcmask 261120
        %v2684 = vsel %vm2682, %v2634, 0
        %v2687 = vsel %vm2682, %v2635, 0
        %v2690 = vsel %vm2682, %v2636, 0
        %v2693 = vsel %vm2682, %v2637, 0
        %v2696 = vsel %vm2682, %v2638, 0
        %v2699 = vsel %vm2682, %v2639, 0
        %v2702 = vsel %vm2682, %v2640, 0
        %v2705 = vsel %vm2682, %v2641, 0
        %v2708 = vsel %vm2682, %v2674, 0
        %v2711 = vsel %vm2682, %v2675, 0
        %v2714 = vsel %vm2682, %v2676, 0
        %v2717 = vsel %vm2682, %v2677, 0
        %v2720 = vsel %vm2682, %v2678, 0
        %v2723 = vsel %vm2682, %v2679, 0
        %v2726 = vsel %vm2682, %v2680, 0
        %v2729 = vsel %vm2682, %v2681, 0
        %2731 = vmatprep.subr.bf16.mxu0 0
        %2732 = vmatpush1.bf16.xpose.msra.mxu0 %v2708
        %2733 = vmatprep.subr.bf16.mxu0 0
        %2734 = vmatpush1.bf16.xpose.msra.mxu0 %v2711
        %2735 = vmatprep.subr.bf16.mxu0 0
        %2736 = vmatpush1.bf16.xpose.msra.mxu0 %v2714
        %2737 = vmatprep.subr.bf16.mxu0 0
        %2738 = vmatpush1.bf16.xpose.msra.mxu0 %v2717
        %2739 = vmatprep.subr.bf16.mxu0 0
        %2740 = vmatpush1.bf16.xpose.msra.mxu0 %v2720
        %2741 = vmatprep.subr.bf16.mxu0 0
        %2742 = vmatpush1.bf16.xpose.msra.mxu0 %v2723
        %2743 = vmatprep.subr.bf16.mxu0 0
        %2744 = vmatpush1.bf16.xpose.msra.mxu0 %v2726
        %2745 = vmatprep.subr.bf16.mxu0 0
        %2746 = vmatpush1.bf16.xpose.msra.mxu0 %v2729
        %2747 = vmatprep.subr.bf16.mxu0 0
        %2748 = vmatpush1.bf16.xpose.msra.mxu0 0
        %2749 = vmatprep.subr.bf16.mxu0 0
        %2750 = vmatpush1.bf16.xpose.msra.mxu0 0
        %2751 = vmatprep.subr.bf16.mxu0 0
        %2752 = vmatpush1.bf16.xpose.msra.mxu0 0
        %2753 = vmatprep.subr.bf16.mxu0 0
        %2754 = vmatpush1.bf16.xpose.msra.mxu0 0
        %2755 = vmatprep.subr.bf16.mxu0 0
        %2756 = vmatpush1.bf16.xpose.msra.mxu0 0
        %2757 = vmatprep.subr.bf16.mxu0 0
        %2758 = vmatpush1.bf16.xpose.msra.mxu0 0
        %2759 = vmatprep.subr.bf16.mxu0 0
        %2760 = vmatpush1.bf16.xpose.msra.mxu0 0
        %2761 = vmatprep.subr.bf16.mxu0 0
        %2762 = vmatpush1.bf16.xpose.msra.mxu0 0
        %2763 = vmatprep.mubr.bf16.mxu0 0
        %2764 = vmatmul.mubr.bf16.gmra.mrb[0].mxu0 %v2684
        %v2765 = vpop.f32.mrb[0].mxu0
        %v2766 = vadd.f32 0.0, %v2765
        %v2767 = vpop.f32.mrb[0].mxu0
        %v2768 = vpop.f32.mrb[0].mxu0
        %v2769 = vadd.f32 0.0, %v2768
        %v2770 = vpop.f32.mrb[0].mxu0
        %2771 = vmatprep.mubr.bf16.mxu0 0
        %2772 = vmatmul.mubr.bf16.gmra.mrb[0].mxu0 %v2687
        %v2773 = vpop.f32.mrb[0].mxu0
        %v2774 = vadd.f32 0.0, %v2773
        %v2775 = vpop.f32.mrb[0].mxu0
        %v2776 = vpop.f32.mrb[0].mxu0
        %v2777 = vadd.f32 0.0, %v2776
        %v2778 = vpop.f32.mrb[0].mxu0
        %2779 = vmatprep.mubr.bf16.mxu0 0
        %2780 = vmatmul.mubr.bf16.gmra.mrb[0].mxu0 %v2690
        %v2781 = vpop.f32.mrb[0].mxu0
        %v2782 = vadd.f32 0.0, %v2781
        %v2783 = vpop.f32.mrb[0].mxu0
        %v2784 = vpop.f32.mrb[0].mxu0
        %v2785 = vadd.f32 0.0, %v2784
        %v2786 = vpop.f32.mrb[0].mxu0
        %2787 = vmatprep.mubr.bf16.mxu0 0
        %2788 = vmatmul.mubr.bf16.gmra.mrb[0].mxu0 %v2693
        %v2789 = vpop.f32.mrb[0].mxu0
        %v2790 = vadd.f32 0.0, %v2789
        %v2791 = vpop.f32.mrb[0].mxu0
        %v2792 = vpop.f32.mrb[0].mxu0
        %v2793 = vadd.f32 0.0, %v2792
        %v2794 = vpop.f32.mrb[0].mxu0
        %2795 = vmatprep.mubr.bf16.mxu0 0
        %2796 = vmatmul.mubr.bf16.gmra.mrb[0].mxu0 %v2696
        %v2797 = vpop.f32.mrb[0].mxu0
        %v2798 = vadd.f32 0.0, %v2797
        %v2799 = vpop.f32.mrb[0].mxu0
        %v2800 = vpop.f32.mrb[0].mxu0
        %v2801 = vadd.f32 0.0, %v2800
        %v2802 = vpop.f32.mrb[0].mxu0
        %2803 = vmatprep.mubr.bf16.mxu0 0
        %2804 = vmatmul.mubr.bf16.gmra.mrb[0].mxu0 %v2699
        %v2805 = vpop.f32.mrb[0].mxu0
        %v2806 = vadd.f32 0.0, %v2805
        %v2807 = vpop.f32.mrb[0].mxu0
        %v2808 = vpop.f32.mrb[0].mxu0
        %v2809 = vadd.f32 0.0, %v2808
        %v2810 = vpop.f32.mrb[0].mxu0
        %2811 = vmatprep.mubr.bf16.mxu0 0
        %2812 = vmatmul.mubr.bf16.gmra.mrb[0].mxu0 %v2702
        %v2813 = vpop.f32.mrb[0].mxu0
        %v2814 = vadd.f32 0.0, %v2813
        %v2815 = vpop.f32.mrb[0].mxu0
        %v2816 = vpop.f32.mrb[0].mxu0
        %v2817 = vadd.f32 0.0, %v2816
        %v2818 = vpop.f32.mrb[0].mxu0
        %2819 = vmatprep.mubr.bf16.mxu0 0
        %2820 = vmatmul.mubr.bf16.gmra.mrb[0].mxu0 %v2705
        %v2821 = vpop.f32.mrb[0].mxu0
        %v2822 = vadd.f32 0.0, %v2821
        %v2823 = vpop.f32.mrb[0].mxu0
        %v2824 = vpop.f32.mrb[0].mxu0
        %v2825 = vadd.f32 0.0, %v2824
        %v2826 = vpop.f32.mrb[0].mxu0
        %2827 = vdwg.mxu0
        %v2844 = vunpack.c.l.b16 %v2522
        %v2845 = vunpack.c.l.b16 %v2523
        %v2846 = vunpack.c.l.b16 %v2524
        %v2847 = vunpack.c.l.b16 %v2525
        %v2848 = vunpack.c.l.b16 %v2526
        %v2849 = vunpack.c.l.b16 %v2527
        %v2850 = vunpack.c.l.b16 %v2528
        %v2851 = vunpack.c.l.b16 %v2529
        %v2852 = vunpack.c.l.b16 %v2530
        %v2853 = vunpack.c.l.b16 %v2531
        %v2854 = vunpack.c.l.b16 %v2532
        %v2855 = vunpack.c.l.b16 %v2533
        %v2856 = vunpack.c.l.b16 %v2534
        %v2857 = vunpack.c.l.b16 %v2535
        %v2858 = vunpack.c.l.b16 %v2536
        %v2859 = vunpack.c.l.b16 %v2537
        %v2860 = vpack.c.b16 %v2845, %v2844
        %v2861 = vpack.c.b16 %v2847, %v2846
        %v2862 = vpack.c.b16 %v2849, %v2848
        %v2863 = vpack.c.b16 %v2851, %v2850
        %v2864 = vpack.c.b16 %v2853, %v2852
        %v2865 = vpack.c.b16 %v2855, %v2854
        %v2866 = vpack.c.b16 %v2857, %v2856
        %v2867 = vpack.c.b16 %v2859, %v2858
        %v2884 = vunpack.c.l.b16 %v2554
        %v2885 = vunpack.c.l.b16 %v2555
        %v2886 = vunpack.c.l.b16 %v2556
        %v2887 = vunpack.c.l.b16 %v2557
        %v2888 = vunpack.c.l.b16 %v2558
        %v2889 = vunpack.c.l.b16 %v2559
        %v2890 = vunpack.c.l.b16 %v2560
        %v2891 = vunpack.c.l.b16 %v2561
        %v2892 = vunpack.c.l.b16 %v2562
        %v2893 = vunpack.c.l.b16 %v2563
        %v2894 = vunpack.c.l.b16 %v2564
        %v2895 = vunpack.c.l.b16 %v2565
        %v2896 = vunpack.c.l.b16 %v2566
        %v2897 = vunpack.c.l.b16 %v2567
        %v2898 = vunpack.c.l.b16 %v2568
        %v2899 = vunpack.c.l.b16 %v2569
        %v2900 = vpack.c.b16 %v2885, %v2884
        %v2901 = vpack.c.b16 %v2887, %v2886
        %v2902 = vpack.c.b16 %v2889, %v2888
        %v2903 = vpack.c.b16 %v2891, %v2890
        %v2904 = vpack.c.b16 %v2893, %v2892
        %v2905 = vpack.c.b16 %v2895, %v2894
        %v2906 = vpack.c.b16 %v2897, %v2896
        %v2907 = vpack.c.b16 %v2899, %v2898
        %v2909 = vsel %vm2682, %v2860, 0
        %v2912 = vsel %vm2682, %v2861, 0
        %v2915 = vsel %vm2682, %v2862, 0
        %v2918 = vsel %vm2682, %v2863, 0
        %v2921 = vsel %vm2682, %v2864, 0
        %v2924 = vsel %vm2682, %v2865, 0
        %v2927 = vsel %vm2682, %v2866, 0
        %v2930 = vsel %vm2682, %v2867, 0
        %v2933 = vsel %vm2682, %v2900, 0
        %v2936 = vsel %vm2682, %v2901, 0
        %v2939 = vsel %vm2682, %v2902, 0
        %v2942 = vsel %vm2682, %v2903, 0
        %v2945 = vsel %vm2682, %v2904, 0
        %v2948 = vsel %vm2682, %v2905, 0
        %v2951 = vsel %vm2682, %v2906, 0
        %v2954 = vsel %vm2682, %v2907, 0
        %2956 = vmatprep.subr.bf16.mxu0 0
        %2957 = vmatpush1.bf16.xpose.msra.mxu0 %v2933
        %2958 = vmatprep.subr.bf16.mxu0 0
        %2959 = vmatpush1.bf16.xpose.msra.mxu0 %v2936
        %2960 = vmatprep.subr.bf16.mxu0 0
        %2961 = vmatpush1.bf16.xpose.msra.mxu0 %v2939
        %2962 = vmatprep.subr.bf16.mxu0 0
        %2963 = vmatpush1.bf16.xpose.msra.mxu0 %v2942
        %2964 = vmatprep.subr.bf16.mxu0 0
        %2965 = vmatpush1.bf16.xpose.msra.mxu0 %v2945
        %2966 = vmatprep.subr.bf16.mxu0 0
        %2967 = vmatpush1.bf16.xpose.msra.mxu0 %v2948
        %2968 = vmatprep.subr.bf16.mxu0 0
        %2969 = vmatpush1.bf16.xpose.msra.mxu0 %v2951
        %2970 = vmatprep.subr.bf16.mxu0 0
        %2971 = vmatpush1.bf16.xpose.msra.mxu0 %v2954
        %2972 = vmatprep.subr.bf16.mxu0 0
        %2973 = vmatpush1.bf16.xpose.msra.mxu0 0
        %2974 = vmatprep.subr.bf16.mxu0 0
        %2975 = vmatpush1.bf16.xpose.msra.mxu0 0
        %2976 = vmatprep.subr.bf16.mxu0 0
        %2977 = vmatpush1.bf16.xpose.msra.mxu0 0
        %2978 = vmatprep.subr.bf16.mxu0 0
        %2979 = vmatpush1.bf16.xpose.msra.mxu0 0
        %2980 = vmatprep.subr.bf16.mxu0 0
        %2981 = vmatpush1.bf16.xpose.msra.mxu0 0
        %2982 = vmatprep.subr.bf16.mxu0 0
        %2983 = vmatpush1.bf16.xpose.msra.mxu0 0
        %2984 = vmatprep.subr.bf16.mxu0 0
        %2985 = vmatpush1.bf16.xpose.msra.mxu0 0
        %2986 = vmatprep.subr.bf16.mxu0 0
        %2987 = vmatpush1.bf16.xpose.msra.mxu0 0
        %2988 = vmatprep.mubr.bf16.mxu0 0
        %2989 = vmatmul.mubr.bf16.gmra.mrb[0].mxu0 %v2909
        %v2990 = vpop.f32.mrb[0].mxu0
        %v2991 = vadd.f32 0.0, %v2990
        %v2992 = vpop.f32.mrb[0].mxu0
        %v2993 = vpop.f32.mrb[0].mxu0
        %v2994 = vadd.f32 0.0, %v2993
        %v2995 = vpop.f32.mrb[0].mxu0
        %2996 = vmatprep.mubr.bf16.mxu0 0
        %2997 = vmatmul.mubr.bf16.gmra.mrb[0].mxu0 %v2912
        %v2998 = vpop.f32.mrb[0].mxu0
        %v2999 = vadd.f32 0.0, %v2998
        %v3000 = vpop.f32.mrb[0].mxu0
        %v3001 = vpop.f32.mrb[0].mxu0
        %v3002 = vadd.f32 0.0, %v3001
        %v3003 = vpop.f32.mrb[0].mxu0
        %3004 = vmatprep.mubr.bf16.mxu0 0
        %3005 = vmatmul.mubr.bf16.gmra.mrb[0].mxu0 %v2915
        %v3006 = vpop.f32.mrb[0].mxu0
        %v3007 = vadd.f32 0.0, %v3006
        %v3008 = vpop.f32.mrb[0].mxu0
        %v3009 = vpop.f32.mrb[0].mxu0
        %v3010 = vadd.f32 0.0, %v3009
        %v3011 = vpop.f32.mrb[0].mxu0
        %3012 = vmatprep.mubr.bf16.mxu0 0
        %3013 = vmatmul.mubr.bf16.gmra.mrb[0].mxu0 %v2918
        %v3014 = vpop.f32.mrb[0].mxu0
        %v3015 = vadd.f32 0.0, %v3014
        %v3016 = vpop.f32.mrb[0].mxu0
        %v3017 = vpop.f32.mrb[0].mxu0
        %v3018 = vadd.f32 0.0, %v3017
        %v3019 = vpop.f32.mrb[0].mxu0
        %3020 = vmatprep.mubr.bf16.mxu0 0
        %3021 = vmatmul.mubr.bf16.gmra.mrb[0].mxu0 %v2921
        %v3022 = vpop.f32.mrb[0].mxu0
        %v3023 = vadd.f32 0.0, %v3022
        %v3024 = vpop.f32.mrb[0].mxu0
        %v3025 = vpop.f32.mrb[0].mxu0
        %v3026 = vadd.f32 0.0, %v3025
        %v3027 = vpop.f32.mrb[0].mxu0
        %3028 = vmatprep.mubr.bf16.mxu0 0
        %3029 = vmatmul.mubr.bf16.gmra.mrb[0].mxu0 %v2924
        %v3030 = vpop.f32.mrb[0].mxu0
        %v3031 = vadd.f32 0.0, %v3030
        %v3032 = vpop.f32.mrb[0].mxu0
        %v3033 = vpop.f32.mrb[0].mxu0
        %v3034 = vadd.f32 0.0, %v3033
        %v3035 = vpop.f32.mrb[0].mxu0
        %3036 = vmatprep.mubr.bf16.mxu0 0
        %3037 = vmatmul.mubr.bf16.gmra.mrb[0].mxu0 %v2927
        %v3038 = vpop.f32.mrb[0].mxu0
        %v3039 = vadd.f32 0.0, %v3038
        %v3040 = vpop.f32.mrb[0].mxu0
        %v3041 = vpop.f32.mrb[0].mxu0
        %v3042 = vadd.f32 0.0, %v3041
        %v3043 = vpop.f32.mrb[0].mxu0
        %3044 = vmatprep.mubr.bf16.mxu0 0
        %3045 = vmatmul.mubr.bf16.gmra.mrb[0].mxu0 %v2930
        %v3046 = vpop.f32.mrb[0].mxu0
        %v3047 = vadd.f32 0.0, %v3046
        %v3048 = vpop.f32.mrb[0].mxu0
        %v3049 = vpop.f32.mrb[0].mxu0
        %v3050 = vadd.f32 0.0, %v3049
        %v3051 = vpop.f32.mrb[0].mxu0
        %3052 = vdwg.mxu0
        %v3053 = vld [vmem:[#allocation2] sm:$0xff]
        %v3054 = vld [vmem:[#allocation2 + $0x8] sm:$0xff]
        %v3055 = vld [vmem:[#allocation2 + $0x10] sm:$0xff]
        %v3056 = vld [vmem:[#allocation2 + $0x18] sm:$0xff]
        %v3057 = vld [vmem:[#allocation2 + $0x20] sm:$0xff]
        %v3058 = vld [vmem:[#allocation2 + $0x28] sm:$0xff]
        %v3059 = vld [vmem:[#allocation2 + $0x30] sm:$0xff]
        %v3060 = vld [vmem:[#allocation2 + $0x38] sm:$0xff]
        %v3061 = vld [vmem:[#allocation2 + $0x40] sm:$0xff]
        %v3062 = vld [vmem:[#allocation2 + $0x48] sm:$0xff]
        %v3063 = vld [vmem:[#allocation2 + $0x50] sm:$0xff]
        %v3064 = vld [vmem:[#allocation2 + $0x58] sm:$0xff]
        %v3065 = vld [vmem:[#allocation2 + $0x60] sm:$0xff]
        %v3066 = vld [vmem:[#allocation2 + $0x68] sm:$0xff]
        %v3067 = vld [vmem:[#allocation2 + $0x70] sm:$0xff]
        %v3068 = vld [vmem:[#allocation2 + $0x78] sm:$0xff]
        %v3069 = vld [vmem:[#allocation2 + $0x80] sm:$0xff]
        %v3070 = vld [vmem:[#allocation2 + $0x88] sm:$0xff]
        %v3071 = vld [vmem:[#allocation2 + $0x90] sm:$0xff]
        %v3072 = vld [vmem:[#allocation2 + $0x98] sm:$0xff]
        %v3073 = vld [vmem:[#allocation2 + $0xa0] sm:$0xff]
        %v3074 = vld [vmem:[#allocation2 + $0xa8] sm:$0xff]
        %v3075 = vld [vmem:[#allocation2 + $0xb0] sm:$0xff]
        %v3076 = vld [vmem:[#allocation2 + $0xb8] sm:$0xff]
        %v3077 = vld [vmem:[#allocation2 + $0xc0] sm:$0xff]
        %v3078 = vld [vmem:[#allocation2 + $0xc8] sm:$0xff]
        %v3079 = vld [vmem:[#allocation2 + $0xd0] sm:$0xff]
        %v3080 = vld [vmem:[#allocation2 + $0xd8] sm:$0xff]
        %v3081 = vld [vmem:[#allocation2 + $0xe0] sm:$0xff]
        %v3082 = vld [vmem:[#allocation2 + $0xe8] sm:$0xff]
        %v3083 = vld [vmem:[#allocation2 + $0xf0] sm:$0xff]
        %v3084 = vld [vmem:[#allocation2 + $0xf8] sm:$0xff]
        %3085 = vmax.xlane.f32.xlu0 %v2766
        %v3086 = vpop.xlane.xlu0 %3085
        %3087 = vmax.xlane.f32.xlu0 %v2769
        %v3088 = vpop.xlane.xlu0 %3087
        %3089 = vmax.xlane.f32.xlu0 %v2774
        %v3090 = vpop.xlane.xlu0 %3089
        %3091 = vmax.xlane.f32.xlu0 %v2777
        %v3092 = vpop.xlane.xlu0 %3091
        %3093 = vmax.xlane.f32.xlu0 %v2782
        %v3094 = vpop.xlane.xlu0 %3093
        %3095 = vmax.xlane.f32.xlu0 %v2785
        %v3096 = vpop.xlane.xlu0 %3095
        %3097 = vmax.xlane.f32.xlu0 %v2790
        %v3098 = vpop.xlane.xlu0 %3097
        %3099 = vmax.xlane.f32.xlu0 %v2793
        %v3100 = vpop.xlane.xlu0 %3099
        %3101 = vmax.xlane.f32.xlu0 %v2798
        %v3102 = vpop.xlane.xlu0 %3101
        %3103 = vmax.xlane.f32.xlu0 %v2801
        %v3104 = vpop.xlane.xlu0 %3103
        %3105 = vmax.xlane.f32.xlu0 %v2806
        %v3106 = vpop.xlane.xlu0 %3105
        %3107 = vmax.xlane.f32.xlu0 %v2809
        %v3108 = vpop.xlane.xlu0 %3107
        %3109 = vmax.xlane.f32.xlu0 %v2814
        %v3110 = vpop.xlane.xlu0 %3109
        %3111 = vmax.xlane.f32.xlu0 %v2817
        %v3112 = vpop.xlane.xlu0 %3111
        %3113 = vmax.xlane.f32.xlu0 %v2822
        %v3114 = vpop.xlane.xlu0 %3113
        %3115 = vmax.xlane.f32.xlu0 %v2825
        %v3116 = vpop.xlane.xlu0 %3115
        %3117 = vmax.xlane.f32.xlu0 %v2991
        %v3118 = vpop.xlane.xlu0 %3117
        %3119 = vmax.xlane.f32.xlu0 %v2994
        %v3120 = vpop.xlane.xlu0 %3119
        %3121 = vmax.xlane.f32.xlu0 %v2999
        %v3122 = vpop.xlane.xlu0 %3121
        %3123 = vmax.xlane.f32.xlu0 %v3002
        %v3124 = vpop.xlane.xlu0 %3123
        %3125 = vmax.xlane.f32.xlu0 %v3007
        %v3126 = vpop.xlane.xlu0 %3125
        %3127 = vmax.xlane.f32.xlu0 %v3010
        %v3128 = vpop.xlane.xlu0 %3127
        %3129 = vmax.xlane.f32.xlu0 %v3015
        %v3130 = vpop.xlane.xlu0 %3129
        %3131 = vmax.xlane.f32.xlu0 %v3018
        %v3132 = vpop.xlane.xlu0 %3131
        %3133 = vmax.xlane.f32.xlu0 %v3023
        %v3134 = vpop.xlane.xlu0 %3133
        %3135 = vmax.xlane.f32.xlu0 %v3026
        %v3136 = vpop.xlane.xlu0 %3135
        %3137 = vmax.xlane.f32.xlu0 %v3031
        %v3138 = vpop.xlane.xlu0 %3137
        %3139 = vmax.xlane.f32.xlu0 %v3034
        %v3140 = vpop.xlane.xlu0 %3139
        %3141 = vmax.xlane.f32.xlu0 %v3039
        %v3142 = vpop.xlane.xlu0 %3141
        %3143 = vmax.xlane.f32.xlu0 %v3042
        %v3144 = vpop.xlane.xlu0 %3143
        %3145 = vmax.xlane.f32.xlu0 %v3047
        %v3146 = vpop.xlane.xlu0 %3145
        %3147 = vmax.xlane.f32.xlu0 %v3050
        %v3148 = vpop.xlane.xlu0 %3147
        %v3149 = vmax.f32 %v3053, %v3086
        %v3150 = vmax.f32 %v3054, %v3088
        %v3151 = vmax.f32 %v3055, %v3090
        %v3152 = vmax.f32 %v3056, %v3092
        %v3153 = vmax.f32 %v3057, %v3094
        %v3154 = vmax.f32 %v3058, %v3096
        %v3155 = vmax.f32 %v3059, %v3098
        %v3156 = vmax.f32 %v3060, %v3100
        %v3157 = vmax.f32 %v3061, %v3102
        %v3158 = vmax.f32 %v3062, %v3104
        %v3159 = vmax.f32 %v3063, %v3106
        %v3160 = vmax.f32 %v3064, %v3108
        %v3161 = vmax.f32 %v3065, %v3110
        %v3162 = vmax.f32 %v3066, %v3112
        %v3163 = vmax.f32 %v3067, %v3114
        %v3164 = vmax.f32 %v3068, %v3116
        %v3165 = vmax.f32 %v3069, %v3118
        %v3166 = vmax.f32 %v3070, %v3120
        %v3167 = vmax.f32 %v3071, %v3122
        %v3168 = vmax.f32 %v3072, %v3124
        %v3169 = vmax.f32 %v3073, %v3126
        %v3170 = vmax.f32 %v3074, %v3128
        %v3171 = vmax.f32 %v3075, %v3130
        %v3172 = vmax.f32 %v3076, %v3132
        %v3173 = vmax.f32 %v3077, %v3134
        %v3174 = vmax.f32 %v3078, %v3136
        %v3175 = vmax.f32 %v3079, %v3138
        %v3176 = vmax.f32 %v3080, %v3140
        %v3177 = vmax.f32 %v3081, %v3142
        %v3178 = vmax.f32 %v3082, %v3144
        %v3179 = vmax.f32 %v3083, %v3146
        %v3180 = vmax.f32 %v3084, %v3148
        %v3181 = vsub.f32 %v3053, %v3149
        %v3182 = vsub.f32 %v3054, %v3150
        %v3183 = vsub.f32 %v3055, %v3151
        %v3184 = vsub.f32 %v3056, %v3152
        %v3185 = vsub.f32 %v3057, %v3153
        %v3186 = vsub.f32 %v3058, %v3154
        %v3187 = vsub.f32 %v3059, %v3155
        %v3188 = vsub.f32 %v3060, %v3156
        %v3189 = vsub.f32 %v3061, %v3157
        %v3190 = vsub.f32 %v3062, %v3158
        %v3191 = vsub.f32 %v3063, %v3159
        %v3192 = vsub.f32 %v3064, %v3160
        %v3193 = vsub.f32 %v3065, %v3161
        %v3194 = vsub.f32 %v3066, %v3162
        %v3195 = vsub.f32 %v3067, %v3163
        %v3196 = vsub.f32 %v3068, %v3164
        %v3197 = vsub.f32 %v3069, %v3165
        %v3198 = vsub.f32 %v3070, %v3166
        %v3199 = vsub.f32 %v3071, %v3167
        %v3200 = vsub.f32 %v3072, %v3168
        %v3201 = vsub.f32 %v3073, %v3169
        %v3202 = vsub.f32 %v3074, %v3170
        %v3203 = vsub.f32 %v3075, %v3171
        %v3204 = vsub.f32 %v3076, %v3172
        %v3205 = vsub.f32 %v3077, %v3173
        %v3206 = vsub.f32 %v3078, %v3174
        %v3207 = vsub.f32 %v3079, %v3175
        %v3208 = vsub.f32 %v3080, %v3176
        %v3209 = vsub.f32 %v3081, %v3177
        %v3210 = vsub.f32 %v3082, %v3178
        %v3211 = vsub.f32 %v3083, %v3179
        %v3212 = vsub.f32 %v3084, %v3180
        %v3213 = vmul.f32 %v3181, 1.442695
        %v3214 = vpow.pop %v3213
        %v3215 = vmul.f32 %v3182, 1.442695
        %v3216 = vpow.pop %v3215
        %v3217 = vmul.f32 %v3183, 1.442695
        %v3218 = vpow.pop %v3217
        %v3219 = vmul.f32 %v3184, 1.442695
        %v3220 = vpow.pop %v3219
        %v3221 = vmul.f32 %v3185, 1.442695
        %v3222 = vpow.pop %v3221
        %v3223 = vmul.f32 %v3186, 1.442695
        %v3224 = vpow.pop %v3223
        %v3225 = vmul.f32 %v3187, 1.442695
        %v3226 = vpow.pop %v3225
        %v3227 = vmul.f32 %v3188, 1.442695
        %v3228 = vpow.pop %v3227
        %v3229 = vmul.f32 %v3189, 1.442695
        %v3230 = vpow.pop %v3229
        %v3231 = vmul.f32 %v3190, 1.442695
        %v3232 = vpow.pop %v3231
        %v3233 = vmul.f32 %v3191, 1.442695
        %v3234 = vpow.pop %v3233
        %v3235 = vmul.f32 %v3192, 1.442695
        %v3236 = vpow.pop %v3235
        %v3237 = vmul.f32 %v3193, 1.442695
        %v3238 = vpow.pop %v3237
        %v3239 = vmul.f32 %v3194, 1.442695
        %v3240 = vpow.pop %v3239
        %v3241 = vmul.f32 %v3195, 1.442695
        %v3242 = vpow.pop %v3241
        %v3243 = vmul.f32 %v3196, 1.442695
        %v3244 = vpow.pop %v3243
        %v3245 = vmul.f32 %v3197, 1.442695
        %v3246 = vpow.pop %v3245
        %v3247 = vmul.f32 %v3198, 1.442695
        %v3248 = vpow.pop %v3247
        %v3249 = vmul.f32 %v3199, 1.442695
        %v3250 = vpow.pop %v3249
        %v3251 = vmul.f32 %v3200, 1.442695
        %v3252 = vpow.pop %v3251
        %v3253 = vmul.f32 %v3201, 1.442695
        %v3254 = vpow.pop %v3253
        %v3255 = vmul.f32 %v3202, 1.442695
        %v3256 = vpow.pop %v3255
        %v3257 = vmul.f32 %v3203, 1.442695
        %v3258 = vpow.pop %v3257
        %v3259 = vmul.f32 %v3204, 1.442695
        %v3260 = vpow.pop %v3259
        %v3261 = vmul.f32 %v3205, 1.442695
        %v3262 = vpow.pop %v3261
        %v3263 = vmul.f32 %v3206, 1.442695
        %v3264 = vpow.pop %v3263
        %v3265 = vmul.f32 %v3207, 1.442695
        %v3266 = vpow.pop %v3265
        %v3267 = vmul.f32 %v3208, 1.442695
        %v3268 = vpow.pop %v3267
        %v3269 = vmul.f32 %v3209, 1.442695
        %v3270 = vpow.pop %v3269
        %v3271 = vmul.f32 %v3210, 1.442695
        %v3272 = vpow.pop %v3271
        %v3273 = vmul.f32 %v3211, 1.442695
        %v3274 = vpow.pop %v3273
        %v3275 = vmul.f32 %v3212, 1.442695
        %v3276 = vpow.pop %v3275
        %3278 = vset.pattern.permute.xlu0 0
        %3279 = vperm.xlu0 %3278, %v3149
        %v3280 = vpop.permute.xlu0 %3279
        %3283 = vset.pattern.permute.xlu0 0
        %3284 = vperm.xlu0 %3283, %v3150
        %v3285 = vpop.permute.xlu0 %3284
        %3288 = vset.pattern.permute.xlu0 0
        %3289 = vperm.xlu0 %3288, %v3151
        %v3290 = vpop.permute.xlu0 %3289
        %3293 = vset.pattern.permute.xlu0 0
        %3294 = vperm.xlu0 %3293, %v3152
        %v3295 = vpop.permute.xlu0 %3294
        %3298 = vset.pattern.permute.xlu0 0
        %3299 = vperm.xlu0 %3298, %v3153
        %v3300 = vpop.permute.xlu0 %3299
        %3303 = vset.pattern.permute.xlu0 0
        %3304 = vperm.xlu0 %3303, %v3154
        %v3305 = vpop.permute.xlu0 %3304
        %3308 = vset.pattern.permute.xlu0 0
        %3309 = vperm.xlu0 %3308, %v3155
        %v3310 = vpop.permute.xlu0 %3309
        %3313 = vset.pattern.permute.xlu0 0
        %3314 = vperm.xlu0 %3313, %v3156
        %v3315 = vpop.permute.xlu0 %3314
        %3318 = vset.pattern.permute.xlu0 0
        %3319 = vperm.xlu0 %3318, %v3157
        %v3320 = vpop.permute.xlu0 %3319
        %3323 = vset.pattern.permute.xlu0 0
        %3324 = vperm.xlu0 %3323, %v3158
        %v3325 = vpop.permute.xlu0 %3324
        %3328 = vset.pattern.permute.xlu0 0
        %3329 = vperm.xlu0 %3328, %v3159
        %v3330 = vpop.permute.xlu0 %3329
        %3333 = vset.pattern.permute.xlu0 0
        %3334 = vperm.xlu0 %3333, %v3160
        %v3335 = vpop.permute.xlu0 %3334
        %3338 = vset.pattern.permute.xlu0 0
        %3339 = vperm.xlu0 %3338, %v3161
        %v3340 = vpop.permute.xlu0 %3339
        %3343 = vset.pattern.permute.xlu0 0
        %3344 = vperm.xlu0 %3343, %v3162
        %v3345 = vpop.permute.xlu0 %3344
        %3348 = vset.pattern.permute.xlu0 0
        %3349 = vperm.xlu0 %3348, %v3163
        %v3350 = vpop.permute.xlu0 %3349
        %3353 = vset.pattern.permute.xlu0 0
        %3354 = vperm.xlu0 %3353, %v3164
        %v3355 = vpop.permute.xlu0 %3354
        %3358 = vset.pattern.permute.xlu0 0
        %3359 = vperm.xlu0 %3358, %v3165
        %v3360 = vpop.permute.xlu0 %3359
        %3363 = vset.pattern.permute.xlu0 0
        %3364 = vperm.xlu0 %3363, %v3166
        %v3365 = vpop.permute.xlu0 %3364
        %3368 = vset.pattern.permute.xlu0 0
        %3369 = vperm.xlu0 %3368, %v3167
        %v3370 = vpop.permute.xlu0 %3369
        %3373 = vset.pattern.permute.xlu0 0
        %3374 = vperm.xlu0 %3373, %v3168
        %v3375 = vpop.permute.xlu0 %3374
        %3378 = vset.pattern.permute.xlu0 0
        %3379 = vperm.xlu0 %3378, %v3169
        %v3380 = vpop.permute.xlu0 %3379
        %3383 = vset.pattern.permute.xlu0 0
        %3384 = vperm.xlu0 %3383, %v3170
        %v3385 = vpop.permute.xlu0 %3384
        %3388 = vset.pattern.permute.xlu0 0
        %3389 = vperm.xlu0 %3388, %v3171
        %v3390 = vpop.permute.xlu0 %3389
        %3393 = vset.pattern.permute.xlu0 0
        %3394 = vperm.xlu0 %3393, %v3172
        %v3395 = vpop.permute.xlu0 %3394
        %3398 = vset.pattern.permute.xlu0 0
        %3399 = vperm.xlu0 %3398, %v3173
        %v3400 = vpop.permute.xlu0 %3399
        %3403 = vset.pattern.permute.xlu0 0
        %3404 = vperm.xlu0 %3403, %v3174
        %v3405 = vpop.permute.xlu0 %3404
        %3408 = vset.pattern.permute.xlu0 0
        %3409 = vperm.xlu0 %3408, %v3175
        %v3410 = vpop.permute.xlu0 %3409
        %3413 = vset.pattern.permute.xlu0 0
        %3414 = vperm.xlu0 %3413, %v3176
        %v3415 = vpop.permute.xlu0 %3414
        %3418 = vset.pattern.permute.xlu0 0
        %3419 = vperm.xlu0 %3418, %v3177
        %v3420 = vpop.permute.xlu0 %3419
        %3423 = vset.pattern.permute.xlu0 0
        %3424 = vperm.xlu0 %3423, %v3178
        %v3425 = vpop.permute.xlu0 %3424
        %3428 = vset.pattern.permute.xlu0 0
        %3429 = vperm.xlu0 %3428, %v3179
        %v3430 = vpop.permute.xlu0 %3429
        %3433 = vset.pattern.permute.xlu0 0
        %3434 = vperm.xlu0 %3433, %v3180
        %v3435 = vpop.permute.xlu0 %3434
        %v3437 = vsub.f32 %v2766, %v3280
        %v3438 = vsub.f32 %v2769, %v3285
        %v3439 = vsub.f32 %v2774, %v3290
        %v3440 = vsub.f32 %v2777, %v3295
        %v3441 = vsub.f32 %v2782, %v3300
        %v3442 = vsub.f32 %v2785, %v3305
        %v3443 = vsub.f32 %v2790, %v3310
        %v3444 = vsub.f32 %v2793, %v3315
        %v3445 = vsub.f32 %v2798, %v3320
        %v3446 = vsub.f32 %v2801, %v3325
        %v3447 = vsub.f32 %v2806, %v3330
        %v3448 = vsub.f32 %v2809, %v3335
        %v3449 = vsub.f32 %v2814, %v3340
        %v3450 = vsub.f32 %v2817, %v3345
        %v3451 = vsub.f32 %v2822, %v3350
        %v3452 = vsub.f32 %v2825, %v3355
        %v3453 = vsub.f32 %v2991, %v3360
        %v3454 = vsub.f32 %v2994, %v3365
        %v3455 = vsub.f32 %v2999, %v3370
        %v3456 = vsub.f32 %v3002, %v3375
        %v3457 = vsub.f32 %v3007, %v3380
        %v3458 = vsub.f32 %v3010, %v3385
        %v3459 = vsub.f32 %v3015, %v3390
        %v3460 = vsub.f32 %v3018, %v3395
        %v3461 = vsub.f32 %v3023, %v3400
        %v3462 = vsub.f32 %v3026, %v3405
        %v3463 = vsub.f32 %v3031, %v3410
        %v3464 = vsub.f32 %v3034, %v3415
        %v3465 = vsub.f32 %v3039, %v3420
        %v3466 = vsub.f32 %v3042, %v3425
        %v3467 = vsub.f32 %v3047, %v3430
        %v3468 = vsub.f32 %v3050, %v3435
        %v3469 = vmul.f32 %v3437, 1.442695
        %v3470 = vpow.pop %v3469
        %v3471 = vmul.f32 %v3438, 1.442695
        %v3472 = vpow.pop %v3471
        %v3473 = vmul.f32 %v3439, 1.442695
        %v3474 = vpow.pop %v3473
        %v3475 = vmul.f32 %v3440, 1.442695
        %v3476 = vpow.pop %v3475
        %v3477 = vmul.f32 %v3441, 1.442695
        %v3478 = vpow.pop %v3477
        %v3479 = vmul.f32 %v3442, 1.442695
        %v3480 = vpow.pop %v3479
        %v3481 = vmul.f32 %v3443, 1.442695
        %v3482 = vpow.pop %v3481
        %v3483 = vmul.f32 %v3444, 1.442695
        %v3484 = vpow.pop %v3483
        %v3485 = vmul.f32 %v3445, 1.442695
        %v3486 = vpow.pop %v3485
        %v3487 = vmul.f32 %v3446, 1.442695
        %v3488 = vpow.pop %v3487
        %v3489 = vmul.f32 %v3447, 1.442695
        %v3490 = vpow.pop %v3489
        %v3491 = vmul.f32 %v3448, 1.442695
        %v3492 = vpow.pop %v3491
        %v3493 = vmul.f32 %v3449, 1.442695
        %v3494 = vpow.pop %v3493
        %v3495 = vmul.f32 %v3450, 1.442695
        %v3496 = vpow.pop %v3495
        %v3497 = vmul.f32 %v3451, 1.442695
        %v3498 = vpow.pop %v3497
        %v3499 = vmul.f32 %v3452, 1.442695
        %v3500 = vpow.pop %v3499
        %v3501 = vmul.f32 %v3453, 1.442695
        %v3502 = vpow.pop %v3501
        %v3503 = vmul.f32 %v3454, 1.442695
        %v3504 = vpow.pop %v3503
        %v3505 = vmul.f32 %v3455, 1.442695
        %v3506 = vpow.pop %v3505
        %v3507 = vmul.f32 %v3456, 1.442695
        %v3508 = vpow.pop %v3507
        %v3509 = vmul.f32 %v3457, 1.442695
        %v3510 = vpow.pop %v3509
        %v3511 = vmul.f32 %v3458, 1.442695
        %v3512 = vpow.pop %v3511
        %v3513 = vmul.f32 %v3459, 1.442695
        %v3514 = vpow.pop %v3513
        %v3515 = vmul.f32 %v3460, 1.442695
        %v3516 = vpow.pop %v3515
        %v3517 = vmul.f32 %v3461, 1.442695
        %v3518 = vpow.pop %v3517
        %v3519 = vmul.f32 %v3462, 1.442695
        %v3520 = vpow.pop %v3519
        %v3521 = vmul.f32 %v3463, 1.442695
        %v3522 = vpow.pop %v3521
        %v3523 = vmul.f32 %v3464, 1.442695
        %v3524 = vpow.pop %v3523
        %v3525 = vmul.f32 %v3465, 1.442695
        %v3526 = vpow.pop %v3525
        %v3527 = vmul.f32 %v3466, 1.442695
        %v3528 = vpow.pop %v3527
        %v3529 = vmul.f32 %v3467, 1.442695
        %v3530 = vpow.pop %v3529
        %v3531 = vmul.f32 %v3468, 1.442695
        %v3532 = vpow.pop %v3531
        %v3533 = vld [vmem:[#allocation3] sm:$0xff]
        %v3534 = vld [vmem:[#allocation3 + $0x8] sm:$0xff]
        %v3535 = vld [vmem:[#allocation3 + $0x10] sm:$0xff]
        %v3536 = vld [vmem:[#allocation3 + $0x18] sm:$0xff]
        %v3537 = vld [vmem:[#allocation3 + $0x20] sm:$0xff]
        %v3538 = vld [vmem:[#allocation3 + $0x28] sm:$0xff]
        %v3539 = vld [vmem:[#allocation3 + $0x30] sm:$0xff]
        %v3540 = vld [vmem:[#allocation3 + $0x38] sm:$0xff]
        %v3541 = vld [vmem:[#allocation3 + $0x40] sm:$0xff]
        %v3542 = vld [vmem:[#allocation3 + $0x48] sm:$0xff]
        %v3543 = vld [vmem:[#allocation3 + $0x50] sm:$0xff]
        %v3544 = vld [vmem:[#allocation3 + $0x58] sm:$0xff]
        %v3545 = vld [vmem:[#allocation3 + $0x60] sm:$0xff]
        %v3546 = vld [vmem:[#allocation3 + $0x68] sm:$0xff]
        %v3547 = vld [vmem:[#allocation3 + $0x70] sm:$0xff]
        %v3548 = vld [vmem:[#allocation3 + $0x78] sm:$0xff]
        %v3549 = vld [vmem:[#allocation3 + $0x80] sm:$0xff]
        %v3550 = vld [vmem:[#allocation3 + $0x88] sm:$0xff]
        %v3551 = vld [vmem:[#allocation3 + $0x90] sm:$0xff]
        %v3552 = vld [vmem:[#allocation3 + $0x98] sm:$0xff]
        %v3553 = vld [vmem:[#allocation3 + $0xa0] sm:$0xff]
        %v3554 = vld [vmem:[#allocation3 + $0xa8] sm:$0xff]
        %v3555 = vld [vmem:[#allocation3 + $0xb0] sm:$0xff]
        %v3556 = vld [vmem:[#allocation3 + $0xb8] sm:$0xff]
        %v3557 = vld [vmem:[#allocation3 + $0xc0] sm:$0xff]
        %v3558 = vld [vmem:[#allocation3 + $0xc8] sm:$0xff]
        %v3559 = vld [vmem:[#allocation3 + $0xd0] sm:$0xff]
        %v3560 = vld [vmem:[#allocation3 + $0xd8] sm:$0xff]
        %v3561 = vld [vmem:[#allocation3 + $0xe0] sm:$0xff]
        %v3562 = vld [vmem:[#allocation3 + $0xe8] sm:$0xff]
        %v3563 = vld [vmem:[#allocation3 + $0xf0] sm:$0xff]
        %v3564 = vld [vmem:[#allocation3 + $0xf8] sm:$0xff]
        %v3565 = vmul.f32 %v3214, %v3533
        %v3566 = vmul.f32 %v3216, %v3534
        %v3567 = vmul.f32 %v3218, %v3535
        %v3568 = vmul.f32 %v3220, %v3536
        %v3569 = vmul.f32 %v3222, %v3537
        %v3570 = vmul.f32 %v3224, %v3538
        %v3571 = vmul.f32 %v3226, %v3539
        %v3572 = vmul.f32 %v3228, %v3540
        %v3573 = vmul.f32 %v3230, %v3541
        %v3574 = vmul.f32 %v3232, %v3542
        %v3575 = vmul.f32 %v3234, %v3543
        %v3576 = vmul.f32 %v3236, %v3544
        %v3577 = vmul.f32 %v3238, %v3545
        %v3578 = vmul.f32 %v3240, %v3546
        %v3579 = vmul.f32 %v3242, %v3547
        %v3580 = vmul.f32 %v3244, %v3548
        %v3581 = vmul.f32 %v3246, %v3549
        %v3582 = vmul.f32 %v3248, %v3550
        %v3583 = vmul.f32 %v3250, %v3551
        %v3584 = vmul.f32 %v3252, %v3552
        %v3585 = vmul.f32 %v3254, %v3553
        %v3586 = vmul.f32 %v3256, %v3554
        %v3587 = vmul.f32 %v3258, %v3555
        %v3588 = vmul.f32 %v3260, %v3556
        %v3589 = vmul.f32 %v3262, %v3557
        %v3590 = vmul.f32 %v3264, %v3558
        %v3591 = vmul.f32 %v3266, %v3559
        %v3592 = vmul.f32 %v3268, %v3560
        %v3593 = vmul.f32 %v3270, %v3561
        %v3594 = vmul.f32 %v3272, %v3562
        %v3595 = vmul.f32 %v3274, %v3563
        %v3596 = vmul.f32 %v3276, %v3564
        %3597 = vadd.xlane.f32.xlu0 %v3470
        %v3598 = vpop.xlane.xlu0 %3597
        %3599 = vadd.xlane.f32.xlu0 %v3472
        %v3600 = vpop.xlane.xlu0 %3599
        %3601 = vadd.xlane.f32.xlu0 %v3474
        %v3602 = vpop.xlane.xlu0 %3601
        %3603 = vadd.xlane.f32.xlu0 %v3476
        %v3604 = vpop.xlane.xlu0 %3603
        %3605 = vadd.xlane.f32.xlu0 %v3478
        %v3606 = vpop.xlane.xlu0 %3605
        %3607 = vadd.xlane.f32.xlu0 %v3480
        %v3608 = vpop.xlane.xlu0 %3607
        %3609 = vadd.xlane.f32.xlu0 %v3482
        %v3610 = vpop.xlane.xlu0 %3609
        %3611 = vadd.xlane.f32.xlu0 %v3484
        %v3612 = vpop.xlane.xlu0 %3611
        %3613 = vadd.xlane.f32.xlu0 %v3486
        %v3614 = vpop.xlane.xlu0 %3613
        %3615 = vadd.xlane.f32.xlu0 %v3488
        %v3616 = vpop.xlane.xlu0 %3615
        %3617 = vadd.xlane.f32.xlu0 %v3490
        %v3618 = vpop.xlane.xlu0 %3617
        %3619 = vadd.xlane.f32.xlu0 %v3492
        %v3620 = vpop.xlane.xlu0 %3619
        %3621 = vadd.xlane.f32.xlu0 %v3494
        %v3622 = vpop.xlane.xlu0 %3621
        %3623 = vadd.xlane.f32.xlu0 %v3496
        %v3624 = vpop.xlane.xlu0 %3623
        %3625 = vadd.xlane.f32.xlu0 %v3498
        %v3626 = vpop.xlane.xlu0 %3625
        %3627 = vadd.xlane.f32.xlu0 %v3500
        %v3628 = vpop.xlane.xlu0 %3627
        %3629 = vadd.xlane.f32.xlu0 %v3502
        %v3630 = vpop.xlane.xlu0 %3629
        %3631 = vadd.xlane.f32.xlu0 %v3504
        %v3632 = vpop.xlane.xlu0 %3631
        %3633 = vadd.xlane.f32.xlu0 %v3506
        %v3634 = vpop.xlane.xlu0 %3633
        %3635 = vadd.xlane.f32.xlu0 %v3508
        %v3636 = vpop.xlane.xlu0 %3635
        %3637 = vadd.xlane.f32.xlu0 %v3510
        %v3638 = vpop.xlane.xlu0 %3637
        %3639 = vadd.xlane.f32.xlu0 %v3512
        %v3640 = vpop.xlane.xlu0 %3639
        %3641 = vadd.xlane.f32.xlu0 %v3514
        %v3642 = vpop.xlane.xlu0 %3641
        %3643 = vadd.xlane.f32.xlu0 %v3516
        %v3644 = vpop.xlane.xlu0 %3643
        %3645 = vadd.xlane.f32.xlu0 %v3518
        %v3646 = vpop.xlane.xlu0 %3645
        %3647 = vadd.xlane.f32.xlu0 %v3520
        %v3648 = vpop.xlane.xlu0 %3647
        %3649 = vadd.xlane.f32.xlu0 %v3522
        %v3650 = vpop.xlane.xlu0 %3649
        %3651 = vadd.xlane.f32.xlu0 %v3524
        %v3652 = vpop.xlane.xlu0 %3651
        %3653 = vadd.xlane.f32.xlu0 %v3526
        %v3654 = vpop.xlane.xlu0 %3653
        %3655 = vadd.xlane.f32.xlu0 %v3528
        %v3656 = vpop.xlane.xlu0 %3655
        %3657 = vadd.xlane.f32.xlu0 %v3530
        %v3658 = vpop.xlane.xlu0 %3657
        %3659 = vadd.xlane.f32.xlu0 %v3532
        %v3660 = vpop.xlane.xlu0 %3659
        %v3661 = vadd.f32 %v3565, %v3598
        %v3662 = vadd.f32 %v3566, %v3600
        %v3663 = vadd.f32 %v3567, %v3602
        %v3664 = vadd.f32 %v3568, %v3604
        %v3665 = vadd.f32 %v3569, %v3606
        %v3666 = vadd.f32 %v3570, %v3608
        %v3667 = vadd.f32 %v3571, %v3610
        %v3668 = vadd.f32 %v3572, %v3612
        %v3669 = vadd.f32 %v3573, %v3614
        %v3670 = vadd.f32 %v3574, %v3616
        %v3671 = vadd.f32 %v3575, %v3618
        %v3672 = vadd.f32 %v3576, %v3620
        %v3673 = vadd.f32 %v3577, %v3622
        %v3674 = vadd.f32 %v3578, %v3624
        %v3675 = vadd.f32 %v3579, %v3626
        %v3676 = vadd.f32 %v3580, %v3628
        %v3677 = vadd.f32 %v3581, %v3630
        %v3678 = vadd.f32 %v3582, %v3632
        %v3679 = vadd.f32 %v3583, %v3634
        %v3680 = vadd.f32 %v3584, %v3636
        %v3681 = vadd.f32 %v3585, %v3638
        %v3682 = vadd.f32 %v3586, %v3640
        %v3683 = vadd.f32 %v3587, %v3642
        %v3684 = vadd.f32 %v3588, %v3644
        %v3685 = vadd.f32 %v3589, %v3646
        %v3686 = vadd.f32 %v3590, %v3648
        %v3687 = vadd.f32 %v3591, %v3650
        %v3688 = vadd.f32 %v3592, %v3652
        %v3689 = vadd.f32 %v3593, %v3654
        %v3690 = vadd.f32 %v3594, %v3656
        %v3691 = vadd.f32 %v3595, %v3658
        %v3692 = vadd.f32 %v3596, %v3660
        %vm3693 = vcmask 7168
        %3694 = vst.msk [vmem:[#allocation3] sm:$0xff] %vm3693, %v3661
        %3695 = vst.msk [vmem:[#allocation3 + $0x8] sm:$0xff] %vm3693, %v3662
        %3696 = vst.msk [vmem:[#allocation3 + $0x10] sm:$0xff] %vm3693, %v3663
        %3697 = vst.msk [vmem:[#allocation3 + $0x18] sm:$0xff] %vm3693, %v3664
        %3698 = vst.msk [vmem:[#allocation3 + $0x20] sm:$0xff] %vm3693, %v3665
        %3699 = vst.msk [vmem:[#allocation3 + $0x28] sm:$0xff] %vm3693, %v3666
        %3700 = vst.msk [vmem:[#allocation3 + $0x30] sm:$0xff] %vm3693, %v3667
        %3701 = vst.msk [vmem:[#allocation3 + $0x38] sm:$0xff] %vm3693, %v3668
        %3702 = vst.msk [vmem:[#allocation3 + $0x40] sm:$0xff] %vm3693, %v3669
        %3703 = vst.msk [vmem:[#allocation3 + $0x48] sm:$0xff] %vm3693, %v3670
        %3704 = vst.msk [vmem:[#allocation3 + $0x50] sm:$0xff] %vm3693, %v3671
        %3705 = vst.msk [vmem:[#allocation3 + $0x58] sm:$0xff] %vm3693, %v3672
        %3706 = vst.msk [vmem:[#allocation3 + $0x60] sm:$0xff] %vm3693, %v3673
        %3707 = vst.msk [vmem:[#allocation3 + $0x68] sm:$0xff] %vm3693, %v3674
        %3708 = vst.msk [vmem:[#allocation3 + $0x70] sm:$0xff] %vm3693, %v3675
        %3709 = vst.msk [vmem:[#allocation3 + $0x78] sm:$0xff] %vm3693, %v3676
        %3710 = vst.msk [vmem:[#allocation3 + $0x80] sm:$0xff] %vm3693, %v3677
        %3711 = vst.msk [vmem:[#allocation3 + $0x88] sm:$0xff] %vm3693, %v3678
        %3712 = vst.msk [vmem:[#allocation3 + $0x90] sm:$0xff] %vm3693, %v3679
        %3713 = vst.msk [vmem:[#allocation3 + $0x98] sm:$0xff] %vm3693, %v3680
        %3714 = vst.msk [vmem:[#allocation3 + $0xa0] sm:$0xff] %vm3693, %v3681
        %3715 = vst.msk [vmem:[#allocation3 + $0xa8] sm:$0xff] %vm3693, %v3682
        %3716 = vst.msk [vmem:[#allocation3 + $0xb0] sm:$0xff] %vm3693, %v3683
        %3717 = vst.msk [vmem:[#allocation3 + $0xb8] sm:$0xff] %vm3693, %v3684
        %3718 = vst.msk [vmem:[#allocation3 + $0xc0] sm:$0xff] %vm3693, %v3685
        %3719 = vst.msk [vmem:[#allocation3 + $0xc8] sm:$0xff] %vm3693, %v3686
        %3720 = vst.msk [vmem:[#allocation3 + $0xd0] sm:$0xff] %vm3693, %v3687
        %3721 = vst.msk [vmem:[#allocation3 + $0xd8] sm:$0xff] %vm3693, %v3688
        %3722 = vst.msk [vmem:[#allocation3 + $0xe0] sm:$0xff] %vm3693, %v3689
        %3723 = vst.msk [vmem:[#allocation3 + $0xe8] sm:$0xff] %vm3693, %v3690
        %3724 = vst.msk [vmem:[#allocation3 + $0xf0] sm:$0xff] %vm3693, %v3691
        %3725 = vst.msk [vmem:[#allocation3 + $0xf8] sm:$0xff] %vm3693, %v3692
        %v3726 = vld [vmem:[#allocation4] sm:$0xff]
        %v3727 = vld [vmem:[#allocation4 + $0x8] sm:$0xff]
        %v3728 = vld [vmem:[#allocation4 + $0x10] sm:$0xff]
        %v3729 = vld [vmem:[#allocation4 + $0x18] sm:$0xff]
        %v3730 = vld [vmem:[#allocation4 + $0x20] sm:$0xff]
        %v3731 = vld [vmem:[#allocation4 + $0x28] sm:$0xff]
        %v3732 = vld [vmem:[#allocation4 + $0x30] sm:$0xff]
        %v3733 = vld [vmem:[#allocation4 + $0x38] sm:$0xff]
        %v3734 = vld [vmem:[#allocation4 + $0x40] sm:$0xff]
        %v3735 = vld [vmem:[#allocation4 + $0x48] sm:$0xff]
        %v3736 = vld [vmem:[#allocation4 + $0x50] sm:$0xff]
        %v3737 = vld [vmem:[#allocation4 + $0x58] sm:$0xff]
        %v3738 = vld [vmem:[#allocation4 + $0x60] sm:$0xff]
        %v3739 = vld [vmem:[#allocation4 + $0x68] sm:$0xff]
        %v3740 = vld [vmem:[#allocation4 + $0x70] sm:$0xff]
        %v3741 = vld [vmem:[#allocation4 + $0x78] sm:$0xff]
        %v3742 = vld [vmem:[#allocation4 + $0x80] sm:$0xff]
        %v3743 = vld [vmem:[#allocation4 + $0x88] sm:$0xff]
        %v3744 = vld [vmem:[#allocation4 + $0x90] sm:$0xff]
        %v3745 = vld [vmem:[#allocation4 + $0x98] sm:$0xff]
        %v3746 = vld [vmem:[#allocation4 + $0xa0] sm:$0xff]
        %v3747 = vld [vmem:[#allocation4 + $0xa8] sm:$0xff]
        %v3748 = vld [vmem:[#allocation4 + $0xb0] sm:$0xff]
        %v3749 = vld [vmem:[#allocation4 + $0xb8] sm:$0xff]
        %v3750 = vld [vmem:[#allocation4 + $0xc0] sm:$0xff]
        %v3751 = vld [vmem:[#allocation4 + $0xc8] sm:$0xff]
        %v3752 = vld [vmem:[#allocation4 + $0xd0] sm:$0xff]
        %v3753 = vld [vmem:[#allocation4 + $0xd8] sm:$0xff]
        %v3754 = vld [vmem:[#allocation4 + $0xe0] sm:$0xff]
        %v3755 = vld [vmem:[#allocation4 + $0xe8] sm:$0xff]
        %v3756 = vld [vmem:[#allocation4 + $0xf0] sm:$0xff]
        %v3757 = vld [vmem:[#allocation4 + $0xf8] sm:$0xff]
        %3759 = vset.pattern.permute.xlu0 0
        %3760 = vperm.xlu0 %3759, %v3214
        %v3761 = vpop.permute.xlu0 %3760
        %3764 = vset.pattern.permute.xlu0 0
        %3765 = vperm.xlu0 %3764, %v3216
        %v3766 = vpop.permute.xlu0 %3765
        %3769 = vset.pattern.permute.xlu0 0
        %3770 = vperm.xlu0 %3769, %v3218
        %v3771 = vpop.permute.xlu0 %3770
        %3774 = vset.pattern.permute.xlu0 0
        %3775 = vperm.xlu0 %3774, %v3220
        %v3776 = vpop.permute.xlu0 %3775
        %3779 = vset.pattern.permute.xlu0 0
        %3780 = vperm.xlu0 %3779, %v3222
        %v3781 = vpop.permute.xlu0 %3780
        %3784 = vset.pattern.permute.xlu0 0
        %3785 = vperm.xlu0 %3784, %v3224
        %v3786 = vpop.permute.xlu0 %3785
        %3789 = vset.pattern.permute.xlu0 0
        %3790 = vperm.xlu0 %3789, %v3226
        %v3791 = vpop.permute.xlu0 %3790
        %3794 = vset.pattern.permute.xlu0 0
        %3795 = vperm.xlu0 %3794, %v3228
        %v3796 = vpop.permute.xlu0 %3795
        %3799 = vset.pattern.permute.xlu0 0
        %3800 = vperm.xlu0 %3799, %v3230
        %v3801 = vpop.permute.xlu0 %3800
        %3804 = vset.pattern.permute.xlu0 0
        %3805 = vperm.xlu0 %3804, %v3232
        %v3806 = vpop.permute.xlu0 %3805
        %3809 = vset.pattern.permute.xlu0 0
        %3810 = vperm.xlu0 %3809, %v3234
        %v3811 = vpop.permute.xlu0 %3810
        %3814 = vset.pattern.permute.xlu0 0
        %3815 = vperm.xlu0 %3814, %v3236
        %v3816 = vpop.permute.xlu0 %3815
        %3819 = vset.pattern.permute.xlu0 0
        %3820 = vperm.xlu0 %3819, %v3238
        %v3821 = vpop.permute.xlu0 %3820
        %3824 = vset.pattern.permute.xlu0 0
        %3825 = vperm.xlu0 %3824, %v3240
        %v3826 = vpop.permute.xlu0 %3825
        %3829 = vset.pattern.permute.xlu0 0
        %3830 = vperm.xlu0 %3829, %v3242
        %v3831 = vpop.permute.xlu0 %3830
        %3834 = vset.pattern.permute.xlu0 0
        %3835 = vperm.xlu0 %3834, %v3244
        %v3836 = vpop.permute.xlu0 %3835
        %3839 = vset.pattern.permute.xlu0 0
        %3840 = vperm.xlu0 %3839, %v3246
        %v3841 = vpop.permute.xlu0 %3840
        %3844 = vset.pattern.permute.xlu0 0
        %3845 = vperm.xlu0 %3844, %v3248
        %v3846 = vpop.permute.xlu0 %3845
        %3849 = vset.pattern.permute.xlu0 0
        %3850 = vperm.xlu0 %3849, %v3250
        %v3851 = vpop.permute.xlu0 %3850
        %3854 = vset.pattern.permute.xlu0 0
        %3855 = vperm.xlu0 %3854, %v3252
        %v3856 = vpop.permute.xlu0 %3855
        %3859 = vset.pattern.permute.xlu0 0
        %3860 = vperm.xlu0 %3859, %v3254
        %v3861 = vpop.permute.xlu0 %3860
        %3864 = vset.pattern.permute.xlu0 0
        %3865 = vperm.xlu0 %3864, %v3256
        %v3866 = vpop.permute.xlu0 %3865
        %3869 = vset.pattern.permute.xlu0 0
        %3870 = vperm.xlu0 %3869, %v3258
        %v3871 = vpop.permute.xlu0 %3870
        %3874 = vset.pattern.permute.xlu0 0
        %3875 = vperm.xlu0 %3874, %v3260
        %v3876 = vpop.permute.xlu0 %3875
        %3879 = vset.pattern.permute.xlu0 0
        %3880 = vperm.xlu0 %3879, %v3262
        %v3881 = vpop.permute.xlu0 %3880
        %3884 = vset.pattern.permute.xlu0 0
        %3885 = vperm.xlu0 %3884, %v3264
        %v3886 = vpop.permute.xlu0 %3885
        %3889 = vset.pattern.permute.xlu0 0
        %3890 = vperm.xlu0 %3889, %v3266
        %v3891 = vpop.permute.xlu0 %3890
        %3894 = vset.pattern.permute.xlu0 0
        %3895 = vperm.xlu0 %3894, %v3268
        %v3896 = vpop.permute.xlu0 %3895
        %3899 = vset.pattern.permute.xlu0 0
        %3900 = vperm.xlu0 %3899, %v3270
        %v3901 = vpop.permute.xlu0 %3900
        %3904 = vset.pattern.permute.xlu0 0
        %3905 = vperm.xlu0 %3904, %v3272
        %v3906 = vpop.permute.xlu0 %3905
        %3909 = vset.pattern.permute.xlu0 0
        %3910 = vperm.xlu0 %3909, %v3274
        %v3911 = vpop.permute.xlu0 %3910
        %3914 = vset.pattern.permute.xlu0 0
        %3915 = vperm.xlu0 %3914, %v3276
        %v3916 = vpop.permute.xlu0 %3915
        %v3918 = vmul.f32 %v3761, %v3726
        %v3919 = vmul.f32 %v3766, %v3727
        %v3920 = vmul.f32 %v3771, %v3728
        %v3921 = vmul.f32 %v3776, %v3729
        %v3922 = vmul.f32 %v3781, %v3730
        %v3923 = vmul.f32 %v3786, %v3731
        %v3924 = vmul.f32 %v3791, %v3732
        %v3925 = vmul.f32 %v3796, %v3733
        %v3926 = vmul.f32 %v3801, %v3734
        %v3927 = vmul.f32 %v3806, %v3735
        %v3928 = vmul.f32 %v3811, %v3736
        %v3929 = vmul.f32 %v3816, %v3737
        %v3930 = vmul.f32 %v3821, %v3738
        %v3931 = vmul.f32 %v3826, %v3739
        %v3932 = vmul.f32 %v3831, %v3740
        %v3933 = vmul.f32 %v3836, %v3741
        %v3934 = vmul.f32 %v3841, %v3742
        %v3935 = vmul.f32 %v3846, %v3743
        %v3936 = vmul.f32 %v3851, %v3744
        %v3937 = vmul.f32 %v3856, %v3745
        %v3938 = vmul.f32 %v3861, %v3746
        %v3939 = vmul.f32 %v3866, %v3747
        %v3940 = vmul.f32 %v3871, %v3748
        %v3941 = vmul.f32 %v3876, %v3749
        %v3942 = vmul.f32 %v3881, %v3750
        %v3943 = vmul.f32 %v3886, %v3751
        %v3944 = vmul.f32 %v3891, %v3752
        %v3945 = vmul.f32 %v3896, %v3753
        %v3946 = vmul.f32 %v3901, %v3754
        %v3947 = vmul.f32 %v3906, %v3755
        %v3948 = vmul.f32 %v3911, %v3756
        %v3949 = vmul.f32 %v3916, %v3757
        %v3950 = vpack.c.bf16 %v3472, %v3470
        %v3951 = vpack.c.bf16 %v3476, %v3474
        %v3952 = vpack.c.bf16 %v3480, %v3478
        %v3953 = vpack.c.bf16 %v3484, %v3482
        %v3954 = vpack.c.bf16 %v3488, %v3486
        %v3955 = vpack.c.bf16 %v3492, %v3490
        %v3956 = vpack.c.bf16 %v3496, %v3494
        %v3957 = vpack.c.bf16 %v3500, %v3498
        %v3958 = vpack.c.bf16 %v3504, %v3502
        %v3959 = vpack.c.bf16 %v3508, %v3506
        %v3960 = vpack.c.bf16 %v3512, %v3510
        %v3961 = vpack.c.bf16 %v3516, %v3514
        %v3962 = vpack.c.bf16 %v3520, %v3518
        %v3963 = vpack.c.bf16 %v3524, %v3522
        %v3964 = vpack.c.bf16 %v3528, %v3526
        %v3965 = vpack.c.bf16 %v3532, %v3530
        %v3982 = vunpack.c.l.b16 %v2570
        %v3983 = vunpack.c.l.b16 %v2571
        %v3984 = vunpack.c.l.b16 %v2572
        %v3985 = vunpack.c.l.b16 %v2573
        %v3986 = vunpack.c.l.b16 %v2574
        %v3987 = vunpack.c.l.b16 %v2575
        %v3988 = vunpack.c.l.b16 %v2576
        %v3989 = vunpack.c.l.b16 %v2577
        %v3990 = vunpack.c.l.b16 %v2578
        %v3991 = vunpack.c.l.b16 %v2579
        %v3992 = vunpack.c.l.b16 %v2580
        %v3993 = vunpack.c.l.b16 %v2581
        %v3994 = vunpack.c.l.b16 %v2582
        %v3995 = vunpack.c.l.b16 %v2583
        %v3996 = vunpack.c.l.b16 %v2584
        %v3997 = vunpack.c.l.b16 %v2585
        %v3998 = vpack.c.b16 %v3983, %v3982
        %v3999 = vpack.c.b16 %v3985, %v3984
        %v4000 = vpack.c.b16 %v3987, %v3986
        %v4001 = vpack.c.b16 %v3989, %v3988
        %v4002 = vpack.c.b16 %v3991, %v3990
        %v4003 = vpack.c.b16 %v3993, %v3992
        %v4004 = vpack.c.b16 %v3995, %v3994
        %v4005 = vpack.c.b16 %v3997, %v3996
        %4014 = vmatprep.subr.bf16.mxu0 0
        %4015 = vmatpush1.bf16.msra.mxu0 %v3998
        %4016 = vmatprep.subr.bf16.mxu0 0
        %4017 = vmatpush1.bf16.msra.mxu0 %v3999
        %4018 = vmatprep.subr.bf16.mxu0 0
        %4019 = vmatpush1.bf16.msra.mxu0 %v4000
        %4020 = vmatprep.subr.bf16.mxu0 0
        %4021 = vmatpush1.bf16.msra.mxu0 %v4001
        %4022 = vmatprep.subr.bf16.mxu0 0
        %4023 = vmatpush1.bf16.msra.mxu0 %v4002
        %4024 = vmatprep.subr.bf16.mxu0 0
        %4025 = vmatpush1.bf16.msra.mxu0 %v4003
        %4026 = vmatprep.subr.bf16.mxu0 0
        %4027 = vmatpush1.bf16.msra.mxu0 %v4004
        %4028 = vmatprep.subr.bf16.mxu0 0
        %4029 = vmatpush1.bf16.msra.mxu0 %v4005
        %4030 = vmatprep.subr.bf16.mxu0 0
        %4031 = vmatpush1.bf16.msra.mxu0 0
        %4032 = vmatprep.subr.bf16.mxu0 0
        %4033 = vmatpush1.bf16.msra.mxu0 0
        %4034 = vmatprep.subr.bf16.mxu0 0
        %4035 = vmatpush1.bf16.msra.mxu0 0
        %4036 = vmatprep.subr.bf16.mxu0 0
        %4037 = vmatpush1.bf16.msra.mxu0 0
        %4038 = vmatprep.subr.bf16.mxu0 0
        %4039 = vmatpush1.bf16.msra.mxu0 0
        %4040 = vmatprep.subr.bf16.mxu0 0
        %4041 = vmatpush1.bf16.msra.mxu0 0
        %4042 = vmatprep.subr.bf16.mxu0 0
        %4043 = vmatpush1.bf16.msra.mxu0 0
        %4044 = vmatprep.subr.bf16.mxu0 0
        %4045 = vmatpush1.bf16.msra.mxu0 0
        %4046 = vmatprep.mubr.bf16.mxu0 0
        %4047 = vmatmul.mubr.bf16.gmra.mrb[0].mxu0 %v3950
        %v4048 = vpop.f32.mrb[0].mxu0
        %v4049 = vadd.f32 0.0, %v4048
        %v4050 = vpop.f32.mrb[0].mxu0
        %v4051 = vpop.f32.mrb[0].mxu0
        %v4052 = vadd.f32 0.0, %v4051
        %v4053 = vpop.f32.mrb[0].mxu0
        %4054 = vmatprep.mubr.bf16.mxu0 0
        %4055 = vmatmul.mubr.bf16.gmra.mrb[0].mxu0 %v3951
        %v4056 = vpop.f32.mrb[0].mxu0
        %v4057 = vadd.f32 0.0, %v4056
        %v4058 = vpop.f32.mrb[0].mxu0
        %v4059 = vpop.f32.mrb[0].mxu0
        %v4060 = vadd.f32 0.0, %v4059
        %v4061 = vpop.f32.mrb[0].mxu0
        %4062 = vmatprep.mubr.bf16.mxu0 0
        %4063 = vmatmul.mubr.bf16.gmra.mrb[0].mxu0 %v3952
        %v4064 = vpop.f32.mrb[0].mxu0
        %v4065 = vadd.f32 0.0, %v4064
        %v4066 = vpop.f32.mrb[0].mxu0
        %v4067 = vpop.f32.mrb[0].mxu0
        %v4068 = vadd.f32 0.0, %v4067
        %v4069 = vpop.f32.mrb[0].mxu0
        %4070 = vmatprep.mubr.bf16.mxu0 0
        %4071 = vmatmul.mubr.bf16.gmra.mrb[0].mxu0 %v3953
        %v4072 = vpop.f32.mrb[0].mxu0
        %v4073 = vadd.f32 0.0, %v4072
        %v4074 = vpop.f32.mrb[0].mxu0
        %v4075 = vpop.f32.mrb[0].mxu0
        %v4076 = vadd.f32 0.0, %v4075
        %v4077 = vpop.f32.mrb[0].mxu0
        %4078 = vmatprep.mubr.bf16.mxu0 0
        %4079 = vmatmul.mubr.bf16.gmra.mrb[0].mxu0 %v3954
        %v4080 = vpop.f32.mrb[0].mxu0
        %v4081 = vadd.f32 0.0, %v4080
        %v4082 = vpop.f32.mrb[0].mxu0
        %v4083 = vpop.f32.mrb[0].mxu0
        %v4084 = vadd.f32 0.0, %v4083
        %v4085 = vpop.f32.mrb[0].mxu0
        %4086 = vmatprep.mubr.bf16.mxu0 0
        %4087 = vmatmul.mubr.bf16.gmra.mrb[0].mxu0 %v3955
        %v4088 = vpop.f32.mrb[0].mxu0
        %v4089 = vadd.f32 0.0, %v4088
        %v4090 = vpop.f32.mrb[0].mxu0
        %v4091 = vpop.f32.mrb[0].mxu0
        %v4092 = vadd.f32 0.0, %v4091
        %v4093 = vpop.f32.mrb[0].mxu0
        %4094 = vmatprep.mubr.bf16.mxu0 0
        %4095 = vmatmul.mubr.bf16.gmra.mrb[0].mxu0 %v3956
        %v4096 = vpop.f32.mrb[0].mxu0
        %v4097 = vadd.f32 0.0, %v4096
        %v4098 = vpop.f32.mrb[0].mxu0
        %v4099 = vpop.f32.mrb[0].mxu0
        %v4100 = vadd.f32 0.0, %v4099
        %v4101 = vpop.f32.mrb[0].mxu0
        %4102 = vmatprep.mubr.bf16.mxu0 0
        %4103 = vmatmul.mubr.bf16.gmra.mrb[0].mxu0 %v3957
        %v4104 = vpop.f32.mrb[0].mxu0
        %v4105 = vadd.f32 0.0, %v4104
        %v4106 = vpop.f32.mrb[0].mxu0
        %v4107 = vpop.f32.mrb[0].mxu0
        %v4108 = vadd.f32 0.0, %v4107
        %v4109 = vpop.f32.mrb[0].mxu0
        %4110 = vdwg.mxu0
        %v4127 = vunpack.c.l.b16 %v2586
        %v4128 = vunpack.c.l.b16 %v2587
        %v4129 = vunpack.c.l.b16 %v2588
        %v4130 = vunpack.c.l.b16 %v2589
        %v4131 = vunpack.c.l.b16 %v2590
        %v4132 = vunpack.c.l.b16 %v2591
        %v4133 = vunpack.c.l.b16 %v2592
        %v4134 = vunpack.c.l.b16 %v2593
        %v4135 = vunpack.c.l.b16 %v2594
        %v4136 = vunpack.c.l.b16 %v2595
        %v4137 = vunpack.c.l.b16 %v2596
        %v4138 = vunpack.c.l.b16 %v2597
        %v4139 = vunpack.c.l.b16 %v2598
        %v4140 = vunpack.c.l.b16 %v2599
        %v4141 = vunpack.c.l.b16 %v2600
        %v4142 = vunpack.c.l.b16 %v2601
        %v4143 = vpack.c.b16 %v4128, %v4127
        %v4144 = vpack.c.b16 %v4130, %v4129
        %v4145 = vpack.c.b16 %v4132, %v4131
        %v4146 = vpack.c.b16 %v4134, %v4133
        %v4147 = vpack.c.b16 %v4136, %v4135
        %v4148 = vpack.c.b16 %v4138, %v4137
        %v4149 = vpack.c.b16 %v4140, %v4139
        %v4150 = vpack.c.b16 %v4142, %v4141
        %4159 = vmatprep.subr.bf16.mxu0 0
        %4160 = vmatpush1.bf16.msra.mxu0 %v4143
        %4161 = vmatprep.subr.bf16.mxu0 0
        %4162 = vmatpush1.bf16.msra.mxu0 %v4144
        %4163 = vmatprep.subr.bf16.mxu0 0
        %4164 = vmatpush1.bf16.msra.mxu0 %v4145
        %4165 = vmatprep.subr.bf16.mxu0 0
        %4166 = vmatpush1.bf16.msra.mxu0 %v4146
        %4167 = vmatprep.subr.bf16.mxu0 0
        %4168 = vmatpush1.bf16.msra.mxu0 %v4147
        %4169 = vmatprep.subr.bf16.mxu0 0
        %4170 = vmatpush1.bf16.msra.mxu0 %v4148
        %4171 = vmatprep.subr.bf16.mxu0 0
        %4172 = vmatpush1.bf16.msra.mxu0 %v4149
        %4173 = vmatprep.subr.bf16.mxu0 0
        %4174 = vmatpush1.bf16.msra.mxu0 %v4150
        %4175 = vmatprep.subr.bf16.mxu0 0
        %4176 = vmatpush1.bf16.msra.mxu0 0
        %4177 = vmatprep.subr.bf16.mxu0 0
        %4178 = vmatpush1.bf16.msra.mxu0 0
        %4179 = vmatprep.subr.bf16.mxu0 0
        %4180 = vmatpush1.bf16.msra.mxu0 0
        %4181 = vmatprep.subr.bf16.mxu0 0
        %4182 = vmatpush1.bf16.msra.mxu0 0
        %4183 = vmatprep.subr.bf16.mxu0 0
        %4184 = vmatpush1.bf16.msra.mxu0 0
        %4185 = vmatprep.subr.bf16.mxu0 0
        %4186 = vmatpush1.bf16.msra.mxu0 0
        %4187 = vmatprep.subr.bf16.mxu0 0
        %4188 = vmatpush1.bf16.msra.mxu0 0
        %4189 = vmatprep.subr.bf16.mxu0 0
        %4190 = vmatpush1.bf16.msra.mxu0 0
        %4191 = vmatprep.mubr.bf16.mxu0 0
        %4192 = vmatmul.mubr.bf16.gmra.mrb[0].mxu0 %v3958
        %v4193 = vpop.f32.mrb[0].mxu0
        %v4194 = vadd.f32 0.0, %v4193
        %v4195 = vpop.f32.mrb[0].mxu0
        %v4196 = vpop.f32.mrb[0].mxu0
        %v4197 = vadd.f32 0.0, %v4196
        %v4198 = vpop.f32.mrb[0].mxu0
        %4199 = vmatprep.mubr.bf16.mxu0 0
        %4200 = vmatmul.mubr.bf16.gmra.mrb[0].mxu0 %v3959
        %v4201 = vpop.f32.mrb[0].mxu0
        %v4202 = vadd.f32 0.0, %v4201
        %v4203 = vpop.f32.mrb[0].mxu0
        %v4204 = vpop.f32.mrb[0].mxu0
        %v4205 = vadd.f32 0.0, %v4204
        %v4206 = vpop.f32.mrb[0].mxu0
        %4207 = vmatprep.mubr.bf16.mxu0 0
        %4208 = vmatmul.mubr.bf16.gmra.mrb[0].mxu0 %v3960
        %v4209 = vpop.f32.mrb[0].mxu0
        %v4210 = vadd.f32 0.0, %v4209
        %v4211 = vpop.f32.mrb[0].mxu0
        %v4212 = vpop.f32.mrb[0].mxu0
        %v4213 = vadd.f32 0.0, %v4212
        %v4214 = vpop.f32.mrb[0].mxu0
        %4215 = vmatprep.mubr.bf16.mxu0 0
        %4216 = vmatmul.mubr.bf16.gmra.mrb[0].mxu0 %v3961
        %v4217 = vpop.f32.mrb[0].mxu0
        %v4218 = vadd.f32 0.0, %v4217
        %v4219 = vpop.f32.mrb[0].mxu0
        %v4220 = vpop.f32.mrb[0].mxu0
        %v4221 = vadd.f32 0.0, %v4220
        %v4222 = vpop.f32.mrb[0].mxu0
        %4223 = vmatprep.mubr.bf16.mxu0 0
        %4224 = vmatmul.mubr.bf16.gmra.mrb[0].mxu0 %v3962
        %v4225 = vpop.f32.mrb[0].mxu0
        %v4226 = vadd.f32 0.0, %v4225
        %v4227 = vpop.f32.mrb[0].mxu0
        %v4228 = vpop.f32.mrb[0].mxu0
        %v4229 = vadd.f32 0.0, %v4228
        %v4230 = vpop.f32.mrb[0].mxu0
        %4231 = vmatprep.mubr.bf16.mxu0 0
        %4232 = vmatmul.mubr.bf16.gmra.mrb[0].mxu0 %v3963
        %v4233 = vpop.f32.mrb[0].mxu0
        %v4234 = vadd.f32 0.0, %v4233
        %v4235 = vpop.f32.mrb[0].mxu0
        %v4236 = vpop.f32.mrb[0].mxu0
        %v4237 = vadd.f32 0.0, %v4236
        %v4238 = vpop.f32.mrb[0].mxu0
        %4239 = vmatprep.mubr.bf16.mxu0 0
        %4240 = vmatmul.mubr.bf16.gmra.mrb[0].mxu0 %v3964
        %v4241 = vpop.f32.mrb[0].mxu0
        %v4242 = vadd.f32 0.0, %v4241
        %v4243 = vpop.f32.mrb[0].mxu0
        %v4244 = vpop.f32.mrb[0].mxu0
        %v4245 = vadd.f32 0.0, %v4244
        %v4246 = vpop.f32.mrb[0].mxu0
        %4247 = vmatprep.mubr.bf16.mxu0 0
        %4248 = vmatmul.mubr.bf16.gmra.mrb[0].mxu0 %v3965
        %v4249 = vpop.f32.mrb[0].mxu0
        %v4250 = vadd.f32 0.0, %v4249
        %v4251 = vpop.f32.mrb[0].mxu0
        %v4252 = vpop.f32.mrb[0].mxu0
        %v4253 = vadd.f32 0.0, %v4252
        %v4254 = vpop.f32.mrb[0].mxu0
        %4255 = vdwg.mxu0
        %v4256 = vadd.f32 %v3918, %v4049
        %v4257 = vadd.f32 %v3919, %v4052
        %v4258 = vadd.f32 %v3920, %v4057
        %v4259 = vadd.f32 %v3921, %v4060
        %v4260 = vadd.f32 %v3922, %v4065
        %v4261 = vadd.f32 %v3923, %v4068
        %v4262 = vadd.f32 %v3924, %v4073
        %v4263 = vadd.f32 %v3925, %v4076
        %v4264 = vadd.f32 %v3926, %v4081
        %v4265 = vadd.f32 %v3927, %v4084
        %v4266 = vadd.f32 %v3928, %v4089
        %v4267 = vadd.f32 %v3929, %v4092
        %v4268 = vadd.f32 %v3930, %v4097
        %v4269 = vadd.f32 %v3931, %v4100
        %v4270 = vadd.f32 %v3932, %v4105
        %v4271 = vadd.f32 %v3933, %v4108
        %v4272 = vadd.f32 %v3934, %v4194
        %v4273 = vadd.f32 %v3935, %v4197
        %v4274 = vadd.f32 %v3936, %v4202
        %v4275 = vadd.f32 %v3937, %v4205
        %v4276 = vadd.f32 %v3938, %v4210
        %v4277 = vadd.f32 %v3939, %v4213
        %v4278 = vadd.f32 %v3940, %v4218
        %v4279 = vadd.f32 %v3941, %v4221
        %v4280 = vadd.f32 %v3942, %v4226
        %v4281 = vadd.f32 %v3943, %v4229
        %v4282 = vadd.f32 %v3944, %v4234
        %v4283 = vadd.f32 %v3945, %v4237
        %v4284 = vadd.f32 %v3946, %v4242
        %v4285 = vadd.f32 %v3947, %v4245
        %v4286 = vadd.f32 %v3948, %v4250
        %v4287 = vadd.f32 %v3949, %v4253
        %4288 = vst.msk [vmem:[#allocation4] sm:$0xff] %vm2682, %v4256
        %4289 = vst.msk [vmem:[#allocation4 + $0x8] sm:$0xff] %vm2682, %v4257
        %4290 = vst.msk [vmem:[#allocation4 + $0x10] sm:$0xff] %vm2682, %v4258
        %4291 = vst.msk [vmem:[#allocation4 + $0x18] sm:$0xff] %vm2682, %v4259
        %4292 = vst.msk [vmem:[#allocation4 + $0x20] sm:$0xff] %vm2682, %v4260
        %4293 = vst.msk [vmem:[#allocation4 + $0x28] sm:$0xff] %vm2682, %v4261
        %4294 = vst.msk [vmem:[#allocation4 + $0x30] sm:$0xff] %vm2682, %v4262
        %4295 = vst.msk [vmem:[#allocation4 + $0x38] sm:$0xff] %vm2682, %v4263
        %4296 = vst.msk [vmem:[#allocation4 + $0x40] sm:$0xff] %vm2682, %v4264
        %4297 = vst.msk [vmem:[#allocation4 + $0x48] sm:$0xff] %vm2682, %v4265
        %4298 = vst.msk [vmem:[#allocation4 + $0x50] sm:$0xff] %vm2682, %v4266
        %4299 = vst.msk [vmem:[#allocation4 + $0x58] sm:$0xff] %vm2682, %v4267
        %4300 = vst.msk [vmem:[#allocation4 + $0x60] sm:$0xff] %vm2682, %v4268
        %4301 = vst.msk [vmem:[#allocation4 + $0x68] sm:$0xff] %vm2682, %v4269
        %4302 = vst.msk [vmem:[#allocation4 + $0x70] sm:$0xff] %vm2682, %v4270
        %4303 = vst.msk [vmem:[#allocation4 + $0x78] sm:$0xff] %vm2682, %v4271
        %4304 = vst.msk [vmem:[#allocation4 + $0x80] sm:$0xff] %vm2682, %v4272
        %4305 = vst.msk [vmem:[#allocation4 + $0x88] sm:$0xff] %vm2682, %v4273
        %4306 = vst.msk [vmem:[#allocation4 + $0x90] sm:$0xff] %vm2682, %v4274
        %4307 = vst.msk [vmem:[#allocation4 + $0x98] sm:$0xff] %vm2682, %v4275
        %4308 = vst.msk [vmem:[#allocation4 + $0xa0] sm:$0xff] %vm2682, %v4276
        %4309 = vst.msk [vmem:[#allocation4 + $0xa8] sm:$0xff] %vm2682, %v4277
        %4310 = vst.msk [vmem:[#allocation4 + $0xb0] sm:$0xff] %vm2682, %v4278
        %4311 = vst.msk [vmem:[#allocation4 + $0xb8] sm:$0xff] %vm2682, %v4279
        %4312 = vst.msk [vmem:[#allocation4 + $0xc0] sm:$0xff] %vm2682, %v4280
        %4313 = vst.msk [vmem:[#allocation4 + $0xc8] sm:$0xff] %vm2682, %v4281
        %4314 = vst.msk [vmem:[#allocation4 + $0xd0] sm:$0xff] %vm2682, %v4282
        %4315 = vst.msk [vmem:[#allocation4 + $0xd8] sm:$0xff] %vm2682, %v4283
        %4316 = vst.msk [vmem:[#allocation4 + $0xe0] sm:$0xff] %vm2682, %v4284
        %4317 = vst.msk [vmem:[#allocation4 + $0xe8] sm:$0xff] %vm2682, %v4285
        %4318 = vst.msk [vmem:[#allocation4 + $0xf0] sm:$0xff] %vm2682, %v4286
        %4319 = vst.msk [vmem:[#allocation4 + $0xf8] sm:$0xff] %vm2682, %v4287
        %4320 = vst.msk [vmem:[#allocation2] sm:$0xff] %vm3693, %v3149
        %4321 = vst.msk [vmem:[#allocation2 + $0x8] sm:$0xff] %vm3693, %v3150
        %4322 = vst.msk [vmem:[#allocation2 + $0x10] sm:$0xff] %vm3693, %v3151
        %4323 = vst.msk [vmem:[#allocation2 + $0x18] sm:$0xff] %vm3693, %v3152
        %4324 = vst.msk [vmem:[#allocation2 + $0x20] sm:$0xff] %vm3693, %v3153
        %4325 = vst.msk [vmem:[#allocation2 + $0x28] sm:$0xff] %vm3693, %v3154
        %4326 = vst.msk [vmem:[#allocation2 + $0x30] sm:$0xff] %vm3693, %v3155
        %4327 = vst.msk [vmem:[#allocation2 + $0x38] sm:$0xff] %vm3693, %v3156
        %4328 = vst.msk [vmem:[#allocation2 + $0x40] sm:$0xff] %vm3693, %v3157
        %4329 = vst.msk [vmem:[#allocation2 + $0x48] sm:$0xff] %vm3693, %v3158
        %4330 = vst.msk [vmem:[#allocation2 + $0x50] sm:$0xff] %vm3693, %v3159
        %4331 = vst.msk [vmem:[#allocation2 + $0x58] sm:$0xff] %vm3693, %v3160
        %4332 = vst.msk [vmem:[#allocation2 + $0x60] sm:$0xff] %vm3693, %v3161
        %4333 = vst.msk [vmem:[#allocation2 + $0x68] sm:$0xff] %vm3693, %v3162
        %4334 = vst.msk [vmem:[#allocation2 + $0x70] sm:$0xff] %vm3693, %v3163
        %4335 = vst.msk [vmem:[#allocation2 + $0x78] sm:$0xff] %vm3693, %v3164
        %4336 = vst.msk [vmem:[#allocation2 + $0x80] sm:$0xff] %vm3693, %v3165
        %4337 = vst.msk [vmem:[#allocation2 + $0x88] sm:$0xff] %vm3693, %v3166
        %4338 = vst.msk [vmem:[#allocation2 + $0x90] sm:$0xff] %vm3693, %v3167
        %4339 = vst.msk [vmem:[#allocation2 + $0x98] sm:$0xff] %vm3693, %v3168
        %4340 = vst.msk [vmem:[#allocation2 + $0xa0] sm:$0xff] %vm3693, %v3169
        %4341 = vst.msk [vmem:[#allocation2 + $0xa8] sm:$0xff] %vm3693, %v3170
        %4342 = vst.msk [vmem:[#allocation2 + $0xb0] sm:$0xff] %vm3693, %v3171
        %4343 = vst.msk [vmem:[#allocation2 + $0xb8] sm:$0xff] %vm3693, %v3172
        %4344 = vst.msk [vmem:[#allocation2 + $0xc0] sm:$0xff] %vm3693, %v3173
        %4345 = vst.msk [vmem:[#allocation2 + $0xc8] sm:$0xff] %vm3693, %v3174
        %4346 = vst.msk [vmem:[#allocation2 + $0xd0] sm:$0xff] %vm3693, %v3175
        %4347 = vst.msk [vmem:[#allocation2 + $0xd8] sm:$0xff] %vm3693, %v3176
        %4348 = vst.msk [vmem:[#allocation2 + $0xe0] sm:$0xff] %vm3693, %v3177
        %4349 = vst.msk [vmem:[#allocation2 + $0xe8] sm:$0xff] %vm3693, %v3178
        %4350 = vst.msk [vmem:[#allocation2 + $0xf0] sm:$0xff] %vm3693, %v3179
        %4351 = vst.msk [vmem:[#allocation2 + $0xf8] sm:$0xff] %vm3693, %v3180
      $region48: #{warp_attn_forward.12} parent=35 // pred_fallthru
        _
      // Predicated region
      $region49: #{warp_attn_forward.12} parent=35 // pred_check
        %p4352 = pneg %p362
      $region50: #{warp_attn_forward.12} parent=35 // pred_check_branch
        %4354 = sbr.rel (%p4352) target = $region52
      $region51: #{warp_attn_forward.12} parent=35 // pred_region
        %v4355 = vld [vmem:[#allocation3] sm:$0xff]
        %v4356 = vld [vmem:[#allocation3 + $0x8] sm:$0xff]
        %v4357 = vld [vmem:[#allocation3 + $0x10] sm:$0xff]
        %v4358 = vld [vmem:[#allocation3 + $0x18] sm:$0xff]
        %v4359 = vld [vmem:[#allocation3 + $0x20] sm:$0xff]
        %v4360 = vld [vmem:[#allocation3 + $0x28] sm:$0xff]
        %v4361 = vld [vmem:[#allocation3 + $0x30] sm:$0xff]
        %v4362 = vld [vmem:[#allocation3 + $0x38] sm:$0xff]
        %v4363 = vld [vmem:[#allocation3 + $0x40] sm:$0xff]
        %v4364 = vld [vmem:[#allocation3 + $0x48] sm:$0xff]
        %v4365 = vld [vmem:[#allocation3 + $0x50] sm:$0xff]
        %v4366 = vld [vmem:[#allocation3 + $0x58] sm:$0xff]
        %v4367 = vld [vmem:[#allocation3 + $0x60] sm:$0xff]
        %v4368 = vld [vmem:[#allocation3 + $0x68] sm:$0xff]
        %v4369 = vld [vmem:[#allocation3 + $0x70] sm:$0xff]
        %v4370 = vld [vmem:[#allocation3 + $0x78] sm:$0xff]
        %v4371 = vld [vmem:[#allocation3 + $0x80] sm:$0xff]
        %v4372 = vld [vmem:[#allocation3 + $0x88] sm:$0xff]
        %v4373 = vld [vmem:[#allocation3 + $0x90] sm:$0xff]
        %v4374 = vld [vmem:[#allocation3 + $0x98] sm:$0xff]
        %v4375 = vld [vmem:[#allocation3 + $0xa0] sm:$0xff]
        %v4376 = vld [vmem:[#allocation3 + $0xa8] sm:$0xff]
        %v4377 = vld [vmem:[#allocation3 + $0xb0] sm:$0xff]
        %v4378 = vld [vmem:[#allocation3 + $0xb8] sm:$0xff]
        %v4379 = vld [vmem:[#allocation3 + $0xc0] sm:$0xff]
        %v4380 = vld [vmem:[#allocation3 + $0xc8] sm:$0xff]
        %v4381 = vld [vmem:[#allocation3 + $0xd0] sm:$0xff]
        %v4382 = vld [vmem:[#allocation3 + $0xd8] sm:$0xff]
        %v4383 = vld [vmem:[#allocation3 + $0xe0] sm:$0xff]
        %v4384 = vld [vmem:[#allocation3 + $0xe8] sm:$0xff]
        %v4385 = vld [vmem:[#allocation3 + $0xf0] sm:$0xff]
        %v4386 = vld [vmem:[#allocation3 + $0xf8] sm:$0xff]
        %vm4387 = vcmp.gt.f32.partialorder %v4355, 0.0
        %vm4388 = vcmp.gt.f32.partialorder %v4356, 0.0
        %vm4389 = vcmp.gt.f32.partialorder %v4357, 0.0
        %vm4390 = vcmp.gt.f32.partialorder %v4358, 0.0
        %vm4391 = vcmp.gt.f32.partialorder %v4359, 0.0
        %vm4392 = vcmp.gt.f32.partialorder %v4360, 0.0
        %vm4393 = vcmp.gt.f32.partialorder %v4361, 0.0
        %vm4394 = vcmp.gt.f32.partialorder %v4362, 0.0
        %vm4395 = vcmp.gt.f32.partialorder %v4363, 0.0
        %vm4396 = vcmp.gt.f32.partialorder %v4364, 0.0
        %vm4397 = vcmp.gt.f32.partialorder %v4365, 0.0
        %vm4398 = vcmp.gt.f32.partialorder %v4366, 0.0
        %vm4399 = vcmp.gt.f32.partialorder %v4367, 0.0
        %vm4400 = vcmp.gt.f32.partialorder %v4368, 0.0
        %vm4401 = vcmp.gt.f32.partialorder %v4369, 0.0
        %vm4402 = vcmp.gt.f32.partialorder %v4370, 0.0
        %vm4403 = vcmp.gt.f32.partialorder %v4371, 0.0
        %vm4404 = vcmp.gt.f32.partialorder %v4372, 0.0
        %vm4405 = vcmp.gt.f32.partialorder %v4373, 0.0
        %vm4406 = vcmp.gt.f32.partialorder %v4374, 0.0
        %vm4407 = vcmp.gt.f32.partialorder %v4375, 0.0
        %vm4408 = vcmp.gt.f32.partialorder %v4376, 0.0
        %vm4409 = vcmp.gt.f32.partialorder %v4377, 0.0
        %vm4410 = vcmp.gt.f32.partialorder %v4378, 0.0
        %vm4411 = vcmp.gt.f32.partialorder %v4379, 0.0
        %vm4412 = vcmp.gt.f32.partialorder %v4380, 0.0
        %vm4413 = vcmp.gt.f32.partialorder %v4381, 0.0
        %vm4414 = vcmp.gt.f32.partialorder %v4382, 0.0
        %vm4415 = vcmp.gt.f32.partialorder %v4383, 0.0
        %vm4416 = vcmp.gt.f32.partialorder %v4384, 0.0
        %vm4417 = vcmp.gt.f32.partialorder %v4385, 0.0
        %vm4418 = vcmp.gt.f32.partialorder %v4386, 0.0
        %v4419 = vsel %vm4387, %v4355, 1.0
        %v4420 = vsel %vm4388, %v4356, 1.0
        %v4421 = vsel %vm4389, %v4357, 1.0
        %v4422 = vsel %vm4390, %v4358, 1.0
        %v4423 = vsel %vm4391, %v4359, 1.0
        %v4424 = vsel %vm4392, %v4360, 1.0
        %v4425 = vsel %vm4393, %v4361, 1.0
        %v4426 = vsel %vm4394, %v4362, 1.0
        %v4427 = vsel %vm4395, %v4363, 1.0
        %v4428 = vsel %vm4396, %v4364, 1.0
        %v4429 = vsel %vm4397, %v4365, 1.0
        %v4430 = vsel %vm4398, %v4366, 1.0
        %v4431 = vsel %vm4399, %v4367, 1.0
        %v4432 = vsel %vm4400, %v4368, 1.0
        %v4433 = vsel %vm4401, %v4369, 1.0
        %v4434 = vsel %vm4402, %v4370, 1.0
        %v4435 = vsel %vm4403, %v4371, 1.0
        %v4436 = vsel %vm4404, %v4372, 1.0
        %v4437 = vsel %vm4405, %v4373, 1.0
        %v4438 = vsel %vm4406, %v4374, 1.0
        %v4439 = vsel %vm4407, %v4375, 1.0
        %v4440 = vsel %vm4408, %v4376, 1.0
        %v4441 = vsel %vm4409, %v4377, 1.0
        %v4442 = vsel %vm4410, %v4378, 1.0
        %v4443 = vsel %vm4411, %v4379, 1.0
        %v4444 = vsel %vm4412, %v4380, 1.0
        %v4445 = vsel %vm4413, %v4381, 1.0
        %v4446 = vsel %vm4414, %v4382, 1.0
        %v4447 = vsel %vm4415, %v4383, 1.0
        %v4448 = vsel %vm4416, %v4384, 1.0
        %v4449 = vsel %vm4417, %v4385, 1.0
        %v4450 = vsel %vm4418, %v4386, 1.0
        %v4451 = vrcp.pop %v4419
        %v4452 = vrcp.pop %v4420
        %v4453 = vrcp.pop %v4421
        %v4454 = vrcp.pop %v4422
        %v4455 = vrcp.pop %v4423
        %v4456 = vrcp.pop %v4424
        %v4457 = vrcp.pop %v4425
        %v4458 = vrcp.pop %v4426
        %v4459 = vrcp.pop %v4427
        %v4460 = vrcp.pop %v4428
        %v4461 = vrcp.pop %v4429
        %v4462 = vrcp.pop %v4430
        %v4463 = vrcp.pop %v4431
        %v4464 = vrcp.pop %v4432
        %v4465 = vrcp.pop %v4433
        %v4466 = vrcp.pop %v4434
        %v4467 = vrcp.pop %v4435
        %v4468 = vrcp.pop %v4436
        %v4469 = vrcp.pop %v4437
        %v4470 = vrcp.pop %v4438
        %v4471 = vrcp.pop %v4439
        %v4472 = vrcp.pop %v4440
        %v4473 = vrcp.pop %v4441
        %v4474 = vrcp.pop %v4442
        %v4475 = vrcp.pop %v4443
        %v4476 = vrcp.pop %v4444
        %v4477 = vrcp.pop %v4445
        %v4478 = vrcp.pop %v4446
        %v4479 = vrcp.pop %v4447
        %v4480 = vrcp.pop %v4448
        %v4481 = vrcp.pop %v4449
        %v4482 = vrcp.pop %v4450
        %v4483 = vld [vmem:[#allocation2] sm:$0xff]
        %v4484 = vld [vmem:[#allocation2 + $0x8] sm:$0xff]
        %v4485 = vld [vmem:[#allocation2 + $0x10] sm:$0xff]
        %v4486 = vld [vmem:[#allocation2 + $0x18] sm:$0xff]
        %v4487 = vld [vmem:[#allocation2 + $0x20] sm:$0xff]
        %v4488 = vld [vmem:[#allocation2 + $0x28] sm:$0xff]
        %v4489 = vld [vmem:[#allocation2 + $0x30] sm:$0xff]
        %v4490 = vld [vmem:[#allocation2 + $0x38] sm:$0xff]
        %v4491 = vld [vmem:[#allocation2 + $0x40] sm:$0xff]
        %v4492 = vld [vmem:[#allocation2 + $0x48] sm:$0xff]
        %v4493 = vld [vmem:[#allocation2 + $0x50] sm:$0xff]
        %v4494 = vld [vmem:[#allocation2 + $0x58] sm:$0xff]
        %v4495 = vld [vmem:[#allocation2 + $0x60] sm:$0xff]
        %v4496 = vld [vmem:[#allocation2 + $0x68] sm:$0xff]
        %v4497 = vld [vmem:[#allocation2 + $0x70] sm:$0xff]
        %v4498 = vld [vmem:[#allocation2 + $0x78] sm:$0xff]
        %v4499 = vld [vmem:[#allocation2 + $0x80] sm:$0xff]
        %v4500 = vld [vmem:[#allocation2 + $0x88] sm:$0xff]
        %v4501 = vld [vmem:[#allocation2 + $0x90] sm:$0xff]
        %v4502 = vld [vmem:[#allocation2 + $0x98] sm:$0xff]
        %v4503 = vld [vmem:[#allocation2 + $0xa0] sm:$0xff]
        %v4504 = vld [vmem:[#allocation2 + $0xa8] sm:$0xff]
        %v4505 = vld [vmem:[#allocation2 + $0xb0] sm:$0xff]
        %v4506 = vld [vmem:[#allocation2 + $0xb8] sm:$0xff]
        %v4507 = vld [vmem:[#allocation2 + $0xc0] sm:$0xff]
        %v4508 = vld [vmem:[#allocation2 + $0xc8] sm:$0xff]
        %v4509 = vld [vmem:[#allocation2 + $0xd0] sm:$0xff]
        %v4510 = vld [vmem:[#allocation2 + $0xd8] sm:$0xff]
        %v4511 = vld [vmem:[#allocation2 + $0xe0] sm:$0xff]
        %v4512 = vld [vmem:[#allocation2 + $0xe8] sm:$0xff]
        %v4513 = vld [vmem:[#allocation2 + $0xf0] sm:$0xff]
        %v4514 = vld [vmem:[#allocation2 + $0xf8] sm:$0xff]
        %vm4515 = vcmp.gt.f32.partialorder %v4483, -5e+29
        %vm4516 = vcmp.gt.f32.partialorder %v4484, -5e+29
        %vm4517 = vcmp.gt.f32.partialorder %v4485, -5e+29
        %vm4518 = vcmp.gt.f32.partialorder %v4486, -5e+29
        %vm4519 = vcmp.gt.f32.partialorder %v4487, -5e+29
        %vm4520 = vcmp.gt.f32.partialorder %v4488, -5e+29
        %vm4521 = vcmp.gt.f32.partialorder %v4489, -5e+29
        %vm4522 = vcmp.gt.f32.partialorder %v4490, -5e+29
        %vm4523 = vcmp.gt.f32.partialorder %v4491, -5e+29
        %vm4524 = vcmp.gt.f32.partialorder %v4492, -5e+29
        %vm4525 = vcmp.gt.f32.partialorder %v4493, -5e+29
        %vm4526 = vcmp.gt.f32.partialorder %v4494, -5e+29
        %vm4527 = vcmp.gt.f32.partialorder %v4495, -5e+29
        %vm4528 = vcmp.gt.f32.partialorder %v4496, -5e+29
        %vm4529 = vcmp.gt.f32.partialorder %v4497, -5e+29
        %vm4530 = vcmp.gt.f32.partialorder %v4498, -5e+29
        %vm4531 = vcmp.gt.f32.partialorder %v4499, -5e+29
        %vm4532 = vcmp.gt.f32.partialorder %v4500, -5e+29
        %vm4533 = vcmp.gt.f32.partialorder %v4501, -5e+29
        %vm4534 = vcmp.gt.f32.partialorder %v4502, -5e+29
        %vm4535 = vcmp.gt.f32.partialorder %v4503, -5e+29
        %vm4536 = vcmp.gt.f32.partialorder %v4504, -5e+29
        %vm4537 = vcmp.gt.f32.partialorder %v4505, -5e+29
        %vm4538 = vcmp.gt.f32.partialorder %v4506, -5e+29
        %vm4539 = vcmp.gt.f32.partialorder %v4507, -5e+29
        %vm4540 = vcmp.gt.f32.partialorder %v4508, -5e+29
        %vm4541 = vcmp.gt.f32.partialorder %v4509, -5e+29
        %vm4542 = vcmp.gt.f32.partialorder %v4510, -5e+29
        %vm4543 = vcmp.gt.f32.partialorder %v4511, -5e+29
        %vm4544 = vcmp.gt.f32.partialorder %v4512, -5e+29
        %vm4545 = vcmp.gt.f32.partialorder %v4513, -5e+29
        %vm4546 = vcmp.gt.f32.partialorder %v4514, -5e+29
        %v4547 = vld [vmem:[#allocation4] sm:$0xff]
        %v4548 = vld [vmem:[#allocation4 + $0x8] sm:$0xff]
        %v4549 = vld [vmem:[#allocation4 + $0x10] sm:$0xff]
        %v4550 = vld [vmem:[#allocation4 + $0x18] sm:$0xff]
        %v4551 = vld [vmem:[#allocation4 + $0x20] sm:$0xff]
        %v4552 = vld [vmem:[#allocation4 + $0x28] sm:$0xff]
        %v4553 = vld [vmem:[#allocation4 + $0x30] sm:$0xff]
        %v4554 = vld [vmem:[#allocation4 + $0x38] sm:$0xff]
        %v4555 = vld [vmem:[#allocation4 + $0x40] sm:$0xff]
        %v4556 = vld [vmem:[#allocation4 + $0x48] sm:$0xff]
        %v4557 = vld [vmem:[#allocation4 + $0x50] sm:$0xff]
        %v4558 = vld [vmem:[#allocation4 + $0x58] sm:$0xff]
        %v4559 = vld [vmem:[#allocation4 + $0x60] sm:$0xff]
        %v4560 = vld [vmem:[#allocation4 + $0x68] sm:$0xff]
        %v4561 = vld [vmem:[#allocation4 + $0x70] sm:$0xff]
        %v4562 = vld [vmem:[#allocation4 + $0x78] sm:$0xff]
        %v4563 = vld [vmem:[#allocation4 + $0x80] sm:$0xff]
        %v4564 = vld [vmem:[#allocation4 + $0x88] sm:$0xff]
        %v4565 = vld [vmem:[#allocation4 + $0x90] sm:$0xff]
        %v4566 = vld [vmem:[#allocation4 + $0x98] sm:$0xff]
        %v4567 = vld [vmem:[#allocation4 + $0xa0] sm:$0xff]
        %v4568 = vld [vmem:[#allocation4 + $0xa8] sm:$0xff]
        %v4569 = vld [vmem:[#allocation4 + $0xb0] sm:$0xff]
        %v4570 = vld [vmem:[#allocation4 + $0xb8] sm:$0xff]
        %v4571 = vld [vmem:[#allocation4 + $0xc0] sm:$0xff]
        %v4572 = vld [vmem:[#allocation4 + $0xc8] sm:$0xff]
        %v4573 = vld [vmem:[#allocation4 + $0xd0] sm:$0xff]
        %v4574 = vld [vmem:[#allocation4 + $0xd8] sm:$0xff]
        %v4575 = vld [vmem:[#allocation4 + $0xe0] sm:$0xff]
        %v4576 = vld [vmem:[#allocation4 + $0xe8] sm:$0xff]
        %v4577 = vld [vmem:[#allocation4 + $0xf0] sm:$0xff]
        %v4578 = vld [vmem:[#allocation4 + $0xf8] sm:$0xff]
        %4580 = vset.pattern.permute.xlu0 0
        %4581 = vperm.xlu0 %4580, %v4451
        %v4582 = vpop.permute.xlu0 %4581
        %4585 = vset.pattern.permute.xlu0 0
        %4586 = vperm.xlu0 %4585, %v4452
        %v4587 = vpop.permute.xlu0 %4586
        %4590 = vset.pattern.permute.xlu0 0
        %4591 = vperm.xlu0 %4590, %v4453
        %v4592 = vpop.permute.xlu0 %4591
        %4595 = vset.pattern.permute.xlu0 0
        %4596 = vperm.xlu0 %4595, %v4454
        %v4597 = vpop.permute.xlu0 %4596
        %4600 = vset.pattern.permute.xlu0 0
        %4601 = vperm.xlu0 %4600, %v4455
        %v4602 = vpop.permute.xlu0 %4601
        %4605 = vset.pattern.permute.xlu0 0
        %4606 = vperm.xlu0 %4605, %v4456
        %v4607 = vpop.permute.xlu0 %4606
        %4610 = vset.pattern.permute.xlu0 0
        %4611 = vperm.xlu0 %4610, %v4457
        %v4612 = vpop.permute.xlu0 %4611
        %4615 = vset.pattern.permute.xlu0 0
        %4616 = vperm.xlu0 %4615, %v4458
        %v4617 = vpop.permute.xlu0 %4616
        %4620 = vset.pattern.permute.xlu0 0
        %4621 = vperm.xlu0 %4620, %v4459
        %v4622 = vpop.permute.xlu0 %4621
        %4625 = vset.pattern.permute.xlu0 0
        %4626 = vperm.xlu0 %4625, %v4460
        %v4627 = vpop.permute.xlu0 %4626
        %4630 = vset.pattern.permute.xlu0 0
        %4631 = vperm.xlu0 %4630, %v4461
        %v4632 = vpop.permute.xlu0 %4631
        %4635 = vset.pattern.permute.xlu0 0
        %4636 = vperm.xlu0 %4635, %v4462
        %v4637 = vpop.permute.xlu0 %4636
        %4640 = vset.pattern.permute.xlu0 0
        %4641 = vperm.xlu0 %4640, %v4463
        %v4642 = vpop.permute.xlu0 %4641
        %4645 = vset.pattern.permute.xlu0 0
        %4646 = vperm.xlu0 %4645, %v4464
        %v4647 = vpop.permute.xlu0 %4646
        %4650 = vset.pattern.permute.xlu0 0
        %4651 = vperm.xlu0 %4650, %v4465
        %v4652 = vpop.permute.xlu0 %4651
        %4655 = vset.pattern.permute.xlu0 0
        %4656 = vperm.xlu0 %4655, %v4466
        %v4657 = vpop.permute.xlu0 %4656
        %4660 = vset.pattern.permute.xlu0 0
        %4661 = vperm.xlu0 %4660, %v4467
        %v4662 = vpop.permute.xlu0 %4661
        %4665 = vset.pattern.permute.xlu0 0
        %4666 = vperm.xlu0 %4665, %v4468
        %v4667 = vpop.permute.xlu0 %4666
        %4670 = vset.pattern.permute.xlu0 0
        %4671 = vperm.xlu0 %4670, %v4469
        %v4672 = vpop.permute.xlu0 %4671
        %4675 = vset.pattern.permute.xlu0 0
        %4676 = vperm.xlu0 %4675, %v4470
        %v4677 = vpop.permute.xlu0 %4676
        %4680 = vset.pattern.permute.xlu0 0
        %4681 = vperm.xlu0 %4680, %v4471
        %v4682 = vpop.permute.xlu0 %4681
        %4685 = vset.pattern.permute.xlu0 0
        %4686 = vperm.xlu0 %4685, %v4472
        %v4687 = vpop.permute.xlu0 %4686
        %4690 = vset.pattern.permute.xlu0 0
        %4691 = vperm.xlu0 %4690, %v4473
        %v4692 = vpop.permute.xlu0 %4691
        %4695 = vset.pattern.permute.xlu0 0
        %4696 = vperm.xlu0 %4695, %v4474
        %v4697 = vpop.permute.xlu0 %4696
        %4700 = vset.pattern.permute.xlu0 0
        %4701 = vperm.xlu0 %4700, %v4475
        %v4702 = vpop.permute.xlu0 %4701
        %4705 = vset.pattern.permute.xlu0 0
        %4706 = vperm.xlu0 %4705, %v4476
        %v4707 = vpop.permute.xlu0 %4706
        %4710 = vset.pattern.permute.xlu0 0
        %4711 = vperm.xlu0 %4710, %v4477
        %v4712 = vpop.permute.xlu0 %4711
        %4715 = vset.pattern.permute.xlu0 0
        %4716 = vperm.xlu0 %4715, %v4478
        %v4717 = vpop.permute.xlu0 %4716
        %4720 = vset.pattern.permute.xlu0 0
        %4721 = vperm.xlu0 %4720, %v4479
        %v4722 = vpop.permute.xlu0 %4721
        %4725 = vset.pattern.permute.xlu0 0
        %4726 = vperm.xlu0 %4725, %v4480
        %v4727 = vpop.permute.xlu0 %4726
        %4730 = vset.pattern.permute.xlu0 0
        %4731 = vperm.xlu0 %4730, %v4481
        %v4732 = vpop.permute.xlu0 %4731
        %4735 = vset.pattern.permute.xlu0 0
        %4736 = vperm.xlu0 %4735, %v4482
        %v4737 = vpop.permute.xlu0 %4736
        %v4739 = vmul.f32 %v4547, %v4582
        %v4740 = vmul.f32 %v4548, %v4587
        %v4741 = vmul.f32 %v4549, %v4592
        %v4742 = vmul.f32 %v4550, %v4597
        %v4743 = vmul.f32 %v4551, %v4602
        %v4744 = vmul.f32 %v4552, %v4607
        %v4745 = vmul.f32 %v4553, %v4612
        %v4746 = vmul.f32 %v4554, %v4617
        %v4747 = vmul.f32 %v4555, %v4622
        %v4748 = vmul.f32 %v4556, %v4627
        %v4749 = vmul.f32 %v4557, %v4632
        %v4750 = vmul.f32 %v4558, %v4637
        %v4751 = vmul.f32 %v4559, %v4642
        %v4752 = vmul.f32 %v4560, %v4647
        %v4753 = vmul.f32 %v4561, %v4652
        %v4754 = vmul.f32 %v4562, %v4657
        %v4755 = vmul.f32 %v4563, %v4662
        %v4756 = vmul.f32 %v4564, %v4667
        %v4757 = vmul.f32 %v4565, %v4672
        %v4758 = vmul.f32 %v4566, %v4677
        %v4759 = vmul.f32 %v4567, %v4682
        %v4760 = vmul.f32 %v4568, %v4687
        %v4761 = vmul.f32 %v4569, %v4692
        %v4762 = vmul.f32 %v4570, %v4697
        %v4763 = vmul.f32 %v4571, %v4702
        %v4764 = vmul.f32 %v4572, %v4707
        %v4765 = vmul.f32 %v4573, %v4712
        %v4766 = vmul.f32 %v4574, %v4717
        %v4767 = vmul.f32 %v4575, %v4722
        %v4768 = vmul.f32 %v4576, %v4727
        %v4769 = vmul.f32 %v4577, %v4732
        %v4770 = vmul.f32 %v4578, %v4737
        %v4771 = vsel %vm4515, 1, 0
        %v4772 = vsel %vm4516, 1, 0
        %v4773 = vsel %vm4517, 1, 0
        %v4774 = vsel %vm4518, 1, 0
        %v4775 = vsel %vm4519, 1, 0
        %v4776 = vsel %vm4520, 1, 0
        %v4777 = vsel %vm4521, 1, 0
        %v4778 = vsel %vm4522, 1, 0
        %v4779 = vsel %vm4523, 1, 0
        %v4780 = vsel %vm4524, 1, 0
        %v4781 = vsel %vm4525, 1, 0
        %v4782 = vsel %vm4526, 1, 0
        %v4783 = vsel %vm4527, 1, 0
        %v4784 = vsel %vm4528, 1, 0
        %v4785 = vsel %vm4529, 1, 0
        %v4786 = vsel %vm4530, 1, 0
        %v4787 = vsel %vm4531, 1, 0
        %v4788 = vsel %vm4532, 1, 0
        %v4789 = vsel %vm4533, 1, 0
        %v4790 = vsel %vm4534, 1, 0
        %v4791 = vsel %vm4535, 1, 0
        %v4792 = vsel %vm4536, 1, 0
        %v4793 = vsel %vm4537, 1, 0
        %v4794 = vsel %vm4538, 1, 0
        %v4795 = vsel %vm4539, 1, 0
        %v4796 = vsel %vm4540, 1, 0
        %v4797 = vsel %vm4541, 1, 0
        %v4798 = vsel %vm4542, 1, 0
        %v4799 = vsel %vm4543, 1, 0
        %v4800 = vsel %vm4544, 1, 0
        %v4801 = vsel %vm4545, 1, 0
        %v4802 = vsel %vm4546, 1, 0
        %4803 = vset.pattern.permute.xlu0 0
        %4804 = vperm.xlu0 %4803, %v4771
        %v4805 = vpop.permute.xlu0 %4804
        %4806 = vset.pattern.permute.xlu0 0
        %4807 = vperm.xlu0 %4806, %v4772
        %v4808 = vpop.permute.xlu0 %4807
        %4809 = vset.pattern.permute.xlu0 0
        %4810 = vperm.xlu0 %4809, %v4773
        %v4811 = vpop.permute.xlu0 %4810
        %4812 = vset.pattern.permute.xlu0 0
        %4813 = vperm.xlu0 %4812, %v4774
        %v4814 = vpop.permute.xlu0 %4813
        %4815 = vset.pattern.permute.xlu0 0
        %4816 = vperm.xlu0 %4815, %v4775
        %v4817 = vpop.permute.xlu0 %4816
        %4818 = vset.pattern.permute.xlu0 0
        %4819 = vperm.xlu0 %4818, %v4776
        %v4820 = vpop.permute.xlu0 %4819
        %4821 = vset.pattern.permute.xlu0 0
        %4822 = vperm.xlu0 %4821, %v4777
        %v4823 = vpop.permute.xlu0 %4822
        %4824 = vset.pattern.permute.xlu0 0
        %4825 = vperm.xlu0 %4824, %v4778
        %v4826 = vpop.permute.xlu0 %4825
        %4827 = vset.pattern.permute.xlu0 0
        %4828 = vperm.xlu0 %4827, %v4779
        %v4829 = vpop.permute.xlu0 %4828
        %4830 = vset.pattern.permute.xlu0 0
        %4831 = vperm.xlu0 %4830, %v4780
        %v4832 = vpop.permute.xlu0 %4831
        %4833 = vset.pattern.permute.xlu0 0
        %4834 = vperm.xlu0 %4833, %v4781
        %v4835 = vpop.permute.xlu0 %4834
        %4836 = vset.pattern.permute.xlu0 0
        %4837 = vperm.xlu0 %4836, %v4782
        %v4838 = vpop.permute.xlu0 %4837
        %4839 = vset.pattern.permute.xlu0 0
        %4840 = vperm.xlu0 %4839, %v4783
        %v4841 = vpop.permute.xlu0 %4840
        %4842 = vset.pattern.permute.xlu0 0
        %4843 = vperm.xlu0 %4842, %v4784
        %v4844 = vpop.permute.xlu0 %4843
        %4845 = vset.pattern.permute.xlu0 0
        %4846 = vperm.xlu0 %4845, %v4785
        %v4847 = vpop.permute.xlu0 %4846
        %4848 = vset.pattern.permute.xlu0 0
        %4849 = vperm.xlu0 %4848, %v4786
        %v4850 = vpop.permute.xlu0 %4849
        %4851 = vset.pattern.permute.xlu0 0
        %4852 = vperm.xlu0 %4851, %v4787
        %v4853 = vpop.permute.xlu0 %4852
        %4854 = vset.pattern.permute.xlu0 0
        %4855 = vperm.xlu0 %4854, %v4788
        %v4856 = vpop.permute.xlu0 %4855
        %4857 = vset.pattern.permute.xlu0 0
        %4858 = vperm.xlu0 %4857, %v4789
        %v4859 = vpop.permute.xlu0 %4858
        %4860 = vset.pattern.permute.xlu0 0
        %4861 = vperm.xlu0 %4860, %v4790
        %v4862 = vpop.permute.xlu0 %4861
        %4863 = vset.pattern.permute.xlu0 0
        %4864 = vperm.xlu0 %4863, %v4791
        %v4865 = vpop.permute.xlu0 %4864
        %4866 = vset.pattern.permute.xlu0 0
        %4867 = vperm.xlu0 %4866, %v4792
        %v4868 = vpop.permute.xlu0 %4867
        %4869 = vset.pattern.permute.xlu0 0
        %4870 = vperm.xlu0 %4869, %v4793
        %v4871 = vpop.permute.xlu0 %4870
        %4872 = vset.pattern.permute.xlu0 0
        %4873 = vperm.xlu0 %4872, %v4794
        %v4874 = vpop.permute.xlu0 %4873
        %4875 = vset.pattern.permute.xlu0 0
        %4876 = vperm.xlu0 %4875, %v4795
        %v4877 = vpop.permute.xlu0 %4876
        %4878 = vset.pattern.permute.xlu0 0
        %4879 = vperm.xlu0 %4878, %v4796
        %v4880 = vpop.permute.xlu0 %4879
        %4881 = vset.pattern.permute.xlu0 0
        %4882 = vperm.xlu0 %4881, %v4797
        %v4883 = vpop.permute.xlu0 %4882
        %4884 = vset.pattern.permute.xlu0 0
        %4885 = vperm.xlu0 %4884, %v4798
        %v4886 = vpop.permute.xlu0 %4885
        %4887 = vset.pattern.permute.xlu0 0
        %4888 = vperm.xlu0 %4887, %v4799
        %v4889 = vpop.permute.xlu0 %4888
        %4890 = vset.pattern.permute.xlu0 0
        %4891 = vperm.xlu0 %4890, %v4800
        %v4892 = vpop.permute.xlu0 %4891
        %4893 = vset.pattern.permute.xlu0 0
        %4894 = vperm.xlu0 %4893, %v4801
        %v4895 = vpop.permute.xlu0 %4894
        %4896 = vset.pattern.permute.xlu0 0
        %4897 = vperm.xlu0 %4896, %v4802
        %v4898 = vpop.permute.xlu0 %4897
        %vm4899 = vcmp.eq.s32.totalorder %v4805, 1
        %vm4900 = vcmp.eq.s32.totalorder %v4808, 1
        %vm4901 = vcmp.eq.s32.totalorder %v4811, 1
        %vm4902 = vcmp.eq.s32.totalorder %v4814, 1
        %vm4903 = vcmp.eq.s32.totalorder %v4817, 1
        %vm4904 = vcmp.eq.s32.totalorder %v4820, 1
        %vm4905 = vcmp.eq.s32.totalorder %v4823, 1
        %vm4906 = vcmp.eq.s32.totalorder %v4826, 1
        %vm4907 = vcmp.eq.s32.totalorder %v4829, 1
        %vm4908 = vcmp.eq.s32.totalorder %v4832, 1
        %vm4909 = vcmp.eq.s32.totalorder %v4835, 1
        %vm4910 = vcmp.eq.s32.totalorder %v4838, 1
        %vm4911 = vcmp.eq.s32.totalorder %v4841, 1
        %vm4912 = vcmp.eq.s32.totalorder %v4844, 1
        %vm4913 = vcmp.eq.s32.totalorder %v4847, 1
        %vm4914 = vcmp.eq.s32.totalorder %v4850, 1
        %vm4915 = vcmp.eq.s32.totalorder %v4853, 1
        %vm4916 = vcmp.eq.s32.totalorder %v4856, 1
        %vm4917 = vcmp.eq.s32.totalorder %v4859, 1
        %vm4918 = vcmp.eq.s32.totalorder %v4862, 1
        %vm4919 = vcmp.eq.s32.totalorder %v4865, 1
        %vm4920 = vcmp.eq.s32.totalorder %v4868, 1
        %vm4921 = vcmp.eq.s32.totalorder %v4871, 1
        %vm4922 = vcmp.eq.s32.totalorder %v4874, 1
        %vm4923 = vcmp.eq.s32.totalorder %v4877, 1
        %vm4924 = vcmp.eq.s32.totalorder %v4880, 1
        %vm4925 = vcmp.eq.s32.totalorder %v4883, 1
        %vm4926 = vcmp.eq.s32.totalorder %v4886, 1
        %vm4927 = vcmp.eq.s32.totalorder %v4889, 1
        %vm4928 = vcmp.eq.s32.totalorder %v4892, 1
        %vm4929 = vcmp.eq.s32.totalorder %v4895, 1
        %vm4930 = vcmp.eq.s32.totalorder %v4898, 1
        %v4931 = vsel %vm4899, %v4739, 0.0
        %v4932 = vsel %vm4900, %v4740, 0.0
        %v4933 = vsel %vm4901, %v4741, 0.0
        %v4934 = vsel %vm4902, %v4742, 0.0
        %v4935 = vsel %vm4903, %v4743, 0.0
        %v4936 = vsel %vm4904, %v4744, 0.0
        %v4937 = vsel %vm4905, %v4745, 0.0
        %v4938 = vsel %vm4906, %v4746, 0.0
        %v4939 = vsel %vm4907, %v4747, 0.0
        %v4940 = vsel %vm4908, %v4748, 0.0
        %v4941 = vsel %vm4909, %v4749, 0.0
        %v4942 = vsel %vm4910, %v4750, 0.0
        %v4943 = vsel %vm4911, %v4751, 0.0
        %v4944 = vsel %vm4912, %v4752, 0.0
        %v4945 = vsel %vm4913, %v4753, 0.0
        %v4946 = vsel %vm4914, %v4754, 0.0
        %v4947 = vsel %vm4915, %v4755, 0.0
        %v4948 = vsel %vm4916, %v4756, 0.0
        %v4949 = vsel %vm4917, %v4757, 0.0
        %v4950 = vsel %vm4918, %v4758, 0.0
        %v4951 = vsel %vm4919, %v4759, 0.0
        %v4952 = vsel %vm4920, %v4760, 0.0
        %v4953 = vsel %vm4921, %v4761, 0.0
        %v4954 = vsel %vm4922, %v4762, 0.0
        %v4955 = vsel %vm4923, %v4763, 0.0
        %v4956 = vsel %vm4924, %v4764, 0.0
        %v4957 = vsel %vm4925, %v4765, 0.0
        %v4958 = vsel %vm4926, %v4766, 0.0
        %v4959 = vsel %vm4927, %v4767, 0.0
        %v4960 = vsel %vm4928, %v4768, 0.0
        %v4961 = vsel %vm4929, %v4769, 0.0
        %v4962 = vsel %vm4930, %v4770, 0.0
        %4979 = vrot.lane.b32.xlu0 %v4947, 32
        %v4980 = vpop.permute.xlu0 %4979
        %4981 = vrot.lane.b32.xlu0 %v4948, 32
        %v4982 = vpop.permute.xlu0 %4981
        %4983 = vrot.lane.b32.xlu0 %v4949, 32
        %v4984 = vpop.permute.xlu0 %4983
        %4985 = vrot.lane.b32.xlu0 %v4950, 32
        %v4986 = vpop.permute.xlu0 %4985
        %4987 = vrot.lane.b32.xlu0 %v4951, 32
        %v4988 = vpop.permute.xlu0 %4987
        %4989 = vrot.lane.b32.xlu0 %v4952, 32
        %v4990 = vpop.permute.xlu0 %4989
        %4991 = vrot.lane.b32.xlu0 %v4953, 32
        %v4992 = vpop.permute.xlu0 %4991
        %4993 = vrot.lane.b32.xlu0 %v4954, 32
        %v4994 = vpop.permute.xlu0 %4993
        %4995 = vrot.lane.b32.xlu0 %v4955, 32
        %v4996 = vpop.permute.xlu0 %4995
        %4997 = vrot.lane.b32.xlu0 %v4956, 32
        %v4998 = vpop.permute.xlu0 %4997
        %4999 = vrot.lane.b32.xlu0 %v4957, 32
        %v5000 = vpop.permute.xlu0 %4999
        %5001 = vrot.lane.b32.xlu0 %v4958, 32
        %v5002 = vpop.permute.xlu0 %5001
        %5003 = vrot.lane.b32.xlu0 %v4959, 32
        %v5004 = vpop.permute.xlu0 %5003
        %5005 = vrot.lane.b32.xlu0 %v4960, 32
        %v5006 = vpop.permute.xlu0 %5005
        %5007 = vrot.lane.b32.xlu0 %v4961, 32
        %v5008 = vpop.permute.xlu0 %5007
        %5009 = vrot.lane.b32.xlu0 %v4962, 32
        %v5010 = vpop.permute.xlu0 %5009
        %vm5027 = vcmask 261120
        %v5028 = vsel %vm5027, %v4931, %v4980
        %v5029 = vsel %vm5027, %v4932, %v4982
        %v5030 = vsel %vm5027, %v4933, %v4984
        %v5031 = vsel %vm5027, %v4934, %v4986
        %v5032 = vsel %vm5027, %v4935, %v4988
        %v5033 = vsel %vm5027, %v4936, %v4990
        %v5034 = vsel %vm5027, %v4937, %v4992
        %v5035 = vsel %vm5027, %v4938, %v4994
        %v5036 = vsel %vm5027, %v4939, %v4996
        %v5037 = vsel %vm5027, %v4940, %v4998
        %v5038 = vsel %vm5027, %v4941, %v5000
        %v5039 = vsel %vm5027, %v4942, %v5002
        %v5040 = vsel %vm5027, %v4943, %v5004
        %v5041 = vsel %vm5027, %v4944, %v5006
        %v5042 = vsel %vm5027, %v4945, %v5008
        %v5043 = vsel %vm5027, %v4946, %v5010
        %v5044 = vpack.c.bf16 %v5029, %v5028
        %v5045 = vpack.c.bf16 %v5031, %v5030
        %v5046 = vpack.c.bf16 %v5033, %v5032
        %v5047 = vpack.c.bf16 %v5035, %v5034
        %v5048 = vpack.c.bf16 %v5037, %v5036
        %v5049 = vpack.c.bf16 %v5039, %v5038
        %v5050 = vpack.c.bf16 %v5041, %v5040
        %v5051 = vpack.c.bf16 %v5043, %v5042
        %v5060 = vunpack.c.l.b16 %v5044
        %v5061 = vunpack.c.h.b16 %v5044
        %v5062 = vunpack.c.l.b16 %v5045
        %v5063 = vunpack.c.h.b16 %v5045
        %v5064 = vunpack.c.l.b16 %v5046
        %v5065 = vunpack.c.h.b16 %v5046
        %v5066 = vunpack.c.l.b16 %v5047
        %v5067 = vunpack.c.h.b16 %v5047
        %v5068 = vunpack.c.l.b16 %v5048
        %v5069 = vunpack.c.h.b16 %v5048
        %v5070 = vunpack.c.l.b16 %v5049
        %v5071 = vunpack.c.h.b16 %v5049
        %v5072 = vunpack.c.l.b16 %v5050
        %v5073 = vunpack.c.h.b16 %v5050
        %v5074 = vunpack.c.l.b16 %v5051
        %v5075 = vunpack.c.h.b16 %v5051
        %v5076 = vpack.c.b16 %v5060, %v5060
        %v5077 = vpack.c.b16 %v5061, %v5061
        %v5078 = vpack.c.b16 %v5062, %v5062
        %v5079 = vpack.c.b16 %v5063, %v5063
        %v5080 = vpack.c.b16 %v5064, %v5064
        %v5081 = vpack.c.b16 %v5065, %v5065
        %v5082 = vpack.c.b16 %v5066, %v5066
        %v5083 = vpack.c.b16 %v5067, %v5067
        %v5084 = vpack.c.b16 %v5068, %v5068
        %v5085 = vpack.c.b16 %v5069, %v5069
        %v5086 = vpack.c.b16 %v5070, %v5070
        %v5087 = vpack.c.b16 %v5071, %v5071
        %v5088 = vpack.c.b16 %v5072, %v5072
        %v5089 = vpack.c.b16 %v5073, %v5073
        %v5090 = vpack.c.b16 %v5074, %v5074
        %v5091 = vpack.c.b16 %v5075, %v5075
        %vm5108 = vcmask 519168
        %5109 = vst.msk [vmem:[%s349] sm:$0xf] %vm5108, %v5076
        %5110 = vst.msk [vmem:[%s349 + $0x4] sm:$0xf] %vm5108, %v5077
        %5111 = vst.msk [vmem:[%s349 + $0x8] sm:$0xf] %vm5108, %v5078
        %5112 = vst.msk [vmem:[%s349 + $0xc] sm:$0xf] %vm5108, %v5079
        %5113 = vst.msk [vmem:[%s349 + $0x10] sm:$0xf] %vm5108, %v5080
        %5114 = vst.msk [vmem:[%s349 + $0x14] sm:$0xf] %vm5108, %v5081
        %5115 = vst.msk [vmem:[%s349 + $0x18] sm:$0xf] %vm5108, %v5082
        %5116 = vst.msk [vmem:[%s349 + $0x1c] sm:$0xf] %vm5108, %v5083
        %5117 = vst.msk [vmem:[%s349 + $0x20] sm:$0xf] %vm5108, %v5084
        %5118 = vst.msk [vmem:[%s349 + $0x24] sm:$0xf] %vm5108, %v5085
        %5119 = vst.msk [vmem:[%s349 + $0x28] sm:$0xf] %vm5108, %v5086
        %5120 = vst.msk [vmem:[%s349 + $0x2c] sm:$0xf] %vm5108, %v5087
        %5121 = vst.msk [vmem:[%s349 + $0x30] sm:$0xf] %vm5108, %v5088
        %5122 = vst.msk [vmem:[%s349 + $0x34] sm:$0xf] %vm5108, %v5089
        %5123 = vst.msk [vmem:[%s349 + $0x38] sm:$0xf] %vm5108, %v5090
        %5124 = vst.msk [vmem:[%s349 + $0x3c] sm:$0xf] %vm5108, %v5091
      $region52: #{warp_attn_forward.12} parent=35 // pred_fallthru
        _
      %s5125 = smul.u32 16, %s23
      %p5126 = scmp.lt.s32.totalorder %s22, 1
      %s5127 = scalar_select %p5126, %s22, 1
      %p5128 = scmp.lt.s32.totalorder %s5125, 15
      %s5129 = scalar_select %p5128, %s5125, 15
      %s5130 = smul.addr %s5127, 16
      %s5131 = sadd.s32 %s5129, %s5130
      %s5132 = smul.addr %s5131, 4
      %s5133 = scalar_lea.vmem %s5, %s5132
      // Predicated region
      $region53: #{warp_attn_forward.12} parent=35 // pred_check
        %p5134 = pneg %p168
      $region54: #{warp_attn_forward.12} parent=35 // pred_check_branch
        %5136 = sbr.rel (%p5134) target = $region56
      $region55: #{warp_attn_forward.12} parent=35 // pred_region
        %s5137 = smul.u32 16, %s23
      $region56: #{warp_attn_forward.12} parent=35 // pred_fallthru
        _
    $region36: #{warp_attn_forward.12} parent=5 // pred_fallthru
      _
    %p5138 = scmp.le.s32.totalorder 2, %s12
    // Predicated region
    $region57: #{warp_attn_forward.12} parent=5 // pred_check
      %p5139 = pneg %p5138
    $region58: #{warp_attn_forward.12} parent=5 // pred_check_branch
      %5141 = sbr.rel (%p5139) target = $region60
    $region59: #{warp_attn_forward.12} parent=5 // pred_region
      %s5142 = ssub.s32 %s12, 2
      // Predicated region
      $region61: #{warp_attn_forward.12} parent=59 // pred_check
        %p5143 = pneg %p174
      $region62: #{warp_attn_forward.12} parent=59 // pred_check_branch
        %5145 = sbr.rel (%p5143) target = $region64
      $region63: #{warp_attn_forward.12} parent=59 // pred_region
        %s5146 = smul.u32 16, %s26
        %p5147 = scmp.lt.s32.totalorder %s25, 1
        %s5148 = scalar_select %p5147, %s25, 1
        %p5149 = scmp.lt.s32.totalorder %s5146, 15
        %s5150 = scalar_select %p5149, %s5146, 15
        %s5151 = smul.addr %s5148, 16
        %s5152 = sadd.s32 %s5150, %s5151
        %s5153 = smul.addr %s5152, 4
        %s5154 = scalar_lea.vmem %s5, %s5153
      $region64: #{warp_attn_forward.12} parent=59 // pred_fallthru
        _
    $region60: #{warp_attn_forward.12} parent=5 // pred_fallthru
      _
  $region6: #{warp_attn_forward.12} parent=0 // loop_footer
    %s16 = sadd.s32 1, %s12
  $region7: #{warp_attn_forward.12} parent=0 // loop_footer_branch
    %11 = sbr.rel target = $region3
  $region8: #{warp_attn_forward.12} parent=0 // loop_exit
    _

</llo_original>
